<compile_context>
chip_gen: v7x
topology: tpu7x:2x2x1
jax: 0.10.0
libtpu: 0.0.40
codegen_flags: <defaults>
</compile_context>

<pallas_src>
import functools
import math

import numpy as np
import jax
import jax.numpy as jnp
from jax.experimental import pallas as pl
from jax.experimental.pallas import tpu as pltpu


# ------------------------------- Pallas kernel -------------------------------
def _encoder_split_kernel(
    x_ref,        # (BS, H+2, W+2, Cin_p)   zero-padded, channel-packed input
    w1_ref,       # (9*Cin_p, Cout_p)       layer-1 im2col weight (block-diag)
    w2_ref,       # (9*Cout_p, Cout_p)      layer-2 im2col weight (block-diag)
    par_ref,      # (8, Cout_p)             rows: b1,g1,be1,b2,g2,be2,0,0
    agg_ref,      # (Cout_p, Gp)            one-hot channel->group aggregation
    scat_ref,     # (Gp, Cout_p)            one-hot group->channel broadcast
    o_ref,        # (BS, H, W, Cout_p)      output block
    col_ref,      # (BS*H*W, 9*max(Cin_p,Cout_p))  im2col scratch (reused)
    h1pad_ref,    # (BS, H+2, W+2, Cout_p)  padded layer-1 activation scratch
    *, H, W, BS, Cin_p, Cout_p, inv_n, eps, slope,
):
    HW = H * W

    def im2col(src_ref, c):
        # Stage the 9 shifted taps of every packed sample into the contiguous
        # im2col scratch; the single copy per tap replaces the per-tap
        # slice+reshape relayout the old 9-matmul formulation paid anyway.
        for p in range(BS):
            for ky in range(3):
                for kx in range(3):
                    t = ky * 3 + kx
                    col_ref[p * HW:(p + 1) * HW, t * c:(t + 1) * c] = (
                        src_ref[p, ky:ky + H, kx:kx + W, :].reshape(HW, c))

    def gn_lrelu(m, bias, gamma, beta):
        # m: (BS*HW, C) raw conv matmul output (bias NOT yet added).
        # GroupNorm(h = m + bias) + affine + LeakyReLU, one fused pass.
        mb = m.reshape(BS, HW, Cout_p)
        s1 = jnp.sum(mb, axis=1)                                   # (BS, C)
        s2 = jnp.sum(mb * mb, axis=1)                              # (BS, C)
        n_hw = float(HW)
        s1h = s1 + n_hw * bias                                     # sums of h
        s2h = s2 + 2.0 * bias * s1 + n_hw * (bias * bias)          # sums of h^2
        stats_g = jnp.dot(jnp.concatenate([s1h, s2h], axis=0), agg_ref[...],
                          preferred_element_type=jnp.float32) * inv_n   # (2BS, G)
        mean_g = stats_g[:BS]
        var_g = stats_g[BS:] - mean_g * mean_g
        istd_g = jax.lax.rsqrt(var_g + eps)
        back = jnp.dot(jnp.concatenate([mean_g, istd_g], axis=0), scat_ref[...],
                       preferred_element_type=jnp.float32)              # (2BS, C)
        mean_c, istd_c = back[:BS], back[BS:]
        scale = istd_c * gamma                                     # (BS, C)
        shift = beta + (bias - mean_c) * scale                     # (BS, C)
        y = mb * scale[:, None, :] + shift[:, None, :]             # 1 mul + 1 add
        return jnp.where(y >= 0.0, y, slope * y)                   # (BS, HW, C)

    b1 = par_ref[0:1, :]; g1 = par_ref[1:2, :]; be1 = par_ref[2:3, :]
    b2 = par_ref[3:4, :]; g2 = par_ref[4:5, :]; be2 = par_ref[5:6, :]

    # Keep only the 1-pixel border of the padded scratch zero (cheap strips;
    # safe under megacore grid sharding, unlike a program_id==0 one-shot init).
    h1pad_ref[:, 0:1, :, :] = jnp.zeros((BS, 1, W + 2, Cout_p), jnp.float32)
    h1pad_ref[:, H + 1:H + 2, :, :] = jnp.zeros((BS, 1, W + 2, Cout_p), jnp.float32)
    h1pad_ref[:, :, 0:1, :] = jnp.zeros((BS, H + 2, 1, Cout_p), jnp.float32)
    h1pad_ref[:, :, W + 1:W + 2, :] = jnp.zeros((BS, H + 2, 1, Cout_p), jnp.float32)

    # ---- layer 1: Conv3x3 -> GroupNorm -> LeakyReLU ----
    im2col(x_ref, Cin_p)
    m1 = jnp.dot(col_ref[:, :9 * Cin_p], w1_ref[...],
                 preferred_element_type=jnp.float32)               # (BS*HW, C)
    h1 = gn_lrelu(m1, b1, g1, be1)                                 # (BS, HW, C)
    h1pad_ref[:, 1:1 + H, 1:1 + W, :] = h1.reshape(BS, H, W, Cout_p)

    # ---- layer 2: Conv3x3 -> GroupNorm -> LeakyReLU ----
    im2col(h1pad_ref, Cout_p)
    m2 = jnp.dot(col_ref[:, :9 * Cout_p], w2_ref[...],
                 preferred_element_type=jnp.float32)
    h2 = gn_lrelu(m2, b2, g2, be2)
    o_ref[...] = h2.reshape(BS, H, W, Cout_p).astype(o_ref.dtype)


# --------------------------------- wrapper -----------------------------------
def encoder_split_forward(x, params, *, groups=16, eps=1e-5, slope=0.2):
    """x: (B, nc, H, W) float32 (NCHW), exactly like the PyTorch module."""
    B, Cin, H, W = x.shape
    w1, b1, g1, be1 = params["w1"], params["b1"], params["g1"], params["be1"]
    w2, b2, g2, be2 = params["w2"], params["b2"], params["g2"], params["be2"]
    Cout = w1.shape[0]
    assert w1.shape == (Cout, Cin, 3, 3) and w2.shape == (Cout, Cout, 3, 3)
    assert Cout % groups == 0

    # ---- lane-density: pack `pack` samples along the channel axis ----
    pack = 1
    if Cin <= 128 and Cout <= 128 and 128 % Cin == 0 and 128 % Cout == 0:
        pack = min(128 // Cin, 128 // Cout)
    pack = max(1, min(pack, B))
    Cin_p, Cout_p, Gp = pack * Cin, pack * Cout, pack * groups
    cpg = Cout // groups

    # ---- batch blocking: BS packed samples per grid step ----
    Bp = -(-B // pack)                       # number of packed samples
    BS = min(Bp, 4)                          # packed samples per grid step
    Bp_pad = -(-Bp // BS) * BS
    B_total = Bp_pad * pack
    Hp, Wp = H + 2, W + 2

    # ---- layout plumbing stays in the XLA wrapper ----
    x_nhwc = jnp.transpose(x, (0, 2, 3, 1)).astype(jnp.float32)    # (B, H, W, Cin)
    if B_total > B:
        x_nhwc = jnp.pad(x_nhwc, ((0, B_total - B), (0, 0), (0, 0), (0, 0)))
    x_pad = jnp.pad(x_nhwc, ((0, 0), (1, 1), (1, 1), (0, 0)))      # (B_tot, Hp, Wp, Cin)
    x_packed = (x_pad.reshape(Bp_pad, pack, Hp, Wp, Cin)
                     .transpose(0, 2, 3, 1, 4)
                     .reshape(Bp_pad, Hp, Wp, Cin_p))              # (Bp, Hp, Wp, Cin_p)

    def pack_weight(w, cin, cout):
        # OIHW -> (tap, cin, cout), then block-diagonal over the pack factor,
        # flattened to the im2col layout (9*pack*cin, pack*cout).
        w_t = jnp.transpose(w, (2, 3, 1, 0)).astype(jnp.float32).reshape(9, cin, cout)
        if pack == 1:
            return w_t.reshape(9 * cin, cout)
        wbd = jnp.zeros((9, pack, cin, pack, cout), jnp.float32)
        for s in range(pack):
            wbd = wbd.at[:, s, :, s, :].set(w_t)
        return wbd.reshape(9 * pack * cin, pack * cout)

    w1_col = pack_weight(w1, Cin, Cout)      # (9*Cin_p, Cout_p)
    w2_col = pack_weight(w2, Cout, Cout)     # (9*Cout_p, Cout_p)

    tile = lambda v: jnp.tile(v.reshape(1, Cout).astype(jnp.float32), (1, pack))
    par = jnp.concatenate([tile(b1), tile(g1), tile(be1),
                           tile(b2), tile(g2), tile(be2),
                           jnp.zeros((2, Cout_p), jnp.float32)], axis=0)  # (8, Cout_p)

    agg_np = np.zeros((Cout_p, Gp), np.float32)
    agg_np[np.arange(Cout_p), np.arange(Cout_p) // cpg] = 1.0      # contiguous groups
    agg = jnp.asarray(agg_np)
    scat = jnp.asarray(np.ascontiguousarray(agg_np.T))
    inv_n = 1.0 / float(H * W * cpg)

    kernel = functools.partial(
        _encoder_split_kernel, H=H, W=W, BS=BS, Cin_p=Cin_p, Cout_p=Cout_p,
        inv_n=inv_n, eps=float(eps), slope=float(slope))

    c_max = max(Cin_p, Cout_p)
    out_packed = pl.pallas_call(
        kernel,
        out_shape=jax.ShapeDtypeStruct((Bp_pad, H, W, Cout_p), jnp.float32),
        grid_spec=pltpu.PrefetchScalarGridSpec(
            num_scalar_prefetch=0,
            grid=(Bp_pad // BS,),
            in_specs=[
                pl.BlockSpec((BS, Hp, Wp, Cin_p), lambda i: (i, 0, 0, 0)),
                pl.BlockSpec((9 * Cin_p, Cout_p), lambda i: (0, 0)),
                pl.BlockSpec((9 * Cout_p, Cout_p), lambda i: (0, 0)),
                pl.BlockSpec((8, Cout_p), lambda i: (0, 0)),
                pl.BlockSpec((Cout_p, Gp), lambda i: (0, 0)),
                pl.BlockSpec((Gp, Cout_p), lambda i: (0, 0)),
            ],
            out_specs=pl.BlockSpec((BS, H, W, Cout_p), lambda i: (i, 0, 0, 0)),
            scratch_shapes=[
                pltpu.VMEM((BS * H * W, 9 * c_max), jnp.float32),   # im2col
                pltpu.VMEM((BS, Hp, Wp, Cout_p), jnp.float32),      # padded h1
            ],
        ),
        compiler_params=pltpu.CompilerParams(
            dimension_semantics=("parallel",),
        ),
    )(x_packed, w1_col, w2_col, par, agg, scat)

    # ---- unpack: channel-packed pairs -> samples, NHWC -> NCHW ----
    out = (out_packed.reshape(Bp_pad, H, W, pack, Cout)
                     .transpose(0, 3, 1, 2, 4)
                     .reshape(Bp_pad * pack, H, W, Cout)[:B])
    return jnp.transpose(out, (0, 3, 1, 2)).astype(x.dtype)


# ------------------------------ reference (JAX) -------------------------------
def encoder_split_reference(x, params, *, groups=16, eps=1e-5, slope=0.2):
    def dcgan_conv(h, w, b, gamma, beta):
        y = jax.lax.conv_general_dilated(
            h, w, window_strides=(1, 1), padding=((1, 1), (1, 1)),
            dimension_numbers=("NCHW", "OIHW", "NCHW"),
            preferred_element_type=jnp.float32)
        y = y + b[None, :, None, None]
        B, C, H, W = y.shape
        yg = y.reshape(B, groups, C // groups, H, W)
        mean = jnp.mean(yg, axis=(2, 3, 4), keepdims=True)
        var = jnp.mean(jnp.square(yg - mean), axis=(2, 3, 4), keepdims=True)
        yn = ((yg - mean) / jnp.sqrt(var + eps)).reshape(B, C, H, W)
        yn = yn * gamma[None, :, None, None] + beta[None, :, None, None]
        return jnp.where(yn >= 0, yn, slope * yn)

    h1 = dcgan_conv(x, params["w1"], params["b1"], params["g1"], params["be1"])
    h2 = dcgan_conv(h1, params["w2"], params["b2"], params["g2"], params["be2"])
    return h2


# ----------------------------------- main -------------------------------------
if __name__ == "__main__":
    nc, nf, B, S = 64, 64, 2, 16          # module defaults nc=nf=64; small batch/spatial
    key = jax.random.PRNGKey(0)
    ks = jax.random.split(key, 9)
    params = {
        "w1": jax.random.normal(ks[0], (nf, nc, 3, 3), jnp.float32) / math.sqrt(nc * 9),
        "b1": 0.1 * jax.random.normal(ks[1], (nf,), jnp.float32),
        "g1": 1.0 + 0.1 * jax.random.normal(ks[2], (nf,), jnp.float32),
        "be1": 0.1 * jax.random.normal(ks[3], (nf,), jnp.float32),
        "w2": jax.random.normal(ks[4], (nf, nf, 3, 3), jnp.float32) / math.sqrt(nf * 9),
        "b2": 0.1 * jax.random.normal(ks[5], (nf,), jnp.float32),
        "g2": 1.0 + 0.1 * jax.random.normal(ks[6], (nf,), jnp.float32),
        "be2": 0.1 * jax.random.normal(ks[7], (nf,), jnp.float32),
    }
    x = jax.random.normal(ks[8], (B, nc, S, S), jnp.float32)

    fwd = jax.jit(encoder_split_forward)
    out = jax.block_until_ready(fwd(x, params))
    assert out.shape == (B, nf, S, S)

    ref = jax.block_until_ready(encoder_split_reference(x, params))
    np.testing.assert_allclose(np.asarray(out), np.asarray(ref), rtol=2e-2, atol=2e-2)

    print("KERNEL_OK")
</pallas_src>

<mosaic_0001>
module attributes {stable_mosaic.version = 11 : i64} {
  func.func @_encoder_split_kernel(%arg0: i32, %arg1: memref<1x18x18x128xf32, #tpu.memory_space<vmem>>, %arg2: memref<1152x128xf32, #tpu.memory_space<vmem>>, %arg3: memref<1152x128xf32, #tpu.memory_space<vmem>>, %arg4: memref<8x128xf32, #tpu.memory_space<vmem>>, %arg5: memref<128x32xf32, #tpu.memory_space<vmem>>, %arg6: memref<32x128xf32, #tpu.memory_space<vmem>>, %arg7: memref<1x16x16x128xf32, #tpu.memory_space<vmem>>, %arg8: memref<256x1152xf32, #tpu.memory_space<vmem>>, %arg9: memref<1x18x18x128xf32, #tpu.memory_space<vmem>>) attributes {dimension_semantics = [#tpu.dimension_semantics<parallel>], iteration_bounds = array<i64: 1>, scalar_prefetch = 0 : i64, scratch_operands = 2 : i64, tpu.core_type = #tpu.core_type<tc>, window_params = [{transform_indices = @transform_0, window_bounds = array<i64: 1, 18, 18, 128>}, {pipeline_mode = #tpu.pipeline_mode<synchronous>, transform_indices = @transform_1, window_bounds = array<i64: 1152, 128>}, {pipeline_mode = #tpu.pipeline_mode<synchronous>, transform_indices = @transform_2, window_bounds = array<i64: 1152, 128>}, {pipeline_mode = #tpu.pipeline_mode<synchronous>, transform_indices = @transform_3, window_bounds = array<i64: 8, 128>}, {pipeline_mode = #tpu.pipeline_mode<synchronous>, transform_indices = @transform_4, window_bounds = array<i64: 128, 32>}, {pipeline_mode = #tpu.pipeline_mode<synchronous>, transform_indices = @transform_5, window_bounds = array<i64: 32, 128>}, {transform_indices = @transform_6, window_bounds = array<i64: 1, 16, 16, 128>}]} {
    %c0 = arith.constant 0 : index
    %c0_0 = arith.constant 0 : index
    %0 = vector.load %arg4[%c0, %c0_0] : memref<8x128xf32, #tpu.memory_space<vmem>>, vector<1x128xf32>
    %c1 = arith.constant 1 : index
    %c0_1 = arith.constant 0 : index
    %1 = vector.load %arg4[%c1, %c0_1] : memref<8x128xf32, #tpu.memory_space<vmem>>, vector<1x128xf32>
    %c2 = arith.constant 2 : index
    %c0_2 = arith.constant 0 : index
    %2 = vector.load %arg4[%c2, %c0_2] : memref<8x128xf32, #tpu.memory_space<vmem>>, vector<1x128xf32>
    %c3 = arith.constant 3 : index
    %c0_3 = arith.constant 0 : index
    %3 = vector.load %arg4[%c3, %c0_3] : memref<8x128xf32, #tpu.memory_space<vmem>>, vector<1x128xf32>
    %c4 = arith.constant 4 : index
    %c0_4 = arith.constant 0 : index
    %4 = vector.load %arg4[%c4, %c0_4] : memref<8x128xf32, #tpu.memory_space<vmem>>, vector<1x128xf32>
    %c5 = arith.constant 5 : index
    %c0_5 = arith.constant 0 : index
    %5 = vector.load %arg4[%c5, %c0_5] : memref<8x128xf32, #tpu.memory_space<vmem>>, vector<1x128xf32>
    %cst = arith.constant 0.000000e+00 : f32
    %6 = vector.broadcast %cst : f32 to vector<1x1x18x128xf32>
    %c0_6 = arith.constant 0 : index
    %c0_7 = arith.constant 0 : index
    %c0_8 = arith.constant 0 : index
    %c0_9 = arith.constant 0 : index
    %7 = vector.load %arg9[%c0_6, %c0_7, %c0_8, %c0_9] : memref<1x18x18x128xf32, #tpu.memory_space<vmem>>, vector<1x1x18x128xf32>
    tpu.vector_store %arg9[%c0_6, %c0_7, %c0_8, %c0_9], %6 {strides = array<i32>} : memref<1x18x18x128xf32, #tpu.memory_space<vmem>>, vector<1x1x18x128xf32>,
    %cst_10 = arith.constant 0.000000e+00 : f32
    %8 = vector.broadcast %cst_10 : f32 to vector<1x1x18x128xf32>
    %c0_11 = arith.constant 0 : index
    %c17 = arith.constant 17 : index
    %c0_12 = arith.constant 0 : index
    %c0_13 = arith.constant 0 : index
    %9 = vector.load %arg9[%c0_11, %c17, %c0_12, %c0_13] : memref<1x18x18x128xf32, #tpu.memory_space<vmem>>, vector<1x1x18x128xf32>
    tpu.vector_store %arg9[%c0_11, %c17, %c0_12, %c0_13], %8 {strides = array<i32>} : memref<1x18x18x128xf32, #tpu.memory_space<vmem>>, vector<1x1x18x128xf32>,
    %cst_14 = arith.constant 0.000000e+00 : f32
    %10 = vector.broadcast %cst_14 : f32 to vector<1x18x1x128xf32>
    %c0_15 = arith.constant 0 : index
    %c0_16 = arith.constant 0 : index
    %c0_17 = arith.constant 0 : index
    %c0_18 = arith.constant 0 : index
    %11 = vector.load %arg9[%c0_15, %c0_16, %c0_17, %c0_18] : memref<1x18x18x128xf32, #tpu.memory_space<vmem>>, vector<1x18x1x128xf32>
    tpu.vector_store %arg9[%c0_15, %c0_16, %c0_17, %c0_18], %10 {strides = array<i32>} : memref<1x18x18x128xf32, #tpu.memory_space<vmem>>, vector<1x18x1x128xf32>,
    %cst_19 = arith.constant 0.000000e+00 : f32
    %12 = vector.broadcast %cst_19 : f32 to vector<1x18x1x128xf32>
    %c0_20 = arith.constant 0 : index
    %c0_21 = arith.constant 0 : index
    %c17_22 = arith.constant 17 : index
    %c0_23 = arith.constant 0 : index
    %13 = vector.load %arg9[%c0_20, %c0_21, %c17_22, %c0_23] : memref<1x18x18x128xf32, #tpu.memory_space<vmem>>, vector<1x18x1x128xf32>
    tpu.vector_store %arg9[%c0_20, %c0_21, %c17_22, %c0_23], %12 {strides = array<i32>} : memref<1x18x18x128xf32, #tpu.memory_space<vmem>>, vector<1x18x1x128xf32>,
    %c0_24 = arith.constant 0 : index
    %c0_25 = arith.constant 0 : index
    %c0_26 = arith.constant 0 : index
    %c0_27 = arith.constant 0 : index
    %14 = vector.load %arg1[%c0_24, %c0_25, %c0_26, %c0_27] : memref<1x18x18x128xf32, #tpu.memory_space<vmem>>, vector<1x16x16x128xf32>
    %15 = vector.shape_cast %14 : vector<1x16x16x128xf32> to vector<16x16x128xf32>
    %16 = vector.shape_cast %15 : vector<16x16x128xf32> to vector<256x128xf32>
    %c0_28 = arith.constant 0 : index
    %c0_29 = arith.constant 0 : index
    %17 = vector.load %arg8[%c0_28, %c0_29] : memref<256x1152xf32, #tpu.memory_space<vmem>>, vector<256x128xf32>
    tpu.vector_store %arg8[%c0_28, %c0_29], %16 {strides = array<i32>} : memref<256x1152xf32, #tpu.memory_space<vmem>>, vector<256x128xf32>,
    %c0_30 = arith.constant 0 : index
    %c0_31 = arith.constant 0 : index
    %c1_32 = arith.constant 1 : index
    %c0_33 = arith.constant 0 : index
    %18 = vector.load %arg1[%c0_30, %c0_31, %c1_32, %c0_33] : memref<1x18x18x128xf32, #tpu.memory_space<vmem>>, vector<1x16x16x128xf32>
    %19 = vector.shape_cast %18 : vector<1x16x16x128xf32> to vector<16x16x128xf32>
    %20 = vector.shape_cast %19 : vector<16x16x128xf32> to vector<256x128xf32>
    %c0_34 = arith.constant 0 : index
    %c128 = arith.constant 128 : index
    %21 = vector.load %arg8[%c0_34, %c128] : memref<256x1152xf32, #tpu.memory_space<vmem>>, vector<256x128xf32>
    tpu.vector_store %arg8[%c0_34, %c128], %20 {strides = array<i32>} : memref<256x1152xf32, #tpu.memory_space<vmem>>, vector<256x128xf32>,
    %c0_35 = arith.constant 0 : index
    %c0_36 = arith.constant 0 : index
    %c2_37 = arith.constant 2 : index
    %c0_38 = arith.constant 0 : index
    %22 = vector.load %arg1[%c0_35, %c0_36, %c2_37, %c0_38] : memref<1x18x18x128xf32, #tpu.memory_space<vmem>>, vector<1x16x16x128xf32>
    %23 = vector.shape_cast %22 : vector<1x16x16x128xf32> to vector<16x16x128xf32>
    %24 = vector.shape_cast %23 : vector<16x16x128xf32> to vector<256x128xf32>
    %c0_39 = arith.constant 0 : index
    %c256 = arith.constant 256 : index
    %25 = vector.load %arg8[%c0_39, %c256] : memref<256x1152xf32, #tpu.memory_space<vmem>>, vector<256x128xf32>
    tpu.vector_store %arg8[%c0_39, %c256], %24 {strides = array<i32>} : memref<256x1152xf32, #tpu.memory_space<vmem>>, vector<256x128xf32>,
    %c0_40 = arith.constant 0 : index
    %c1_41 = arith.constant 1 : index
    %c0_42 = arith.constant 0 : index
    %c0_43 = arith.constant 0 : index
    %26 = vector.load %arg1[%c0_40, %c1_41, %c0_42, %c0_43] : memref<1x18x18x128xf32, #tpu.memory_space<vmem>>, vector<1x16x16x128xf32>
    %27 = vector.shape_cast %26 : vector<1x16x16x128xf32> to vector<16x16x128xf32>
    %28 = vector.shape_cast %27 : vector<16x16x128xf32> to vector<256x128xf32>
    %c0_44 = arith.constant 0 : index
    %c384 = arith.constant 384 : index
    %29 = vector.load %arg8[%c0_44, %c384] : memref<256x1152xf32, #tpu.memory_space<vmem>>, vector<256x128xf32>
    tpu.vector_store %arg8[%c0_44, %c384], %28 {strides = array<i32>} : memref<256x1152xf32, #tpu.memory_space<vmem>>, vector<256x128xf32>,
    %c0_45 = arith.constant 0 : index
    %c1_46 = arith.constant 1 : index
    %c1_47 = arith.constant 1 : index
    %c0_48 = arith.constant 0 : index
    %30 = vector.load %arg1[%c0_45, %c1_46, %c1_47, %c0_48] : memref<1x18x18x128xf32, #tpu.memory_space<vmem>>, vector<1x16x16x128xf32>
    %31 = vector.shape_cast %30 : vector<1x16x16x128xf32> to vector<16x16x128xf32>
    %32 = vector.shape_cast %31 : vector<16x16x128xf32> to vector<256x128xf32>
    %c0_49 = arith.constant 0 : index
    %c512 = arith.constant 512 : index
    %33 = vector.load %arg8[%c0_49, %c512] : memref<256x1152xf32, #tpu.memory_space<vmem>>, vector<256x128xf32>
    tpu.vector_store %arg8[%c0_49, %c512], %32 {strides = array<i32>} : memref<256x1152xf32, #tpu.memory_space<vmem>>, vector<256x128xf32>,
    %c0_50 = arith.constant 0 : index
    %c1_51 = arith.constant 1 : index
    %c2_52 = arith.constant 2 : index
    %c0_53 = arith.constant 0 : index
    %34 = vector.load %arg1[%c0_50, %c1_51, %c2_52, %c0_53] : memref<1x18x18x128xf32, #tpu.memory_space<vmem>>, vector<1x16x16x128xf32>
    %35 = vector.shape_cast %34 : vector<1x16x16x128xf32> to vector<16x16x128xf32>
    %36 = vector.shape_cast %35 : vector<16x16x128xf32> to vector<256x128xf32>
    %c0_54 = arith.constant 0 : index
    %c640 = arith.constant 640 : index
    %37 = vector.load %arg8[%c0_54, %c640] : memref<256x1152xf32, #tpu.memory_space<vmem>>, vector<256x128xf32>
    tpu.vector_store %arg8[%c0_54, %c640], %36 {strides = array<i32>} : memref<256x1152xf32, #tpu.memory_space<vmem>>, vector<256x128xf32>,
    %c0_55 = arith.constant 0 : index
    %c2_56 = arith.constant 2 : index
    %c0_57 = arith.constant 0 : index
    %c0_58 = arith.constant 0 : index
    %38 = vector.load %arg1[%c0_55, %c2_56, %c0_57, %c0_58] : memref<1x18x18x128xf32, #tpu.memory_space<vmem>>, vector<1x16x16x128xf32>
    %39 = vector.shape_cast %38 : vector<1x16x16x128xf32> to vector<16x16x128xf32>
    %40 = vector.shape_cast %39 : vector<16x16x128xf32> to vector<256x128xf32>
    %c0_59 = arith.constant 0 : index
    %c768 = arith.constant 768 : index
    %41 = vector.load %arg8[%c0_59, %c768] : memref<256x1152xf32, #tpu.memory_space<vmem>>, vector<256x128xf32>
    tpu.vector_store %arg8[%c0_59, %c768], %40 {strides = array<i32>} : memref<256x1152xf32, #tpu.memory_space<vmem>>, vector<256x128xf32>,
    %c0_60 = arith.constant 0 : index
    %c2_61 = arith.constant 2 : index
    %c1_62 = arith.constant 1 : index
    %c0_63 = arith.constant 0 : index
    %42 = vector.load %arg1[%c0_60, %c2_61, %c1_62, %c0_63] : memref<1x18x18x128xf32, #tpu.memory_space<vmem>>, vector<1x16x16x128xf32>
    %43 = vector.shape_cast %42 : vector<1x16x16x128xf32> to vector<16x16x128xf32>
    %44 = vector.shape_cast %43 : vector<16x16x128xf32> to vector<256x128xf32>
    %c0_64 = arith.constant 0 : index
    %c896 = arith.constant 896 : index
    %45 = vector.load %arg8[%c0_64, %c896] : memref<256x1152xf32, #tpu.memory_space<vmem>>, vector<256x128xf32>
    tpu.vector_store %arg8[%c0_64, %c896], %44 {strides = array<i32>} : memref<256x1152xf32, #tpu.memory_space<vmem>>, vector<256x128xf32>,
    %c0_65 = arith.constant 0 : index
    %c2_66 = arith.constant 2 : index
    %c2_67 = arith.constant 2 : index
    %c0_68 = arith.constant 0 : index
    %46 = vector.load %arg1[%c0_65, %c2_66, %c2_67, %c0_68] : memref<1x18x18x128xf32, #tpu.memory_space<vmem>>, vector<1x16x16x128xf32>
    %47 = vector.shape_cast %46 : vector<1x16x16x128xf32> to vector<16x16x128xf32>
    %48 = vector.shape_cast %47 : vector<16x16x128xf32> to vector<256x128xf32>
    %c0_69 = arith.constant 0 : index
    %c1024 = arith.constant 1024 : index
    %49 = vector.load %arg8[%c0_69, %c1024] : memref<256x1152xf32, #tpu.memory_space<vmem>>, vector<256x128xf32>
    tpu.vector_store %arg8[%c0_69, %c1024], %48 {strides = array<i32>} : memref<256x1152xf32, #tpu.memory_space<vmem>>, vector<256x128xf32>,
    %c0_70 = arith.constant 0 : index
    %c0_71 = arith.constant 0 : index
    %50 = vector.load %arg8[%c0_70, %c0_71] : memref<256x1152xf32, #tpu.memory_space<vmem>>, vector<256x1152xf32>
    %c0_72 = arith.constant 0 : index
    %c0_73 = arith.constant 0 : index
    %51 = vector.load %arg2[%c0_72, %c0_73] : memref<1152x128xf32, #tpu.memory_space<vmem>>, vector<1152x128xf32>
    %cst_74 = arith.constant dense<0.000000e+00> : vector<256x128xf32>
    %52 = tpu.matmul %50, %51, %cst_74 {dimension_numbers = #tpu.dot_dimension_numbers<[1], [0], [0], [1], [0, 0, 1, 1], [], []>} : vector<256x1152xf32>, vector<1152x128xf32>, vector<256x128xf32> -> vector<256x128xf32>
    %53 = vector.shape_cast %52 : vector<256x128xf32> to vector<1x256x128xf32>
    %cst_75 = arith.constant dense<0.000000e+00> : vector<1x128xf32>
    %54 = vector.multi_reduction <add>, %53, %cst_75 [1] : vector<1x256x128xf32> to vector<1x128xf32>
    %55 = arith.mulf %53, %53 : vector<1x256x128xf32>
    %cst_76 = arith.constant dense<0.000000e+00> : vector<1x128xf32>
    %56 = vector.multi_reduction <add>, %55, %cst_76 [1] : vector<1x256x128xf32> to vector<1x128xf32>
    %cst_77 = arith.constant 2.560000e+02 : f32
    %57 = vector.broadcast %cst_77 : f32 to vector<1x128xf32>
    %58 = arith.mulf %57, %0 : vector<1x128xf32>
    %59 = arith.addf %54, %58 : vector<1x128xf32>
    %cst_78 = arith.constant 2.000000e+00 : f32
    %60 = vector.broadcast %cst_78 : f32 to vector<1x128xf32>
    %61 = arith.mulf %60, %0 : vector<1x128xf32>
    %62 = arith.mulf %61, %54 : vector<1x128xf32>
    %63 = arith.addf %56, %62 : vector<1x128xf32>
    %64 = arith.mulf %0, %0 : vector<1x128xf32>
    %cst_79 = arith.constant 2.560000e+02 : f32
    %65 = vector.broadcast %cst_79 : f32 to vector<1x128xf32>
    %66 = arith.mulf %65, %64 : vector<1x128xf32>
    %67 = arith.addf %63, %66 : vector<1x128xf32>
    %68 = tpu.concatenate %59, %67 in 0 : vector<1x128xf32>, vector<1x128xf32> -> vector<2x128xf32>
    %c0_80 = arith.constant 0 : index
    %c0_81 = arith.constant 0 : index
    %69 = vector.load %arg5[%c0_80, %c0_81] : memref<128x32xf32, #tpu.memory_space<vmem>>, vector<128x32xf32>
    %cst_82 = arith.constant dense<0.000000e+00> : vector<2x32xf32>
    %70 = tpu.matmul %68, %69, %cst_82 {dimension_numbers = #tpu.dot_dimension_numbers<[1], [0], [0], [1], [0, 0, 1, 1], [], []>} : vector<2x128xf32>, vector<128x32xf32>, vector<2x32xf32> -> vector<2x32xf32>
    %cst_83 = arith.constant 9.765625E-4 : f32
    %71 = vector.broadcast %cst_83 : f32 to vector<2x32xf32>
    %72 = arith.mulf %70, %71 : vector<2x32xf32>
    %73 = vector.extract_strided_slice %72 {offsets = [0, 0], sizes = [1, 32], strides = [1, 1]} : vector<2x32xf32> to vector<1x32xf32>
    %74 = vector.extract_strided_slice %72 {offsets = [1, 0], sizes = [1, 32], strides = [1, 1]} : vector<2x32xf32> to vector<1x32xf32>
    %75 = arith.mulf %73, %73 : vector<1x32xf32>
    %76 = arith.subf %74, %75 : vector<1x32xf32>
    %cst_84 = arith.constant 9.99999974E-6 : f32
    %77 = vector.broadcast %cst_84 : f32 to vector<1x32xf32>
    %78 = arith.addf %76, %77 : vector<1x32xf32>
    %79 = math.rsqrt %78 : vector<1x32xf32>
    %80 = tpu.concatenate %73, %79 in 0 : vector<1x32xf32>, vector<1x32xf32> -> vector<2x32xf32>
    %c0_85 = arith.constant 0 : index
    %c0_86 = arith.constant 0 : index
    %81 = vector.load %arg6[%c0_85, %c0_86] : memref<32x128xf32, #tpu.memory_space<vmem>>, vector<32x128xf32>
    %cst_87 = arith.constant dense<0.000000e+00> : vector<2x128xf32>
    %82 = tpu.matmul %80, %81, %cst_87 {dimension_numbers = #tpu.dot_dimension_numbers<[1], [0], [0], [1], [0, 0, 1, 1], [], []>} : vector<2x32xf32>, vector<32x128xf32>, vector<2x128xf32> -> vector<2x128xf32>
    %83 = vector.extract_strided_slice %82 {offsets = [0, 0], sizes = [1, 128], strides = [1, 1]} : vector<2x128xf32> to vector<1x128xf32>
    %84 = vector.extract_strided_slice %82 {offsets = [1, 0], sizes = [1, 128], strides = [1, 1]} : vector<2x128xf32> to vector<1x128xf32>
    %85 = arith.mulf %84, %1 : vector<1x128xf32>
    %86 = arith.subf %0, %83 : vector<1x128xf32>
    %87 = arith.mulf %86, %85 : vector<1x128xf32>
    %88 = arith.addf %2, %87 : vector<1x128xf32>
    %89 = vector.shape_cast %85 : vector<1x128xf32> to vector<1x1x128xf32>
    %90 = vector.broadcast %89 : vector<1x1x128xf32> to vector<1x256x128xf32>
    %91 = arith.mulf %53, %90 : vector<1x256x128xf32>
    %92 = vector.shape_cast %88 : vector<1x128xf32> to vector<1x1x128xf32>
    %93 = vector.broadcast %92 : vector<1x1x128xf32> to vector<1x256x128xf32>
    %94 = arith.addf %91, %93 : vector<1x256x128xf32>
    %cst_88 = arith.constant 0.000000e+00 : f32
    %95 = vector.broadcast %cst_88 : f32 to vector<1x256x128xf32>
    %96 = arith.cmpf oge, %94, %95 : vector<1x256x128xf32>
    %cst_89 = arith.constant 2.000000e-01 : f32
    %97 = vector.broadcast %cst_89 : f32 to vector<1x256x128xf32>
    %98 = arith.mulf %97, %94 : vector<1x256x128xf32>
    %99 = arith.select %96, %94, %98 : vector<1x256x128xi1>, vector<1x256x128xf32>
    %100 = vector.shape_cast %99 : vector<1x256x128xf32> to vector<1x16x16x128xf32>
    %c0_90 = arith.constant 0 : index
    %c1_91 = arith.constant 1 : index
    %c1_92 = arith.constant 1 : index
    %c0_93 = arith.constant 0 : index
    %101 = vector.load %arg9[%c0_90, %c1_91, %c1_92, %c0_93] : memref<1x18x18x128xf32, #tpu.memory_space<vmem>>, vector<1x16x16x128xf32>
    tpu.vector_store %arg9[%c0_90, %c1_91, %c1_92, %c0_93], %100 {strides = array<i32>} : memref<1x18x18x128xf32, #tpu.memory_space<vmem>>, vector<1x16x16x128xf32>,
    %c0_94 = arith.constant 0 : index
    %c0_95 = arith.constant 0 : index
    %c0_96 = arith.constant 0 : index
    %c0_97 = arith.constant 0 : index
    %102 = vector.load %arg9[%c0_94, %c0_95, %c0_96, %c0_97] : memref<1x18x18x128xf32, #tpu.memory_space<vmem>>, vector<1x16x16x128xf32>
    %103 = vector.shape_cast %102 : vector<1x16x16x128xf32> to vector<16x16x128xf32>
    %104 = vector.shape_cast %103 : vector<16x16x128xf32> to vector<256x128xf32>
    %c0_98 = arith.constant 0 : index
    %c0_99 = arith.constant 0 : index
    %105 = vector.load %arg8[%c0_98, %c0_99] : memref<256x1152xf32, #tpu.memory_space<vmem>>, vector<256x128xf32>
    tpu.vector_store %arg8[%c0_98, %c0_99], %104 {strides = array<i32>} : memref<256x1152xf32, #tpu.memory_space<vmem>>, vector<256x128xf32>,
    %c0_100 = arith.constant 0 : index
    %c0_101 = arith.constant 0 : index
    %c1_102 = arith.constant 1 : index
    %c0_103 = arith.constant 0 : index
    %106 = vector.load %arg9[%c0_100, %c0_101, %c1_102, %c0_103] : memref<1x18x18x128xf32, #tpu.memory_space<vmem>>, vector<1x16x16x128xf32>
    %107 = vector.shape_cast %106 : vector<1x16x16x128xf32> to vector<16x16x128xf32>
    %108 = vector.shape_cast %107 : vector<16x16x128xf32> to vector<256x128xf32>
    %c0_104 = arith.constant 0 : index
    %c128_105 = arith.constant 128 : index
    %109 = vector.load %arg8[%c0_104, %c128_105] : memref<256x1152xf32, #tpu.memory_space<vmem>>, vector<256x128xf32>
    tpu.vector_store %arg8[%c0_104, %c128_105], %108 {strides = array<i32>} : memref<256x1152xf32, #tpu.memory_space<vmem>>, vector<256x128xf32>,
    %c0_106 = arith.constant 0 : index
    %c0_107 = arith.constant 0 : index
    %c2_108 = arith.constant 2 : index
    %c0_109 = arith.constant 0 : index
    %110 = vector.load %arg9[%c0_106, %c0_107, %c2_108, %c0_109] : memref<1x18x18x128xf32, #tpu.memory_space<vmem>>, vector<1x16x16x128xf32>
    %111 = vector.shape_cast %110 : vector<1x16x16x128xf32> to vector<16x16x128xf32>
    %112 = vector.shape_cast %111 : vector<16x16x128xf32> to vector<256x128xf32>
    %c0_110 = arith.constant 0 : index
    %c256_111 = arith.constant 256 : index
    %113 = vector.load %arg8[%c0_110, %c256_111] : memref<256x1152xf32, #tpu.memory_space<vmem>>, vector<256x128xf32>
    tpu.vector_store %arg8[%c0_110, %c256_111], %112 {strides = array<i32>} : memref<256x1152xf32, #tpu.memory_space<vmem>>, vector<256x128xf32>,
    %c0_112 = arith.constant 0 : index
    %c1_113 = arith.constant 1 : index
    %c0_114 = arith.constant 0 : index
    %c0_115 = arith.constant 0 : index
    %114 = vector.load %arg9[%c0_112, %c1_113, %c0_114, %c0_115] : memref<1x18x18x128xf32, #tpu.memory_space<vmem>>, vector<1x16x16x128xf32>
    %115 = vector.shape_cast %114 : vector<1x16x16x128xf32> to vector<16x16x128xf32>
    %116 = vector.shape_cast %115 : vector<16x16x128xf32> to vector<256x128xf32>
    %c0_116 = arith.constant 0 : index
    %c384_117 = arith.constant 384 : index
    %117 = vector.load %arg8[%c0_116, %c384_117] : memref<256x1152xf32, #tpu.memory_space<vmem>>, vector<256x128xf32>
    tpu.vector_store %arg8[%c0_116, %c384_117], %116 {strides = array<i32>} : memref<256x1152xf32, #tpu.memory_space<vmem>>, vector<256x128xf32>,
    %c0_118 = arith.constant 0 : index
    %c1_119 = arith.constant 1 : index
    %c1_120 = arith.constant 1 : index
    %c0_121 = arith.constant 0 : index
    %118 = vector.load %arg9[%c0_118, %c1_119, %c1_120, %c0_121] : memref<1x18x18x128xf32, #tpu.memory_space<vmem>>, vector<1x16x16x128xf32>
    %119 = vector.shape_cast %118 : vector<1x16x16x128xf32> to vector<16x16x128xf32>
    %120 = vector.shape_cast %119 : vector<16x16x128xf32> to vector<256x128xf32>
    %c0_122 = arith.constant 0 : index
    %c512_123 = arith.constant 512 : index
    %121 = vector.load %arg8[%c0_122, %c512_123] : memref<256x1152xf32, #tpu.memory_space<vmem>>, vector<256x128xf32>
    tpu.vector_store %arg8[%c0_122, %c512_123], %120 {strides = array<i32>} : memref<256x1152xf32, #tpu.memory_space<vmem>>, vector<256x128xf32>,
    %c0_124 = arith.constant 0 : index
    %c1_125 = arith.constant 1 : index
    %c2_126 = arith.constant 2 : index
    %c0_127 = arith.constant 0 : index
    %122 = vector.load %arg9[%c0_124, %c1_125, %c2_126, %c0_127] : memref<1x18x18x128xf32, #tpu.memory_space<vmem>>, vector<1x16x16x128xf32>
    %123 = vector.shape_cast %122 : vector<1x16x16x128xf32> to vector<16x16x128xf32>
    %124 = vector.shape_cast %123 : vector<16x16x128xf32> to vector<256x128xf32>
    %c0_128 = arith.constant 0 : index
    %c640_129 = arith.constant 640 : index
    %125 = vector.load %arg8[%c0_128, %c640_129] : memref<256x1152xf32, #tpu.memory_space<vmem>>, vector<256x128xf32>
    tpu.vector_store %arg8[%c0_128, %c640_129], %124 {strides = array<i32>} : memref<256x1152xf32, #tpu.memory_space<vmem>>, vector<256x128xf32>,
    %c0_130 = arith.constant 0 : index
    %c2_131 = arith.constant 2 : index
    %c0_132 = arith.constant 0 : index
    %c0_133 = arith.constant 0 : index
    %126 = vector.load %arg9[%c0_130, %c2_131, %c0_132, %c0_133] : memref<1x18x18x128xf32, #tpu.memory_space<vmem>>, vector<1x16x16x128xf32>
    %127 = vector.shape_cast %126 : vector<1x16x16x128xf32> to vector<16x16x128xf32>
    %128 = vector.shape_cast %127 : vector<16x16x128xf32> to vector<256x128xf32>
    %c0_134 = arith.constant 0 : index
    %c768_135 = arith.constant 768 : index
    %129 = vector.load %arg8[%c0_134, %c768_135] : memref<256x1152xf32, #tpu.memory_space<vmem>>, vector<256x128xf32>
    tpu.vector_store %arg8[%c0_134, %c768_135], %128 {strides = array<i32>} : memref<256x1152xf32, #tpu.memory_space<vmem>>, vector<256x128xf32>,
    %c0_136 = arith.constant 0 : index
    %c2_137 = arith.constant 2 : index
    %c1_138 = arith.constant 1 : index
    %c0_139 = arith.constant 0 : index
    %130 = vector.load %arg9[%c0_136, %c2_137, %c1_138, %c0_139] : memref<1x18x18x128xf32, #tpu.memory_space<vmem>>, vector<1x16x16x128xf32>
    %131 = vector.shape_cast %130 : vector<1x16x16x128xf32> to vector<16x16x128xf32>
    %132 = vector.shape_cast %131 : vector<16x16x128xf32> to vector<256x128xf32>
    %c0_140 = arith.constant 0 : index
    %c896_141 = arith.constant 896 : index
    %133 = vector.load %arg8[%c0_140, %c896_141] : memref<256x1152xf32, #tpu.memory_space<vmem>>, vector<256x128xf32>
    tpu.vector_store %arg8[%c0_140, %c896_141], %132 {strides = array<i32>} : memref<256x1152xf32, #tpu.memory_space<vmem>>, vector<256x128xf32>,
    %c0_142 = arith.constant 0 : index
    %c2_143 = arith.constant 2 : index
    %c2_144 = arith.constant 2 : index
    %c0_145 = arith.constant 0 : index
    %134 = vector.load %arg9[%c0_142, %c2_143, %c2_144, %c0_145] : memref<1x18x18x128xf32, #tpu.memory_space<vmem>>, vector<1x16x16x128xf32>
    %135 = vector.shape_cast %134 : vector<1x16x16x128xf32> to vector<16x16x128xf32>
    %136 = vector.shape_cast %135 : vector<16x16x128xf32> to vector<256x128xf32>
    %c0_146 = arith.constant 0 : index
    %c1024_147 = arith.constant 1024 : index
    %137 = vector.load %arg8[%c0_146, %c1024_147] : memref<256x1152xf32, #tpu.memory_space<vmem>>, vector<256x128xf32>
    tpu.vector_store %arg8[%c0_146, %c1024_147], %136 {strides = array<i32>} : memref<256x1152xf32, #tpu.memory_space<vmem>>, vector<256x128xf32>,
    %c0_148 = arith.constant 0 : index
    %c0_149 = arith.constant 0 : index
    %138 = vector.load %arg8[%c0_148, %c0_149] : memref<256x1152xf32, #tpu.memory_space<vmem>>, vector<256x1152xf32>
    %c0_150 = arith.constant 0 : index
    %c0_151 = arith.constant 0 : index
    %139 = vector.load %arg3[%c0_150, %c0_151] : memref<1152x128xf32, #tpu.memory_space<vmem>>, vector<1152x128xf32>
    %cst_152 = arith.constant dense<0.000000e+00> : vector<256x128xf32>
    %140 = tpu.matmul %138, %139, %cst_152 {dimension_numbers = #tpu.dot_dimension_numbers<[1], [0], [0], [1], [0, 0, 1, 1], [], []>} : vector<256x1152xf32>, vector<1152x128xf32>, vector<256x128xf32> -> vector<256x128xf32>
    %141 = vector.shape_cast %140 : vector<256x128xf32> to vector<1x256x128xf32>
    %cst_153 = arith.constant dense<0.000000e+00> : vector<1x128xf32>
    %142 = vector.multi_reduction <add>, %141, %cst_153 [1] : vector<1x256x128xf32> to vector<1x128xf32>
    %143 = arith.mulf %141, %141 : vector<1x256x128xf32>
    %cst_154 = arith.constant dense<0.000000e+00> : vector<1x128xf32>
    %144 = vector.multi_reduction <add>, %143, %cst_154 [1] : vector<1x256x128xf32> to vector<1x128xf32>
    %cst_155 = arith.constant 2.560000e+02 : f32
    %145 = vector.broadcast %cst_155 : f32 to vector<1x128xf32>
    %146 = arith.mulf %145, %3 : vector<1x128xf32>
    %147 = arith.addf %142, %146 : vector<1x128xf32>
    %cst_156 = arith.constant 2.000000e+00 : f32
    %148 = vector.broadcast %cst_156 : f32 to vector<1x128xf32>
    %149 = arith.mulf %148, %3 : vector<1x128xf32>
    %150 = arith.mulf %149, %142 : vector<1x128xf32>
    %151 = arith.addf %144, %150 : vector<1x128xf32>
    %152 = arith.mulf %3, %3 : vector<1x128xf32>
    %cst_157 = arith.constant 2.560000e+02 : f32
    %153 = vector.broadcast %cst_157 : f32 to vector<1x128xf32>
    %154 = arith.mulf %153, %152 : vector<1x128xf32>
    %155 = arith.addf %151, %154 : vector<1x128xf32>
    %156 = tpu.concatenate %147, %155 in 0 : vector<1x128xf32>, vector<1x128xf32> -> vector<2x128xf32>
    %c0_158 = arith.constant 0 : index
    %c0_159 = arith.constant 0 : index
    %157 = vector.load %arg5[%c0_158, %c0_159] : memref<128x32xf32, #tpu.memory_space<vmem>>, vector<128x32xf32>
    %cst_160 = arith.constant dense<0.000000e+00> : vector<2x32xf32>
    %158 = tpu.matmul %156, %157, %cst_160 {dimension_numbers = #tpu.dot_dimension_numbers<[1], [0], [0], [1], [0, 0, 1, 1], [], []>} : vector<2x128xf32>, vector<128x32xf32>, vector<2x32xf32> -> vector<2x32xf32>
    %cst_161 = arith.constant 9.765625E-4 : f32
    %159 = vector.broadcast %cst_161 : f32 to vector<2x32xf32>
    %160 = arith.mulf %158, %159 : vector<2x32xf32>
    %161 = vector.extract_strided_slice %160 {offsets = [0, 0], sizes = [1, 32], strides = [1, 1]} : vector<2x32xf32> to vector<1x32xf32>
    %162 = vector.extract_strided_slice %160 {offsets = [1, 0], sizes = [1, 32], strides = [1, 1]} : vector<2x32xf32> to vector<1x32xf32>
    %163 = arith.mulf %161, %161 : vector<1x32xf32>
    %164 = arith.subf %162, %163 : vector<1x32xf32>
    %cst_162 = arith.constant 9.99999974E-6 : f32
    %165 = vector.broadcast %cst_162 : f32 to vector<1x32xf32>
    %166 = arith.addf %164, %165 : vector<1x32xf32>
    %167 = math.rsqrt %166 : vector<1x32xf32>
    %168 = tpu.concatenate %161, %167 in 0 : vector<1x32xf32>, vector<1x32xf32> -> vector<2x32xf32>
    %c0_163 = arith.constant 0 : index
    %c0_164 = arith.constant 0 : index
    %169 = vector.load %arg6[%c0_163, %c0_164] : memref<32x128xf32, #tpu.memory_space<vmem>>, vector<32x128xf32>
    %cst_165 = arith.constant dense<0.000000e+00> : vector<2x128xf32>
    %170 = tpu.matmul %168, %169, %cst_165 {dimension_numbers = #tpu.dot_dimension_numbers<[1], [0], [0], [1], [0, 0, 1, 1], [], []>} : vector<2x32xf32>, vector<32x128xf32>, vector<2x128xf32> -> vector<2x128xf32>
    %171 = vector.extract_strided_slice %170 {offsets = [0, 0], sizes = [1, 128], strides = [1, 1]} : vector<2x128xf32> to vector<1x128xf32>
    %172 = vector.extract_strided_slice %170 {offsets = [1, 0], sizes = [1, 128], strides = [1, 1]} : vector<2x128xf32> to vector<1x128xf32>
    %173 = arith.mulf %172, %4 : vector<1x128xf32>
    %174 = arith.subf %3, %171 : vector<1x128xf32>
    %175 = arith.mulf %174, %173 : vector<1x128xf32>
    %176 = arith.addf %5, %175 : vector<1x128xf32>
    %177 = vector.shape_cast %173 : vector<1x128xf32> to vector<1x1x128xf32>
    %178 = vector.broadcast %177 : vector<1x1x128xf32> to vector<1x256x128xf32>
    %179 = arith.mulf %141, %178 : vector<1x256x128xf32>
    %180 = vector.shape_cast %176 : vector<1x128xf32> to vector<1x1x128xf32>
    %181 = vector.broadcast %180 : vector<1x1x128xf32> to vector<1x256x128xf32>
    %182 = arith.addf %179, %181 : vector<1x256x128xf32>
    %cst_166 = arith.constant 0.000000e+00 : f32
    %183 = vector.broadcast %cst_166 : f32 to vector<1x256x128xf32>
    %184 = arith.cmpf oge, %182, %183 : vector<1x256x128xf32>
    %cst_167 = arith.constant 2.000000e-01 : f32
    %185 = vector.broadcast %cst_167 : f32 to vector<1x256x128xf32>
    %186 = arith.mulf %185, %182 : vector<1x256x128xf32>
    %187 = arith.select %184, %182, %186 : vector<1x256x128xi1>, vector<1x256x128xf32>
    %188 = vector.shape_cast %187 : vector<1x256x128xf32> to vector<1x16x16x128xf32>
    %c0_168 = arith.constant 0 : index
    %c0_169 = arith.constant 0 : index
    %c0_170 = arith.constant 0 : index
    %c0_171 = arith.constant 0 : index
    %189 = vector.load %arg7[%c0_168, %c0_169, %c0_170, %c0_171] : memref<1x16x16x128xf32, #tpu.memory_space<vmem>>, vector<1x16x16x128xf32>
    tpu.vector_store %arg7[%c0_168, %c0_169, %c0_170, %c0_171], %188 {strides = array<i32>} : memref<1x16x16x128xf32, #tpu.memory_space<vmem>>, vector<1x16x16x128xf32>,
    return
  }
  func.func @transform_0(%arg0: i32) -> (i32, i32, i32, i32) {
    %c0_i32 = arith.constant 0 : i32
    %c0_i32_0 = arith.constant 0 : i32
    %c0_i32_1 = arith.constant 0 : i32
    %c0_i32_2 = arith.constant 0 : i32
    return %arg0, %c0_i32, %c0_i32_0, %c0_i32_1 : i32, i32, i32, i32
  }
  func.func @transform_1(%arg0: i32) -> (i32, i32) {
    %c0_i32 = arith.constant 0 : i32
    %c0_i32_0 = arith.constant 0 : i32
    %c0_i32_1 = arith.constant 0 : i32
    return %c0_i32, %c0_i32_0 : i32, i32
  }
  func.func @transform_2(%arg0: i32) -> (i32, i32) {
    %c0_i32 = arith.constant 0 : i32
    %c0_i32_0 = arith.constant 0 : i32
    %c0_i32_1 = arith.constant 0 : i32
    return %c0_i32, %c0_i32_0 : i32, i32
  }
  func.func @transform_3(%arg0: i32) -> (i32, i32) {
    %c0_i32 = arith.constant 0 : i32
    %c0_i32_0 = arith.constant 0 : i32
    %c0_i32_1 = arith.constant 0 : i32
    return %c0_i32, %c0_i32_0 : i32, i32
  }
  func.func @transform_4(%arg0: i32) -> (i32, i32) {
    %c0_i32 = arith.constant 0 : i32
    %c0_i32_0 = arith.constant 0 : i32
    %c0_i32_1 = arith.constant 0 : i32
    return %c0_i32, %c0_i32_0 : i32, i32
  }
  func.func @transform_5(%arg0: i32) -> (i32, i32) {
    %c0_i32 = arith.constant 0 : i32
    %c0_i32_0 = arith.constant 0 : i32
    %c0_i32_1 = arith.constant 0 : i32
    return %c0_i32, %c0_i32_0 : i32, i32
  }
  func.func @transform_6(%arg0: i32) -> (i32, i32, i32, i32) {
    %c0_i32 = arith.constant 0 : i32
    %c0_i32_0 = arith.constant 0 : i32
    %c0_i32_1 = arith.constant 0 : i32
    %c0_i32_2 = arith.constant 0 : i32
    return %arg0, %c0_i32, %c0_i32_0, %c0_i32_1 : i32, i32, i32, i32
  }
}

</mosaic_0001>

<llo_original>
// kernel: encoder_split_forward.1
$region0: #{encoder_split_forward.1}
  #allocation0 [shape = 'u32[]', space=smem, size = 0x4, offset = 0x4, fixed_abs, tag = 'smem constant byte address 0x4 - core index']
  #allocation1 [shape = 'u32[144,128]{1,0:T(1,128)}', space=vmem, size = 0x12000, scoped, tag = 'internal scratch']
  #allocation2 [shape = 'f32[256,1152]{1,0:T(8,128)}', space=vmem, size = 0x120000, scoped, tag = 'scratch operand']
  #allocation3 [shape = 'f32[1,18,18,128]{3,2,1,0:T(8,128)}', space=vmem, size = 0x36000, scoped, tag = 'scratch operand']
  %s0 = inlined_call_operand.vmem [shape: f32[1,18,18,128], index: 0, kind: input, shape index: {}]
  %s1 = inlined_call_operand.vmem [shape: f32[1152,128], index: 1, kind: input, shape index: {}]
  %s2 = inlined_call_operand.vmem [shape: f32[1152,128], index: 2, kind: input, shape index: {}]
  %s3 = inlined_call_operand.vmem [shape: f32[8,128], index: 3, kind: input, shape index: {}]
  %s4 = inlined_call_operand.vmem [shape: f32[128,32], index: 4, kind: input, shape index: {}]
  %s5 = inlined_call_operand.vmem [shape: f32[32,128], index: 5, kind: input, shape index: {}]
  %s6 = inlined_call_operand.vmem [shape: f32[1,16,16,128], index: 6, kind: output, shape index: {}]
  %s7 = sld [smem:[#allocation0]]
  $region34: #{encoder_split_forward.1} parent=0
    _
  %s9 = ssub.s32 1, %s7
  %s10 = scalar_select 0, %s9, %s7
  // Predicated region
  $region2: #{encoder_split_forward.1} parent=0 // pred_check
    _
  $region3: #{encoder_split_forward.1} parent=0 // pred_check_branch
    %12 = sbr.rel (0) target = $region5
  $region4: #{encoder_split_forward.1} parent=0 // pred_region
    _
  $region5: #{encoder_split_forward.1} parent=0 // pred_fallthru
    _
  // Predicated region
  $region6: #{encoder_split_forward.1} parent=0 // pred_check
    _
  $region7: #{encoder_split_forward.1} parent=0 // pred_check_branch
    %14 = sbr.rel (0) target = $region9
  $region8: #{encoder_split_forward.1} parent=0 // pred_region
    _
  $region9: #{encoder_split_forward.1} parent=0 // pred_fallthru
    _
  // Predicated region
  $region10: #{encoder_split_forward.1} parent=0 // pred_check
    _
  $region11: #{encoder_split_forward.1} parent=0 // pred_check_branch
    %16 = sbr.rel (0) target = $region13
  $region12: #{encoder_split_forward.1} parent=0 // pred_region
    _
  $region13: #{encoder_split_forward.1} parent=0 // pred_fallthru
    _
  // Predicated region
  $region14: #{encoder_split_forward.1} parent=0 // pred_check
    _
  $region15: #{encoder_split_forward.1} parent=0 // pred_check_branch
    %18 = sbr.rel (0) target = $region17
  $region16: #{encoder_split_forward.1} parent=0 // pred_region
    _
  $region17: #{encoder_split_forward.1} parent=0 // pred_fallthru
    _
  // Predicated region
  $region18: #{encoder_split_forward.1} parent=0 // pred_check
    _
  $region19: #{encoder_split_forward.1} parent=0 // pred_check_branch
    %20 = sbr.rel (0) target = $region21
  $region20: #{encoder_split_forward.1} parent=0 // pred_region
    _
  $region21: #{encoder_split_forward.1} parent=0 // pred_fallthru
    _
  // Predicated region
  $region22: #{encoder_split_forward.1} parent=0 // pred_check
    _
  $region23: #{encoder_split_forward.1} parent=0 // pred_check_branch
    %22 = sbr.rel (0) target = $region25
  $region24: #{encoder_split_forward.1} parent=0 // pred_region
    _
  $region25: #{encoder_split_forward.1} parent=0 // pred_fallthru
    _
  %v23 = vld [vmem:[%s3] sm:$0x1]
  %v24 = vld [vmem:[%s3 + $0x1] sm:$0x1]
  %v25 = vld [vmem:[%s3 + $0x2] sm:$0x1]
  %v26 = vld [vmem:[%s3 + $0x3] sm:$0x1]
  %v27 = vld [vmem:[%s3 + $0x4] sm:$0x1]
  %v28 = vld [vmem:[%s3 + $0x5] sm:$0x1]
  %29 = vst [vmem:[#allocation3] sm:$0xff] 0.0
  %30 = vst [vmem:[#allocation3 + $0x8] sm:$0xff] 0.0
  %31 = vst [vmem:[#allocation3 + $0x10] sm:$0x3] 0.0
  %s32 = scalar_lea.vmem [#allocation3], 408
  %33 = vst [vmem:[%s32] sm:$0xff] 0.0
  %34 = vst [vmem:[%s32 + $0x8] sm:$0xff] 0.0
  %35 = vst [vmem:[%s32 + $0x10] sm:$0x3] 0.0
  %36 = vst [vmem:[#allocation3] sm:$0x1] 0.0
  %37 = vst [vmem:[#allocation3 + $0x18] sm:$0x1] 0.0
  %38 = vst [vmem:[#allocation3 + $0x30] sm:$0x1] 0.0
  %39 = vst [vmem:[#allocation3 + $0x48] sm:$0x1] 0.0
  %40 = vst [vmem:[#allocation3 + $0x60] sm:$0x1] 0.0
  %41 = vst [vmem:[#allocation3 + $0x78] sm:$0x1] 0.0
  %42 = vst [vmem:[#allocation3 + $0x90] sm:$0x1] 0.0
  %43 = vst [vmem:[#allocation3 + $0xa8] sm:$0x1] 0.0
  %44 = vst [vmem:[#allocation3 + $0xc0] sm:$0x1] 0.0
  %45 = vst [vmem:[#allocation3 + $0xd8] sm:$0x1] 0.0
  %46 = vst [vmem:[#allocation3 + $0xf0] sm:$0x1] 0.0
  %47 = vst [vmem:[#allocation3 + $0x108] sm:$0x1] 0.0
  %48 = vst [vmem:[#allocation3 + $0x120] sm:$0x1] 0.0
  %49 = vst [vmem:[#allocation3 + $0x138] sm:$0x1] 0.0
  %50 = vst [vmem:[#allocation3 + $0x150] sm:$0x1] 0.0
  %51 = vst [vmem:[#allocation3 + $0x168] sm:$0x1] 0.0
  %52 = vst [vmem:[#allocation3 + $0x180] sm:$0x1] 0.0
  %53 = vst [vmem:[#allocation3 + $0x198] sm:$0x1] 0.0
  %54 = vst [vmem:[#allocation3 + $0x11] sm:$0x1] 0.0
  %55 = vst [vmem:[#allocation3 + $0x29] sm:$0x1] 0.0
  %56 = vst [vmem:[#allocation3 + $0x41] sm:$0x1] 0.0
  %57 = vst [vmem:[#allocation3 + $0x59] sm:$0x1] 0.0
  %58 = vst [vmem:[#allocation3 + $0x71] sm:$0x1] 0.0
  %59 = vst [vmem:[#allocation3 + $0x89] sm:$0x1] 0.0
  %60 = vst [vmem:[#allocation3 + $0xa1] sm:$0x1] 0.0
  %61 = vst [vmem:[#allocation3 + $0xb9] sm:$0x1] 0.0
  %62 = vst [vmem:[#allocation3 + $0xd1] sm:$0x1] 0.0
  %63 = vst [vmem:[#allocation3 + $0xe9] sm:$0x1] 0.0
  %64 = vst [vmem:[#allocation3 + $0x101] sm:$0x1] 0.0
  %65 = vst [vmem:[#allocation3 + $0x119] sm:$0x1] 0.0
  %66 = vst [vmem:[#allocation3 + $0x131] sm:$0x1] 0.0
  %67 = vst [vmem:[#allocation3 + $0x149] sm:$0x1] 0.0
  %68 = vst [vmem:[#allocation3 + $0x161] sm:$0x1] 0.0
  %69 = vst [vmem:[#allocation3 + $0x179] sm:$0x1] 0.0
  %70 = vst [vmem:[#allocation3 + $0x191] sm:$0x1] 0.0
  %71 = vst [vmem:[#allocation3 + $0x1a9] sm:$0x1] 0.0
  %v72 = vld [vmem:[%s0] sm:$0xff]
  %v73 = vld [vmem:[%s0 + $0x8] sm:$0xff]
  %v74 = vld [vmem:[%s0 + $0x18] sm:$0xff]
  %v75 = vld [vmem:[%s0 + $0x20] sm:$0xff]
  %v76 = vld [vmem:[%s0 + $0x30] sm:$0xff]
  %v77 = vld [vmem:[%s0 + $0x38] sm:$0xff]
  %v78 = vld [vmem:[%s0 + $0x48] sm:$0xff]
  %v79 = vld [vmem:[%s0 + $0x50] sm:$0xff]
  %v80 = vld [vmem:[%s0 + $0x60] sm:$0xff]
  %v81 = vld [vmem:[%s0 + $0x68] sm:$0xff]
  %v82 = vld [vmem:[%s0 + $0x78] sm:$0xff]
  %v83 = vld [vmem:[%s0 + $0x80] sm:$0xff]
  %v84 = vld [vmem:[%s0 + $0x90] sm:$0xff]
  %v85 = vld [vmem:[%s0 + $0x98] sm:$0xff]
  %v86 = vld [vmem:[%s0 + $0xa8] sm:$0xff]
  %v87 = vld [vmem:[%s0 + $0xb0] sm:$0xff]
  %v88 = vld [vmem:[%s0 + $0xc0] sm:$0xff]
  %v89 = vld [vmem:[%s0 + $0xc8] sm:$0xff]
  %v90 = vld [vmem:[%s0 + $0xd8] sm:$0xff]
  %v91 = vld [vmem:[%s0 + $0xe0] sm:$0xff]
  %v92 = vld [vmem:[%s0 + $0xf0] sm:$0xff]
  %v93 = vld [vmem:[%s0 + $0xf8] sm:$0xff]
  %v94 = vld [vmem:[%s0 + $0x108] sm:$0xff]
  %v95 = vld [vmem:[%s0 + $0x110] sm:$0xff]
  %v96 = vld [vmem:[%s0 + $0x120] sm:$0xff]
  %v97 = vld [vmem:[%s0 + $0x128] sm:$0xff]
  %v98 = vld [vmem:[%s0 + $0x138] sm:$0xff]
  %v99 = vld [vmem:[%s0 + $0x140] sm:$0xff]
  %v100 = vld [vmem:[%s0 + $0x150] sm:$0xff]
  %v101 = vld [vmem:[%s0 + $0x158] sm:$0xff]
  %v102 = vld [vmem:[%s0 + $0x168] sm:$0xff]
  %v103 = vld [vmem:[%s0 + $0x170] sm:$0xff]
  %104 = vst [vmem:[#allocation2] sm:$0xff] %v72
  %105 = vst [vmem:[#allocation2 + $0x48] sm:$0xff] %v73
  %106 = vst [vmem:[#allocation2 + $0x90] sm:$0xff] %v74
  %107 = vst [vmem:[#allocation2 + $0xd8] sm:$0xff] %v75
  %108 = vst [vmem:[#allocation2 + $0x120] sm:$0xff] %v76
  %109 = vst [vmem:[#allocation2 + $0x168] sm:$0xff] %v77
  %110 = vst [vmem:[#allocation2 + $0x1b0] sm:$0xff] %v78
  %111 = vst [vmem:[#allocation2 + $0x1f8] sm:$0xff] %v79
  %112 = vst [vmem:[#allocation2 + $0x240] sm:$0xff] %v80
  %113 = vst [vmem:[#allocation2 + $0x288] sm:$0xff] %v81
  %114 = vst [vmem:[#allocation2 + $0x2d0] sm:$0xff] %v82
  %115 = vst [vmem:[#allocation2 + $0x318] sm:$0xff] %v83
  %116 = vst [vmem:[#allocation2 + $0x360] sm:$0xff] %v84
  %117 = vst [vmem:[#allocation2 + $0x3a8] sm:$0xff] %v85
  %118 = vst [vmem:[#allocation2 + $0x3f0] sm:$0xff] %v86
  %119 = vst [vmem:[#allocation2 + $0x438] sm:$0xff] %v87
  %120 = vst [vmem:[#allocation2 + $0x480] sm:$0xff] %v88
  %121 = vst [vmem:[#allocation2 + $0x4c8] sm:$0xff] %v89
  %122 = vst [vmem:[#allocation2 + $0x510] sm:$0xff] %v90
  %123 = vst [vmem:[#allocation2 + $0x558] sm:$0xff] %v91
  %124 = vst [vmem:[#allocation2 + $0x5a0] sm:$0xff] %v92
  %125 = vst [vmem:[#allocation2 + $0x5e8] sm:$0xff] %v93
  %126 = vst [vmem:[#allocation2 + $0x630] sm:$0xff] %v94
  %127 = vst [vmem:[#allocation2 + $0x678] sm:$0xff] %v95
  %128 = vst [vmem:[#allocation2 + $0x6c0] sm:$0xff] %v96
  %129 = vst [vmem:[#allocation2 + $0x708] sm:$0xff] %v97
  %130 = vst [vmem:[#allocation2 + $0x750] sm:$0xff] %v98
  %131 = vst [vmem:[#allocation2 + $0x798] sm:$0xff] %v99
  %132 = vst [vmem:[#allocation2 + $0x7e0] sm:$0xff] %v100
  %133 = vst [vmem:[#allocation2 + $0x828] sm:$0xff] %v101
  %134 = vst [vmem:[#allocation2 + $0x870] sm:$0xff] %v102
  %135 = vst [vmem:[#allocation2 + $0x8b8] sm:$0xff] %v103
  %v136 = vld [vmem:[%s0 + $0x1] sm:$0xff]
  %v137 = vld [vmem:[%s0 + $0x9] sm:$0xff]
  %v138 = vld [vmem:[%s0 + $0x19] sm:$0xff]
  %v139 = vld [vmem:[%s0 + $0x21] sm:$0xff]
  %v140 = vld [vmem:[%s0 + $0x31] sm:$0xff]
  %v141 = vld [vmem:[%s0 + $0x39] sm:$0xff]
  %v142 = vld [vmem:[%s0 + $0x49] sm:$0xff]
  %v143 = vld [vmem:[%s0 + $0x51] sm:$0xff]
  %v144 = vld [vmem:[%s0 + $0x61] sm:$0xff]
  %v145 = vld [vmem:[%s0 + $0x69] sm:$0xff]
  %v146 = vld [vmem:[%s0 + $0x79] sm:$0xff]
  %v147 = vld [vmem:[%s0 + $0x81] sm:$0xff]
  %v148 = vld [vmem:[%s0 + $0x91] sm:$0xff]
  %v149 = vld [vmem:[%s0 + $0x99] sm:$0xff]
  %v150 = vld [vmem:[%s0 + $0xa9] sm:$0xff]
  %v151 = vld [vmem:[%s0 + $0xb1] sm:$0xff]
  %v152 = vld [vmem:[%s0 + $0xc1] sm:$0xff]
  %v153 = vld [vmem:[%s0 + $0xc9] sm:$0xff]
  %v154 = vld [vmem:[%s0 + $0xd9] sm:$0xff]
  %v155 = vld [vmem:[%s0 + $0xe1] sm:$0xff]
  %v156 = vld [vmem:[%s0 + $0xf1] sm:$0xff]
  %v157 = vld [vmem:[%s0 + $0xf9] sm:$0xff]
  %v158 = vld [vmem:[%s0 + $0x109] sm:$0xff]
  %v159 = vld [vmem:[%s0 + $0x111] sm:$0xff]
  %v160 = vld [vmem:[%s0 + $0x121] sm:$0xff]
  %v161 = vld [vmem:[%s0 + $0x129] sm:$0xff]
  %v162 = vld [vmem:[%s0 + $0x139] sm:$0xff]
  %v163 = vld [vmem:[%s0 + $0x141] sm:$0xff]
  %v164 = vld [vmem:[%s0 + $0x151] sm:$0xff]
  %v165 = vld [vmem:[%s0 + $0x159] sm:$0xff]
  %v166 = vld [vmem:[%s0 + $0x169] sm:$0xff]
  %v167 = vld [vmem:[%s0 + $0x171] sm:$0xff]
  %168 = vst [vmem:[#allocation2 + $0x8] sm:$0xff] %v136
  %169 = vst [vmem:[#allocation2 + $0x50] sm:$0xff] %v137
  %170 = vst [vmem:[#allocation2 + $0x98] sm:$0xff] %v138
  %171 = vst [vmem:[#allocation2 + $0xe0] sm:$0xff] %v139
  %172 = vst [vmem:[#allocation2 + $0x128] sm:$0xff] %v140
  %173 = vst [vmem:[#allocation2 + $0x170] sm:$0xff] %v141
  %174 = vst [vmem:[#allocation2 + $0x1b8] sm:$0xff] %v142
  %175 = vst [vmem:[#allocation2 + $0x200] sm:$0xff] %v143
  %176 = vst [vmem:[#allocation2 + $0x248] sm:$0xff] %v144
  %177 = vst [vmem:[#allocation2 + $0x290] sm:$0xff] %v145
  %178 = vst [vmem:[#allocation2 + $0x2d8] sm:$0xff] %v146
  %179 = vst [vmem:[#allocation2 + $0x320] sm:$0xff] %v147
  %180 = vst [vmem:[#allocation2 + $0x368] sm:$0xff] %v148
  %181 = vst [vmem:[#allocation2 + $0x3b0] sm:$0xff] %v149
  %182 = vst [vmem:[#allocation2 + $0x3f8] sm:$0xff] %v150
  %183 = vst [vmem:[#allocation2 + $0x440] sm:$0xff] %v151
  %184 = vst [vmem:[#allocation2 + $0x488] sm:$0xff] %v152
  %185 = vst [vmem:[#allocation2 + $0x4d0] sm:$0xff] %v153
  %186 = vst [vmem:[#allocation2 + $0x518] sm:$0xff] %v154
  %187 = vst [vmem:[#allocation2 + $0x560] sm:$0xff] %v155
  %188 = vst [vmem:[#allocation2 + $0x5a8] sm:$0xff] %v156
  %189 = vst [vmem:[#allocation2 + $0x5f0] sm:$0xff] %v157
  %190 = vst [vmem:[#allocation2 + $0x638] sm:$0xff] %v158
  %191 = vst [vmem:[#allocation2 + $0x680] sm:$0xff] %v159
  %192 = vst [vmem:[#allocation2 + $0x6c8] sm:$0xff] %v160
  %193 = vst [vmem:[#allocation2 + $0x710] sm:$0xff] %v161
  %194 = vst [vmem:[#allocation2 + $0x758] sm:$0xff] %v162
  %195 = vst [vmem:[#allocation2 + $0x7a0] sm:$0xff] %v163
  %196 = vst [vmem:[#allocation2 + $0x7e8] sm:$0xff] %v164
  %197 = vst [vmem:[#allocation2 + $0x830] sm:$0xff] %v165
  %198 = vst [vmem:[#allocation2 + $0x878] sm:$0xff] %v166
  %199 = vst [vmem:[#allocation2 + $0x8c0] sm:$0xff] %v167
  %v200 = vld [vmem:[%s0 + $0x2] sm:$0xff]
  %v201 = vld [vmem:[%s0 + $0xa] sm:$0xff]
  %v202 = vld [vmem:[%s0 + $0x1a] sm:$0xff]
  %v203 = vld [vmem:[%s0 + $0x22] sm:$0xff]
  %v204 = vld [vmem:[%s0 + $0x32] sm:$0xff]
  %v205 = vld [vmem:[%s0 + $0x3a] sm:$0xff]
  %v206 = vld [vmem:[%s0 + $0x4a] sm:$0xff]
  %v207 = vld [vmem:[%s0 + $0x52] sm:$0xff]
  %v208 = vld [vmem:[%s0 + $0x62] sm:$0xff]
  %v209 = vld [vmem:[%s0 + $0x6a] sm:$0xff]
  %v210 = vld [vmem:[%s0 + $0x7a] sm:$0xff]
  %v211 = vld [vmem:[%s0 + $0x82] sm:$0xff]
  %v212 = vld [vmem:[%s0 + $0x92] sm:$0xff]
  %v213 = vld [vmem:[%s0 + $0x9a] sm:$0xff]
  %v214 = vld [vmem:[%s0 + $0xaa] sm:$0xff]
  %v215 = vld [vmem:[%s0 + $0xb2] sm:$0xff]
  %v216 = vld [vmem:[%s0 + $0xc2] sm:$0xff]
  %v217 = vld [vmem:[%s0 + $0xca] sm:$0xff]
  %v218 = vld [vmem:[%s0 + $0xda] sm:$0xff]
  %v219 = vld [vmem:[%s0 + $0xe2] sm:$0xff]
  %v220 = vld [vmem:[%s0 + $0xf2] sm:$0xff]
  %v221 = vld [vmem:[%s0 + $0xfa] sm:$0xff]
  %v222 = vld [vmem:[%s0 + $0x10a] sm:$0xff]
  %v223 = vld [vmem:[%s0 + $0x112] sm:$0xff]
  %v224 = vld [vmem:[%s0 + $0x122] sm:$0xff]
  %v225 = vld [vmem:[%s0 + $0x12a] sm:$0xff]
  %v226 = vld [vmem:[%s0 + $0x13a] sm:$0xff]
  %v227 = vld [vmem:[%s0 + $0x142] sm:$0xff]
  %v228 = vld [vmem:[%s0 + $0x152] sm:$0xff]
  %v229 = vld [vmem:[%s0 + $0x15a] sm:$0xff]
  %v230 = vld [vmem:[%s0 + $0x16a] sm:$0xff]
  %v231 = vld [vmem:[%s0 + $0x172] sm:$0xff]
  %232 = vst [vmem:[#allocation2 + $0x10] sm:$0xff] %v200
  %233 = vst [vmem:[#allocation2 + $0x58] sm:$0xff] %v201
  %234 = vst [vmem:[#allocation2 + $0xa0] sm:$0xff] %v202
  %235 = vst [vmem:[#allocation2 + $0xe8] sm:$0xff] %v203
  %236 = vst [vmem:[#allocation2 + $0x130] sm:$0xff] %v204
  %237 = vst [vmem:[#allocation2 + $0x178] sm:$0xff] %v205
  %238 = vst [vmem:[#allocation2 + $0x1c0] sm:$0xff] %v206
  %239 = vst [vmem:[#allocation2 + $0x208] sm:$0xff] %v207
  %240 = vst [vmem:[#allocation2 + $0x250] sm:$0xff] %v208
  %241 = vst [vmem:[#allocation2 + $0x298] sm:$0xff] %v209
  %242 = vst [vmem:[#allocation2 + $0x2e0] sm:$0xff] %v210
  %243 = vst [vmem:[#allocation2 + $0x328] sm:$0xff] %v211
  %244 = vst [vmem:[#allocation2 + $0x370] sm:$0xff] %v212
  %245 = vst [vmem:[#allocation2 + $0x3b8] sm:$0xff] %v213
  %246 = vst [vmem:[#allocation2 + $0x400] sm:$0xff] %v214
  %247 = vst [vmem:[#allocation2 + $0x448] sm:$0xff] %v215
  %248 = vst [vmem:[#allocation2 + $0x490] sm:$0xff] %v216
  %249 = vst [vmem:[#allocation2 + $0x4d8] sm:$0xff] %v217
  %250 = vst [vmem:[#allocation2 + $0x520] sm:$0xff] %v218
  %251 = vst [vmem:[#allocation2 + $0x568] sm:$0xff] %v219
  %252 = vst [vmem:[#allocation2 + $0x5b0] sm:$0xff] %v220
  %253 = vst [vmem:[#allocation2 + $0x5f8] sm:$0xff] %v221
  %254 = vst [vmem:[#allocation2 + $0x640] sm:$0xff] %v222
  %255 = vst [vmem:[#allocation2 + $0x688] sm:$0xff] %v223
  %256 = vst [vmem:[#allocation2 + $0x6d0] sm:$0xff] %v224
  %257 = vst [vmem:[#allocation2 + $0x718] sm:$0xff] %v225
  %258 = vst [vmem:[#allocation2 + $0x760] sm:$0xff] %v226
  %259 = vst [vmem:[#allocation2 + $0x7a8] sm:$0xff] %v227
  %260 = vst [vmem:[#allocation2 + $0x7f0] sm:$0xff] %v228
  %261 = vst [vmem:[#allocation2 + $0x838] sm:$0xff] %v229
  %262 = vst [vmem:[#allocation2 + $0x880] sm:$0xff] %v230
  %263 = vst [vmem:[#allocation2 + $0x8c8] sm:$0xff] %v231
  %s264 = scalar_lea.vmem %s0, 24
  %v265 = vld [vmem:[%s264] sm:$0xff]
  %v266 = vld [vmem:[%s264 + $0x8] sm:$0xff]
  %v267 = vld [vmem:[%s264 + $0x18] sm:$0xff]
  %v268 = vld [vmem:[%s264 + $0x20] sm:$0xff]
  %v269 = vld [vmem:[%s264 + $0x30] sm:$0xff]
  %v270 = vld [vmem:[%s264 + $0x38] sm:$0xff]
  %v271 = vld [vmem:[%s264 + $0x48] sm:$0xff]
  %v272 = vld [vmem:[%s264 + $0x50] sm:$0xff]
  %v273 = vld [vmem:[%s264 + $0x60] sm:$0xff]
  %v274 = vld [vmem:[%s264 + $0x68] sm:$0xff]
  %v275 = vld [vmem:[%s264 + $0x78] sm:$0xff]
  %v276 = vld [vmem:[%s264 + $0x80] sm:$0xff]
  %v277 = vld [vmem:[%s264 + $0x90] sm:$0xff]
  %v278 = vld [vmem:[%s264 + $0x98] sm:$0xff]
  %v279 = vld [vmem:[%s264 + $0xa8] sm:$0xff]
  %v280 = vld [vmem:[%s264 + $0xb0] sm:$0xff]
  %v281 = vld [vmem:[%s264 + $0xc0] sm:$0xff]
  %v282 = vld [vmem:[%s264 + $0xc8] sm:$0xff]
  %v283 = vld [vmem:[%s264 + $0xd8] sm:$0xff]
  %v284 = vld [vmem:[%s264 + $0xe0] sm:$0xff]
  %v285 = vld [vmem:[%s264 + $0xf0] sm:$0xff]
  %v286 = vld [vmem:[%s264 + $0xf8] sm:$0xff]
  %v287 = vld [vmem:[%s264 + $0x108] sm:$0xff]
  %v288 = vld [vmem:[%s264 + $0x110] sm:$0xff]
  %v289 = vld [vmem:[%s264 + $0x120] sm:$0xff]
  %v290 = vld [vmem:[%s264 + $0x128] sm:$0xff]
  %v291 = vld [vmem:[%s264 + $0x138] sm:$0xff]
  %v292 = vld [vmem:[%s264 + $0x140] sm:$0xff]
  %v293 = vld [vmem:[%s264 + $0x150] sm:$0xff]
  %v294 = vld [vmem:[%s264 + $0x158] sm:$0xff]
  %v295 = vld [vmem:[%s264 + $0x168] sm:$0xff]
  %v296 = vld [vmem:[%s264 + $0x170] sm:$0xff]
  %297 = vst [vmem:[#allocation2 + $0x18] sm:$0xff] %v265
  %298 = vst [vmem:[#allocation2 + $0x60] sm:$0xff] %v266
  %299 = vst [vmem:[#allocation2 + $0xa8] sm:$0xff] %v267
  %300 = vst [vmem:[#allocation2 + $0xf0] sm:$0xff] %v268
  %301 = vst [vmem:[#allocation2 + $0x138] sm:$0xff] %v269
  %302 = vst [vmem:[#allocation2 + $0x180] sm:$0xff] %v270
  %303 = vst [vmem:[#allocation2 + $0x1c8] sm:$0xff] %v271
  %304 = vst [vmem:[#allocation2 + $0x210] sm:$0xff] %v272
  %305 = vst [vmem:[#allocation2 + $0x258] sm:$0xff] %v273
  %306 = vst [vmem:[#allocation2 + $0x2a0] sm:$0xff] %v274
  %307 = vst [vmem:[#allocation2 + $0x2e8] sm:$0xff] %v275
  %308 = vst [vmem:[#allocation2 + $0x330] sm:$0xff] %v276
  %309 = vst [vmem:[#allocation2 + $0x378] sm:$0xff] %v277
  %310 = vst [vmem:[#allocation2 + $0x3c0] sm:$0xff] %v278
  %311 = vst [vmem:[#allocation2 + $0x408] sm:$0xff] %v279
  %312 = vst [vmem:[#allocation2 + $0x450] sm:$0xff] %v280
  %313 = vst [vmem:[#allocation2 + $0x498] sm:$0xff] %v281
  %314 = vst [vmem:[#allocation2 + $0x4e0] sm:$0xff] %v282
  %315 = vst [vmem:[#allocation2 + $0x528] sm:$0xff] %v283
  %316 = vst [vmem:[#allocation2 + $0x570] sm:$0xff] %v284
  %317 = vst [vmem:[#allocation2 + $0x5b8] sm:$0xff] %v285
  %318 = vst [vmem:[#allocation2 + $0x600] sm:$0xff] %v286
  %319 = vst [vmem:[#allocation2 + $0x648] sm:$0xff] %v287
  %320 = vst [vmem:[#allocation2 + $0x690] sm:$0xff] %v288
  %321 = vst [vmem:[#allocation2 + $0x6d8] sm:$0xff] %v289
  %322 = vst [vmem:[#allocation2 + $0x720] sm:$0xff] %v290
  %323 = vst [vmem:[#allocation2 + $0x768] sm:$0xff] %v291
  %324 = vst [vmem:[#allocation2 + $0x7b0] sm:$0xff] %v292
  %325 = vst [vmem:[#allocation2 + $0x7f8] sm:$0xff] %v293
  %326 = vst [vmem:[#allocation2 + $0x840] sm:$0xff] %v294
  %327 = vst [vmem:[#allocation2 + $0x888] sm:$0xff] %v295
  %328 = vst [vmem:[#allocation2 + $0x8d0] sm:$0xff] %v296
  %v329 = vld [vmem:[%s264 + $0x1] sm:$0xff]
  %v330 = vld [vmem:[%s264 + $0x9] sm:$0xff]
  %v331 = vld [vmem:[%s264 + $0x19] sm:$0xff]
  %v332 = vld [vmem:[%s264 + $0x21] sm:$0xff]
  %v333 = vld [vmem:[%s264 + $0x31] sm:$0xff]
  %v334 = vld [vmem:[%s264 + $0x39] sm:$0xff]
  %v335 = vld [vmem:[%s264 + $0x49] sm:$0xff]
  %v336 = vld [vmem:[%s264 + $0x51] sm:$0xff]
  %v337 = vld [vmem:[%s264 + $0x61] sm:$0xff]
  %v338 = vld [vmem:[%s264 + $0x69] sm:$0xff]
  %v339 = vld [vmem:[%s264 + $0x79] sm:$0xff]
  %v340 = vld [vmem:[%s264 + $0x81] sm:$0xff]
  %v341 = vld [vmem:[%s264 + $0x91] sm:$0xff]
  %v342 = vld [vmem:[%s264 + $0x99] sm:$0xff]
  %v343 = vld [vmem:[%s264 + $0xa9] sm:$0xff]
  %v344 = vld [vmem:[%s264 + $0xb1] sm:$0xff]
  %v345 = vld [vmem:[%s264 + $0xc1] sm:$0xff]
  %v346 = vld [vmem:[%s264 + $0xc9] sm:$0xff]
  %v347 = vld [vmem:[%s264 + $0xd9] sm:$0xff]
  %v348 = vld [vmem:[%s264 + $0xe1] sm:$0xff]
  %v349 = vld [vmem:[%s264 + $0xf1] sm:$0xff]
  %v350 = vld [vmem:[%s264 + $0xf9] sm:$0xff]
  %v351 = vld [vmem:[%s264 + $0x109] sm:$0xff]
  %v352 = vld [vmem:[%s264 + $0x111] sm:$0xff]
  %v353 = vld [vmem:[%s264 + $0x121] sm:$0xff]
  %v354 = vld [vmem:[%s264 + $0x129] sm:$0xff]
  %v355 = vld [vmem:[%s264 + $0x139] sm:$0xff]
  %v356 = vld [vmem:[%s264 + $0x141] sm:$0xff]
  %v357 = vld [vmem:[%s264 + $0x151] sm:$0xff]
  %v358 = vld [vmem:[%s264 + $0x159] sm:$0xff]
  %v359 = vld [vmem:[%s264 + $0x169] sm:$0xff]
  %v360 = vld [vmem:[%s264 + $0x171] sm:$0xff]
  %361 = vst [vmem:[#allocation2 + $0x20] sm:$0xff] %v329
  %362 = vst [vmem:[#allocation2 + $0x68] sm:$0xff] %v330
  %363 = vst [vmem:[#allocation2 + $0xb0] sm:$0xff] %v331
  %364 = vst [vmem:[#allocation2 + $0xf8] sm:$0xff] %v332
  %365 = vst [vmem:[#allocation2 + $0x140] sm:$0xff] %v333
  %366 = vst [vmem:[#allocation2 + $0x188] sm:$0xff] %v334
  %367 = vst [vmem:[#allocation2 + $0x1d0] sm:$0xff] %v335
  %368 = vst [vmem:[#allocation2 + $0x218] sm:$0xff] %v336
  %369 = vst [vmem:[#allocation2 + $0x260] sm:$0xff] %v337
  %370 = vst [vmem:[#allocation2 + $0x2a8] sm:$0xff] %v338
  %371 = vst [vmem:[#allocation2 + $0x2f0] sm:$0xff] %v339
  %372 = vst [vmem:[#allocation2 + $0x338] sm:$0xff] %v340
  %373 = vst [vmem:[#allocation2 + $0x380] sm:$0xff] %v341
  %374 = vst [vmem:[#allocation2 + $0x3c8] sm:$0xff] %v342
  %375 = vst [vmem:[#allocation2 + $0x410] sm:$0xff] %v343
  %376 = vst [vmem:[#allocation2 + $0x458] sm:$0xff] %v344
  %377 = vst [vmem:[#allocation2 + $0x4a0] sm:$0xff] %v345
  %378 = vst [vmem:[#allocation2 + $0x4e8] sm:$0xff] %v346
  %379 = vst [vmem:[#allocation2 + $0x530] sm:$0xff] %v347
  %380 = vst [vmem:[#allocation2 + $0x578] sm:$0xff] %v348
  %381 = vst [vmem:[#allocation2 + $0x5c0] sm:$0xff] %v349
  %382 = vst [vmem:[#allocation2 + $0x608] sm:$0xff] %v350
  %383 = vst [vmem:[#allocation2 + $0x650] sm:$0xff] %v351
  %384 = vst [vmem:[#allocation2 + $0x698] sm:$0xff] %v352
  %385 = vst [vmem:[#allocation2 + $0x6e0] sm:$0xff] %v353
  %386 = vst [vmem:[#allocation2 + $0x728] sm:$0xff] %v354
  %387 = vst [vmem:[#allocation2 + $0x770] sm:$0xff] %v355
  %388 = vst [vmem:[#allocation2 + $0x7b8] sm:$0xff] %v356
  %389 = vst [vmem:[#allocation2 + $0x800] sm:$0xff] %v357
  %390 = vst [vmem:[#allocation2 + $0x848] sm:$0xff] %v358
  %391 = vst [vmem:[#allocation2 + $0x890] sm:$0xff] %v359
  %392 = vst [vmem:[#allocation2 + $0x8d8] sm:$0xff] %v360
  %v393 = vld [vmem:[%s264 + $0x2] sm:$0xff]
  %v394 = vld [vmem:[%s264 + $0xa] sm:$0xff]
  %v395 = vld [vmem:[%s264 + $0x1a] sm:$0xff]
  %v396 = vld [vmem:[%s264 + $0x22] sm:$0xff]
  %v397 = vld [vmem:[%s264 + $0x32] sm:$0xff]
  %v398 = vld [vmem:[%s264 + $0x3a] sm:$0xff]
  %v399 = vld [vmem:[%s264 + $0x4a] sm:$0xff]
  %v400 = vld [vmem:[%s264 + $0x52] sm:$0xff]
  %v401 = vld [vmem:[%s264 + $0x62] sm:$0xff]
  %v402 = vld [vmem:[%s264 + $0x6a] sm:$0xff]
  %v403 = vld [vmem:[%s264 + $0x7a] sm:$0xff]
  %v404 = vld [vmem:[%s264 + $0x82] sm:$0xff]
  %v405 = vld [vmem:[%s264 + $0x92] sm:$0xff]
  %v406 = vld [vmem:[%s264 + $0x9a] sm:$0xff]
  %v407 = vld [vmem:[%s264 + $0xaa] sm:$0xff]
  %v408 = vld [vmem:[%s264 + $0xb2] sm:$0xff]
  %v409 = vld [vmem:[%s264 + $0xc2] sm:$0xff]
  %v410 = vld [vmem:[%s264 + $0xca] sm:$0xff]
  %v411 = vld [vmem:[%s264 + $0xda] sm:$0xff]
  %v412 = vld [vmem:[%s264 + $0xe2] sm:$0xff]
  %v413 = vld [vmem:[%s264 + $0xf2] sm:$0xff]
  %v414 = vld [vmem:[%s264 + $0xfa] sm:$0xff]
  %v415 = vld [vmem:[%s264 + $0x10a] sm:$0xff]
  %v416 = vld [vmem:[%s264 + $0x112] sm:$0xff]
  %v417 = vld [vmem:[%s264 + $0x122] sm:$0xff]
  %v418 = vld [vmem:[%s264 + $0x12a] sm:$0xff]
  %v419 = vld [vmem:[%s264 + $0x13a] sm:$0xff]
  %v420 = vld [vmem:[%s264 + $0x142] sm:$0xff]
  %v421 = vld [vmem:[%s264 + $0x152] sm:$0xff]
  %v422 = vld [vmem:[%s264 + $0x15a] sm:$0xff]
  %v423 = vld [vmem:[%s264 + $0x16a] sm:$0xff]
  %v424 = vld [vmem:[%s264 + $0x172] sm:$0xff]
  %425 = vst [vmem:[#allocation2 + $0x28] sm:$0xff] %v393
  %426 = vst [vmem:[#allocation2 + $0x70] sm:$0xff] %v394
  %427 = vst [vmem:[#allocation2 + $0xb8] sm:$0xff] %v395
  %428 = vst [vmem:[#allocation2 + $0x100] sm:$0xff] %v396
  %429 = vst [vmem:[#allocation2 + $0x148] sm:$0xff] %v397
  %430 = vst [vmem:[#allocation2 + $0x190] sm:$0xff] %v398
  %431 = vst [vmem:[#allocation2 + $0x1d8] sm:$0xff] %v399
  %432 = vst [vmem:[#allocation2 + $0x220] sm:$0xff] %v400
  %433 = vst [vmem:[#allocation2 + $0x268] sm:$0xff] %v401
  %434 = vst [vmem:[#allocation2 + $0x2b0] sm:$0xff] %v402
  %435 = vst [vmem:[#allocation2 + $0x2f8] sm:$0xff] %v403
  %436 = vst [vmem:[#allocation2 + $0x340] sm:$0xff] %v404
  %437 = vst [vmem:[#allocation2 + $0x388] sm:$0xff] %v405
  %438 = vst [vmem:[#allocation2 + $0x3d0] sm:$0xff] %v406
  %439 = vst [vmem:[#allocation2 + $0x418] sm:$0xff] %v407
  %440 = vst [vmem:[#allocation2 + $0x460] sm:$0xff] %v408
  %441 = vst [vmem:[#allocation2 + $0x4a8] sm:$0xff] %v409
  %442 = vst [vmem:[#allocation2 + $0x4f0] sm:$0xff] %v410
  %443 = vst [vmem:[#allocation2 + $0x538] sm:$0xff] %v411
  %444 = vst [vmem:[#allocation2 + $0x580] sm:$0xff] %v412
  %445 = vst [vmem:[#allocation2 + $0x5c8] sm:$0xff] %v413
  %446 = vst [vmem:[#allocation2 + $0x610] sm:$0xff] %v414
  %447 = vst [vmem:[#allocation2 + $0x658] sm:$0xff] %v415
  %448 = vst [vmem:[#allocation2 + $0x6a0] sm:$0xff] %v416
  %449 = vst [vmem:[#allocation2 + $0x6e8] sm:$0xff] %v417
  %450 = vst [vmem:[#allocation2 + $0x730] sm:$0xff] %v418
  %451 = vst [vmem:[#allocation2 + $0x778] sm:$0xff] %v419
  %452 = vst [vmem:[#allocation2 + $0x7c0] sm:$0xff] %v420
  %453 = vst [vmem:[#allocation2 + $0x808] sm:$0xff] %v421
  %454 = vst [vmem:[#allocation2 + $0x850] sm:$0xff] %v422
  %455 = vst [vmem:[#allocation2 + $0x898] sm:$0xff] %v423
  %456 = vst [vmem:[#allocation2 + $0x8e0] sm:$0xff] %v424
  %s457 = scalar_lea.vmem %s0, 48
  %v458 = vld [vmem:[%s457] sm:$0xff]
  %v459 = vld [vmem:[%s457 + $0x8] sm:$0xff]
  %v460 = vld [vmem:[%s457 + $0x18] sm:$0xff]
  %v461 = vld [vmem:[%s457 + $0x20] sm:$0xff]
  %v462 = vld [vmem:[%s457 + $0x30] sm:$0xff]
  %v463 = vld [vmem:[%s457 + $0x38] sm:$0xff]
  %v464 = vld [vmem:[%s457 + $0x48] sm:$0xff]
  %v465 = vld [vmem:[%s457 + $0x50] sm:$0xff]
  %v466 = vld [vmem:[%s457 + $0x60] sm:$0xff]
  %v467 = vld [vmem:[%s457 + $0x68] sm:$0xff]
  %v468 = vld [vmem:[%s457 + $0x78] sm:$0xff]
  %v469 = vld [vmem:[%s457 + $0x80] sm:$0xff]
  %v470 = vld [vmem:[%s457 + $0x90] sm:$0xff]
  %v471 = vld [vmem:[%s457 + $0x98] sm:$0xff]
  %v472 = vld [vmem:[%s457 + $0xa8] sm:$0xff]
  %v473 = vld [vmem:[%s457 + $0xb0] sm:$0xff]
  %v474 = vld [vmem:[%s457 + $0xc0] sm:$0xff]
  %v475 = vld [vmem:[%s457 + $0xc8] sm:$0xff]
  %v476 = vld [vmem:[%s457 + $0xd8] sm:$0xff]
  %v477 = vld [vmem:[%s457 + $0xe0] sm:$0xff]
  %v478 = vld [vmem:[%s457 + $0xf0] sm:$0xff]
  %v479 = vld [vmem:[%s457 + $0xf8] sm:$0xff]
  %v480 = vld [vmem:[%s457 + $0x108] sm:$0xff]
  %v481 = vld [vmem:[%s457 + $0x110] sm:$0xff]
  %v482 = vld [vmem:[%s457 + $0x120] sm:$0xff]
  %v483 = vld [vmem:[%s457 + $0x128] sm:$0xff]
  %v484 = vld [vmem:[%s457 + $0x138] sm:$0xff]
  %v485 = vld [vmem:[%s457 + $0x140] sm:$0xff]
  %v486 = vld [vmem:[%s457 + $0x150] sm:$0xff]
  %v487 = vld [vmem:[%s457 + $0x158] sm:$0xff]
  %v488 = vld [vmem:[%s457 + $0x168] sm:$0xff]
  %v489 = vld [vmem:[%s457 + $0x170] sm:$0xff]
  %490 = vst [vmem:[#allocation2 + $0x30] sm:$0xff] %v458
  %491 = vst [vmem:[#allocation2 + $0x78] sm:$0xff] %v459
  %492 = vst [vmem:[#allocation2 + $0xc0] sm:$0xff] %v460
  %493 = vst [vmem:[#allocation2 + $0x108] sm:$0xff] %v461
  %494 = vst [vmem:[#allocation2 + $0x150] sm:$0xff] %v462
  %495 = vst [vmem:[#allocation2 + $0x198] sm:$0xff] %v463
  %496 = vst [vmem:[#allocation2 + $0x1e0] sm:$0xff] %v464
  %497 = vst [vmem:[#allocation2 + $0x228] sm:$0xff] %v465
  %498 = vst [vmem:[#allocation2 + $0x270] sm:$0xff] %v466
  %499 = vst [vmem:[#allocation2 + $0x2b8] sm:$0xff] %v467
  %500 = vst [vmem:[#allocation2 + $0x300] sm:$0xff] %v468
  %501 = vst [vmem:[#allocation2 + $0x348] sm:$0xff] %v469
  %502 = vst [vmem:[#allocation2 + $0x390] sm:$0xff] %v470
  %503 = vst [vmem:[#allocation2 + $0x3d8] sm:$0xff] %v471
  %504 = vst [vmem:[#allocation2 + $0x420] sm:$0xff] %v472
  %505 = vst [vmem:[#allocation2 + $0x468] sm:$0xff] %v473
  %506 = vst [vmem:[#allocation2 + $0x4b0] sm:$0xff] %v474
  %507 = vst [vmem:[#allocation2 + $0x4f8] sm:$0xff] %v475
  %508 = vst [vmem:[#allocation2 + $0x540] sm:$0xff] %v476
  %509 = vst [vmem:[#allocation2 + $0x588] sm:$0xff] %v477
  %510 = vst [vmem:[#allocation2 + $0x5d0] sm:$0xff] %v478
  %511 = vst [vmem:[#allocation2 + $0x618] sm:$0xff] %v479
  %512 = vst [vmem:[#allocation2 + $0x660] sm:$0xff] %v480
  %513 = vst [vmem:[#allocation2 + $0x6a8] sm:$0xff] %v481
  %514 = vst [vmem:[#allocation2 + $0x6f0] sm:$0xff] %v482
  %515 = vst [vmem:[#allocation2 + $0x738] sm:$0xff] %v483
  %516 = vst [vmem:[#allocation2 + $0x780] sm:$0xff] %v484
  %517 = vst [vmem:[#allocation2 + $0x7c8] sm:$0xff] %v485
  %518 = vst [vmem:[#allocation2 + $0x810] sm:$0xff] %v486
  %519 = vst [vmem:[#allocation2 + $0x858] sm:$0xff] %v487
  %520 = vst [vmem:[#allocation2 + $0x8a0] sm:$0xff] %v488
  %521 = vst [vmem:[#allocation2 + $0x8e8] sm:$0xff] %v489
  %v522 = vld [vmem:[%s457 + $0x1] sm:$0xff]
  %v523 = vld [vmem:[%s457 + $0x9] sm:$0xff]
  %v524 = vld [vmem:[%s457 + $0x19] sm:$0xff]
  %v525 = vld [vmem:[%s457 + $0x21] sm:$0xff]
  %v526 = vld [vmem:[%s457 + $0x31] sm:$0xff]
  %v527 = vld [vmem:[%s457 + $0x39] sm:$0xff]
  %v528 = vld [vmem:[%s457 + $0x49] sm:$0xff]
  %v529 = vld [vmem:[%s457 + $0x51] sm:$0xff]
  %v530 = vld [vmem:[%s457 + $0x61] sm:$0xff]
  %v531 = vld [vmem:[%s457 + $0x69] sm:$0xff]
  %v532 = vld [vmem:[%s457 + $0x79] sm:$0xff]
  %v533 = vld [vmem:[%s457 + $0x81] sm:$0xff]
  %v534 = vld [vmem:[%s457 + $0x91] sm:$0xff]
  %v535 = vld [vmem:[%s457 + $0x99] sm:$0xff]
  %v536 = vld [vmem:[%s457 + $0xa9] sm:$0xff]
  %v537 = vld [vmem:[%s457 + $0xb1] sm:$0xff]
  %v538 = vld [vmem:[%s457 + $0xc1] sm:$0xff]
  %v539 = vld [vmem:[%s457 + $0xc9] sm:$0xff]
  %v540 = vld [vmem:[%s457 + $0xd9] sm:$0xff]
  %v541 = vld [vmem:[%s457 + $0xe1] sm:$0xff]
  %v542 = vld [vmem:[%s457 + $0xf1] sm:$0xff]
  %v543 = vld [vmem:[%s457 + $0xf9] sm:$0xff]
  %v544 = vld [vmem:[%s457 + $0x109] sm:$0xff]
  %v545 = vld [vmem:[%s457 + $0x111] sm:$0xff]
  %v546 = vld [vmem:[%s457 + $0x121] sm:$0xff]
  %v547 = vld [vmem:[%s457 + $0x129] sm:$0xff]
  %v548 = vld [vmem:[%s457 + $0x139] sm:$0xff]
  %v549 = vld [vmem:[%s457 + $0x141] sm:$0xff]
  %v550 = vld [vmem:[%s457 + $0x151] sm:$0xff]
  %v551 = vld [vmem:[%s457 + $0x159] sm:$0xff]
  %v552 = vld [vmem:[%s457 + $0x169] sm:$0xff]
  %v553 = vld [vmem:[%s457 + $0x171] sm:$0xff]
  %554 = vst [vmem:[#allocation2 + $0x38] sm:$0xff] %v522
  %555 = vst [vmem:[#allocation2 + $0x80] sm:$0xff] %v523
  %556 = vst [vmem:[#allocation2 + $0xc8] sm:$0xff] %v524
  %557 = vst [vmem:[#allocation2 + $0x110] sm:$0xff] %v525
  %558 = vst [vmem:[#allocation2 + $0x158] sm:$0xff] %v526
  %559 = vst [vmem:[#allocation2 + $0x1a0] sm:$0xff] %v527
  %560 = vst [vmem:[#allocation2 + $0x1e8] sm:$0xff] %v528
  %561 = vst [vmem:[#allocation2 + $0x230] sm:$0xff] %v529
  %562 = vst [vmem:[#allocation2 + $0x278] sm:$0xff] %v530
  %563 = vst [vmem:[#allocation2 + $0x2c0] sm:$0xff] %v531
  %564 = vst [vmem:[#allocation2 + $0x308] sm:$0xff] %v532
  %565 = vst [vmem:[#allocation2 + $0x350] sm:$0xff] %v533
  %566 = vst [vmem:[#allocation2 + $0x398] sm:$0xff] %v534
  %567 = vst [vmem:[#allocation2 + $0x3e0] sm:$0xff] %v535
  %568 = vst [vmem:[#allocation2 + $0x428] sm:$0xff] %v536
  %569 = vst [vmem:[#allocation2 + $0x470] sm:$0xff] %v537
  %570 = vst [vmem:[#allocation2 + $0x4b8] sm:$0xff] %v538
  %571 = vst [vmem:[#allocation2 + $0x500] sm:$0xff] %v539
  %572 = vst [vmem:[#allocation2 + $0x548] sm:$0xff] %v540
  %573 = vst [vmem:[#allocation2 + $0x590] sm:$0xff] %v541
  %574 = vst [vmem:[#allocation2 + $0x5d8] sm:$0xff] %v542
  %575 = vst [vmem:[#allocation2 + $0x620] sm:$0xff] %v543
  %576 = vst [vmem:[#allocation2 + $0x668] sm:$0xff] %v544
  %577 = vst [vmem:[#allocation2 + $0x6b0] sm:$0xff] %v545
  %578 = vst [vmem:[#allocation2 + $0x6f8] sm:$0xff] %v546
  %579 = vst [vmem:[#allocation2 + $0x740] sm:$0xff] %v547
  %580 = vst [vmem:[#allocation2 + $0x788] sm:$0xff] %v548
  %581 = vst [vmem:[#allocation2 + $0x7d0] sm:$0xff] %v549
  %582 = vst [vmem:[#allocation2 + $0x818] sm:$0xff] %v550
  %583 = vst [vmem:[#allocation2 + $0x860] sm:$0xff] %v551
  %584 = vst [vmem:[#allocation2 + $0x8a8] sm:$0xff] %v552
  %585 = vst [vmem:[#allocation2 + $0x8f0] sm:$0xff] %v553
  %v586 = vld [vmem:[%s457 + $0x2] sm:$0xff]
  %v587 = vld [vmem:[%s457 + $0xa] sm:$0xff]
  %v588 = vld [vmem:[%s457 + $0x1a] sm:$0xff]
  %v589 = vld [vmem:[%s457 + $0x22] sm:$0xff]
  %v590 = vld [vmem:[%s457 + $0x32] sm:$0xff]
  %v591 = vld [vmem:[%s457 + $0x3a] sm:$0xff]
  %v592 = vld [vmem:[%s457 + $0x4a] sm:$0xff]
  %v593 = vld [vmem:[%s457 + $0x52] sm:$0xff]
  %v594 = vld [vmem:[%s457 + $0x62] sm:$0xff]
  %v595 = vld [vmem:[%s457 + $0x6a] sm:$0xff]
  %v596 = vld [vmem:[%s457 + $0x7a] sm:$0xff]
  %v597 = vld [vmem:[%s457 + $0x82] sm:$0xff]
  %v598 = vld [vmem:[%s457 + $0x92] sm:$0xff]
  %v599 = vld [vmem:[%s457 + $0x9a] sm:$0xff]
  %v600 = vld [vmem:[%s457 + $0xaa] sm:$0xff]
  %v601 = vld [vmem:[%s457 + $0xb2] sm:$0xff]
  %v602 = vld [vmem:[%s457 + $0xc2] sm:$0xff]
  %v603 = vld [vmem:[%s457 + $0xca] sm:$0xff]
  %v604 = vld [vmem:[%s457 + $0xda] sm:$0xff]
  %v605 = vld [vmem:[%s457 + $0xe2] sm:$0xff]
  %v606 = vld [vmem:[%s457 + $0xf2] sm:$0xff]
  %v607 = vld [vmem:[%s457 + $0xfa] sm:$0xff]
  %v608 = vld [vmem:[%s457 + $0x10a] sm:$0xff]
  %v609 = vld [vmem:[%s457 + $0x112] sm:$0xff]
  %v610 = vld [vmem:[%s457 + $0x122] sm:$0xff]
  %v611 = vld [vmem:[%s457 + $0x12a] sm:$0xff]
  %v612 = vld [vmem:[%s457 + $0x13a] sm:$0xff]
  %v613 = vld [vmem:[%s457 + $0x142] sm:$0xff]
  %v614 = vld [vmem:[%s457 + $0x152] sm:$0xff]
  %v615 = vld [vmem:[%s457 + $0x15a] sm:$0xff]
  %v616 = vld [vmem:[%s457 + $0x16a] sm:$0xff]
  %v617 = vld [vmem:[%s457 + $0x172] sm:$0xff]
  %618 = vst [vmem:[#allocation2 + $0x40] sm:$0xff] %v586
  %619 = vst [vmem:[#allocation2 + $0x88] sm:$0xff] %v587
  %620 = vst [vmem:[#allocation2 + $0xd0] sm:$0xff] %v588
  %621 = vst [vmem:[#allocation2 + $0x118] sm:$0xff] %v589
  %622 = vst [vmem:[#allocation2 + $0x160] sm:$0xff] %v590
  %623 = vst [vmem:[#allocation2 + $0x1a8] sm:$0xff] %v591
  %624 = vst [vmem:[#allocation2 + $0x1f0] sm:$0xff] %v592
  %625 = vst [vmem:[#allocation2 + $0x238] sm:$0xff] %v593
  %626 = vst [vmem:[#allocation2 + $0x280] sm:$0xff] %v594
  %627 = vst [vmem:[#allocation2 + $0x2c8] sm:$0xff] %v595
  %628 = vst [vmem:[#allocation2 + $0x310] sm:$0xff] %v596
  %629 = vst [vmem:[#allocation2 + $0x358] sm:$0xff] %v597
  %630 = vst [vmem:[#allocation2 + $0x3a0] sm:$0xff] %v598
  %631 = vst [vmem:[#allocation2 + $0x3e8] sm:$0xff] %v599
  %632 = vst [vmem:[#allocation2 + $0x430] sm:$0xff] %v600
  %633 = vst [vmem:[#allocation2 + $0x478] sm:$0xff] %v601
  %634 = vst [vmem:[#allocation2 + $0x4c0] sm:$0xff] %v602
  %635 = vst [vmem:[#allocation2 + $0x508] sm:$0xff] %v603
  %636 = vst [vmem:[#allocation2 + $0x550] sm:$0xff] %v604
  %637 = vst [vmem:[#allocation2 + $0x598] sm:$0xff] %v605
  %638 = vst [vmem:[#allocation2 + $0x5e0] sm:$0xff] %v606
  %639 = vst [vmem:[#allocation2 + $0x628] sm:$0xff] %v607
  %640 = vst [vmem:[#allocation2 + $0x670] sm:$0xff] %v608
  %641 = vst [vmem:[#allocation2 + $0x6b8] sm:$0xff] %v609
  %642 = vst [vmem:[#allocation2 + $0x700] sm:$0xff] %v610
  %643 = vst [vmem:[#allocation2 + $0x748] sm:$0xff] %v611
  %644 = vst [vmem:[#allocation2 + $0x790] sm:$0xff] %v612
  %645 = vst [vmem:[#allocation2 + $0x7d8] sm:$0xff] %v613
  %646 = vst [vmem:[#allocation2 + $0x820] sm:$0xff] %v614
  %647 = vst [vmem:[#allocation2 + $0x868] sm:$0xff] %v615
  %648 = vst [vmem:[#allocation2 + $0x8b0] sm:$0xff] %v616
  %649 = vst [vmem:[#allocation2 + $0x8f8] sm:$0xff] %v617
  %v650 = vld [vmem:[#allocation2] sm:$0xff]
  %v651 = vld [vmem:[#allocation2 + $0x8] sm:$0xff]
  %v652 = vld [vmem:[#allocation2 + $0x10] sm:$0xff]
  %v653 = vld [vmem:[#allocation2 + $0x18] sm:$0xff]
  %v654 = vld [vmem:[#allocation2 + $0x20] sm:$0xff]
  %v655 = vld [vmem:[#allocation2 + $0x28] sm:$0xff]
  %v656 = vld [vmem:[#allocation2 + $0x30] sm:$0xff]
  %v657 = vld [vmem:[#allocation2 + $0x38] sm:$0xff]
  %v658 = vld [vmem:[#allocation2 + $0x40] sm:$0xff]
  %v659 = vld [vmem:[#allocation2 + $0x48] sm:$0xff]
  %v660 = vld [vmem:[#allocation2 + $0x50] sm:$0xff]
  %v661 = vld [vmem:[#allocation2 + $0x58] sm:$0xff]
  %v662 = vld [vmem:[#allocation2 + $0x60] sm:$0xff]
  %v663 = vld [vmem:[#allocation2 + $0x68] sm:$0xff]
  %v664 = vld [vmem:[#allocation2 + $0x70] sm:$0xff]
  %v665 = vld [vmem:[#allocation2 + $0x78] sm:$0xff]
  %v666 = vld [vmem:[#allocation2 + $0x80] sm:$0xff]
  %v667 = vld [vmem:[#allocation2 + $0x88] sm:$0xff]
  %v668 = vld [vmem:[#allocation2 + $0x90] sm:$0xff]
  %v669 = vld [vmem:[#allocation2 + $0x98] sm:$0xff]
  %v670 = vld [vmem:[#allocation2 + $0xa0] sm:$0xff]
  %v671 = vld [vmem:[#allocation2 + $0xa8] sm:$0xff]
  %v672 = vld [vmem:[#allocation2 + $0xb0] sm:$0xff]
  %v673 = vld [vmem:[#allocation2 + $0xb8] sm:$0xff]
  %v674 = vld [vmem:[#allocation2 + $0xc0] sm:$0xff]
  %v675 = vld [vmem:[#allocation2 + $0xc8] sm:$0xff]
  %v676 = vld [vmem:[#allocation2 + $0xd0] sm:$0xff]
  %v677 = vld [vmem:[#allocation2 + $0xd8] sm:$0xff]
  %v678 = vld [vmem:[#allocation2 + $0xe0] sm:$0xff]
  %v679 = vld [vmem:[#allocation2 + $0xe8] sm:$0xff]
  %v680 = vld [vmem:[#allocation2 + $0xf0] sm:$0xff]
  %v681 = vld [vmem:[#allocation2 + $0xf8] sm:$0xff]
  %v682 = vld [vmem:[#allocation2 + $0x100] sm:$0xff]
  %v683 = vld [vmem:[#allocation2 + $0x108] sm:$0xff]
  %v684 = vld [vmem:[#allocation2 + $0x110] sm:$0xff]
  %v685 = vld [vmem:[#allocation2 + $0x118] sm:$0xff]
  %v686 = vld [vmem:[#allocation2 + $0x120] sm:$0xff]
  %v687 = vld [vmem:[#allocation2 + $0x128] sm:$0xff]
  %v688 = vld [vmem:[#allocation2 + $0x130] sm:$0xff]
  %v689 = vld [vmem:[#allocation2 + $0x138] sm:$0xff]
  %v690 = vld [vmem:[#allocation2 + $0x140] sm:$0xff]
  %v691 = vld [vmem:[#allocation2 + $0x148] sm:$0xff]
  %v692 = vld [vmem:[#allocation2 + $0x150] sm:$0xff]
  %v693 = vld [vmem:[#allocation2 + $0x158] sm:$0xff]
  %v694 = vld [vmem:[#allocation2 + $0x160] sm:$0xff]
  %v695 = vld [vmem:[#allocation2 + $0x168] sm:$0xff]
  %v696 = vld [vmem:[#allocation2 + $0x170] sm:$0xff]
  %v697 = vld [vmem:[#allocation2 + $0x178] sm:$0xff]
  %v698 = vld [vmem:[#allocation2 + $0x180] sm:$0xff]
  %v699 = vld [vmem:[#allocation2 + $0x188] sm:$0xff]
  %v700 = vld [vmem:[#allocation2 + $0x190] sm:$0xff]
  %v701 = vld [vmem:[#allocation2 + $0x198] sm:$0xff]
  %v702 = vld [vmem:[#allocation2 + $0x1a0] sm:$0xff]
  %v703 = vld [vmem:[#allocation2 + $0x1a8] sm:$0xff]
  %v704 = vld [vmem:[#allocation2 + $0x1b0] sm:$0xff]
  %v705 = vld [vmem:[#allocation2 + $0x1b8] sm:$0xff]
  %v706 = vld [vmem:[#allocation2 + $0x1c0] sm:$0xff]
  %v707 = vld [vmem:[#allocation2 + $0x1c8] sm:$0xff]
  %v708 = vld [vmem:[#allocation2 + $0x1d0] sm:$0xff]
  %v709 = vld [vmem:[#allocation2 + $0x1d8] sm:$0xff]
  %v710 = vld [vmem:[#allocation2 + $0x1e0] sm:$0xff]
  %v711 = vld [vmem:[#allocation2 + $0x1e8] sm:$0xff]
  %v712 = vld [vmem:[#allocation2 + $0x1f0] sm:$0xff]
  %v713 = vld [vmem:[#allocation2 + $0x1f8] sm:$0xff]
  %v714 = vld [vmem:[#allocation2 + $0x200] sm:$0xff]
  %v715 = vld [vmem:[#allocation2 + $0x208] sm:$0xff]
  %v716 = vld [vmem:[#allocation2 + $0x210] sm:$0xff]
  %v717 = vld [vmem:[#allocation2 + $0x218] sm:$0xff]
  %v718 = vld [vmem:[#allocation2 + $0x220] sm:$0xff]
  %v719 = vld [vmem:[#allocation2 + $0x228] sm:$0xff]
  %v720 = vld [vmem:[#allocation2 + $0x230] sm:$0xff]
  %v721 = vld [vmem:[#allocation2 + $0x238] sm:$0xff]
  %v722 = vld [vmem:[#allocation2 + $0x240] sm:$0xff]
  %v723 = vld [vmem:[#allocation2 + $0x248] sm:$0xff]
  %v724 = vld [vmem:[#allocation2 + $0x250] sm:$0xff]
  %v725 = vld [vmem:[#allocation2 + $0x258] sm:$0xff]
  %v726 = vld [vmem:[#allocation2 + $0x260] sm:$0xff]
  %v727 = vld [vmem:[#allocation2 + $0x268] sm:$0xff]
  %v728 = vld [vmem:[#allocation2 + $0x270] sm:$0xff]
  %v729 = vld [vmem:[#allocation2 + $0x278] sm:$0xff]
  %v730 = vld [vmem:[#allocation2 + $0x280] sm:$0xff]
  %v731 = vld [vmem:[#allocation2 + $0x288] sm:$0xff]
  %v732 = vld [vmem:[#allocation2 + $0x290] sm:$0xff]
  %v733 = vld [vmem:[#allocation2 + $0x298] sm:$0xff]
  %v734 = vld [vmem:[#allocation2 + $0x2a0] sm:$0xff]
  %v735 = vld [vmem:[#allocation2 + $0x2a8] sm:$0xff]
  %v736 = vld [vmem:[#allocation2 + $0x2b0] sm:$0xff]
  %v737 = vld [vmem:[#allocation2 + $0x2b8] sm:$0xff]
  %v738 = vld [vmem:[#allocation2 + $0x2c0] sm:$0xff]
  %v739 = vld [vmem:[#allocation2 + $0x2c8] sm:$0xff]
  %v740 = vld [vmem:[#allocation2 + $0x2d0] sm:$0xff]
  %v741 = vld [vmem:[#allocation2 + $0x2d8] sm:$0xff]
  %v742 = vld [vmem:[#allocation2 + $0x2e0] sm:$0xff]
  %v743 = vld [vmem:[#allocation2 + $0x2e8] sm:$0xff]
  %v744 = vld [vmem:[#allocation2 + $0x2f0] sm:$0xff]
  %v745 = vld [vmem:[#allocation2 + $0x2f8] sm:$0xff]
  %v746 = vld [vmem:[#allocation2 + $0x300] sm:$0xff]
  %v747 = vld [vmem:[#allocation2 + $0x308] sm:$0xff]
  %v748 = vld [vmem:[#allocation2 + $0x310] sm:$0xff]
  %v749 = vld [vmem:[#allocation2 + $0x318] sm:$0xff]
  %v750 = vld [vmem:[#allocation2 + $0x320] sm:$0xff]
  %v751 = vld [vmem:[#allocation2 + $0x328] sm:$0xff]
  %v752 = vld [vmem:[#allocation2 + $0x330] sm:$0xff]
  %v753 = vld [vmem:[#allocation2 + $0x338] sm:$0xff]
  %v754 = vld [vmem:[#allocation2 + $0x340] sm:$0xff]
  %v755 = vld [vmem:[#allocation2 + $0x348] sm:$0xff]
  %v756 = vld [vmem:[#allocation2 + $0x350] sm:$0xff]
  %v757 = vld [vmem:[#allocation2 + $0x358] sm:$0xff]
  %v758 = vld [vmem:[#allocation2 + $0x360] sm:$0xff]
  %v759 = vld [vmem:[#allocation2 + $0x368] sm:$0xff]
  %v760 = vld [vmem:[#allocation2 + $0x370] sm:$0xff]
  %v761 = vld [vmem:[#allocation2 + $0x378] sm:$0xff]
  %v762 = vld [vmem:[#allocation2 + $0x380] sm:$0xff]
  %v763 = vld [vmem:[#allocation2 + $0x388] sm:$0xff]
  %v764 = vld [vmem:[#allocation2 + $0x390] sm:$0xff]
  %v765 = vld [vmem:[#allocation2 + $0x398] sm:$0xff]
  %v766 = vld [vmem:[#allocation2 + $0x3a0] sm:$0xff]
  %v767 = vld [vmem:[#allocation2 + $0x3a8] sm:$0xff]
  %v768 = vld [vmem:[#allocation2 + $0x3b0] sm:$0xff]
  %v769 = vld [vmem:[#allocation2 + $0x3b8] sm:$0xff]
  %v770 = vld [vmem:[#allocation2 + $0x3c0] sm:$0xff]
  %v771 = vld [vmem:[#allocation2 + $0x3c8] sm:$0xff]
  %v772 = vld [vmem:[#allocation2 + $0x3d0] sm:$0xff]
  %v773 = vld [vmem:[#allocation2 + $0x3d8] sm:$0xff]
  %v774 = vld [vmem:[#allocation2 + $0x3e0] sm:$0xff]
  %v775 = vld [vmem:[#allocation2 + $0x3e8] sm:$0xff]
  %v776 = vld [vmem:[#allocation2 + $0x3f0] sm:$0xff]
  %v777 = vld [vmem:[#allocation2 + $0x3f8] sm:$0xff]
  %v778 = vld [vmem:[#allocation2 + $0x400] sm:$0xff]
  %v779 = vld [vmem:[#allocation2 + $0x408] sm:$0xff]
  %v780 = vld [vmem:[#allocation2 + $0x410] sm:$0xff]
  %v781 = vld [vmem:[#allocation2 + $0x418] sm:$0xff]
  %v782 = vld [vmem:[#allocation2 + $0x420] sm:$0xff]
  %v783 = vld [vmem:[#allocation2 + $0x428] sm:$0xff]
  %v784 = vld [vmem:[#allocation2 + $0x430] sm:$0xff]
  %v785 = vld [vmem:[#allocation2 + $0x438] sm:$0xff]
  %v786 = vld [vmem:[#allocation2 + $0x440] sm:$0xff]
  %v787 = vld [vmem:[#allocation2 + $0x448] sm:$0xff]
  %v788 = vld [vmem:[#allocation2 + $0x450] sm:$0xff]
  %v789 = vld [vmem:[#allocation2 + $0x458] sm:$0xff]
  %v790 = vld [vmem:[#allocation2 + $0x460] sm:$0xff]
  %v791 = vld [vmem:[#allocation2 + $0x468] sm:$0xff]
  %v792 = vld [vmem:[#allocation2 + $0x470] sm:$0xff]
  %v793 = vld [vmem:[#allocation2 + $0x478] sm:$0xff]
  %v794 = vld [vmem:[#allocation2 + $0x480] sm:$0xff]
  %v795 = vld [vmem:[#allocation2 + $0x488] sm:$0xff]
  %v796 = vld [vmem:[#allocation2 + $0x490] sm:$0xff]
  %v797 = vld [vmem:[#allocation2 + $0x498] sm:$0xff]
  %v798 = vld [vmem:[#allocation2 + $0x4a0] sm:$0xff]
  %v799 = vld [vmem:[#allocation2 + $0x4a8] sm:$0xff]
  %v800 = vld [vmem:[#allocation2 + $0x4b0] sm:$0xff]
  %v801 = vld [vmem:[#allocation2 + $0x4b8] sm:$0xff]
  %v802 = vld [vmem:[#allocation2 + $0x4c0] sm:$0xff]
  %v803 = vld [vmem:[#allocation2 + $0x4c8] sm:$0xff]
  %v804 = vld [vmem:[#allocation2 + $0x4d0] sm:$0xff]
  %v805 = vld [vmem:[#allocation2 + $0x4d8] sm:$0xff]
  %v806 = vld [vmem:[#allocation2 + $0x4e0] sm:$0xff]
  %v807 = vld [vmem:[#allocation2 + $0x4e8] sm:$0xff]
  %v808 = vld [vmem:[#allocation2 + $0x4f0] sm:$0xff]
  %v809 = vld [vmem:[#allocation2 + $0x4f8] sm:$0xff]
  %v810 = vld [vmem:[#allocation2 + $0x500] sm:$0xff]
  %v811 = vld [vmem:[#allocation2 + $0x508] sm:$0xff]
  %v812 = vld [vmem:[#allocation2 + $0x510] sm:$0xff]
  %v813 = vld [vmem:[#allocation2 + $0x518] sm:$0xff]
  %v814 = vld [vmem:[#allocation2 + $0x520] sm:$0xff]
  %v815 = vld [vmem:[#allocation2 + $0x528] sm:$0xff]
  %v816 = vld [vmem:[#allocation2 + $0x530] sm:$0xff]
  %v817 = vld [vmem:[#allocation2 + $0x538] sm:$0xff]
  %v818 = vld [vmem:[#allocation2 + $0x540] sm:$0xff]
  %v819 = vld [vmem:[#allocation2 + $0x548] sm:$0xff]
  %v820 = vld [vmem:[#allocation2 + $0x550] sm:$0xff]
  %v821 = vld [vmem:[#allocation2 + $0x558] sm:$0xff]
  %v822 = vld [vmem:[#allocation2 + $0x560] sm:$0xff]
  %v823 = vld [vmem:[#allocation2 + $0x568] sm:$0xff]
  %v824 = vld [vmem:[#allocation2 + $0x570] sm:$0xff]
  %v825 = vld [vmem:[#allocation2 + $0x578] sm:$0xff]
  %v826 = vld [vmem:[#allocation2 + $0x580] sm:$0xff]
  %v827 = vld [vmem:[#allocation2 + $0x588] sm:$0xff]
  %v828 = vld [vmem:[#allocation2 + $0x590] sm:$0xff]
  %v829 = vld [vmem:[#allocation2 + $0x598] sm:$0xff]
  %v830 = vld [vmem:[#allocation2 + $0x5a0] sm:$0xff]
  %v831 = vld [vmem:[#allocation2 + $0x5a8] sm:$0xff]
  %v832 = vld [vmem:[#allocation2 + $0x5b0] sm:$0xff]
  %v833 = vld [vmem:[#allocation2 + $0x5b8] sm:$0xff]
  %v834 = vld [vmem:[#allocation2 + $0x5c0] sm:$0xff]
  %v835 = vld [vmem:[#allocation2 + $0x5c8] sm:$0xff]
  %v836 = vld [vmem:[#allocation2 + $0x5d0] sm:$0xff]
  %v837 = vld [vmem:[#allocation2 + $0x5d8] sm:$0xff]
  %v838 = vld [vmem:[#allocation2 + $0x5e0] sm:$0xff]
  %v839 = vld [vmem:[#allocation2 + $0x5e8] sm:$0xff]
  %v840 = vld [vmem:[#allocation2 + $0x5f0] sm:$0xff]
  %v841 = vld [vmem:[#allocation2 + $0x5f8] sm:$0xff]
  %v842 = vld [vmem:[#allocation2 + $0x600] sm:$0xff]
  %v843 = vld [vmem:[#allocation2 + $0x608] sm:$0xff]
  %v844 = vld [vmem:[#allocation2 + $0x610] sm:$0xff]
  %v845 = vld [vmem:[#allocation2 + $0x618] sm:$0xff]
  %v846 = vld [vmem:[#allocation2 + $0x620] sm:$0xff]
  %v847 = vld [vmem:[#allocation2 + $0x628] sm:$0xff]
  %v848 = vld [vmem:[#allocation2 + $0x630] sm:$0xff]
  %v849 = vld [vmem:[#allocation2 + $0x638] sm:$0xff]
  %v850 = vld [vmem:[#allocation2 + $0x640] sm:$0xff]
  %v851 = vld [vmem:[#allocation2 + $0x648] sm:$0xff]
  %v852 = vld [vmem:[#allocation2 + $0x650] sm:$0xff]
  %v853 = vld [vmem:[#allocation2 + $0x658] sm:$0xff]
  %v854 = vld [vmem:[#allocation2 + $0x660] sm:$0xff]
  %v855 = vld [vmem:[#allocation2 + $0x668] sm:$0xff]
  %v856 = vld [vmem:[#allocation2 + $0x670] sm:$0xff]
  %v857 = vld [vmem:[#allocation2 + $0x678] sm:$0xff]
  %v858 = vld [vmem:[#allocation2 + $0x680] sm:$0xff]
  %v859 = vld [vmem:[#allocation2 + $0x688] sm:$0xff]
  %v860 = vld [vmem:[#allocation2 + $0x690] sm:$0xff]
  %v861 = vld [vmem:[#allocation2 + $0x698] sm:$0xff]
  %v862 = vld [vmem:[#allocation2 + $0x6a0] sm:$0xff]
  %v863 = vld [vmem:[#allocation2 + $0x6a8] sm:$0xff]
  %v864 = vld [vmem:[#allocation2 + $0x6b0] sm:$0xff]
  %v865 = vld [vmem:[#allocation2 + $0x6b8] sm:$0xff]
  %v866 = vld [vmem:[#allocation2 + $0x6c0] sm:$0xff]
  %v867 = vld [vmem:[#allocation2 + $0x6c8] sm:$0xff]
  %v868 = vld [vmem:[#allocation2 + $0x6d0] sm:$0xff]
  %v869 = vld [vmem:[#allocation2 + $0x6d8] sm:$0xff]
  %v870 = vld [vmem:[#allocation2 + $0x6e0] sm:$0xff]
  %v871 = vld [vmem:[#allocation2 + $0x6e8] sm:$0xff]
  %v872 = vld [vmem:[#allocation2 + $0x6f0] sm:$0xff]
  %v873 = vld [vmem:[#allocation2 + $0x6f8] sm:$0xff]
  %v874 = vld [vmem:[#allocation2 + $0x700] sm:$0xff]
  %v875 = vld [vmem:[#allocation2 + $0x708] sm:$0xff]
  %v876 = vld [vmem:[#allocation2 + $0x710] sm:$0xff]
  %v877 = vld [vmem:[#allocation2 + $0x718] sm:$0xff]
  %v878 = vld [vmem:[#allocation2 + $0x720] sm:$0xff]
  %v879 = vld [vmem:[#allocation2 + $0x728] sm:$0xff]
  %v880 = vld [vmem:[#allocation2 + $0x730] sm:$0xff]
  %v881 = vld [vmem:[#allocation2 + $0x738] sm:$0xff]
  %v882 = vld [vmem:[#allocation2 + $0x740] sm:$0xff]
  %v883 = vld [vmem:[#allocation2 + $0x748] sm:$0xff]
  %v884 = vld [vmem:[#allocation2 + $0x750] sm:$0xff]
  %v885 = vld [vmem:[#allocation2 + $0x758] sm:$0xff]
  %v886 = vld [vmem:[#allocation2 + $0x760] sm:$0xff]
  %v887 = vld [vmem:[#allocation2 + $0x768] sm:$0xff]
  %v888 = vld [vmem:[#allocation2 + $0x770] sm:$0xff]
  %v889 = vld [vmem:[#allocation2 + $0x778] sm:$0xff]
  %v890 = vld [vmem:[#allocation2 + $0x780] sm:$0xff]
  %v891 = vld [vmem:[#allocation2 + $0x788] sm:$0xff]
  %v892 = vld [vmem:[#allocation2 + $0x790] sm:$0xff]
  %v893 = vld [vmem:[#allocation2 + $0x798] sm:$0xff]
  %v894 = vld [vmem:[#allocation2 + $0x7a0] sm:$0xff]
  %v895 = vld [vmem:[#allocation2 + $0x7a8] sm:$0xff]
  %v896 = vld [vmem:[#allocation2 + $0x7b0] sm:$0xff]
  %v897 = vld [vmem:[#allocation2 + $0x7b8] sm:$0xff]
  %v898 = vld [vmem:[#allocation2 + $0x7c0] sm:$0xff]
  %v899 = vld [vmem:[#allocation2 + $0x7c8] sm:$0xff]
  %v900 = vld [vmem:[#allocation2 + $0x7d0] sm:$0xff]
  %v901 = vld [vmem:[#allocation2 + $0x7d8] sm:$0xff]
  %v902 = vld [vmem:[#allocation2 + $0x7e0] sm:$0xff]
  %v903 = vld [vmem:[#allocation2 + $0x7e8] sm:$0xff]
  %v904 = vld [vmem:[#allocation2 + $0x7f0] sm:$0xff]
  %v905 = vld [vmem:[#allocation2 + $0x7f8] sm:$0xff]
  %v906 = vld [vmem:[#allocation2 + $0x800] sm:$0xff]
  %v907 = vld [vmem:[#allocation2 + $0x808] sm:$0xff]
  %v908 = vld [vmem:[#allocation2 + $0x810] sm:$0xff]
  %v909 = vld [vmem:[#allocation2 + $0x818] sm:$0xff]
  %v910 = vld [vmem:[#allocation2 + $0x820] sm:$0xff]
  %v911 = vld [vmem:[#allocation2 + $0x828] sm:$0xff]
  %v912 = vld [vmem:[#allocation2 + $0x830] sm:$0xff]
  %v913 = vld [vmem:[#allocation2 + $0x838] sm:$0xff]
  %v914 = vld [vmem:[#allocation2 + $0x840] sm:$0xff]
  %v915 = vld [vmem:[#allocation2 + $0x848] sm:$0xff]
  %v916 = vld [vmem:[#allocation2 + $0x850] sm:$0xff]
  %v917 = vld [vmem:[#allocation2 + $0x858] sm:$0xff]
  %v918 = vld [vmem:[#allocation2 + $0x860] sm:$0xff]
  %v919 = vld [vmem:[#allocation2 + $0x868] sm:$0xff]
  %v920 = vld [vmem:[#allocation2 + $0x870] sm:$0xff]
  %v921 = vld [vmem:[#allocation2 + $0x878] sm:$0xff]
  %v922 = vld [vmem:[#allocation2 + $0x880] sm:$0xff]
  %v923 = vld [vmem:[#allocation2 + $0x888] sm:$0xff]
  %v924 = vld [vmem:[#allocation2 + $0x890] sm:$0xff]
  %v925 = vld [vmem:[#allocation2 + $0x898] sm:$0xff]
  %v926 = vld [vmem:[#allocation2 + $0x8a0] sm:$0xff]
  %v927 = vld [vmem:[#allocation2 + $0x8a8] sm:$0xff]
  %v928 = vld [vmem:[#allocation2 + $0x8b0] sm:$0xff]
  %v929 = vld [vmem:[#allocation2 + $0x8b8] sm:$0xff]
  %v930 = vld [vmem:[#allocation2 + $0x8c0] sm:$0xff]
  %v931 = vld [vmem:[#allocation2 + $0x8c8] sm:$0xff]
  %v932 = vld [vmem:[#allocation2 + $0x8d0] sm:$0xff]
  %v933 = vld [vmem:[#allocation2 + $0x8d8] sm:$0xff]
  %v934 = vld [vmem:[#allocation2 + $0x8e0] sm:$0xff]
  %v935 = vld [vmem:[#allocation2 + $0x8e8] sm:$0xff]
  %v936 = vld [vmem:[#allocation2 + $0x8f0] sm:$0xff]
  %v937 = vld [vmem:[#allocation2 + $0x8f8] sm:$0xff]
  %v938 = vld [vmem:[%s1] sm:$0xff]
  %v939 = vld [vmem:[%s1 + $0x8] sm:$0xff]
  %v940 = vld [vmem:[%s1 + $0x10] sm:$0xff]
  %v941 = vld [vmem:[%s1 + $0x18] sm:$0xff]
  %v942 = vld [vmem:[%s1 + $0x20] sm:$0xff]
  %v943 = vld [vmem:[%s1 + $0x28] sm:$0xff]
  %v944 = vld [vmem:[%s1 + $0x30] sm:$0xff]
  %v945 = vld [vmem:[%s1 + $0x38] sm:$0xff]
  %v946 = vld [vmem:[%s1 + $0x40] sm:$0xff]
  %v947 = vld [vmem:[%s1 + $0x48] sm:$0xff]
  %v948 = vld [vmem:[%s1 + $0x50] sm:$0xff]
  %v949 = vld [vmem:[%s1 + $0x58] sm:$0xff]
  %v950 = vld [vmem:[%s1 + $0x60] sm:$0xff]
  %v951 = vld [vmem:[%s1 + $0x68] sm:$0xff]
  %v952 = vld [vmem:[%s1 + $0x70] sm:$0xff]
  %v953 = vld [vmem:[%s1 + $0x78] sm:$0xff]
  %v954 = vld [vmem:[%s1 + $0x80] sm:$0xff]
  %v955 = vld [vmem:[%s1 + $0x88] sm:$0xff]
  %v956 = vld [vmem:[%s1 + $0x90] sm:$0xff]
  %v957 = vld [vmem:[%s1 + $0x98] sm:$0xff]
  %v958 = vld [vmem:[%s1 + $0xa0] sm:$0xff]
  %v959 = vld [vmem:[%s1 + $0xa8] sm:$0xff]
  %v960 = vld [vmem:[%s1 + $0xb0] sm:$0xff]
  %v961 = vld [vmem:[%s1 + $0xb8] sm:$0xff]
  %v962 = vld [vmem:[%s1 + $0xc0] sm:$0xff]
  %v963 = vld [vmem:[%s1 + $0xc8] sm:$0xff]
  %v964 = vld [vmem:[%s1 + $0xd0] sm:$0xff]
  %v965 = vld [vmem:[%s1 + $0xd8] sm:$0xff]
  %v966 = vld [vmem:[%s1 + $0xe0] sm:$0xff]
  %v967 = vld [vmem:[%s1 + $0xe8] sm:$0xff]
  %v968 = vld [vmem:[%s1 + $0xf0] sm:$0xff]
  %v969 = vld [vmem:[%s1 + $0xf8] sm:$0xff]
  %v970 = vld [vmem:[%s1 + $0x100] sm:$0xff]
  %v971 = vld [vmem:[%s1 + $0x108] sm:$0xff]
  %v972 = vld [vmem:[%s1 + $0x110] sm:$0xff]
  %v973 = vld [vmem:[%s1 + $0x118] sm:$0xff]
  %v974 = vld [vmem:[%s1 + $0x120] sm:$0xff]
  %v975 = vld [vmem:[%s1 + $0x128] sm:$0xff]
  %v976 = vld [vmem:[%s1 + $0x130] sm:$0xff]
  %v977 = vld [vmem:[%s1 + $0x138] sm:$0xff]
  %v978 = vld [vmem:[%s1 + $0x140] sm:$0xff]
  %v979 = vld [vmem:[%s1 + $0x148] sm:$0xff]
  %v980 = vld [vmem:[%s1 + $0x150] sm:$0xff]
  %v981 = vld [vmem:[%s1 + $0x158] sm:$0xff]
  %v982 = vld [vmem:[%s1 + $0x160] sm:$0xff]
  %v983 = vld [vmem:[%s1 + $0x168] sm:$0xff]
  %v984 = vld [vmem:[%s1 + $0x170] sm:$0xff]
  %v985 = vld [vmem:[%s1 + $0x178] sm:$0xff]
  %v986 = vld [vmem:[%s1 + $0x180] sm:$0xff]
  %v987 = vld [vmem:[%s1 + $0x188] sm:$0xff]
  %v988 = vld [vmem:[%s1 + $0x190] sm:$0xff]
  %v989 = vld [vmem:[%s1 + $0x198] sm:$0xff]
  %v990 = vld [vmem:[%s1 + $0x1a0] sm:$0xff]
  %v991 = vld [vmem:[%s1 + $0x1a8] sm:$0xff]
  %v992 = vld [vmem:[%s1 + $0x1b0] sm:$0xff]
  %v993 = vld [vmem:[%s1 + $0x1b8] sm:$0xff]
  %v994 = vld [vmem:[%s1 + $0x1c0] sm:$0xff]
  %v995 = vld [vmem:[%s1 + $0x1c8] sm:$0xff]
  %v996 = vld [vmem:[%s1 + $0x1d0] sm:$0xff]
  %v997 = vld [vmem:[%s1 + $0x1d8] sm:$0xff]
  %v998 = vld [vmem:[%s1 + $0x1e0] sm:$0xff]
  %v999 = vld [vmem:[%s1 + $0x1e8] sm:$0xff]
  %v1000 = vld [vmem:[%s1 + $0x1f0] sm:$0xff]
  %v1001 = vld [vmem:[%s1 + $0x1f8] sm:$0xff]
  %v1002 = vld [vmem:[%s1 + $0x200] sm:$0xff]
  %v1003 = vld [vmem:[%s1 + $0x208] sm:$0xff]
  %v1004 = vld [vmem:[%s1 + $0x210] sm:$0xff]
  %v1005 = vld [vmem:[%s1 + $0x218] sm:$0xff]
  %v1006 = vld [vmem:[%s1 + $0x220] sm:$0xff]
  %v1007 = vld [vmem:[%s1 + $0x228] sm:$0xff]
  %v1008 = vld [vmem:[%s1 + $0x230] sm:$0xff]
  %v1009 = vld [vmem:[%s1 + $0x238] sm:$0xff]
  %v1010 = vld [vmem:[%s1 + $0x240] sm:$0xff]
  %v1011 = vld [vmem:[%s1 + $0x248] sm:$0xff]
  %v1012 = vld [vmem:[%s1 + $0x250] sm:$0xff]
  %v1013 = vld [vmem:[%s1 + $0x258] sm:$0xff]
  %v1014 = vld [vmem:[%s1 + $0x260] sm:$0xff]
  %v1015 = vld [vmem:[%s1 + $0x268] sm:$0xff]
  %v1016 = vld [vmem:[%s1 + $0x270] sm:$0xff]
  %v1017 = vld [vmem:[%s1 + $0x278] sm:$0xff]
  %v1018 = vld [vmem:[%s1 + $0x280] sm:$0xff]
  %v1019 = vld [vmem:[%s1 + $0x288] sm:$0xff]
  %v1020 = vld [vmem:[%s1 + $0x290] sm:$0xff]
  %v1021 = vld [vmem:[%s1 + $0x298] sm:$0xff]
  %v1022 = vld [vmem:[%s1 + $0x2a0] sm:$0xff]
  %v1023 = vld [vmem:[%s1 + $0x2a8] sm:$0xff]
  %v1024 = vld [vmem:[%s1 + $0x2b0] sm:$0xff]
  %v1025 = vld [vmem:[%s1 + $0x2b8] sm:$0xff]
  %v1026 = vld [vmem:[%s1 + $0x2c0] sm:$0xff]
  %v1027 = vld [vmem:[%s1 + $0x2c8] sm:$0xff]
  %v1028 = vld [vmem:[%s1 + $0x2d0] sm:$0xff]
  %v1029 = vld [vmem:[%s1 + $0x2d8] sm:$0xff]
  %v1030 = vld [vmem:[%s1 + $0x2e0] sm:$0xff]
  %v1031 = vld [vmem:[%s1 + $0x2e8] sm:$0xff]
  %v1032 = vld [vmem:[%s1 + $0x2f0] sm:$0xff]
  %v1033 = vld [vmem:[%s1 + $0x2f8] sm:$0xff]
  %v1034 = vld [vmem:[%s1 + $0x300] sm:$0xff]
  %v1035 = vld [vmem:[%s1 + $0x308] sm:$0xff]
  %v1036 = vld [vmem:[%s1 + $0x310] sm:$0xff]
  %v1037 = vld [vmem:[%s1 + $0x318] sm:$0xff]
  %v1038 = vld [vmem:[%s1 + $0x320] sm:$0xff]
  %v1039 = vld [vmem:[%s1 + $0x328] sm:$0xff]
  %v1040 = vld [vmem:[%s1 + $0x330] sm:$0xff]
  %v1041 = vld [vmem:[%s1 + $0x338] sm:$0xff]
  %v1042 = vld [vmem:[%s1 + $0x340] sm:$0xff]
  %v1043 = vld [vmem:[%s1 + $0x348] sm:$0xff]
  %v1044 = vld [vmem:[%s1 + $0x350] sm:$0xff]
  %v1045 = vld [vmem:[%s1 + $0x358] sm:$0xff]
  %v1046 = vld [vmem:[%s1 + $0x360] sm:$0xff]
  %v1047 = vld [vmem:[%s1 + $0x368] sm:$0xff]
  %v1048 = vld [vmem:[%s1 + $0x370] sm:$0xff]
  %v1049 = vld [vmem:[%s1 + $0x378] sm:$0xff]
  %v1050 = vld [vmem:[%s1 + $0x380] sm:$0xff]
  %v1051 = vld [vmem:[%s1 + $0x388] sm:$0xff]
  %v1052 = vld [vmem:[%s1 + $0x390] sm:$0xff]
  %v1053 = vld [vmem:[%s1 + $0x398] sm:$0xff]
  %v1054 = vld [vmem:[%s1 + $0x3a0] sm:$0xff]
  %v1055 = vld [vmem:[%s1 + $0x3a8] sm:$0xff]
  %v1056 = vld [vmem:[%s1 + $0x3b0] sm:$0xff]
  %v1057 = vld [vmem:[%s1 + $0x3b8] sm:$0xff]
  %v1058 = vld [vmem:[%s1 + $0x3c0] sm:$0xff]
  %v1059 = vld [vmem:[%s1 + $0x3c8] sm:$0xff]
  %v1060 = vld [vmem:[%s1 + $0x3d0] sm:$0xff]
  %v1061 = vld [vmem:[%s1 + $0x3d8] sm:$0xff]
  %v1062 = vld [vmem:[%s1 + $0x3e0] sm:$0xff]
  %v1063 = vld [vmem:[%s1 + $0x3e8] sm:$0xff]
  %v1064 = vld [vmem:[%s1 + $0x3f0] sm:$0xff]
  %v1065 = vld [vmem:[%s1 + $0x3f8] sm:$0xff]
  %v1066 = vld [vmem:[%s1 + $0x400] sm:$0xff]
  %v1067 = vld [vmem:[%s1 + $0x408] sm:$0xff]
  %v1068 = vld [vmem:[%s1 + $0x410] sm:$0xff]
  %v1069 = vld [vmem:[%s1 + $0x418] sm:$0xff]
  %v1070 = vld [vmem:[%s1 + $0x420] sm:$0xff]
  %v1071 = vld [vmem:[%s1 + $0x428] sm:$0xff]
  %v1072 = vld [vmem:[%s1 + $0x430] sm:$0xff]
  %v1073 = vld [vmem:[%s1 + $0x438] sm:$0xff]
  %v1074 = vld [vmem:[%s1 + $0x440] sm:$0xff]
  %v1075 = vld [vmem:[%s1 + $0x448] sm:$0xff]
  %v1076 = vld [vmem:[%s1 + $0x450] sm:$0xff]
  %v1077 = vld [vmem:[%s1 + $0x458] sm:$0xff]
  %v1078 = vld [vmem:[%s1 + $0x460] sm:$0xff]
  %v1079 = vld [vmem:[%s1 + $0x468] sm:$0xff]
  %v1080 = vld [vmem:[%s1 + $0x470] sm:$0xff]
  %v1081 = vld [vmem:[%s1 + $0x478] sm:$0xff]
  %1082 = vmatprep.subr.mxu0 0.0
  %1083 = vmatpush1.msra.mxu0 %v938
  %1084 = vmatprep.subr.mxu0 0.0
  %1085 = vmatpush1.msra.mxu0 %v939
  %1086 = vmatprep.subr.mxu0 0.0
  %1087 = vmatpush1.msra.mxu0 %v940
  %1088 = vmatprep.subr.mxu0 0.0
  %1089 = vmatpush1.msra.mxu0 %v941
  %1090 = vmatprep.subr.mxu0 0.0
  %1091 = vmatpush1.msra.mxu0 %v942
  %1092 = vmatprep.subr.mxu0 0.0
  %1093 = vmatpush1.msra.mxu0 %v943
  %1094 = vmatprep.subr.mxu0 0.0
  %1095 = vmatpush1.msra.mxu0 %v944
  %1096 = vmatprep.subr.mxu0 0.0
  %1097 = vmatpush1.msra.mxu0 %v945
  %1098 = vmatprep.subr.mxu0 0.0
  %1099 = vmatpush1.msra.mxu0 %v946
  %1100 = vmatprep.subr.mxu0 0.0
  %1101 = vmatpush1.msra.mxu0 %v947
  %1102 = vmatprep.subr.mxu0 0.0
  %1103 = vmatpush1.msra.mxu0 %v948
  %1104 = vmatprep.subr.mxu0 0.0
  %1105 = vmatpush1.msra.mxu0 %v949
  %1106 = vmatprep.subr.mxu0 0.0
  %1107 = vmatpush1.msra.mxu0 %v950
  %1108 = vmatprep.subr.mxu0 0.0
  %1109 = vmatpush1.msra.mxu0 %v951
  %1110 = vmatprep.subr.mxu0 0.0
  %1111 = vmatpush1.msra.mxu0 %v952
  %1112 = vmatprep.subr.mxu0 0.0
  %1113 = vmatpush1.msra.mxu0 %v953
  %1114 = vmatprep.subr.mxu0 0.0
  %1115 = vmatpush1.msra.mxu0 %v954
  %1116 = vmatprep.subr.mxu0 0.0
  %1117 = vmatpush1.msra.mxu0 %v955
  %1118 = vmatprep.subr.mxu0 0.0
  %1119 = vmatpush1.msra.mxu0 %v956
  %1120 = vmatprep.subr.mxu0 0.0
  %1121 = vmatpush1.msra.mxu0 %v957
  %1122 = vmatprep.subr.mxu0 0.0
  %1123 = vmatpush1.msra.mxu0 %v958
  %1124 = vmatprep.subr.mxu0 0.0
  %1125 = vmatpush1.msra.mxu0 %v959
  %1126 = vmatprep.subr.mxu0 0.0
  %1127 = vmatpush1.msra.mxu0 %v960
  %1128 = vmatprep.subr.mxu0 0.0
  %1129 = vmatpush1.msra.mxu0 %v961
  %1130 = vmatprep.subr.mxu0 0.0
  %1131 = vmatpush1.msra.mxu0 %v962
  %1132 = vmatprep.subr.mxu0 0.0
  %1133 = vmatpush1.msra.mxu0 %v963
  %1134 = vmatprep.subr.mxu0 0.0
  %1135 = vmatpush1.msra.mxu0 %v964
  %1136 = vmatprep.subr.mxu0 0.0
  %1137 = vmatpush1.msra.mxu0 %v965
  %1138 = vmatprep.subr.mxu0 0.0
  %1139 = vmatpush1.msra.mxu0 %v966
  %1140 = vmatprep.subr.mxu0 0.0
  %1141 = vmatpush1.msra.mxu0 %v967
  %1142 = vmatprep.subr.mxu0 0.0
  %1143 = vmatpush1.msra.mxu0 %v968
  %1144 = vmatprep.subr.mxu0 0.0
  %1145 = vmatpush1.msra.mxu0 %v969
  %1146 = vmatprep.mubr.f32.mxu0 %v651
  %1147 = vmatmul.mubr.f32.gmra.mrb[0].mxu0 %v650
  %v1148 = vpop.f32.mrb[0].mxu0
  %v1149 = vadd.f32 0.0, %v1148
  %v1150 = vpop.f32.mrb[0].mxu0
  %1151 = vmatprep.mubr.f32.mxu0 %v660
  %1152 = vmatmul.mubr.f32.gmra.mrb[0].mxu0 %v659
  %v1153 = vpop.f32.mrb[0].mxu0
  %v1154 = vadd.f32 0.0, %v1153
  %v1155 = vpop.f32.mrb[0].mxu0
  %1156 = vmatprep.mubr.f32.mxu0 %v669
  %1157 = vmatmul.mubr.f32.gmra.mrb[0].mxu0 %v668
  %v1158 = vpop.f32.mrb[0].mxu0
  %v1159 = vadd.f32 0.0, %v1158
  %v1160 = vpop.f32.mrb[0].mxu0
  %1161 = vmatprep.mubr.f32.mxu0 %v678
  %1162 = vmatmul.mubr.f32.gmra.mrb[0].mxu0 %v677
  %v1163 = vpop.f32.mrb[0].mxu0
  %v1164 = vadd.f32 0.0, %v1163
  %v1165 = vpop.f32.mrb[0].mxu0
  %1166 = vmatprep.mubr.f32.mxu0 %v687
  %1167 = vmatmul.mubr.f32.gmra.mrb[0].mxu0 %v686
  %v1168 = vpop.f32.mrb[0].mxu0
  %v1169 = vadd.f32 0.0, %v1168
  %v1170 = vpop.f32.mrb[0].mxu0
  %1171 = vmatprep.mubr.f32.mxu0 %v696
  %1172 = vmatmul.mubr.f32.gmra.mrb[0].mxu0 %v695
  %v1173 = vpop.f32.mrb[0].mxu0
  %v1174 = vadd.f32 0.0, %v1173
  %v1175 = vpop.f32.mrb[0].mxu0
  %1176 = vmatprep.mubr.f32.mxu0 %v705
  %1177 = vmatmul.mubr.f32.gmra.mrb[0].mxu0 %v704
  %v1178 = vpop.f32.mrb[0].mxu0
  %v1179 = vadd.f32 0.0, %v1178
  %v1180 = vpop.f32.mrb[0].mxu0
  %1181 = vmatprep.mubr.f32.mxu0 %v714
  %1182 = vmatmul.mubr.f32.gmra.mrb[0].mxu0 %v713
  %v1183 = vpop.f32.mrb[0].mxu0
  %v1184 = vadd.f32 0.0, %v1183
  %v1185 = vpop.f32.mrb[0].mxu0
  %1186 = vmatprep.mubr.f32.mxu0 %v723
  %1187 = vmatmul.mubr.f32.gmra.mrb[0].mxu0 %v722
  %v1188 = vpop.f32.mrb[0].mxu0
  %v1189 = vadd.f32 0.0, %v1188
  %v1190 = vpop.f32.mrb[0].mxu0
  %1191 = vmatprep.mubr.f32.mxu0 %v732
  %1192 = vmatmul.mubr.f32.gmra.mrb[0].mxu0 %v731
  %v1193 = vpop.f32.mrb[0].mxu0
  %v1194 = vadd.f32 0.0, %v1193
  %v1195 = vpop.f32.mrb[0].mxu0
  %1196 = vmatprep.mubr.f32.mxu0 %v741
  %1197 = vmatmul.mubr.f32.gmra.mrb[0].mxu0 %v740
  %v1198 = vpop.f32.mrb[0].mxu0
  %v1199 = vadd.f32 0.0, %v1198
  %v1200 = vpop.f32.mrb[0].mxu0
  %1201 = vmatprep.mubr.f32.mxu0 %v750
  %1202 = vmatmul.mubr.f32.gmra.mrb[0].mxu0 %v749
  %v1203 = vpop.f32.mrb[0].mxu0
  %v1204 = vadd.f32 0.0, %v1203
  %v1205 = vpop.f32.mrb[0].mxu0
  %1206 = vmatprep.mubr.f32.mxu0 %v759
  %1207 = vmatmul.mubr.f32.gmra.mrb[0].mxu0 %v758
  %v1208 = vpop.f32.mrb[0].mxu0
  %v1209 = vadd.f32 0.0, %v1208
  %v1210 = vpop.f32.mrb[0].mxu0
  %1211 = vmatprep.mubr.f32.mxu0 %v768
  %1212 = vmatmul.mubr.f32.gmra.mrb[0].mxu0 %v767
  %v1213 = vpop.f32.mrb[0].mxu0
  %v1214 = vadd.f32 0.0, %v1213
  %v1215 = vpop.f32.mrb[0].mxu0
  %1216 = vmatprep.mubr.f32.mxu0 %v777
  %1217 = vmatmul.mubr.f32.gmra.mrb[0].mxu0 %v776
  %v1218 = vpop.f32.mrb[0].mxu0
  %v1219 = vadd.f32 0.0, %v1218
  %v1220 = vpop.f32.mrb[0].mxu0
  %1221 = vmatprep.mubr.f32.mxu0 %v786
  %1222 = vmatmul.mubr.f32.gmra.mrb[0].mxu0 %v785
  %v1223 = vpop.f32.mrb[0].mxu0
  %v1224 = vadd.f32 0.0, %v1223
  %v1225 = vpop.f32.mrb[0].mxu0
  %1226 = vmatprep.mubr.f32.mxu0 %v795
  %1227 = vmatmul.mubr.f32.gmra.mrb[0].mxu0 %v794
  %v1228 = vpop.f32.mrb[0].mxu0
  %v1229 = vadd.f32 0.0, %v1228
  %v1230 = vpop.f32.mrb[0].mxu0
  %1231 = vmatprep.mubr.f32.mxu0 %v804
  %1232 = vmatmul.mubr.f32.gmra.mrb[0].mxu0 %v803
  %v1233 = vpop.f32.mrb[0].mxu0
  %v1234 = vadd.f32 0.0, %v1233
  %v1235 = vpop.f32.mrb[0].mxu0
  %1236 = vmatprep.mubr.f32.mxu0 %v813
  %1237 = vmatmul.mubr.f32.gmra.mrb[0].mxu0 %v812
  %v1238 = vpop.f32.mrb[0].mxu0
  %v1239 = vadd.f32 0.0, %v1238
  %v1240 = vpop.f32.mrb[0].mxu0
  %1241 = vmatprep.mubr.f32.mxu0 %v822
  %1242 = vmatmul.mubr.f32.gmra.mrb[0].mxu0 %v821
  %v1243 = vpop.f32.mrb[0].mxu0
  %v1244 = vadd.f32 0.0, %v1243
  %v1245 = vpop.f32.mrb[0].mxu0
  %1246 = vmatprep.mubr.f32.mxu0 %v831
  %1247 = vmatmul.mubr.f32.gmra.mrb[0].mxu0 %v830
  %v1248 = vpop.f32.mrb[0].mxu0
  %v1249 = vadd.f32 0.0, %v1248
  %v1250 = vpop.f32.mrb[0].mxu0
  %1251 = vmatprep.mubr.f32.mxu0 %v840
  %1252 = vmatmul.mubr.f32.gmra.mrb[0].mxu0 %v839
  %v1253 = vpop.f32.mrb[0].mxu0
  %v1254 = vadd.f32 0.0, %v1253
  %v1255 = vpop.f32.mrb[0].mxu0
  %1256 = vmatprep.mubr.f32.mxu0 %v849
  %1257 = vmatmul.mubr.f32.gmra.mrb[0].mxu0 %v848
  %v1258 = vpop.f32.mrb[0].mxu0
  %v1259 = vadd.f32 0.0, %v1258
  %v1260 = vpop.f32.mrb[0].mxu0
  %1261 = vmatprep.mubr.f32.mxu0 %v858
  %1262 = vmatmul.mubr.f32.gmra.mrb[0].mxu0 %v857
  %v1263 = vpop.f32.mrb[0].mxu0
  %v1264 = vadd.f32 0.0, %v1263
  %v1265 = vpop.f32.mrb[0].mxu0
  %1266 = vmatprep.mubr.f32.mxu0 %v867
  %1267 = vmatmul.mubr.f32.gmra.mrb[0].mxu0 %v866
  %v1268 = vpop.f32.mrb[0].mxu0
  %v1269 = vadd.f32 0.0, %v1268
  %v1270 = vpop.f32.mrb[0].mxu0
  %1271 = vmatprep.mubr.f32.mxu0 %v876
  %1272 = vmatmul.mubr.f32.gmra.mrb[0].mxu0 %v875
  %v1273 = vpop.f32.mrb[0].mxu0
  %v1274 = vadd.f32 0.0, %v1273
  %v1275 = vpop.f32.mrb[0].mxu0
  %1276 = vmatprep.mubr.f32.mxu0 %v885
  %1277 = vmatmul.mubr.f32.gmra.mrb[0].mxu0 %v884
  %v1278 = vpop.f32.mrb[0].mxu0
  %v1279 = vadd.f32 0.0, %v1278
  %v1280 = vpop.f32.mrb[0].mxu0
  %1281 = vmatprep.mubr.f32.mxu0 %v894
  %1282 = vmatmul.mubr.f32.gmra.mrb[0].mxu0 %v893
  %v1283 = vpop.f32.mrb[0].mxu0
  %v1284 = vadd.f32 0.0, %v1283
  %v1285 = vpop.f32.mrb[0].mxu0
  %1286 = vmatprep.mubr.f32.mxu0 %v903
  %1287 = vmatmul.mubr.f32.gmra.mrb[0].mxu0 %v902
  %v1288 = vpop.f32.mrb[0].mxu0
  %v1289 = vadd.f32 0.0, %v1288
  %v1290 = vpop.f32.mrb[0].mxu0
  %1291 = vmatprep.mubr.f32.mxu0 %v912
  %1292 = vmatmul.mubr.f32.gmra.mrb[0].mxu0 %v911
  %v1293 = vpop.f32.mrb[0].mxu0
  %v1294 = vadd.f32 0.0, %v1293
  %v1295 = vpop.f32.mrb[0].mxu0
  %1296 = vmatprep.mubr.f32.mxu0 %v921
  %1297 = vmatmul.mubr.f32.gmra.mrb[0].mxu0 %v920
  %v1298 = vpop.f32.mrb[0].mxu0
  %v1299 = vadd.f32 0.0, %v1298
  %v1300 = vpop.f32.mrb[0].mxu0
  %1301 = vmatprep.mubr.f32.mxu0 %v930
  %1302 = vmatmul.mubr.f32.gmra.mrb[0].mxu0 %v929
  %v1303 = vpop.f32.mrb[0].mxu0
  %v1304 = vadd.f32 0.0, %v1303
  %v1305 = vpop.f32.mrb[0].mxu0
  %1306 = vdwg.mxu0
  %1307 = vmatprep.subr.mxu0 0.0
  %1308 = vmatpush1.msra.mxu0 %v970
  %1309 = vmatprep.subr.mxu0 0.0
  %1310 = vmatpush1.msra.mxu0 %v971
  %1311 = vmatprep.subr.mxu0 0.0
  %1312 = vmatpush1.msra.mxu0 %v972
  %1313 = vmatprep.subr.mxu0 0.0
  %1314 = vmatpush1.msra.mxu0 %v973
  %1315 = vmatprep.subr.mxu0 0.0
  %1316 = vmatpush1.msra.mxu0 %v974
  %1317 = vmatprep.subr.mxu0 0.0
  %1318 = vmatpush1.msra.mxu0 %v975
  %1319 = vmatprep.subr.mxu0 0.0
  %1320 = vmatpush1.msra.mxu0 %v976
  %1321 = vmatprep.subr.mxu0 0.0
  %1322 = vmatpush1.msra.mxu0 %v977
  %1323 = vmatprep.subr.mxu0 0.0
  %1324 = vmatpush1.msra.mxu0 %v978
  %1325 = vmatprep.subr.mxu0 0.0
  %1326 = vmatpush1.msra.mxu0 %v979
  %1327 = vmatprep.subr.mxu0 0.0
  %1328 = vmatpush1.msra.mxu0 %v980
  %1329 = vmatprep.subr.mxu0 0.0
  %1330 = vmatpush1.msra.mxu0 %v981
  %1331 = vmatprep.subr.mxu0 0.0
  %1332 = vmatpush1.msra.mxu0 %v982
  %1333 = vmatprep.subr.mxu0 0.0
  %1334 = vmatpush1.msra.mxu0 %v983
  %1335 = vmatprep.subr.mxu0 0.0
  %1336 = vmatpush1.msra.mxu0 %v984
  %1337 = vmatprep.subr.mxu0 0.0
  %1338 = vmatpush1.msra.mxu0 %v985
  %1339 = vmatprep.subr.mxu0 0.0
  %1340 = vmatpush1.msra.mxu0 %v986
  %1341 = vmatprep.subr.mxu0 0.0
  %1342 = vmatpush1.msra.mxu0 %v987
  %1343 = vmatprep.subr.mxu0 0.0
  %1344 = vmatpush1.msra.mxu0 %v988
  %1345 = vmatprep.subr.mxu0 0.0
  %1346 = vmatpush1.msra.mxu0 %v989
  %1347 = vmatprep.subr.mxu0 0.0
  %1348 = vmatpush1.msra.mxu0 %v990
  %1349 = vmatprep.subr.mxu0 0.0
  %1350 = vmatpush1.msra.mxu0 %v991
  %1351 = vmatprep.subr.mxu0 0.0
  %1352 = vmatpush1.msra.mxu0 %v992
  %1353 = vmatprep.subr.mxu0 0.0
  %1354 = vmatpush1.msra.mxu0 %v993
  %1355 = vmatprep.subr.mxu0 0.0
  %1356 = vmatpush1.msra.mxu0 %v994
  %1357 = vmatprep.subr.mxu0 0.0
  %1358 = vmatpush1.msra.mxu0 %v995
  %1359 = vmatprep.subr.mxu0 0.0
  %1360 = vmatpush1.msra.mxu0 %v996
  %1361 = vmatprep.subr.mxu0 0.0
  %1362 = vmatpush1.msra.mxu0 %v997
  %1363 = vmatprep.subr.mxu0 0.0
  %1364 = vmatpush1.msra.mxu0 %v998
  %1365 = vmatprep.subr.mxu0 0.0
  %1366 = vmatpush1.msra.mxu0 %v999
  %1367 = vmatprep.subr.mxu0 0.0
  %1368 = vmatpush1.msra.mxu0 %v1000
  %1369 = vmatprep.subr.mxu0 0.0
  %1370 = vmatpush1.msra.mxu0 %v1001
  %1371 = vmatprep.mubr.f32.mxu0 %v653
  %1372 = vmatmul.mubr.f32.gmra.mrb[0].mxu0 %v652
  %v1373 = vpop.f32.mrb[0].mxu0
  %v1374 = vadd.f32 %v1149, %v1373
  %v1375 = vpop.f32.mrb[0].mxu0
  %1376 = vmatprep.mubr.f32.mxu0 %v662
  %1377 = vmatmul.mubr.f32.gmra.mrb[0].mxu0 %v661
  %v1378 = vpop.f32.mrb[0].mxu0
  %v1379 = vadd.f32 %v1154, %v1378
  %v1380 = vpop.f32.mrb[0].mxu0
  %1381 = vmatprep.mubr.f32.mxu0 %v671
  %1382 = vmatmul.mubr.f32.gmra.mrb[0].mxu0 %v670
  %v1383 = vpop.f32.mrb[0].mxu0
  %v1384 = vadd.f32 %v1159, %v1383
  %v1385 = vpop.f32.mrb[0].mxu0
  %1386 = vmatprep.mubr.f32.mxu0 %v680
  %1387 = vmatmul.mubr.f32.gmra.mrb[0].mxu0 %v679
  %v1388 = vpop.f32.mrb[0].mxu0
  %v1389 = vadd.f32 %v1164, %v1388
  %v1390 = vpop.f32.mrb[0].mxu0
  %1391 = vmatprep.mubr.f32.mxu0 %v689
  %1392 = vmatmul.mubr.f32.gmra.mrb[0].mxu0 %v688
  %v1393 = vpop.f32.mrb[0].mxu0
  %v1394 = vadd.f32 %v1169, %v1393
  %v1395 = vpop.f32.mrb[0].mxu0
  %1396 = vmatprep.mubr.f32.mxu0 %v698
  %1397 = vmatmul.mubr.f32.gmra.mrb[0].mxu0 %v697
  %v1398 = vpop.f32.mrb[0].mxu0
  %v1399 = vadd.f32 %v1174, %v1398
  %v1400 = vpop.f32.mrb[0].mxu0
  %1401 = vmatprep.mubr.f32.mxu0 %v707
  %1402 = vmatmul.mubr.f32.gmra.mrb[0].mxu0 %v706
  %v1403 = vpop.f32.mrb[0].mxu0
  %v1404 = vadd.f32 %v1179, %v1403
  %v1405 = vpop.f32.mrb[0].mxu0
  %1406 = vmatprep.mubr.f32.mxu0 %v716
  %1407 = vmatmul.mubr.f32.gmra.mrb[0].mxu0 %v715
  %v1408 = vpop.f32.mrb[0].mxu0
  %v1409 = vadd.f32 %v1184, %v1408
  %v1410 = vpop.f32.mrb[0].mxu0
  %1411 = vmatprep.mubr.f32.mxu0 %v725
  %1412 = vmatmul.mubr.f32.gmra.mrb[0].mxu0 %v724
  %v1413 = vpop.f32.mrb[0].mxu0
  %v1414 = vadd.f32 %v1189, %v1413
  %v1415 = vpop.f32.mrb[0].mxu0
  %1416 = vmatprep.mubr.f32.mxu0 %v734
  %1417 = vmatmul.mubr.f32.gmra.mrb[0].mxu0 %v733
  %v1418 = vpop.f32.mrb[0].mxu0
  %v1419 = vadd.f32 %v1194, %v1418
  %v1420 = vpop.f32.mrb[0].mxu0
  %1421 = vmatprep.mubr.f32.mxu0 %v743
  %1422 = vmatmul.mubr.f32.gmra.mrb[0].mxu0 %v742
  %v1423 = vpop.f32.mrb[0].mxu0
  %v1424 = vadd.f32 %v1199, %v1423
  %v1425 = vpop.f32.mrb[0].mxu0
  %1426 = vmatprep.mubr.f32.mxu0 %v752
  %1427 = vmatmul.mubr.f32.gmra.mrb[0].mxu0 %v751
  %v1428 = vpop.f32.mrb[0].mxu0
  %v1429 = vadd.f32 %v1204, %v1428
  %v1430 = vpop.f32.mrb[0].mxu0
  %1431 = vmatprep.mubr.f32.mxu0 %v761
  %1432 = vmatmul.mubr.f32.gmra.mrb[0].mxu0 %v760
  %v1433 = vpop.f32.mrb[0].mxu0
  %v1434 = vadd.f32 %v1209, %v1433
  %v1435 = vpop.f32.mrb[0].mxu0
  %1436 = vmatprep.mubr.f32.mxu0 %v770
  %1437 = vmatmul.mubr.f32.gmra.mrb[0].mxu0 %v769
  %v1438 = vpop.f32.mrb[0].mxu0
  %v1439 = vadd.f32 %v1214, %v1438
  %v1440 = vpop.f32.mrb[0].mxu0
  %1441 = vmatprep.mubr.f32.mxu0 %v779
  %1442 = vmatmul.mubr.f32.gmra.mrb[0].mxu0 %v778
  %v1443 = vpop.f32.mrb[0].mxu0
  %v1444 = vadd.f32 %v1219, %v1443
  %v1445 = vpop.f32.mrb[0].mxu0
  %1446 = vmatprep.mubr.f32.mxu0 %v788
  %1447 = vmatmul.mubr.f32.gmra.mrb[0].mxu0 %v787
  %v1448 = vpop.f32.mrb[0].mxu0
  %v1449 = vadd.f32 %v1224, %v1448
  %v1450 = vpop.f32.mrb[0].mxu0
  %1451 = vmatprep.mubr.f32.mxu0 %v797
  %1452 = vmatmul.mubr.f32.gmra.mrb[0].mxu0 %v796
  %v1453 = vpop.f32.mrb[0].mxu0
  %v1454 = vadd.f32 %v1229, %v1453
  %v1455 = vpop.f32.mrb[0].mxu0
  %1456 = vmatprep.mubr.f32.mxu0 %v806
  %1457 = vmatmul.mubr.f32.gmra.mrb[0].mxu0 %v805
  %v1458 = vpop.f32.mrb[0].mxu0
  %v1459 = vadd.f32 %v1234, %v1458
  %v1460 = vpop.f32.mrb[0].mxu0
  %1461 = vmatprep.mubr.f32.mxu0 %v815
  %1462 = vmatmul.mubr.f32.gmra.mrb[0].mxu0 %v814
  %v1463 = vpop.f32.mrb[0].mxu0
  %v1464 = vadd.f32 %v1239, %v1463
  %v1465 = vpop.f32.mrb[0].mxu0
  %1466 = vmatprep.mubr.f32.mxu0 %v824
  %1467 = vmatmul.mubr.f32.gmra.mrb[0].mxu0 %v823
  %v1468 = vpop.f32.mrb[0].mxu0
  %v1469 = vadd.f32 %v1244, %v1468
  %v1470 = vpop.f32.mrb[0].mxu0
  %1471 = vmatprep.mubr.f32.mxu0 %v833
  %1472 = vmatmul.mubr.f32.gmra.mrb[0].mxu0 %v832
  %v1473 = vpop.f32.mrb[0].mxu0
  %v1474 = vadd.f32 %v1249, %v1473
  %v1475 = vpop.f32.mrb[0].mxu0
  %1476 = vmatprep.mubr.f32.mxu0 %v842
  %1477 = vmatmul.mubr.f32.gmra.mrb[0].mxu0 %v841
  %v1478 = vpop.f32.mrb[0].mxu0
  %v1479 = vadd.f32 %v1254, %v1478
  %v1480 = vpop.f32.mrb[0].mxu0
  %1481 = vmatprep.mubr.f32.mxu0 %v851
  %1482 = vmatmul.mubr.f32.gmra.mrb[0].mxu0 %v850
  %v1483 = vpop.f32.mrb[0].mxu0
  %v1484 = vadd.f32 %v1259, %v1483
  %v1485 = vpop.f32.mrb[0].mxu0
  %1486 = vmatprep.mubr.f32.mxu0 %v860
  %1487 = vmatmul.mubr.f32.gmra.mrb[0].mxu0 %v859
  %v1488 = vpop.f32.mrb[0].mxu0
  %v1489 = vadd.f32 %v1264, %v1488
  %v1490 = vpop.f32.mrb[0].mxu0
  %1491 = vmatprep.mubr.f32.mxu0 %v869
  %1492 = vmatmul.mubr.f32.gmra.mrb[0].mxu0 %v868
  %v1493 = vpop.f32.mrb[0].mxu0
  %v1494 = vadd.f32 %v1269, %v1493
  %v1495 = vpop.f32.mrb[0].mxu0
  %1496 = vmatprep.mubr.f32.mxu0 %v878
  %1497 = vmatmul.mubr.f32.gmra.mrb[0].mxu0 %v877
  %v1498 = vpop.f32.mrb[0].mxu0
  %v1499 = vadd.f32 %v1274, %v1498
  %v1500 = vpop.f32.mrb[0].mxu0
  %1501 = vmatprep.mubr.f32.mxu0 %v887
  %1502 = vmatmul.mubr.f32.gmra.mrb[0].mxu0 %v886
  %v1503 = vpop.f32.mrb[0].mxu0
  %v1504 = vadd.f32 %v1279, %v1503
  %v1505 = vpop.f32.mrb[0].mxu0
  %1506 = vmatprep.mubr.f32.mxu0 %v896
  %1507 = vmatmul.mubr.f32.gmra.mrb[0].mxu0 %v895
  %v1508 = vpop.f32.mrb[0].mxu0
  %v1509 = vadd.f32 %v1284, %v1508
  %v1510 = vpop.f32.mrb[0].mxu0
  %1511 = vmatprep.mubr.f32.mxu0 %v905
  %1512 = vmatmul.mubr.f32.gmra.mrb[0].mxu0 %v904
  %v1513 = vpop.f32.mrb[0].mxu0
  %v1514 = vadd.f32 %v1289, %v1513
  %v1515 = vpop.f32.mrb[0].mxu0
  %1516 = vmatprep.mubr.f32.mxu0 %v914
  %1517 = vmatmul.mubr.f32.gmra.mrb[0].mxu0 %v913
  %v1518 = vpop.f32.mrb[0].mxu0
  %v1519 = vadd.f32 %v1294, %v1518
  %v1520 = vpop.f32.mrb[0].mxu0
  %1521 = vmatprep.mubr.f32.mxu0 %v923
  %1522 = vmatmul.mubr.f32.gmra.mrb[0].mxu0 %v922
  %v1523 = vpop.f32.mrb[0].mxu0
  %v1524 = vadd.f32 %v1299, %v1523
  %v1525 = vpop.f32.mrb[0].mxu0
  %1526 = vmatprep.mubr.f32.mxu0 %v932
  %1527 = vmatmul.mubr.f32.gmra.mrb[0].mxu0 %v931
  %v1528 = vpop.f32.mrb[0].mxu0
  %v1529 = vadd.f32 %v1304, %v1528
  %v1530 = vpop.f32.mrb[0].mxu0
  %1531 = vdwg.mxu0
  %1532 = vmatprep.subr.mxu0 0.0
  %1533 = vmatpush1.msra.mxu0 %v1002
  %1534 = vmatprep.subr.mxu0 0.0
  %1535 = vmatpush1.msra.mxu0 %v1003
  %1536 = vmatprep.subr.mxu0 0.0
  %1537 = vmatpush1.msra.mxu0 %v1004
  %1538 = vmatprep.subr.mxu0 0.0
  %1539 = vmatpush1.msra.mxu0 %v1005
  %1540 = vmatprep.subr.mxu0 0.0
  %1541 = vmatpush1.msra.mxu0 %v1006
  %1542 = vmatprep.subr.mxu0 0.0
  %1543 = vmatpush1.msra.mxu0 %v1007
  %1544 = vmatprep.subr.mxu0 0.0
  %1545 = vmatpush1.msra.mxu0 %v1008
  %1546 = vmatprep.subr.mxu0 0.0
  %1547 = vmatpush1.msra.mxu0 %v1009
  %1548 = vmatprep.subr.mxu0 0.0
  %1549 = vmatpush1.msra.mxu0 %v1010
  %1550 = vmatprep.subr.mxu0 0.0
  %1551 = vmatpush1.msra.mxu0 %v1011
  %1552 = vmatprep.subr.mxu0 0.0
  %1553 = vmatpush1.msra.mxu0 %v1012
  %1554 = vmatprep.subr.mxu0 0.0
  %1555 = vmatpush1.msra.mxu0 %v1013
  %1556 = vmatprep.subr.mxu0 0.0
  %1557 = vmatpush1.msra.mxu0 %v1014
  %1558 = vmatprep.subr.mxu0 0.0
  %1559 = vmatpush1.msra.mxu0 %v1015
  %1560 = vmatprep.subr.mxu0 0.0
  %1561 = vmatpush1.msra.mxu0 %v1016
  %1562 = vmatprep.subr.mxu0 0.0
  %1563 = vmatpush1.msra.mxu0 %v1017
  %1564 = vmatprep.subr.mxu0 0.0
  %1565 = vmatpush1.msra.mxu0 %v1018
  %1566 = vmatprep.subr.mxu0 0.0
  %1567 = vmatpush1.msra.mxu0 %v1019
  %1568 = vmatprep.subr.mxu0 0.0
  %1569 = vmatpush1.msra.mxu0 %v1020
  %1570 = vmatprep.subr.mxu0 0.0
  %1571 = vmatpush1.msra.mxu0 %v1021
  %1572 = vmatprep.subr.mxu0 0.0
  %1573 = vmatpush1.msra.mxu0 %v1022
  %1574 = vmatprep.subr.mxu0 0.0
  %1575 = vmatpush1.msra.mxu0 %v1023
  %1576 = vmatprep.subr.mxu0 0.0
  %1577 = vmatpush1.msra.mxu0 %v1024
  %1578 = vmatprep.subr.mxu0 0.0
  %1579 = vmatpush1.msra.mxu0 %v1025
  %1580 = vmatprep.subr.mxu0 0.0
  %1581 = vmatpush1.msra.mxu0 %v1026
  %1582 = vmatprep.subr.mxu0 0.0
  %1583 = vmatpush1.msra.mxu0 %v1027
  %1584 = vmatprep.subr.mxu0 0.0
  %1585 = vmatpush1.msra.mxu0 %v1028
  %1586 = vmatprep.subr.mxu0 0.0
  %1587 = vmatpush1.msra.mxu0 %v1029
  %1588 = vmatprep.subr.mxu0 0.0
  %1589 = vmatpush1.msra.mxu0 %v1030
  %1590 = vmatprep.subr.mxu0 0.0
  %1591 = vmatpush1.msra.mxu0 %v1031
  %1592 = vmatprep.subr.mxu0 0.0
  %1593 = vmatpush1.msra.mxu0 %v1032
  %1594 = vmatprep.subr.mxu0 0.0
  %1595 = vmatpush1.msra.mxu0 %v1033
  %1596 = vmatprep.mubr.f32.mxu0 %v655
  %1597 = vmatmul.mubr.f32.gmra.mrb[0].mxu0 %v654
  %v1598 = vpop.f32.mrb[0].mxu0
  %v1599 = vadd.f32 %v1374, %v1598
  %v1600 = vpop.f32.mrb[0].mxu0
  %1601 = vmatprep.mubr.f32.mxu0 %v664
  %1602 = vmatmul.mubr.f32.gmra.mrb[0].mxu0 %v663
  %v1603 = vpop.f32.mrb[0].mxu0
  %v1604 = vadd.f32 %v1379, %v1603
  %v1605 = vpop.f32.mrb[0].mxu0
  %1606 = vmatprep.mubr.f32.mxu0 %v673
  %1607 = vmatmul.mubr.f32.gmra.mrb[0].mxu0 %v672
  %v1608 = vpop.f32.mrb[0].mxu0
  %v1609 = vadd.f32 %v1384, %v1608
  %v1610 = vpop.f32.mrb[0].mxu0
  %1611 = vmatprep.mubr.f32.mxu0 %v682
  %1612 = vmatmul.mubr.f32.gmra.mrb[0].mxu0 %v681
  %v1613 = vpop.f32.mrb[0].mxu0
  %v1614 = vadd.f32 %v1389, %v1613
  %v1615 = vpop.f32.mrb[0].mxu0
  %1616 = vmatprep.mubr.f32.mxu0 %v691
  %1617 = vmatmul.mubr.f32.gmra.mrb[0].mxu0 %v690
  %v1618 = vpop.f32.mrb[0].mxu0
  %v1619 = vadd.f32 %v1394, %v1618
  %v1620 = vpop.f32.mrb[0].mxu0
  %1621 = vmatprep.mubr.f32.mxu0 %v700
  %1622 = vmatmul.mubr.f32.gmra.mrb[0].mxu0 %v699
  %v1623 = vpop.f32.mrb[0].mxu0
  %v1624 = vadd.f32 %v1399, %v1623
  %v1625 = vpop.f32.mrb[0].mxu0
  %1626 = vmatprep.mubr.f32.mxu0 %v709
  %1627 = vmatmul.mubr.f32.gmra.mrb[0].mxu0 %v708
  %v1628 = vpop.f32.mrb[0].mxu0
  %v1629 = vadd.f32 %v1404, %v1628
  %v1630 = vpop.f32.mrb[0].mxu0
  %1631 = vmatprep.mubr.f32.mxu0 %v718
  %1632 = vmatmul.mubr.f32.gmra.mrb[0].mxu0 %v717
  %v1633 = vpop.f32.mrb[0].mxu0
  %v1634 = vadd.f32 %v1409, %v1633
  %v1635 = vpop.f32.mrb[0].mxu0
  %1636 = vmatprep.mubr.f32.mxu0 %v727
  %1637 = vmatmul.mubr.f32.gmra.mrb[0].mxu0 %v726
  %v1638 = vpop.f32.mrb[0].mxu0
  %v1639 = vadd.f32 %v1414, %v1638
  %v1640 = vpop.f32.mrb[0].mxu0
  %1641 = vmatprep.mubr.f32.mxu0 %v736
  %1642 = vmatmul.mubr.f32.gmra.mrb[0].mxu0 %v735
  %v1643 = vpop.f32.mrb[0].mxu0
  %v1644 = vadd.f32 %v1419, %v1643
  %v1645 = vpop.f32.mrb[0].mxu0
  %1646 = vmatprep.mubr.f32.mxu0 %v745
  %1647 = vmatmul.mubr.f32.gmra.mrb[0].mxu0 %v744
  %v1648 = vpop.f32.mrb[0].mxu0
  %v1649 = vadd.f32 %v1424, %v1648
  %v1650 = vpop.f32.mrb[0].mxu0
  %1651 = vmatprep.mubr.f32.mxu0 %v754
  %1652 = vmatmul.mubr.f32.gmra.mrb[0].mxu0 %v753
  %v1653 = vpop.f32.mrb[0].mxu0
  %v1654 = vadd.f32 %v1429, %v1653
  %v1655 = vpop.f32.mrb[0].mxu0
  %1656 = vmatprep.mubr.f32.mxu0 %v763
  %1657 = vmatmul.mubr.f32.gmra.mrb[0].mxu0 %v762
  %v1658 = vpop.f32.mrb[0].mxu0
  %v1659 = vadd.f32 %v1434, %v1658
  %v1660 = vpop.f32.mrb[0].mxu0
  %1661 = vmatprep.mubr.f32.mxu0 %v772
  %1662 = vmatmul.mubr.f32.gmra.mrb[0].mxu0 %v771
  %v1663 = vpop.f32.mrb[0].mxu0
  %v1664 = vadd.f32 %v1439, %v1663
  %v1665 = vpop.f32.mrb[0].mxu0
  %1666 = vmatprep.mubr.f32.mxu0 %v781
  %1667 = vmatmul.mubr.f32.gmra.mrb[0].mxu0 %v780
  %v1668 = vpop.f32.mrb[0].mxu0
  %v1669 = vadd.f32 %v1444, %v1668
  %v1670 = vpop.f32.mrb[0].mxu0
  %1671 = vmatprep.mubr.f32.mxu0 %v790
  %1672 = vmatmul.mubr.f32.gmra.mrb[0].mxu0 %v789
  %v1673 = vpop.f32.mrb[0].mxu0
  %v1674 = vadd.f32 %v1449, %v1673
  %v1675 = vpop.f32.mrb[0].mxu0
  %1676 = vmatprep.mubr.f32.mxu0 %v799
  %1677 = vmatmul.mubr.f32.gmra.mrb[0].mxu0 %v798
  %v1678 = vpop.f32.mrb[0].mxu0
  %v1679 = vadd.f32 %v1454, %v1678
  %v1680 = vpop.f32.mrb[0].mxu0
  %1681 = vmatprep.mubr.f32.mxu0 %v808
  %1682 = vmatmul.mubr.f32.gmra.mrb[0].mxu0 %v807
  %v1683 = vpop.f32.mrb[0].mxu0
  %v1684 = vadd.f32 %v1459, %v1683
  %v1685 = vpop.f32.mrb[0].mxu0
  %1686 = vmatprep.mubr.f32.mxu0 %v817
  %1687 = vmatmul.mubr.f32.gmra.mrb[0].mxu0 %v816
  %v1688 = vpop.f32.mrb[0].mxu0
  %v1689 = vadd.f32 %v1464, %v1688
  %v1690 = vpop.f32.mrb[0].mxu0
  %1691 = vmatprep.mubr.f32.mxu0 %v826
  %1692 = vmatmul.mubr.f32.gmra.mrb[0].mxu0 %v825
  %v1693 = vpop.f32.mrb[0].mxu0
  %v1694 = vadd.f32 %v1469, %v1693
  %v1695 = vpop.f32.mrb[0].mxu0
  %1696 = vmatprep.mubr.f32.mxu0 %v835
  %1697 = vmatmul.mubr.f32.gmra.mrb[0].mxu0 %v834
  %v1698 = vpop.f32.mrb[0].mxu0
  %v1699 = vadd.f32 %v1474, %v1698
  %v1700 = vpop.f32.mrb[0].mxu0
  %1701 = vmatprep.mubr.f32.mxu0 %v844
  %1702 = vmatmul.mubr.f32.gmra.mrb[0].mxu0 %v843
  %v1703 = vpop.f32.mrb[0].mxu0
  %v1704 = vadd.f32 %v1479, %v1703
  %v1705 = vpop.f32.mrb[0].mxu0
  %1706 = vmatprep.mubr.f32.mxu0 %v853
  %1707 = vmatmul.mubr.f32.gmra.mrb[0].mxu0 %v852
  %v1708 = vpop.f32.mrb[0].mxu0
  %v1709 = vadd.f32 %v1484, %v1708
  %v1710 = vpop.f32.mrb[0].mxu0
  %1711 = vmatprep.mubr.f32.mxu0 %v862
  %1712 = vmatmul.mubr.f32.gmra.mrb[0].mxu0 %v861
  %v1713 = vpop.f32.mrb[0].mxu0
  %v1714 = vadd.f32 %v1489, %v1713
  %v1715 = vpop.f32.mrb[0].mxu0
  %1716 = vmatprep.mubr.f32.mxu0 %v871
  %1717 = vmatmul.mubr.f32.gmra.mrb[0].mxu0 %v870
  %v1718 = vpop.f32.mrb[0].mxu0
  %v1719 = vadd.f32 %v1494, %v1718
  %v1720 = vpop.f32.mrb[0].mxu0
  %1721 = vmatprep.mubr.f32.mxu0 %v880
  %1722 = vmatmul.mubr.f32.gmra.mrb[0].mxu0 %v879
  %v1723 = vpop.f32.mrb[0].mxu0
  %v1724 = vadd.f32 %v1499, %v1723
  %v1725 = vpop.f32.mrb[0].mxu0
  %1726 = vmatprep.mubr.f32.mxu0 %v889
  %1727 = vmatmul.mubr.f32.gmra.mrb[0].mxu0 %v888
  %v1728 = vpop.f32.mrb[0].mxu0
  %v1729 = vadd.f32 %v1504, %v1728
  %v1730 = vpop.f32.mrb[0].mxu0
  %1731 = vmatprep.mubr.f32.mxu0 %v898
  %1732 = vmatmul.mubr.f32.gmra.mrb[0].mxu0 %v897
  %v1733 = vpop.f32.mrb[0].mxu0
  %v1734 = vadd.f32 %v1509, %v1733
  %v1735 = vpop.f32.mrb[0].mxu0
  %1736 = vmatprep.mubr.f32.mxu0 %v907
  %1737 = vmatmul.mubr.f32.gmra.mrb[0].mxu0 %v906
  %v1738 = vpop.f32.mrb[0].mxu0
  %v1739 = vadd.f32 %v1514, %v1738
  %v1740 = vpop.f32.mrb[0].mxu0
  %1741 = vmatprep.mubr.f32.mxu0 %v916
  %1742 = vmatmul.mubr.f32.gmra.mrb[0].mxu0 %v915
  %v1743 = vpop.f32.mrb[0].mxu0
  %v1744 = vadd.f32 %v1519, %v1743
  %v1745 = vpop.f32.mrb[0].mxu0
  %1746 = vmatprep.mubr.f32.mxu0 %v925
  %1747 = vmatmul.mubr.f32.gmra.mrb[0].mxu0 %v924
  %v1748 = vpop.f32.mrb[0].mxu0
  %v1749 = vadd.f32 %v1524, %v1748
  %v1750 = vpop.f32.mrb[0].mxu0
  %1751 = vmatprep.mubr.f32.mxu0 %v934
  %1752 = vmatmul.mubr.f32.gmra.mrb[0].mxu0 %v933
  %v1753 = vpop.f32.mrb[0].mxu0
  %v1754 = vadd.f32 %v1529, %v1753
  %v1755 = vpop.f32.mrb[0].mxu0
  %1756 = vdwg.mxu0
  %1757 = vmatprep.subr.mxu0 0.0
  %1758 = vmatpush1.msra.mxu0 %v1034
  %1759 = vmatprep.subr.mxu0 0.0
  %1760 = vmatpush1.msra.mxu0 %v1035
  %1761 = vmatprep.subr.mxu0 0.0
  %1762 = vmatpush1.msra.mxu0 %v1036
  %1763 = vmatprep.subr.mxu0 0.0
  %1764 = vmatpush1.msra.mxu0 %v1037
  %1765 = vmatprep.subr.mxu0 0.0
  %1766 = vmatpush1.msra.mxu0 %v1038
  %1767 = vmatprep.subr.mxu0 0.0
  %1768 = vmatpush1.msra.mxu0 %v1039
  %1769 = vmatprep.subr.mxu0 0.0
  %1770 = vmatpush1.msra.mxu0 %v1040
  %1771 = vmatprep.subr.mxu0 0.0
  %1772 = vmatpush1.msra.mxu0 %v1041
  %1773 = vmatprep.subr.mxu0 0.0
  %1774 = vmatpush1.msra.mxu0 %v1042
  %1775 = vmatprep.subr.mxu0 0.0
  %1776 = vmatpush1.msra.mxu0 %v1043
  %1777 = vmatprep.subr.mxu0 0.0
  %1778 = vmatpush1.msra.mxu0 %v1044
  %1779 = vmatprep.subr.mxu0 0.0
  %1780 = vmatpush1.msra.mxu0 %v1045
  %1781 = vmatprep.subr.mxu0 0.0
  %1782 = vmatpush1.msra.mxu0 %v1046
  %1783 = vmatprep.subr.mxu0 0.0
  %1784 = vmatpush1.msra.mxu0 %v1047
  %1785 = vmatprep.subr.mxu0 0.0
  %1786 = vmatpush1.msra.mxu0 %v1048
  %1787 = vmatprep.subr.mxu0 0.0
  %1788 = vmatpush1.msra.mxu0 %v1049
  %1789 = vmatprep.subr.mxu0 0.0
  %1790 = vmatpush1.msra.mxu0 %v1050
  %1791 = vmatprep.subr.mxu0 0.0
  %1792 = vmatpush1.msra.mxu0 %v1051
  %1793 = vmatprep.subr.mxu0 0.0
  %1794 = vmatpush1.msra.mxu0 %v1052
  %1795 = vmatprep.subr.mxu0 0.0
  %1796 = vmatpush1.msra.mxu0 %v1053
  %1797 = vmatprep.subr.mxu0 0.0
  %1798 = vmatpush1.msra.mxu0 %v1054
  %1799 = vmatprep.subr.mxu0 0.0
  %1800 = vmatpush1.msra.mxu0 %v1055
  %1801 = vmatprep.subr.mxu0 0.0
  %1802 = vmatpush1.msra.mxu0 %v1056
  %1803 = vmatprep.subr.mxu0 0.0
  %1804 = vmatpush1.msra.mxu0 %v1057
  %1805 = vmatprep.subr.mxu0 0.0
  %1806 = vmatpush1.msra.mxu0 %v1058
  %1807 = vmatprep.subr.mxu0 0.0
  %1808 = vmatpush1.msra.mxu0 %v1059
  %1809 = vmatprep.subr.mxu0 0.0
  %1810 = vmatpush1.msra.mxu0 %v1060
  %1811 = vmatprep.subr.mxu0 0.0
  %1812 = vmatpush1.msra.mxu0 %v1061
  %1813 = vmatprep.subr.mxu0 0.0
  %1814 = vmatpush1.msra.mxu0 %v1062
  %1815 = vmatprep.subr.mxu0 0.0
  %1816 = vmatpush1.msra.mxu0 %v1063
  %1817 = vmatprep.subr.mxu0 0.0
  %1818 = vmatpush1.msra.mxu0 %v1064
  %1819 = vmatprep.subr.mxu0 0.0
  %1820 = vmatpush1.msra.mxu0 %v1065
  %1821 = vmatprep.mubr.f32.mxu0 %v657
  %1822 = vmatmul.mubr.f32.gmra.mrb[0].mxu0 %v656
  %v1823 = vpop.f32.mrb[0].mxu0
  %v1824 = vadd.f32 %v1599, %v1823
  %v1825 = vpop.f32.mrb[0].mxu0
  %1826 = vmatprep.mubr.f32.mxu0 %v666
  %1827 = vmatmul.mubr.f32.gmra.mrb[0].mxu0 %v665
  %v1828 = vpop.f32.mrb[0].mxu0
  %v1829 = vadd.f32 %v1604, %v1828
  %v1830 = vpop.f32.mrb[0].mxu0
  %1831 = vmatprep.mubr.f32.mxu0 %v675
  %1832 = vmatmul.mubr.f32.gmra.mrb[0].mxu0 %v674
  %v1833 = vpop.f32.mrb[0].mxu0
  %v1834 = vadd.f32 %v1609, %v1833
  %v1835 = vpop.f32.mrb[0].mxu0
  %1836 = vmatprep.mubr.f32.mxu0 %v684
  %1837 = vmatmul.mubr.f32.gmra.mrb[0].mxu0 %v683
  %v1838 = vpop.f32.mrb[0].mxu0
  %v1839 = vadd.f32 %v1614, %v1838
  %v1840 = vpop.f32.mrb[0].mxu0
  %1841 = vmatprep.mubr.f32.mxu0 %v693
  %1842 = vmatmul.mubr.f32.gmra.mrb[0].mxu0 %v692
  %v1843 = vpop.f32.mrb[0].mxu0
  %v1844 = vadd.f32 %v1619, %v1843
  %v1845 = vpop.f32.mrb[0].mxu0
  %1846 = vmatprep.mubr.f32.mxu0 %v702
  %1847 = vmatmul.mubr.f32.gmra.mrb[0].mxu0 %v701
  %v1848 = vpop.f32.mrb[0].mxu0
  %v1849 = vadd.f32 %v1624, %v1848
  %v1850 = vpop.f32.mrb[0].mxu0
  %1851 = vmatprep.mubr.f32.mxu0 %v711
  %1852 = vmatmul.mubr.f32.gmra.mrb[0].mxu0 %v710
  %v1853 = vpop.f32.mrb[0].mxu0
  %v1854 = vadd.f32 %v1629, %v1853
  %v1855 = vpop.f32.mrb[0].mxu0
  %1856 = vmatprep.mubr.f32.mxu0 %v720
  %1857 = vmatmul.mubr.f32.gmra.mrb[0].mxu0 %v719
  %v1858 = vpop.f32.mrb[0].mxu0
  %v1859 = vadd.f32 %v1634, %v1858
  %v1860 = vpop.f32.mrb[0].mxu0
  %1861 = vmatprep.mubr.f32.mxu0 %v729
  %1862 = vmatmul.mubr.f32.gmra.mrb[0].mxu0 %v728
  %v1863 = vpop.f32.mrb[0].mxu0
  %v1864 = vadd.f32 %v1639, %v1863
  %v1865 = vpop.f32.mrb[0].mxu0
  %1866 = vmatprep.mubr.f32.mxu0 %v738
  %1867 = vmatmul.mubr.f32.gmra.mrb[0].mxu0 %v737
  %v1868 = vpop.f32.mrb[0].mxu0
  %v1869 = vadd.f32 %v1644, %v1868
  %v1870 = vpop.f32.mrb[0].mxu0
  %1871 = vmatprep.mubr.f32.mxu0 %v747
  %1872 = vmatmul.mubr.f32.gmra.mrb[0].mxu0 %v746
  %v1873 = vpop.f32.mrb[0].mxu0
  %v1874 = vadd.f32 %v1649, %v1873
  %v1875 = vpop.f32.mrb[0].mxu0
  %1876 = vmatprep.mubr.f32.mxu0 %v756
  %1877 = vmatmul.mubr.f32.gmra.mrb[0].mxu0 %v755
  %v1878 = vpop.f32.mrb[0].mxu0
  %v1879 = vadd.f32 %v1654, %v1878
  %v1880 = vpop.f32.mrb[0].mxu0
  %1881 = vmatprep.mubr.f32.mxu0 %v765
  %1882 = vmatmul.mubr.f32.gmra.mrb[0].mxu0 %v764
  %v1883 = vpop.f32.mrb[0].mxu0
  %v1884 = vadd.f32 %v1659, %v1883
  %v1885 = vpop.f32.mrb[0].mxu0
  %1886 = vmatprep.mubr.f32.mxu0 %v774
  %1887 = vmatmul.mubr.f32.gmra.mrb[0].mxu0 %v773
  %v1888 = vpop.f32.mrb[0].mxu0
  %v1889 = vadd.f32 %v1664, %v1888
  %v1890 = vpop.f32.mrb[0].mxu0
  %1891 = vmatprep.mubr.f32.mxu0 %v783
  %1892 = vmatmul.mubr.f32.gmra.mrb[0].mxu0 %v782
  %v1893 = vpop.f32.mrb[0].mxu0
  %v1894 = vadd.f32 %v1669, %v1893
  %v1895 = vpop.f32.mrb[0].mxu0
  %1896 = vmatprep.mubr.f32.mxu0 %v792
  %1897 = vmatmul.mubr.f32.gmra.mrb[0].mxu0 %v791
  %v1898 = vpop.f32.mrb[0].mxu0
  %v1899 = vadd.f32 %v1674, %v1898
  %v1900 = vpop.f32.mrb[0].mxu0
  %1901 = vmatprep.mubr.f32.mxu0 %v801
  %1902 = vmatmul.mubr.f32.gmra.mrb[0].mxu0 %v800
  %v1903 = vpop.f32.mrb[0].mxu0
  %v1904 = vadd.f32 %v1679, %v1903
  %v1905 = vpop.f32.mrb[0].mxu0
  %1906 = vmatprep.mubr.f32.mxu0 %v810
  %1907 = vmatmul.mubr.f32.gmra.mrb[0].mxu0 %v809
  %v1908 = vpop.f32.mrb[0].mxu0
  %v1909 = vadd.f32 %v1684, %v1908
  %v1910 = vpop.f32.mrb[0].mxu0
  %1911 = vmatprep.mubr.f32.mxu0 %v819
  %1912 = vmatmul.mubr.f32.gmra.mrb[0].mxu0 %v818
  %v1913 = vpop.f32.mrb[0].mxu0
  %v1914 = vadd.f32 %v1689, %v1913
  %v1915 = vpop.f32.mrb[0].mxu0
  %1916 = vmatprep.mubr.f32.mxu0 %v828
  %1917 = vmatmul.mubr.f32.gmra.mrb[0].mxu0 %v827
  %v1918 = vpop.f32.mrb[0].mxu0
  %v1919 = vadd.f32 %v1694, %v1918
  %v1920 = vpop.f32.mrb[0].mxu0
  %1921 = vmatprep.mubr.f32.mxu0 %v837
  %1922 = vmatmul.mubr.f32.gmra.mrb[0].mxu0 %v836
  %v1923 = vpop.f32.mrb[0].mxu0
  %v1924 = vadd.f32 %v1699, %v1923
  %v1925 = vpop.f32.mrb[0].mxu0
  %1926 = vmatprep.mubr.f32.mxu0 %v846
  %1927 = vmatmul.mubr.f32.gmra.mrb[0].mxu0 %v845
  %v1928 = vpop.f32.mrb[0].mxu0
  %v1929 = vadd.f32 %v1704, %v1928
  %v1930 = vpop.f32.mrb[0].mxu0
  %1931 = vmatprep.mubr.f32.mxu0 %v855
  %1932 = vmatmul.mubr.f32.gmra.mrb[0].mxu0 %v854
  %v1933 = vpop.f32.mrb[0].mxu0
  %v1934 = vadd.f32 %v1709, %v1933
  %v1935 = vpop.f32.mrb[0].mxu0
  %1936 = vmatprep.mubr.f32.mxu0 %v864
  %1937 = vmatmul.mubr.f32.gmra.mrb[0].mxu0 %v863
  %v1938 = vpop.f32.mrb[0].mxu0
  %v1939 = vadd.f32 %v1714, %v1938
  %v1940 = vpop.f32.mrb[0].mxu0
  %1941 = vmatprep.mubr.f32.mxu0 %v873
  %1942 = vmatmul.mubr.f32.gmra.mrb[0].mxu0 %v872
  %v1943 = vpop.f32.mrb[0].mxu0
  %v1944 = vadd.f32 %v1719, %v1943
  %v1945 = vpop.f32.mrb[0].mxu0
  %1946 = vmatprep.mubr.f32.mxu0 %v882
  %1947 = vmatmul.mubr.f32.gmra.mrb[0].mxu0 %v881
  %v1948 = vpop.f32.mrb[0].mxu0
  %v1949 = vadd.f32 %v1724, %v1948
  %v1950 = vpop.f32.mrb[0].mxu0
  %1951 = vmatprep.mubr.f32.mxu0 %v891
  %1952 = vmatmul.mubr.f32.gmra.mrb[0].mxu0 %v890
  %v1953 = vpop.f32.mrb[0].mxu0
  %v1954 = vadd.f32 %v1729, %v1953
  %v1955 = vpop.f32.mrb[0].mxu0
  %1956 = vmatprep.mubr.f32.mxu0 %v900
  %1957 = vmatmul.mubr.f32.gmra.mrb[0].mxu0 %v899
  %v1958 = vpop.f32.mrb[0].mxu0
  %v1959 = vadd.f32 %v1734, %v1958
  %v1960 = vpop.f32.mrb[0].mxu0
  %1961 = vmatprep.mubr.f32.mxu0 %v909
  %1962 = vmatmul.mubr.f32.gmra.mrb[0].mxu0 %v908
  %v1963 = vpop.f32.mrb[0].mxu0
  %v1964 = vadd.f32 %v1739, %v1963
  %v1965 = vpop.f32.mrb[0].mxu0
  %1966 = vmatprep.mubr.f32.mxu0 %v918
  %1967 = vmatmul.mubr.f32.gmra.mrb[0].mxu0 %v917
  %v1968 = vpop.f32.mrb[0].mxu0
  %v1969 = vadd.f32 %v1744, %v1968
  %v1970 = vpop.f32.mrb[0].mxu0
  %1971 = vmatprep.mubr.f32.mxu0 %v927
  %1972 = vmatmul.mubr.f32.gmra.mrb[0].mxu0 %v926
  %v1973 = vpop.f32.mrb[0].mxu0
  %v1974 = vadd.f32 %v1749, %v1973
  %v1975 = vpop.f32.mrb[0].mxu0
  %1976 = vmatprep.mubr.f32.mxu0 %v936
  %1977 = vmatmul.mubr.f32.gmra.mrb[0].mxu0 %v935
  %v1978 = vpop.f32.mrb[0].mxu0
  %v1979 = vadd.f32 %v1754, %v1978
  %v1980 = vpop.f32.mrb[0].mxu0
  %1981 = vdwg.mxu0
  %1982 = vmatprep.subr.mxu0 0.0
  %1983 = vmatpush1.msra.mxu0 %v1066
  %1984 = vmatprep.subr.mxu0 0.0
  %1985 = vmatpush1.msra.mxu0 %v1067
  %1986 = vmatprep.subr.mxu0 0.0
  %1987 = vmatpush1.msra.mxu0 %v1068
  %1988 = vmatprep.subr.mxu0 0.0
  %1989 = vmatpush1.msra.mxu0 %v1069
  %1990 = vmatprep.subr.mxu0 0.0
  %1991 = vmatpush1.msra.mxu0 %v1070
  %1992 = vmatprep.subr.mxu0 0.0
  %1993 = vmatpush1.msra.mxu0 %v1071
  %1994 = vmatprep.subr.mxu0 0.0
  %1995 = vmatpush1.msra.mxu0 %v1072
  %1996 = vmatprep.subr.mxu0 0.0
  %1997 = vmatpush1.msra.mxu0 %v1073
  %1998 = vmatprep.subr.mxu0 0.0
  %1999 = vmatpush1.msra.mxu0 %v1074
  %2000 = vmatprep.subr.mxu0 0.0
  %2001 = vmatpush1.msra.mxu0 %v1075
  %2002 = vmatprep.subr.mxu0 0.0
  %2003 = vmatpush1.msra.mxu0 %v1076
  %2004 = vmatprep.subr.mxu0 0.0
  %2005 = vmatpush1.msra.mxu0 %v1077
  %2006 = vmatprep.subr.mxu0 0.0
  %2007 = vmatpush1.msra.mxu0 %v1078
  %2008 = vmatprep.subr.mxu0 0.0
  %2009 = vmatpush1.msra.mxu0 %v1079
  %2010 = vmatprep.subr.mxu0 0.0
  %2011 = vmatpush1.msra.mxu0 %v1080
  %2012 = vmatprep.subr.mxu0 0.0
  %2013 = vmatpush1.msra.mxu0 %v1081
  %2014 = vmatprep.subr.mxu0 0.0
  %2015 = vmatpush1.msra.mxu0 0.0
  %2016 = vmatprep.subr.mxu0 0.0
  %2017 = vmatpush1.msra.mxu0 0.0
  %2018 = vmatprep.subr.mxu0 0.0
  %2019 = vmatpush1.msra.mxu0 0.0
  %2020 = vmatprep.subr.mxu0 0.0
  %2021 = vmatpush1.msra.mxu0 0.0
  %2022 = vmatprep.subr.mxu0 0.0
  %2023 = vmatpush1.msra.mxu0 0.0
  %2024 = vmatprep.subr.mxu0 0.0
  %2025 = vmatpush1.msra.mxu0 0.0
  %2026 = vmatprep.subr.mxu0 0.0
  %2027 = vmatpush1.msra.mxu0 0.0
  %2028 = vmatprep.subr.mxu0 0.0
  %2029 = vmatpush1.msra.mxu0 0.0
  %2030 = vmatprep.subr.mxu0 0.0
  %2031 = vmatpush1.msra.mxu0 0.0
  %2032 = vmatprep.subr.mxu0 0.0
  %2033 = vmatpush1.msra.mxu0 0.0
  %2034 = vmatprep.subr.mxu0 0.0
  %2035 = vmatpush1.msra.mxu0 0.0
  %2036 = vmatprep.subr.mxu0 0.0
  %2037 = vmatpush1.msra.mxu0 0.0
  %2038 = vmatprep.subr.mxu0 0.0
  %2039 = vmatpush1.msra.mxu0 0.0
  %2040 = vmatprep.subr.mxu0 0.0
  %2041 = vmatpush1.msra.mxu0 0.0
  %2042 = vmatprep.subr.mxu0 0.0
  %2043 = vmatpush1.msra.mxu0 0.0
  %2044 = vmatprep.subr.mxu0 0.0
  %2045 = vmatpush1.msra.mxu0 0.0
  %2046 = vmatprep.mubr.f32.mxu0 0.0
  %2047 = vmatmul.mubr.f32.gmra.mrb[0].mxu0 %v658
  %v2048 = vpop.f32.mrb[0].mxu0
  %v2049 = vadd.f32 %v1824, %v2048
  %v2050 = vpop.f32.mrb[0].mxu0
  %2051 = vmatprep.mubr.f32.mxu0 0.0
  %2052 = vmatmul.mubr.f32.gmra.mrb[0].mxu0 %v667
  %v2053 = vpop.f32.mrb[0].mxu0
  %v2054 = vadd.f32 %v1829, %v2053
  %v2055 = vpop.f32.mrb[0].mxu0
  %2056 = vmatprep.mubr.f32.mxu0 0.0
  %2057 = vmatmul.mubr.f32.gmra.mrb[0].mxu0 %v676
  %v2058 = vpop.f32.mrb[0].mxu0
  %v2059 = vadd.f32 %v1834, %v2058
  %v2060 = vpop.f32.mrb[0].mxu0
  %2061 = vmatprep.mubr.f32.mxu0 0.0
  %2062 = vmatmul.mubr.f32.gmra.mrb[0].mxu0 %v685
  %v2063 = vpop.f32.mrb[0].mxu0
  %v2064 = vadd.f32 %v1839, %v2063
  %v2065 = vpop.f32.mrb[0].mxu0
  %2066 = vmatprep.mubr.f32.mxu0 0.0
  %2067 = vmatmul.mubr.f32.gmra.mrb[0].mxu0 %v694
  %v2068 = vpop.f32.mrb[0].mxu0
  %v2069 = vadd.f32 %v1844, %v2068
  %v2070 = vpop.f32.mrb[0].mxu0
  %2071 = vmatprep.mubr.f32.mxu0 0.0
  %2072 = vmatmul.mubr.f32.gmra.mrb[0].mxu0 %v703
  %v2073 = vpop.f32.mrb[0].mxu0
  %v2074 = vadd.f32 %v1849, %v2073
  %v2075 = vpop.f32.mrb[0].mxu0
  %2076 = vmatprep.mubr.f32.mxu0 0.0
  %2077 = vmatmul.mubr.f32.gmra.mrb[0].mxu0 %v712
  %v2078 = vpop.f32.mrb[0].mxu0
  %v2079 = vadd.f32 %v1854, %v2078
  %v2080 = vpop.f32.mrb[0].mxu0
  %2081 = vmatprep.mubr.f32.mxu0 0.0
  %2082 = vmatmul.mubr.f32.gmra.mrb[0].mxu0 %v721
  %v2083 = vpop.f32.mrb[0].mxu0
  %v2084 = vadd.f32 %v1859, %v2083
  %v2085 = vpop.f32.mrb[0].mxu0
  %2086 = vmatprep.mubr.f32.mxu0 0.0
  %2087 = vmatmul.mubr.f32.gmra.mrb[0].mxu0 %v730
  %v2088 = vpop.f32.mrb[0].mxu0
  %v2089 = vadd.f32 %v1864, %v2088
  %v2090 = vpop.f32.mrb[0].mxu0
  %2091 = vmatprep.mubr.f32.mxu0 0.0
  %2092 = vmatmul.mubr.f32.gmra.mrb[0].mxu0 %v739
  %v2093 = vpop.f32.mrb[0].mxu0
  %v2094 = vadd.f32 %v1869, %v2093
  %v2095 = vpop.f32.mrb[0].mxu0
  %2096 = vmatprep.mubr.f32.mxu0 0.0
  %2097 = vmatmul.mubr.f32.gmra.mrb[0].mxu0 %v748
  %v2098 = vpop.f32.mrb[0].mxu0
  %v2099 = vadd.f32 %v1874, %v2098
  %v2100 = vpop.f32.mrb[0].mxu0
  %2101 = vmatprep.mubr.f32.mxu0 0.0
  %2102 = vmatmul.mubr.f32.gmra.mrb[0].mxu0 %v757
  %v2103 = vpop.f32.mrb[0].mxu0
  %v2104 = vadd.f32 %v1879, %v2103
  %v2105 = vpop.f32.mrb[0].mxu0
  %2106 = vmatprep.mubr.f32.mxu0 0.0
  %2107 = vmatmul.mubr.f32.gmra.mrb[0].mxu0 %v766
  %v2108 = vpop.f32.mrb[0].mxu0
  %v2109 = vadd.f32 %v1884, %v2108
  %v2110 = vpop.f32.mrb[0].mxu0
  %2111 = vmatprep.mubr.f32.mxu0 0.0
  %2112 = vmatmul.mubr.f32.gmra.mrb[0].mxu0 %v775
  %v2113 = vpop.f32.mrb[0].mxu0
  %v2114 = vadd.f32 %v1889, %v2113
  %v2115 = vpop.f32.mrb[0].mxu0
  %2116 = vmatprep.mubr.f32.mxu0 0.0
  %2117 = vmatmul.mubr.f32.gmra.mrb[0].mxu0 %v784
  %v2118 = vpop.f32.mrb[0].mxu0
  %v2119 = vadd.f32 %v1894, %v2118
  %v2120 = vpop.f32.mrb[0].mxu0
  %2121 = vmatprep.mubr.f32.mxu0 0.0
  %2122 = vmatmul.mubr.f32.gmra.mrb[0].mxu0 %v793
  %v2123 = vpop.f32.mrb[0].mxu0
  %v2124 = vadd.f32 %v1899, %v2123
  %v2125 = vpop.f32.mrb[0].mxu0
  %2126 = vmatprep.mubr.f32.mxu0 0.0
  %2127 = vmatmul.mubr.f32.gmra.mrb[0].mxu0 %v802
  %v2128 = vpop.f32.mrb[0].mxu0
  %v2129 = vadd.f32 %v1904, %v2128
  %v2130 = vpop.f32.mrb[0].mxu0
  %2131 = vmatprep.mubr.f32.mxu0 0.0
  %2132 = vmatmul.mubr.f32.gmra.mrb[0].mxu0 %v811
  %v2133 = vpop.f32.mrb[0].mxu0
  %v2134 = vadd.f32 %v1909, %v2133
  %v2135 = vpop.f32.mrb[0].mxu0
  %2136 = vmatprep.mubr.f32.mxu0 0.0
  %2137 = vmatmul.mubr.f32.gmra.mrb[0].mxu0 %v820
  %v2138 = vpop.f32.mrb[0].mxu0
  %v2139 = vadd.f32 %v1914, %v2138
  %v2140 = vpop.f32.mrb[0].mxu0
  %2141 = vmatprep.mubr.f32.mxu0 0.0
  %2142 = vmatmul.mubr.f32.gmra.mrb[0].mxu0 %v829
  %v2143 = vpop.f32.mrb[0].mxu0
  %v2144 = vadd.f32 %v1919, %v2143
  %v2145 = vpop.f32.mrb[0].mxu0
  %2146 = vmatprep.mubr.f32.mxu0 0.0
  %2147 = vmatmul.mubr.f32.gmra.mrb[0].mxu0 %v838
  %v2148 = vpop.f32.mrb[0].mxu0
  %v2149 = vadd.f32 %v1924, %v2148
  %v2150 = vpop.f32.mrb[0].mxu0
  %2151 = vmatprep.mubr.f32.mxu0 0.0
  %2152 = vmatmul.mubr.f32.gmra.mrb[0].mxu0 %v847
  %v2153 = vpop.f32.mrb[0].mxu0
  %v2154 = vadd.f32 %v1929, %v2153
  %v2155 = vpop.f32.mrb[0].mxu0
  %2156 = vmatprep.mubr.f32.mxu0 0.0
  %2157 = vmatmul.mubr.f32.gmra.mrb[0].mxu0 %v856
  %v2158 = vpop.f32.mrb[0].mxu0
  %v2159 = vadd.f32 %v1934, %v2158
  %v2160 = vpop.f32.mrb[0].mxu0
  %2161 = vmatprep.mubr.f32.mxu0 0.0
  %2162 = vmatmul.mubr.f32.gmra.mrb[0].mxu0 %v865
  %v2163 = vpop.f32.mrb[0].mxu0
  %v2164 = vadd.f32 %v1939, %v2163
  %v2165 = vpop.f32.mrb[0].mxu0
  %2166 = vmatprep.mubr.f32.mxu0 0.0
  %2167 = vmatmul.mubr.f32.gmra.mrb[0].mxu0 %v874
  %v2168 = vpop.f32.mrb[0].mxu0
  %v2169 = vadd.f32 %v1944, %v2168
  %v2170 = vpop.f32.mrb[0].mxu0
  %2171 = vmatprep.mubr.f32.mxu0 0.0
  %2172 = vmatmul.mubr.f32.gmra.mrb[0].mxu0 %v883
  %v2173 = vpop.f32.mrb[0].mxu0
  %v2174 = vadd.f32 %v1949, %v2173
  %v2175 = vpop.f32.mrb[0].mxu0
  %2176 = vmatprep.mubr.f32.mxu0 0.0
  %2177 = vmatmul.mubr.f32.gmra.mrb[0].mxu0 %v892
  %v2178 = vpop.f32.mrb[0].mxu0
  %v2179 = vadd.f32 %v1954, %v2178
  %v2180 = vpop.f32.mrb[0].mxu0
  %2181 = vmatprep.mubr.f32.mxu0 0.0
  %2182 = vmatmul.mubr.f32.gmra.mrb[0].mxu0 %v901
  %v2183 = vpop.f32.mrb[0].mxu0
  %v2184 = vadd.f32 %v1959, %v2183
  %v2185 = vpop.f32.mrb[0].mxu0
  %2186 = vmatprep.mubr.f32.mxu0 0.0
  %2187 = vmatmul.mubr.f32.gmra.mrb[0].mxu0 %v910
  %v2188 = vpop.f32.mrb[0].mxu0
  %v2189 = vadd.f32 %v1964, %v2188
  %v2190 = vpop.f32.mrb[0].mxu0
  %2191 = vmatprep.mubr.f32.mxu0 0.0
  %2192 = vmatmul.mubr.f32.gmra.mrb[0].mxu0 %v919
  %v2193 = vpop.f32.mrb[0].mxu0
  %v2194 = vadd.f32 %v1969, %v2193
  %v2195 = vpop.f32.mrb[0].mxu0
  %2196 = vmatprep.mubr.f32.mxu0 0.0
  %2197 = vmatmul.mubr.f32.gmra.mrb[0].mxu0 %v928
  %v2198 = vpop.f32.mrb[0].mxu0
  %v2199 = vadd.f32 %v1974, %v2198
  %v2200 = vpop.f32.mrb[0].mxu0
  %2201 = vmatprep.mubr.f32.mxu0 0.0
  %2202 = vmatmul.mubr.f32.gmra.mrb[0].mxu0 %v937
  %v2203 = vpop.f32.mrb[0].mxu0
  %v2204 = vadd.f32 %v1979, %v2203
  %v2205 = vpop.f32.mrb[0].mxu0
  %2206 = vdwg.mxu0
  %v2207 = vadd.f32 %v2049, %v2054
  %v2208 = vadd.f32 %v2207, %v2059
  %v2209 = vadd.f32 %v2208, %v2064
  %v2210 = vadd.f32 %v2209, %v2069
  %v2211 = vadd.f32 %v2210, %v2074
  %v2212 = vadd.f32 %v2211, %v2079
  %v2213 = vadd.f32 %v2212, %v2084
  %v2214 = vadd.f32 %v2213, %v2089
  %v2215 = vadd.f32 %v2214, %v2094
  %v2216 = vadd.f32 %v2215, %v2099
  %v2217 = vadd.f32 %v2216, %v2104
  %v2218 = vadd.f32 %v2217, %v2109
  %v2219 = vadd.f32 %v2218, %v2114
  %v2220 = vadd.f32 %v2219, %v2119
  %v2221 = vadd.f32 %v2220, %v2124
  %v2222 = vadd.f32 %v2221, %v2129
  %v2223 = vadd.f32 %v2222, %v2134
  %v2224 = vadd.f32 %v2223, %v2139
  %v2225 = vadd.f32 %v2224, %v2144
  %v2226 = vadd.f32 %v2225, %v2149
  %v2227 = vadd.f32 %v2226, %v2154
  %v2228 = vadd.f32 %v2227, %v2159
  %v2229 = vadd.f32 %v2228, %v2164
  %v2230 = vadd.f32 %v2229, %v2169
  %v2231 = vadd.f32 %v2230, %v2174
  %v2232 = vadd.f32 %v2231, %v2179
  %v2233 = vadd.f32 %v2232, %v2184
  %v2234 = vadd.f32 %v2233, %v2189
  %v2235 = vadd.f32 %v2234, %v2194
  %v2236 = vadd.f32 %v2235, %v2199
  %v2237 = vadd.f32 %v2236, %v2204
  %v2238 = vrot.slane %v2237, 4
  %v2239 = vadd.f32 %v2237, %v2238
  %v2240 = vrot.slane %v2239, 2
  %v2241 = vadd.f32 %v2239, %v2240
  %v2242 = vrot.slane %v2241, 1
  %v2243 = vadd.f32 %v2241, %v2242
  %v2244 = vmul.f32 %v2049, %v2049
  %v2245 = vmul.f32 %v2054, %v2054
  %v2246 = vmul.f32 %v2059, %v2059
  %v2247 = vmul.f32 %v2064, %v2064
  %v2248 = vmul.f32 %v2069, %v2069
  %v2249 = vmul.f32 %v2074, %v2074
  %v2250 = vmul.f32 %v2079, %v2079
  %v2251 = vmul.f32 %v2084, %v2084
  %v2252 = vmul.f32 %v2089, %v2089
  %v2253 = vmul.f32 %v2094, %v2094
  %v2254 = vmul.f32 %v2099, %v2099
  %v2255 = vmul.f32 %v2104, %v2104
  %v2256 = vmul.f32 %v2109, %v2109
  %v2257 = vmul.f32 %v2114, %v2114
  %v2258 = vmul.f32 %v2119, %v2119
  %v2259 = vmul.f32 %v2124, %v2124
  %v2260 = vmul.f32 %v2129, %v2129
  %v2261 = vmul.f32 %v2134, %v2134
  %v2262 = vmul.f32 %v2139, %v2139
  %v2263 = vmul.f32 %v2144, %v2144
  %v2264 = vmul.f32 %v2149, %v2149
  %v2265 = vmul.f32 %v2154, %v2154
  %v2266 = vmul.f32 %v2159, %v2159
  %v2267 = vmul.f32 %v2164, %v2164
  %v2268 = vmul.f32 %v2169, %v2169
  %v2269 = vmul.f32 %v2174, %v2174
  %v2270 = vmul.f32 %v2179, %v2179
  %v2271 = vmul.f32 %v2184, %v2184
  %v2272 = vmul.f32 %v2189, %v2189
  %v2273 = vmul.f32 %v2194, %v2194
  %v2274 = vmul.f32 %v2199, %v2199
  %v2275 = vmul.f32 %v2204, %v2204
  %v2276 = vadd.f32 %v2244, %v2245
  %v2277 = vadd.f32 %v2276, %v2246
  %v2278 = vadd.f32 %v2277, %v2247
  %v2279 = vadd.f32 %v2278, %v2248
  %v2280 = vadd.f32 %v2279, %v2249
  %v2281 = vadd.f32 %v2280, %v2250
  %v2282 = vadd.f32 %v2281, %v2251
  %v2283 = vadd.f32 %v2282, %v2252
  %v2284 = vadd.f32 %v2283, %v2253
  %v2285 = vadd.f32 %v2284, %v2254
  %v2286 = vadd.f32 %v2285, %v2255
  %v2287 = vadd.f32 %v2286, %v2256
  %v2288 = vadd.f32 %v2287, %v2257
  %v2289 = vadd.f32 %v2288, %v2258
  %v2290 = vadd.f32 %v2289, %v2259
  %v2291 = vadd.f32 %v2290, %v2260
  %v2292 = vadd.f32 %v2291, %v2261
  %v2293 = vadd.f32 %v2292, %v2262
  %v2294 = vadd.f32 %v2293, %v2263
  %v2295 = vadd.f32 %v2294, %v2264
  %v2296 = vadd.f32 %v2295, %v2265
  %v2297 = vadd.f32 %v2296, %v2266
  %v2298 = vadd.f32 %v2297, %v2267
  %v2299 = vadd.f32 %v2298, %v2268
  %v2300 = vadd.f32 %v2299, %v2269
  %v2301 = vadd.f32 %v2300, %v2270
  %v2302 = vadd.f32 %v2301, %v2271
  %v2303 = vadd.f32 %v2302, %v2272
  %v2304 = vadd.f32 %v2303, %v2273
  %v2305 = vadd.f32 %v2304, %v2274
  %v2306 = vadd.f32 %v2305, %v2275
  %v2307 = vrot.slane %v2306, 4
  %v2308 = vadd.f32 %v2306, %v2307
  %v2309 = vrot.slane %v2308, 2
  %v2310 = vadd.f32 %v2308, %v2309
  %v2311 = vrot.slane %v2310, 1
  %v2312 = vadd.f32 %v2310, %v2311
  %v2313 = vmul.f32 %v23, 256.0
  %v2314 = vadd.f32 %v2243, %v2313
  %v2315 = vmul.f32 %v23, 2.0
  %v2316 = vmul.f32 %v2315, %v2243
  %v2317 = vadd.f32 %v2312, %v2316
  %v2318 = vmul.f32 %v23, %v23
  %v2319 = vmul.f32 %v2318, 256.0
  %v2320 = vadd.f32 %v2317, %v2319
  %v2322 = vrot.slane %v2320, 7
  %vm2324 = vcmask 1040384
  %v2325 = vsel %vm2324, %v2314, %v2322
  %v2326 = vld [vmem:[%s4] sm:$0xff]
  %v2327 = vld [vmem:[%s4 + $0x8] sm:$0xff]
  %v2328 = vld [vmem:[%s4 + $0x10] sm:$0xff]
  %v2329 = vld [vmem:[%s4 + $0x18] sm:$0xff]
  %v2330 = vld [vmem:[%s4 + $0x20] sm:$0xff]
  %v2331 = vld [vmem:[%s4 + $0x28] sm:$0xff]
  %v2332 = vld [vmem:[%s4 + $0x30] sm:$0xff]
  %v2333 = vld [vmem:[%s4 + $0x38] sm:$0xff]
  %v2334 = vld [vmem:[%s4 + $0x40] sm:$0xff]
  %v2335 = vld [vmem:[%s4 + $0x48] sm:$0xff]
  %v2336 = vld [vmem:[%s4 + $0x50] sm:$0xff]
  %v2337 = vld [vmem:[%s4 + $0x58] sm:$0xff]
  %v2338 = vld [vmem:[%s4 + $0x60] sm:$0xff]
  %v2339 = vld [vmem:[%s4 + $0x68] sm:$0xff]
  %v2340 = vld [vmem:[%s4 + $0x70] sm:$0xff]
  %v2341 = vld [vmem:[%s4 + $0x78] sm:$0xff]
  %2342 = vmatprep.subr.mxu0 0.0
  %2343 = vmatpush1.msra.mxu0 %v2326
  %2344 = vmatprep.subr.mxu0 0.0
  %2345 = vmatpush1.msra.mxu0 %v2327
  %2346 = vmatprep.subr.mxu0 0.0
  %2347 = vmatpush1.msra.mxu0 %v2328
  %2348 = vmatprep.subr.mxu0 0.0
  %2349 = vmatpush1.msra.mxu0 %v2329
  %2350 = vmatprep.subr.mxu0 0.0
  %2351 = vmatpush1.msra.mxu0 %v2330
  %2352 = vmatprep.subr.mxu0 0.0
  %2353 = vmatpush1.msra.mxu0 %v2331
  %2354 = vmatprep.subr.mxu0 0.0
  %2355 = vmatpush1.msra.mxu0 %v2332
  %2356 = vmatprep.subr.mxu0 0.0
  %2357 = vmatpush1.msra.mxu0 %v2333
  %2358 = vmatprep.subr.mxu0 0.0
  %2359 = vmatpush1.msra.mxu0 %v2334
  %2360 = vmatprep.subr.mxu0 0.0
  %2361 = vmatpush1.msra.mxu0 %v2335
  %2362 = vmatprep.subr.mxu0 0.0
  %2363 = vmatpush1.msra.mxu0 %v2336
  %2364 = vmatprep.subr.mxu0 0.0
  %2365 = vmatpush1.msra.mxu0 %v2337
  %2366 = vmatprep.subr.mxu0 0.0
  %2367 = vmatpush1.msra.mxu0 %v2338
  %2368 = vmatprep.subr.mxu0 0.0
  %2369 = vmatpush1.msra.mxu0 %v2339
  %2370 = vmatprep.subr.mxu0 0.0
  %2371 = vmatpush1.msra.mxu0 %v2340
  %2372 = vmatprep.subr.mxu0 0.0
  %2373 = vmatpush1.msra.mxu0 %v2341
  %2374 = vmatprep.subr.mxu0 0.0
  %2375 = vmatpush1.msra.mxu0 0.0
  %2376 = vmatprep.subr.mxu0 0.0
  %2377 = vmatpush1.msra.mxu0 0.0
  %2378 = vmatprep.subr.mxu0 0.0
  %2379 = vmatpush1.msra.mxu0 0.0
  %2380 = vmatprep.subr.mxu0 0.0
  %2381 = vmatpush1.msra.mxu0 0.0
  %2382 = vmatprep.subr.mxu0 0.0
  %2383 = vmatpush1.msra.mxu0 0.0
  %2384 = vmatprep.subr.mxu0 0.0
  %2385 = vmatpush1.msra.mxu0 0.0
  %2386 = vmatprep.subr.mxu0 0.0
  %2387 = vmatpush1.msra.mxu0 0.0
  %2388 = vmatprep.subr.mxu0 0.0
  %2389 = vmatpush1.msra.mxu0 0.0
  %2390 = vmatprep.subr.mxu0 0.0
  %2391 = vmatpush1.msra.mxu0 0.0
  %2392 = vmatprep.subr.mxu0 0.0
  %2393 = vmatpush1.msra.mxu0 0.0
  %2394 = vmatprep.subr.mxu0 0.0
  %2395 = vmatpush1.msra.mxu0 0.0
  %2396 = vmatprep.subr.mxu0 0.0
  %2397 = vmatpush1.msra.mxu0 0.0
  %2398 = vmatprep.subr.mxu0 0.0
  %2399 = vmatpush1.msra.mxu0 0.0
  %2400 = vmatprep.subr.mxu0 0.0
  %2401 = vmatpush1.msra.mxu0 0.0
  %2402 = vmatprep.subr.mxu0 0.0
  %2403 = vmatpush1.msra.mxu0 0.0
  %2404 = vmatprep.subr.mxu0 0.0
  %2405 = vmatpush1.msra.mxu0 0.0
  %2406 = vmatprep.mubr.f32.mxu0 0.0
  %2407 = vmatmul.mubr.f32.gmra.mrb[0].mxu0 %v2325
  %v2408 = vpop.f32.mrb[0].mxu0
  %v2409 = vadd.f32 0.0, %v2408
  %v2410 = vpop.f32.mrb[0].mxu0
  %2411 = vdwg.mxu0
  %v2412 = vmul.f32 %v2409, 0.0009765625
  %v2413 = vmul.f32 %v2412, %v2412
  %v2415 = vrot.slane %v2413, 7
  %v2417 = vsub.f32 %v2412, %v2415
  %v2418 = vadd.f32 %v2417, 1e-05
  %v2419 = vrsqrt.pop %v2418
  %v2420 = vsel %vm2324, %v2412, %v2419
  %v2421 = vld [vmem:[%s5] sm:$0xff]
  %v2422 = vld [vmem:[%s5 + $0x8] sm:$0xff]
  %v2423 = vld [vmem:[%s5 + $0x10] sm:$0xff]
  %v2424 = vld [vmem:[%s5 + $0x18] sm:$0xff]
  %vm2425 = vcmask 261120
  %v2427 = vsel %vm2425, %v2420, 0
  %2429 = vmatprep.subr.mxu0 0.0
  %2430 = vmatpush1.msra.mxu0 %v2421
  %2431 = vmatprep.subr.mxu0 0.0
  %2432 = vmatpush1.msra.mxu0 %v2422
  %2433 = vmatprep.subr.mxu0 0.0
  %2434 = vmatpush1.msra.mxu0 %v2423
  %2435 = vmatprep.subr.mxu0 0.0
  %2436 = vmatpush1.msra.mxu0 %v2424
  %2437 = vmatprep.subr.mxu0 0.0
  %2438 = vmatpush1.msra.mxu0 0.0
  %2439 = vmatprep.subr.mxu0 0.0
  %2440 = vmatpush1.msra.mxu0 0.0
  %2441 = vmatprep.subr.mxu0 0.0
  %2442 = vmatpush1.msra.mxu0 0.0
  %2443 = vmatprep.subr.mxu0 0.0
  %2444 = vmatpush1.msra.mxu0 0.0
  %2445 = vmatprep.subr.mxu0 0.0
  %2446 = vmatpush1.msra.mxu0 0.0
  %2447 = vmatprep.subr.mxu0 0.0
  %2448 = vmatpush1.msra.mxu0 0.0
  %2449 = vmatprep.subr.mxu0 0.0
  %2450 = vmatpush1.msra.mxu0 0.0
  %2451 = vmatprep.subr.mxu0 0.0
  %2452 = vmatpush1.msra.mxu0 0.0
  %2453 = vmatprep.subr.mxu0 0.0
  %2454 = vmatpush1.msra.mxu0 0.0
  %2455 = vmatprep.subr.mxu0 0.0
  %2456 = vmatpush1.msra.mxu0 0.0
  %2457 = vmatprep.subr.mxu0 0.0
  %2458 = vmatpush1.msra.mxu0 0.0
  %2459 = vmatprep.subr.mxu0 0.0
  %2460 = vmatpush1.msra.mxu0 0.0
  %2461 = vmatprep.subr.mxu0 0.0
  %2462 = vmatpush1.msra.mxu0 0.0
  %2463 = vmatprep.subr.mxu0 0.0
  %2464 = vmatpush1.msra.mxu0 0.0
  %2465 = vmatprep.subr.mxu0 0.0
  %2466 = vmatpush1.msra.mxu0 0.0
  %2467 = vmatprep.subr.mxu0 0.0
  %2468 = vmatpush1.msra.mxu0 0.0
  %2469 = vmatprep.subr.mxu0 0.0
  %2470 = vmatpush1.msra.mxu0 0.0
  %2471 = vmatprep.subr.mxu0 0.0
  %2472 = vmatpush1.msra.mxu0 0.0
  %2473 = vmatprep.subr.mxu0 0.0
  %2474 = vmatpush1.msra.mxu0 0.0
  %2475 = vmatprep.subr.mxu0 0.0
  %2476 = vmatpush1.msra.mxu0 0.0
  %2477 = vmatprep.subr.mxu0 0.0
  %2478 = vmatpush1.msra.mxu0 0.0
  %2479 = vmatprep.subr.mxu0 0.0
  %2480 = vmatpush1.msra.mxu0 0.0
  %2481 = vmatprep.subr.mxu0 0.0
  %2482 = vmatpush1.msra.mxu0 0.0
  %2483 = vmatprep.subr.mxu0 0.0
  %2484 = vmatpush1.msra.mxu0 0.0
  %2485 = vmatprep.subr.mxu0 0.0
  %2486 = vmatpush1.msra.mxu0 0.0
  %2487 = vmatprep.subr.mxu0 0.0
  %2488 = vmatpush1.msra.mxu0 0.0
  %2489 = vmatprep.subr.mxu0 0.0
  %2490 = vmatpush1.msra.mxu0 0.0
  %2491 = vmatprep.subr.mxu0 0.0
  %2492 = vmatpush1.msra.mxu0 0.0
  %2493 = vmatprep.mubr.f32.mxu0 0.0
  %2494 = vmatmul.mubr.f32.gmra.mrb[0].mxu0 %v2427
  %v2495 = vpop.f32.mrb[0].mxu0
  %v2496 = vadd.f32 0.0, %v2495
  %v2497 = vpop.f32.mrb[0].mxu0
  %2498 = vdwg.mxu0
  %v2500 = vrot.slane %v24, 7
  %v2502 = vmul.f32 %v2496, %v2500
  %v2503 = vsub.f32 %v23, %v2496
  %v2505 = vrot.slane %v2502, 1
  %v2507 = vmul.f32 %v2503, %v2505
  %v2508 = vadd.f32 %v25, %v2507
  %v2509 = vlaneseq
  %v2510 = vshrl.u32 %v2509, 7
  %v2511 = vsub.s32 1, %v2510
  %v2512 = vrot.slane %v2502, %v2511
  %v2513 = vmul.f32 %v2049, %v2512
  %v2514 = vmul.f32 %v2054, %v2512
  %v2515 = vmul.f32 %v2059, %v2512
  %v2516 = vmul.f32 %v2064, %v2512
  %v2517 = vmul.f32 %v2069, %v2512
  %v2518 = vmul.f32 %v2074, %v2512
  %v2519 = vmul.f32 %v2079, %v2512
  %v2520 = vmul.f32 %v2084, %v2512
  %v2521 = vmul.f32 %v2089, %v2512
  %v2522 = vmul.f32 %v2094, %v2512
  %v2523 = vmul.f32 %v2099, %v2512
  %v2524 = vmul.f32 %v2104, %v2512
  %v2525 = vmul.f32 %v2109, %v2512
  %v2526 = vmul.f32 %v2114, %v2512
  %v2527 = vmul.f32 %v2119, %v2512
  %v2528 = vmul.f32 %v2124, %v2512
  %v2529 = vmul.f32 %v2129, %v2512
  %v2530 = vmul.f32 %v2134, %v2512
  %v2531 = vmul.f32 %v2139, %v2512
  %v2532 = vmul.f32 %v2144, %v2512
  %v2533 = vmul.f32 %v2149, %v2512
  %v2534 = vmul.f32 %v2154, %v2512
  %v2535 = vmul.f32 %v2159, %v2512
  %v2536 = vmul.f32 %v2164, %v2512
  %v2537 = vmul.f32 %v2169, %v2512
  %v2538 = vmul.f32 %v2174, %v2512
  %v2539 = vmul.f32 %v2179, %v2512
  %v2540 = vmul.f32 %v2184, %v2512
  %v2541 = vmul.f32 %v2189, %v2512
  %v2542 = vmul.f32 %v2194, %v2512
  %v2543 = vmul.f32 %v2199, %v2512
  %v2544 = vmul.f32 %v2204, %v2512
  %v2545 = vlaneseq
  %v2546 = vshrl.u32 %v2545, 7
  %v2547 = vsub.s32 0, %v2546
  %v2548 = vrot.slane %v2508, %v2547
  %v2549 = vadd.f32 %v2513, %v2548
  %v2550 = vadd.f32 %v2514, %v2548
  %v2551 = vadd.f32 %v2515, %v2548
  %v2552 = vadd.f32 %v2516, %v2548
  %v2553 = vadd.f32 %v2517, %v2548
  %v2554 = vadd.f32 %v2518, %v2548
  %v2555 = vadd.f32 %v2519, %v2548
  %v2556 = vadd.f32 %v2520, %v2548
  %v2557 = vadd.f32 %v2521, %v2548
  %v2558 = vadd.f32 %v2522, %v2548
  %v2559 = vadd.f32 %v2523, %v2548
  %v2560 = vadd.f32 %v2524, %v2548
  %v2561 = vadd.f32 %v2525, %v2548
  %v2562 = vadd.f32 %v2526, %v2548
  %v2563 = vadd.f32 %v2527, %v2548
  %v2564 = vadd.f32 %v2528, %v2548
  %v2565 = vadd.f32 %v2529, %v2548
  %v2566 = vadd.f32 %v2530, %v2548
  %v2567 = vadd.f32 %v2531, %v2548
  %v2568 = vadd.f32 %v2532, %v2548
  %v2569 = vadd.f32 %v2533, %v2548
  %v2570 = vadd.f32 %v2534, %v2548
  %v2571 = vadd.f32 %v2535, %v2548
  %v2572 = vadd.f32 %v2536, %v2548
  %v2573 = vadd.f32 %v2537, %v2548
  %v2574 = vadd.f32 %v2538, %v2548
  %v2575 = vadd.f32 %v2539, %v2548
  %v2576 = vadd.f32 %v2540, %v2548
  %v2577 = vadd.f32 %v2541, %v2548
  %v2578 = vadd.f32 %v2542, %v2548
  %v2579 = vadd.f32 %v2543, %v2548
  %v2580 = vadd.f32 %v2544, %v2548
  %vm2581 = vcmp.ge.f32.partialorder %v2549, 0.0
  %vm2582 = vcmp.ge.f32.partialorder %v2550, 0.0
  %vm2583 = vcmp.ge.f32.partialorder %v2551, 0.0
  %vm2584 = vcmp.ge.f32.partialorder %v2552, 0.0
  %vm2585 = vcmp.ge.f32.partialorder %v2553, 0.0
  %vm2586 = vcmp.ge.f32.partialorder %v2554, 0.0
  %vm2587 = vcmp.ge.f32.partialorder %v2555, 0.0
  %vm2588 = vcmp.ge.f32.partialorder %v2556, 0.0
  %vm2589 = vcmp.ge.f32.partialorder %v2557, 0.0
  %vm2590 = vcmp.ge.f32.partialorder %v2558, 0.0
  %vm2591 = vcmp.ge.f32.partialorder %v2559, 0.0
  %vm2592 = vcmp.ge.f32.partialorder %v2560, 0.0
  %vm2593 = vcmp.ge.f32.partialorder %v2561, 0.0
  %vm2594 = vcmp.ge.f32.partialorder %v2562, 0.0
  %vm2595 = vcmp.ge.f32.partialorder %v2563, 0.0
  %vm2596 = vcmp.ge.f32.partialorder %v2564, 0.0
  %vm2597 = vcmp.ge.f32.partialorder %v2565, 0.0
  %vm2598 = vcmp.ge.f32.partialorder %v2566, 0.0
  %vm2599 = vcmp.ge.f32.partialorder %v2567, 0.0
  %vm2600 = vcmp.ge.f32.partialorder %v2568, 0.0
  %vm2601 = vcmp.ge.f32.partialorder %v2569, 0.0
  %vm2602 = vcmp.ge.f32.partialorder %v2570, 0.0
  %vm2603 = vcmp.ge.f32.partialorder %v2571, 0.0
  %vm2604 = vcmp.ge.f32.partialorder %v2572, 0.0
  %vm2605 = vcmp.ge.f32.partialorder %v2573, 0.0
  %vm2606 = vcmp.ge.f32.partialorder %v2574, 0.0
  %vm2607 = vcmp.ge.f32.partialorder %v2575, 0.0
  %vm2608 = vcmp.ge.f32.partialorder %v2576, 0.0
  %vm2609 = vcmp.ge.f32.partialorder %v2577, 0.0
  %vm2610 = vcmp.ge.f32.partialorder %v2578, 0.0
  %vm2611 = vcmp.ge.f32.partialorder %v2579, 0.0
  %vm2612 = vcmp.ge.f32.partialorder %v2580, 0.0
  %v2613 = vmul.f32 %v2549, 0.2
  %v2614 = vmul.f32 %v2550, 0.2
  %v2615 = vmul.f32 %v2551, 0.2
  %v2616 = vmul.f32 %v2552, 0.2
  %v2617 = vmul.f32 %v2553, 0.2
  %v2618 = vmul.f32 %v2554, 0.2
  %v2619 = vmul.f32 %v2555, 0.2
  %v2620 = vmul.f32 %v2556, 0.2
  %v2621 = vmul.f32 %v2557, 0.2
  %v2622 = vmul.f32 %v2558, 0.2
  %v2623 = vmul.f32 %v2559, 0.2
  %v2624 = vmul.f32 %v2560, 0.2
  %v2625 = vmul.f32 %v2561, 0.2
  %v2626 = vmul.f32 %v2562, 0.2
  %v2627 = vmul.f32 %v2563, 0.2
  %v2628 = vmul.f32 %v2564, 0.2
  %v2629 = vmul.f32 %v2565, 0.2
  %v2630 = vmul.f32 %v2566, 0.2
  %v2631 = vmul.f32 %v2567, 0.2
  %v2632 = vmul.f32 %v2568, 0.2
  %v2633 = vmul.f32 %v2569, 0.2
  %v2634 = vmul.f32 %v2570, 0.2
  %v2635 = vmul.f32 %v2571, 0.2
  %v2636 = vmul.f32 %v2572, 0.2
  %v2637 = vmul.f32 %v2573, 0.2
  %v2638 = vmul.f32 %v2574, 0.2
  %v2639 = vmul.f32 %v2575, 0.2
  %v2640 = vmul.f32 %v2576, 0.2
  %v2641 = vmul.f32 %v2577, 0.2
  %v2642 = vmul.f32 %v2578, 0.2
  %v2643 = vmul.f32 %v2579, 0.2
  %v2644 = vmul.f32 %v2580, 0.2
  %v2645 = vsel %vm2581, %v2549, %v2613
  %v2646 = vsel %vm2582, %v2550, %v2614
  %v2647 = vsel %vm2583, %v2551, %v2615
  %v2648 = vsel %vm2584, %v2552, %v2616
  %v2649 = vsel %vm2585, %v2553, %v2617
  %v2650 = vsel %vm2586, %v2554, %v2618
  %v2651 = vsel %vm2587, %v2555, %v2619
  %v2652 = vsel %vm2588, %v2556, %v2620
  %v2653 = vsel %vm2589, %v2557, %v2621
  %v2654 = vsel %vm2590, %v2558, %v2622
  %v2655 = vsel %vm2591, %v2559, %v2623
  %v2656 = vsel %vm2592, %v2560, %v2624
  %v2657 = vsel %vm2593, %v2561, %v2625
  %v2658 = vsel %vm2594, %v2562, %v2626
  %v2659 = vsel %vm2595, %v2563, %v2627
  %v2660 = vsel %vm2596, %v2564, %v2628
  %v2661 = vsel %vm2597, %v2565, %v2629
  %v2662 = vsel %vm2598, %v2566, %v2630
  %v2663 = vsel %vm2599, %v2567, %v2631
  %v2664 = vsel %vm2600, %v2568, %v2632
  %v2665 = vsel %vm2601, %v2569, %v2633
  %v2666 = vsel %vm2602, %v2570, %v2634
  %v2667 = vsel %vm2603, %v2571, %v2635
  %v2668 = vsel %vm2604, %v2572, %v2636
  %v2669 = vsel %vm2605, %v2573, %v2637
  %v2670 = vsel %vm2606, %v2574, %v2638
  %v2671 = vsel %vm2607, %v2575, %v2639
  %v2672 = vsel %vm2608, %v2576, %v2640
  %v2673 = vsel %vm2609, %v2577, %v2641
  %v2674 = vsel %vm2610, %v2578, %v2642
  %v2675 = vsel %vm2611, %v2579, %v2643
  %v2676 = vsel %vm2612, %v2580, %v2644
  %s2677 = scalar_lea.vmem [#allocation3], 24
  %2678 = vst [vmem:[%s2677 + $0x1] sm:$0xff] %v2645
  %2679 = vst [vmem:[%s2677 + $0x9] sm:$0xff] %v2646
  %2680 = vst [vmem:[%s2677 + $0x19] sm:$0xff] %v2647
  %2681 = vst [vmem:[%s2677 + $0x21] sm:$0xff] %v2648
  %2682 = vst [vmem:[%s2677 + $0x31] sm:$0xff] %v2649
  %2683 = vst [vmem:[%s2677 + $0x39] sm:$0xff] %v2650
  %2684 = vst [vmem:[%s2677 + $0x49] sm:$0xff] %v2651
  %2685 = vst [vmem:[%s2677 + $0x51] sm:$0xff] %v2652
  %2686 = vst [vmem:[%s2677 + $0x61] sm:$0xff] %v2653
  %2687 = vst [vmem:[%s2677 + $0x69] sm:$0xff] %v2654
  %2688 = vst [vmem:[%s2677 + $0x79] sm:$0xff] %v2655
  %2689 = vst [vmem:[%s2677 + $0x81] sm:$0xff] %v2656
  %2690 = vst [vmem:[%s2677 + $0x91] sm:$0xff] %v2657
  %2691 = vst [vmem:[%s2677 + $0x99] sm:$0xff] %v2658
  %2692 = vst [vmem:[%s2677 + $0xa9] sm:$0xff] %v2659
  %2693 = vst [vmem:[%s2677 + $0xb1] sm:$0xff] %v2660
  %2694 = vst [vmem:[%s2677 + $0xc1] sm:$0xff] %v2661
  %2695 = vst [vmem:[%s2677 + $0xc9] sm:$0xff] %v2662
  %2696 = vst [vmem:[%s2677 + $0xd9] sm:$0xff] %v2663
  %2697 = vst [vmem:[%s2677 + $0xe1] sm:$0xff] %v2664
  %2698 = vst [vmem:[%s2677 + $0xf1] sm:$0xff] %v2665
  %2699 = vst [vmem:[%s2677 + $0xf9] sm:$0xff] %v2666
  %2700 = vst [vmem:[%s2677 + $0x109] sm:$0xff] %v2667
  %2701 = vst [vmem:[%s2677 + $0x111] sm:$0xff] %v2668
  %2702 = vst [vmem:[%s2677 + $0x121] sm:$0xff] %v2669
  %2703 = vst [vmem:[%s2677 + $0x129] sm:$0xff] %v2670
  %2704 = vst [vmem:[%s2677 + $0x139] sm:$0xff] %v2671
  %2705 = vst [vmem:[%s2677 + $0x141] sm:$0xff] %v2672
  %2706 = vst [vmem:[%s2677 + $0x151] sm:$0xff] %v2673
  %2707 = vst [vmem:[%s2677 + $0x159] sm:$0xff] %v2674
  %2708 = vst [vmem:[%s2677 + $0x169] sm:$0xff] %v2675
  %2709 = vst [vmem:[%s2677 + $0x171] sm:$0xff] %v2676
  %v2710 = vld [vmem:[#allocation3] sm:$0xff]
  %v2711 = vld [vmem:[#allocation3 + $0x8] sm:$0xff]
  %v2712 = vld [vmem:[#allocation3 + $0x18] sm:$0xff]
  %v2713 = vld [vmem:[#allocation3 + $0x20] sm:$0xff]
  %v2714 = vld [vmem:[#allocation3 + $0x30] sm:$0xff]
  %v2715 = vld [vmem:[#allocation3 + $0x38] sm:$0xff]
  %v2716 = vld [vmem:[#allocation3 + $0x48] sm:$0xff]
  %v2717 = vld [vmem:[#allocation3 + $0x50] sm:$0xff]
  %v2718 = vld [vmem:[#allocation3 + $0x60] sm:$0xff]
  %v2719 = vld [vmem:[#allocation3 + $0x68] sm:$0xff]
  %v2720 = vld [vmem:[#allocation3 + $0x78] sm:$0xff]
  %v2721 = vld [vmem:[#allocation3 + $0x80] sm:$0xff]
  %v2722 = vld [vmem:[#allocation3 + $0x90] sm:$0xff]
  %v2723 = vld [vmem:[#allocation3 + $0x98] sm:$0xff]
  %v2724 = vld [vmem:[#allocation3 + $0xa8] sm:$0xff]
  %v2725 = vld [vmem:[#allocation3 + $0xb0] sm:$0xff]
  %v2726 = vld [vmem:[#allocation3 + $0xc0] sm:$0xff]
  %v2727 = vld [vmem:[#allocation3 + $0xc8] sm:$0xff]
  %v2728 = vld [vmem:[#allocation3 + $0xd8] sm:$0xff]
  %v2729 = vld [vmem:[#allocation3 + $0xe0] sm:$0xff]
  %v2730 = vld [vmem:[#allocation3 + $0xf0] sm:$0xff]
  %v2731 = vld [vmem:[#allocation3 + $0xf8] sm:$0xff]
  %v2732 = vld [vmem:[#allocation3 + $0x108] sm:$0xff]
  %v2733 = vld [vmem:[#allocation3 + $0x110] sm:$0xff]
  %v2734 = vld [vmem:[#allocation3 + $0x120] sm:$0xff]
  %v2735 = vld [vmem:[#allocation3 + $0x128] sm:$0xff]
  %v2736 = vld [vmem:[#allocation3 + $0x138] sm:$0xff]
  %v2737 = vld [vmem:[#allocation3 + $0x140] sm:$0xff]
  %v2738 = vld [vmem:[#allocation3 + $0x150] sm:$0xff]
  %v2739 = vld [vmem:[#allocation3 + $0x158] sm:$0xff]
  %v2740 = vld [vmem:[#allocation3 + $0x168] sm:$0xff]
  %v2741 = vld [vmem:[#allocation3 + $0x170] sm:$0xff]
  %2742 = vst [vmem:[#allocation2] sm:$0xff] %v2710
  %2743 = vst [vmem:[#allocation2 + $0x48] sm:$0xff] %v2711
  %2744 = vst [vmem:[#allocation2 + $0x90] sm:$0xff] %v2712
  %2745 = vst [vmem:[#allocation2 + $0xd8] sm:$0xff] %v2713
  %2746 = vst [vmem:[#allocation2 + $0x120] sm:$0xff] %v2714
  %2747 = vst [vmem:[#allocation2 + $0x168] sm:$0xff] %v2715
  %2748 = vst [vmem:[#allocation2 + $0x1b0] sm:$0xff] %v2716
  %2749 = vst [vmem:[#allocation2 + $0x1f8] sm:$0xff] %v2717
  %2750 = vst [vmem:[#allocation2 + $0x240] sm:$0xff] %v2718
  %2751 = vst [vmem:[#allocation2 + $0x288] sm:$0xff] %v2719
  %2752 = vst [vmem:[#allocation2 + $0x2d0] sm:$0xff] %v2720
  %2753 = vst [vmem:[#allocation2 + $0x318] sm:$0xff] %v2721
  %2754 = vst [vmem:[#allocation2 + $0x360] sm:$0xff] %v2722
  %2755 = vst [vmem:[#allocation2 + $0x3a8] sm:$0xff] %v2723
  %2756 = vst [vmem:[#allocation2 + $0x3f0] sm:$0xff] %v2724
  %2757 = vst [vmem:[#allocation2 + $0x438] sm:$0xff] %v2725
  %2758 = vst [vmem:[#allocation2 + $0x480] sm:$0xff] %v2726
  %2759 = vst [vmem:[#allocation2 + $0x4c8] sm:$0xff] %v2727
  %2760 = vst [vmem:[#allocation2 + $0x510] sm:$0xff] %v2728
  %2761 = vst [vmem:[#allocation2 + $0x558] sm:$0xff] %v2729
  %2762 = vst [vmem:[#allocation2 + $0x5a0] sm:$0xff] %v2730
  %2763 = vst [vmem:[#allocation2 + $0x5e8] sm:$0xff] %v2731
  %2764 = vst [vmem:[#allocation2 + $0x630] sm:$0xff] %v2732
  %2765 = vst [vmem:[#allocation2 + $0x678] sm:$0xff] %v2733
  %2766 = vst [vmem:[#allocation2 + $0x6c0] sm:$0xff] %v2734
  %2767 = vst [vmem:[#allocation2 + $0x708] sm:$0xff] %v2735
  %2768 = vst [vmem:[#allocation2 + $0x750] sm:$0xff] %v2736
  %2769 = vst [vmem:[#allocation2 + $0x798] sm:$0xff] %v2737
  %2770 = vst [vmem:[#allocation2 + $0x7e0] sm:$0xff] %v2738
  %2771 = vst [vmem:[#allocation2 + $0x828] sm:$0xff] %v2739
  %2772 = vst [vmem:[#allocation2 + $0x870] sm:$0xff] %v2740
  %2773 = vst [vmem:[#allocation2 + $0x8b8] sm:$0xff] %v2741
  %v2774 = vld [vmem:[#allocation3 + $0x1] sm:$0xff]
  %v2775 = vld [vmem:[#allocation3 + $0x9] sm:$0xff]
  %v2776 = vld [vmem:[#allocation3 + $0x19] sm:$0xff]
  %v2777 = vld [vmem:[#allocation3 + $0x21] sm:$0xff]
  %v2778 = vld [vmem:[#allocation3 + $0x31] sm:$0xff]
  %v2779 = vld [vmem:[#allocation3 + $0x39] sm:$0xff]
  %v2780 = vld [vmem:[#allocation3 + $0x49] sm:$0xff]
  %v2781 = vld [vmem:[#allocation3 + $0x51] sm:$0xff]
  %v2782 = vld [vmem:[#allocation3 + $0x61] sm:$0xff]
  %v2783 = vld [vmem:[#allocation3 + $0x69] sm:$0xff]
  %v2784 = vld [vmem:[#allocation3 + $0x79] sm:$0xff]
  %v2785 = vld [vmem:[#allocation3 + $0x81] sm:$0xff]
  %v2786 = vld [vmem:[#allocation3 + $0x91] sm:$0xff]
  %v2787 = vld [vmem:[#allocation3 + $0x99] sm:$0xff]
  %v2788 = vld [vmem:[#allocation3 + $0xa9] sm:$0xff]
  %v2789 = vld [vmem:[#allocation3 + $0xb1] sm:$0xff]
  %v2790 = vld [vmem:[#allocation3 + $0xc1] sm:$0xff]
  %v2791 = vld [vmem:[#allocation3 + $0xc9] sm:$0xff]
  %v2792 = vld [vmem:[#allocation3 + $0xd9] sm:$0xff]
  %v2793 = vld [vmem:[#allocation3 + $0xe1] sm:$0xff]
  %v2794 = vld [vmem:[#allocation3 + $0xf1] sm:$0xff]
  %v2795 = vld [vmem:[#allocation3 + $0xf9] sm:$0xff]
  %v2796 = vld [vmem:[#allocation3 + $0x109] sm:$0xff]
  %v2797 = vld [vmem:[#allocation3 + $0x111] sm:$0xff]
  %v2798 = vld [vmem:[#allocation3 + $0x121] sm:$0xff]
  %v2799 = vld [vmem:[#allocation3 + $0x129] sm:$0xff]
  %v2800 = vld [vmem:[#allocation3 + $0x139] sm:$0xff]
  %v2801 = vld [vmem:[#allocation3 + $0x141] sm:$0xff]
  %v2802 = vld [vmem:[#allocation3 + $0x151] sm:$0xff]
  %v2803 = vld [vmem:[#allocation3 + $0x159] sm:$0xff]
  %v2804 = vld [vmem:[#allocation3 + $0x169] sm:$0xff]
  %v2805 = vld [vmem:[#allocation3 + $0x171] sm:$0xff]
  %2806 = vst [vmem:[#allocation2 + $0x8] sm:$0xff] %v2774
  %2807 = vst [vmem:[#allocation2 + $0x50] sm:$0xff] %v2775
  %2808 = vst [vmem:[#allocation2 + $0x98] sm:$0xff] %v2776
  %2809 = vst [vmem:[#allocation2 + $0xe0] sm:$0xff] %v2777
  %2810 = vst [vmem:[#allocation2 + $0x128] sm:$0xff] %v2778
  %2811 = vst [vmem:[#allocation2 + $0x170] sm:$0xff] %v2779
  %2812 = vst [vmem:[#allocation2 + $0x1b8] sm:$0xff] %v2780
  %2813 = vst [vmem:[#allocation2 + $0x200] sm:$0xff] %v2781
  %2814 = vst [vmem:[#allocation2 + $0x248] sm:$0xff] %v2782
  %2815 = vst [vmem:[#allocation2 + $0x290] sm:$0xff] %v2783
  %2816 = vst [vmem:[#allocation2 + $0x2d8] sm:$0xff] %v2784
  %2817 = vst [vmem:[#allocation2 + $0x320] sm:$0xff] %v2785
  %2818 = vst [vmem:[#allocation2 + $0x368] sm:$0xff] %v2786
  %2819 = vst [vmem:[#allocation2 + $0x3b0] sm:$0xff] %v2787
  %2820 = vst [vmem:[#allocation2 + $0x3f8] sm:$0xff] %v2788
  %2821 = vst [vmem:[#allocation2 + $0x440] sm:$0xff] %v2789
  %2822 = vst [vmem:[#allocation2 + $0x488] sm:$0xff] %v2790
  %2823 = vst [vmem:[#allocation2 + $0x4d0] sm:$0xff] %v2791
  %2824 = vst [vmem:[#allocation2 + $0x518] sm:$0xff] %v2792
  %2825 = vst [vmem:[#allocation2 + $0x560] sm:$0xff] %v2793
  %2826 = vst [vmem:[#allocation2 + $0x5a8] sm:$0xff] %v2794
  %2827 = vst [vmem:[#allocation2 + $0x5f0] sm:$0xff] %v2795
  %2828 = vst [vmem:[#allocation2 + $0x638] sm:$0xff] %v2796
  %2829 = vst [vmem:[#allocation2 + $0x680] sm:$0xff] %v2797
  %2830 = vst [vmem:[#allocation2 + $0x6c8] sm:$0xff] %v2798
  %2831 = vst [vmem:[#allocation2 + $0x710] sm:$0xff] %v2799
  %2832 = vst [vmem:[#allocation2 + $0x758] sm:$0xff] %v2800
  %2833 = vst [vmem:[#allocation2 + $0x7a0] sm:$0xff] %v2801
  %2834 = vst [vmem:[#allocation2 + $0x7e8] sm:$0xff] %v2802
  %2835 = vst [vmem:[#allocation2 + $0x830] sm:$0xff] %v2803
  %2836 = vst [vmem:[#allocation2 + $0x878] sm:$0xff] %v2804
  %2837 = vst [vmem:[#allocation2 + $0x8c0] sm:$0xff] %v2805
  %v2838 = vld [vmem:[#allocation3 + $0x2] sm:$0xff]
  %v2839 = vld [vmem:[#allocation3 + $0xa] sm:$0xff]
  %v2840 = vld [vmem:[#allocation3 + $0x1a] sm:$0xff]
  %v2841 = vld [vmem:[#allocation3 + $0x22] sm:$0xff]
  %v2842 = vld [vmem:[#allocation3 + $0x32] sm:$0xff]
  %v2843 = vld [vmem:[#allocation3 + $0x3a] sm:$0xff]
  %v2844 = vld [vmem:[#allocation3 + $0x4a] sm:$0xff]
  %v2845 = vld [vmem:[#allocation3 + $0x52] sm:$0xff]
  %v2846 = vld [vmem:[#allocation3 + $0x62] sm:$0xff]
  %v2847 = vld [vmem:[#allocation3 + $0x6a] sm:$0xff]
  %v2848 = vld [vmem:[#allocation3 + $0x7a] sm:$0xff]
  %v2849 = vld [vmem:[#allocation3 + $0x82] sm:$0xff]
  %v2850 = vld [vmem:[#allocation3 + $0x92] sm:$0xff]
  %v2851 = vld [vmem:[#allocation3 + $0x9a] sm:$0xff]
  %v2852 = vld [vmem:[#allocation3 + $0xaa] sm:$0xff]
  %v2853 = vld [vmem:[#allocation3 + $0xb2] sm:$0xff]
  %v2854 = vld [vmem:[#allocation3 + $0xc2] sm:$0xff]
  %v2855 = vld [vmem:[#allocation3 + $0xca] sm:$0xff]
  %v2856 = vld [vmem:[#allocation3 + $0xda] sm:$0xff]
  %v2857 = vld [vmem:[#allocation3 + $0xe2] sm:$0xff]
  %v2858 = vld [vmem:[#allocation3 + $0xf2] sm:$0xff]
  %v2859 = vld [vmem:[#allocation3 + $0xfa] sm:$0xff]
  %v2860 = vld [vmem:[#allocation3 + $0x10a] sm:$0xff]
  %v2861 = vld [vmem:[#allocation3 + $0x112] sm:$0xff]
  %v2862 = vld [vmem:[#allocation3 + $0x122] sm:$0xff]
  %v2863 = vld [vmem:[#allocation3 + $0x12a] sm:$0xff]
  %v2864 = vld [vmem:[#allocation3 + $0x13a] sm:$0xff]
  %v2865 = vld [vmem:[#allocation3 + $0x142] sm:$0xff]
  %v2866 = vld [vmem:[#allocation3 + $0x152] sm:$0xff]
  %v2867 = vld [vmem:[#allocation3 + $0x15a] sm:$0xff]
  %v2868 = vld [vmem:[#allocation3 + $0x16a] sm:$0xff]
  %v2869 = vld [vmem:[#allocation3 + $0x172] sm:$0xff]
  %2870 = vst [vmem:[#allocation2 + $0x10] sm:$0xff] %v2838
  %2871 = vst [vmem:[#allocation2 + $0x58] sm:$0xff] %v2839
  %2872 = vst [vmem:[#allocation2 + $0xa0] sm:$0xff] %v2840
  %2873 = vst [vmem:[#allocation2 + $0xe8] sm:$0xff] %v2841
  %2874 = vst [vmem:[#allocation2 + $0x130] sm:$0xff] %v2842
  %2875 = vst [vmem:[#allocation2 + $0x178] sm:$0xff] %v2843
  %2876 = vst [vmem:[#allocation2 + $0x1c0] sm:$0xff] %v2844
  %2877 = vst [vmem:[#allocation2 + $0x208] sm:$0xff] %v2845
  %2878 = vst [vmem:[#allocation2 + $0x250] sm:$0xff] %v2846
  %2879 = vst [vmem:[#allocation2 + $0x298] sm:$0xff] %v2847
  %2880 = vst [vmem:[#allocation2 + $0x2e0] sm:$0xff] %v2848
  %2881 = vst [vmem:[#allocation2 + $0x328] sm:$0xff] %v2849
  %2882 = vst [vmem:[#allocation2 + $0x370] sm:$0xff] %v2850
  %2883 = vst [vmem:[#allocation2 + $0x3b8] sm:$0xff] %v2851
  %2884 = vst [vmem:[#allocation2 + $0x400] sm:$0xff] %v2852
  %2885 = vst [vmem:[#allocation2 + $0x448] sm:$0xff] %v2853
  %2886 = vst [vmem:[#allocation2 + $0x490] sm:$0xff] %v2854
  %2887 = vst [vmem:[#allocation2 + $0x4d8] sm:$0xff] %v2855
  %2888 = vst [vmem:[#allocation2 + $0x520] sm:$0xff] %v2856
  %2889 = vst [vmem:[#allocation2 + $0x568] sm:$0xff] %v2857
  %2890 = vst [vmem:[#allocation2 + $0x5b0] sm:$0xff] %v2858
  %2891 = vst [vmem:[#allocation2 + $0x5f8] sm:$0xff] %v2859
  %2892 = vst [vmem:[#allocation2 + $0x640] sm:$0xff] %v2860
  %2893 = vst [vmem:[#allocation2 + $0x688] sm:$0xff] %v2861
  %2894 = vst [vmem:[#allocation2 + $0x6d0] sm:$0xff] %v2862
  %2895 = vst [vmem:[#allocation2 + $0x718] sm:$0xff] %v2863
  %2896 = vst [vmem:[#allocation2 + $0x760] sm:$0xff] %v2864
  %2897 = vst [vmem:[#allocation2 + $0x7a8] sm:$0xff] %v2865
  %2898 = vst [vmem:[#allocation2 + $0x7f0] sm:$0xff] %v2866
  %2899 = vst [vmem:[#allocation2 + $0x838] sm:$0xff] %v2867
  %2900 = vst [vmem:[#allocation2 + $0x880] sm:$0xff] %v2868
  %2901 = vst [vmem:[#allocation2 + $0x8c8] sm:$0xff] %v2869
  %v2902 = vld [vmem:[%s2677] sm:$0xff]
  %v2903 = vld [vmem:[%s2677 + $0x8] sm:$0xff]
  %v2904 = vld [vmem:[%s2677 + $0x18] sm:$0xff]
  %v2905 = vld [vmem:[%s2677 + $0x20] sm:$0xff]
  %v2906 = vld [vmem:[%s2677 + $0x30] sm:$0xff]
  %v2907 = vld [vmem:[%s2677 + $0x38] sm:$0xff]
  %v2908 = vld [vmem:[%s2677 + $0x48] sm:$0xff]
  %v2909 = vld [vmem:[%s2677 + $0x50] sm:$0xff]
  %v2910 = vld [vmem:[%s2677 + $0x60] sm:$0xff]
  %v2911 = vld [vmem:[%s2677 + $0x68] sm:$0xff]
  %v2912 = vld [vmem:[%s2677 + $0x78] sm:$0xff]
  %v2913 = vld [vmem:[%s2677 + $0x80] sm:$0xff]
  %v2914 = vld [vmem:[%s2677 + $0x90] sm:$0xff]
  %v2915 = vld [vmem:[%s2677 + $0x98] sm:$0xff]
  %v2916 = vld [vmem:[%s2677 + $0xa8] sm:$0xff]
  %v2917 = vld [vmem:[%s2677 + $0xb0] sm:$0xff]
  %v2918 = vld [vmem:[%s2677 + $0xc0] sm:$0xff]
  %v2919 = vld [vmem:[%s2677 + $0xc8] sm:$0xff]
  %v2920 = vld [vmem:[%s2677 + $0xd8] sm:$0xff]
  %v2921 = vld [vmem:[%s2677 + $0xe0] sm:$0xff]
  %v2922 = vld [vmem:[%s2677 + $0xf0] sm:$0xff]
  %v2923 = vld [vmem:[%s2677 + $0xf8] sm:$0xff]
  %v2924 = vld [vmem:[%s2677 + $0x108] sm:$0xff]
  %v2925 = vld [vmem:[%s2677 + $0x110] sm:$0xff]
  %v2926 = vld [vmem:[%s2677 + $0x120] sm:$0xff]
  %v2927 = vld [vmem:[%s2677 + $0x128] sm:$0xff]
  %v2928 = vld [vmem:[%s2677 + $0x138] sm:$0xff]
  %v2929 = vld [vmem:[%s2677 + $0x140] sm:$0xff]
  %v2930 = vld [vmem:[%s2677 + $0x150] sm:$0xff]
  %v2931 = vld [vmem:[%s2677 + $0x158] sm:$0xff]
  %v2932 = vld [vmem:[%s2677 + $0x168] sm:$0xff]
  %v2933 = vld [vmem:[%s2677 + $0x170] sm:$0xff]
  %2934 = vst [vmem:[#allocation2 + $0x18] sm:$0xff] %v2902
  %2935 = vst [vmem:[#allocation2 + $0x60] sm:$0xff] %v2903
  %2936 = vst [vmem:[#allocation2 + $0xa8] sm:$0xff] %v2904
  %2937 = vst [vmem:[#allocation2 + $0xf0] sm:$0xff] %v2905
  %2938 = vst [vmem:[#allocation2 + $0x138] sm:$0xff] %v2906
  %2939 = vst [vmem:[#allocation2 + $0x180] sm:$0xff] %v2907
  %2940 = vst [vmem:[#allocation2 + $0x1c8] sm:$0xff] %v2908
  %2941 = vst [vmem:[#allocation2 + $0x210] sm:$0xff] %v2909
  %2942 = vst [vmem:[#allocation2 + $0x258] sm:$0xff] %v2910
  %2943 = vst [vmem:[#allocation2 + $0x2a0] sm:$0xff] %v2911
  %2944 = vst [vmem:[#allocation2 + $0x2e8] sm:$0xff] %v2912
  %2945 = vst [vmem:[#allocation2 + $0x330] sm:$0xff] %v2913
  %2946 = vst [vmem:[#allocation2 + $0x378] sm:$0xff] %v2914
  %2947 = vst [vmem:[#allocation2 + $0x3c0] sm:$0xff] %v2915
  %2948 = vst [vmem:[#allocation2 + $0x408] sm:$0xff] %v2916
  %2949 = vst [vmem:[#allocation2 + $0x450] sm:$0xff] %v2917
  %2950 = vst [vmem:[#allocation2 + $0x498] sm:$0xff] %v2918
  %2951 = vst [vmem:[#allocation2 + $0x4e0] sm:$0xff] %v2919
  %2952 = vst [vmem:[#allocation2 + $0x528] sm:$0xff] %v2920
  %2953 = vst [vmem:[#allocation2 + $0x570] sm:$0xff] %v2921
  %2954 = vst [vmem:[#allocation2 + $0x5b8] sm:$0xff] %v2922
  %2955 = vst [vmem:[#allocation2 + $0x600] sm:$0xff] %v2923
  %2956 = vst [vmem:[#allocation2 + $0x648] sm:$0xff] %v2924
  %2957 = vst [vmem:[#allocation2 + $0x690] sm:$0xff] %v2925
  %2958 = vst [vmem:[#allocation2 + $0x6d8] sm:$0xff] %v2926
  %2959 = vst [vmem:[#allocation2 + $0x720] sm:$0xff] %v2927
  %2960 = vst [vmem:[#allocation2 + $0x768] sm:$0xff] %v2928
  %2961 = vst [vmem:[#allocation2 + $0x7b0] sm:$0xff] %v2929
  %2962 = vst [vmem:[#allocation2 + $0x7f8] sm:$0xff] %v2930
  %2963 = vst [vmem:[#allocation2 + $0x840] sm:$0xff] %v2931
  %2964 = vst [vmem:[#allocation2 + $0x888] sm:$0xff] %v2932
  %2965 = vst [vmem:[#allocation2 + $0x8d0] sm:$0xff] %v2933
  %v2966 = vld [vmem:[%s2677 + $0x1] sm:$0xff]
  %v2967 = vld [vmem:[%s2677 + $0x9] sm:$0xff]
  %v2968 = vld [vmem:[%s2677 + $0x19] sm:$0xff]
  %v2969 = vld [vmem:[%s2677 + $0x21] sm:$0xff]
  %v2970 = vld [vmem:[%s2677 + $0x31] sm:$0xff]
  %v2971 = vld [vmem:[%s2677 + $0x39] sm:$0xff]
  %v2972 = vld [vmem:[%s2677 + $0x49] sm:$0xff]
  %v2973 = vld [vmem:[%s2677 + $0x51] sm:$0xff]
  %v2974 = vld [vmem:[%s2677 + $0x61] sm:$0xff]
  %v2975 = vld [vmem:[%s2677 + $0x69] sm:$0xff]
  %v2976 = vld [vmem:[%s2677 + $0x79] sm:$0xff]
  %v2977 = vld [vmem:[%s2677 + $0x81] sm:$0xff]
  %v2978 = vld [vmem:[%s2677 + $0x91] sm:$0xff]
  %v2979 = vld [vmem:[%s2677 + $0x99] sm:$0xff]
  %v2980 = vld [vmem:[%s2677 + $0xa9] sm:$0xff]
  %v2981 = vld [vmem:[%s2677 + $0xb1] sm:$0xff]
  %v2982 = vld [vmem:[%s2677 + $0xc1] sm:$0xff]
  %v2983 = vld [vmem:[%s2677 + $0xc9] sm:$0xff]
  %v2984 = vld [vmem:[%s2677 + $0xd9] sm:$0xff]
  %v2985 = vld [vmem:[%s2677 + $0xe1] sm:$0xff]
  %v2986 = vld [vmem:[%s2677 + $0xf1] sm:$0xff]
  %v2987 = vld [vmem:[%s2677 + $0xf9] sm:$0xff]
  %v2988 = vld [vmem:[%s2677 + $0x109] sm:$0xff]
  %v2989 = vld [vmem:[%s2677 + $0x111] sm:$0xff]
  %v2990 = vld [vmem:[%s2677 + $0x121] sm:$0xff]
  %v2991 = vld [vmem:[%s2677 + $0x129] sm:$0xff]
  %v2992 = vld [vmem:[%s2677 + $0x139] sm:$0xff]
  %v2993 = vld [vmem:[%s2677 + $0x141] sm:$0xff]
  %v2994 = vld [vmem:[%s2677 + $0x151] sm:$0xff]
  %v2995 = vld [vmem:[%s2677 + $0x159] sm:$0xff]
  %v2996 = vld [vmem:[%s2677 + $0x169] sm:$0xff]
  %v2997 = vld [vmem:[%s2677 + $0x171] sm:$0xff]
  %2998 = vst [vmem:[#allocation2 + $0x20] sm:$0xff] %v2966
  %2999 = vst [vmem:[#allocation2 + $0x68] sm:$0xff] %v2967
  %3000 = vst [vmem:[#allocation2 + $0xb0] sm:$0xff] %v2968
  %3001 = vst [vmem:[#allocation2 + $0xf8] sm:$0xff] %v2969
  %3002 = vst [vmem:[#allocation2 + $0x140] sm:$0xff] %v2970
  %3003 = vst [vmem:[#allocation2 + $0x188] sm:$0xff] %v2971
  %3004 = vst [vmem:[#allocation2 + $0x1d0] sm:$0xff] %v2972
  %3005 = vst [vmem:[#allocation2 + $0x218] sm:$0xff] %v2973
  %3006 = vst [vmem:[#allocation2 + $0x260] sm:$0xff] %v2974
  %3007 = vst [vmem:[#allocation2 + $0x2a8] sm:$0xff] %v2975
  %3008 = vst [vmem:[#allocation2 + $0x2f0] sm:$0xff] %v2976
  %3009 = vst [vmem:[#allocation2 + $0x338] sm:$0xff] %v2977
  %3010 = vst [vmem:[#allocation2 + $0x380] sm:$0xff] %v2978
  %3011 = vst [vmem:[#allocation2 + $0x3c8] sm:$0xff] %v2979
  %3012 = vst [vmem:[#allocation2 + $0x410] sm:$0xff] %v2980
  %3013 = vst [vmem:[#allocation2 + $0x458] sm:$0xff] %v2981
  %3014 = vst [vmem:[#allocation2 + $0x4a0] sm:$0xff] %v2982
  %3015 = vst [vmem:[#allocation2 + $0x4e8] sm:$0xff] %v2983
  %3016 = vst [vmem:[#allocation2 + $0x530] sm:$0xff] %v2984
  %3017 = vst [vmem:[#allocation2 + $0x578] sm:$0xff] %v2985
  %3018 = vst [vmem:[#allocation2 + $0x5c0] sm:$0xff] %v2986
  %3019 = vst [vmem:[#allocation2 + $0x608] sm:$0xff] %v2987
  %3020 = vst [vmem:[#allocation2 + $0x650] sm:$0xff] %v2988
  %3021 = vst [vmem:[#allocation2 + $0x698] sm:$0xff] %v2989
  %3022 = vst [vmem:[#allocation2 + $0x6e0] sm:$0xff] %v2990
  %3023 = vst [vmem:[#allocation2 + $0x728] sm:$0xff] %v2991
  %3024 = vst [vmem:[#allocation2 + $0x770] sm:$0xff] %v2992
  %3025 = vst [vmem:[#allocation2 + $0x7b8] sm:$0xff] %v2993
  %3026 = vst [vmem:[#allocation2 + $0x800] sm:$0xff] %v2994
  %3027 = vst [vmem:[#allocation2 + $0x848] sm:$0xff] %v2995
  %3028 = vst [vmem:[#allocation2 + $0x890] sm:$0xff] %v2996
  %3029 = vst [vmem:[#allocation2 + $0x8d8] sm:$0xff] %v2997
  %v3030 = vld [vmem:[%s2677 + $0x2] sm:$0xff]
  %v3031 = vld [vmem:[%s2677 + $0xa] sm:$0xff]
  %v3032 = vld [vmem:[%s2677 + $0x1a] sm:$0xff]
  %v3033 = vld [vmem:[%s2677 + $0x22] sm:$0xff]
  %v3034 = vld [vmem:[%s2677 + $0x32] sm:$0xff]
  %v3035 = vld [vmem:[%s2677 + $0x3a] sm:$0xff]
  %v3036 = vld [vmem:[%s2677 + $0x4a] sm:$0xff]
  %v3037 = vld [vmem:[%s2677 + $0x52] sm:$0xff]
  %v3038 = vld [vmem:[%s2677 + $0x62] sm:$0xff]
  %v3039 = vld [vmem:[%s2677 + $0x6a] sm:$0xff]
  %v3040 = vld [vmem:[%s2677 + $0x7a] sm:$0xff]
  %v3041 = vld [vmem:[%s2677 + $0x82] sm:$0xff]
  %v3042 = vld [vmem:[%s2677 + $0x92] sm:$0xff]
  %v3043 = vld [vmem:[%s2677 + $0x9a] sm:$0xff]
  %v3044 = vld [vmem:[%s2677 + $0xaa] sm:$0xff]
  %v3045 = vld [vmem:[%s2677 + $0xb2] sm:$0xff]
  %v3046 = vld [vmem:[%s2677 + $0xc2] sm:$0xff]
  %v3047 = vld [vmem:[%s2677 + $0xca] sm:$0xff]
  %v3048 = vld [vmem:[%s2677 + $0xda] sm:$0xff]
  %v3049 = vld [vmem:[%s2677 + $0xe2] sm:$0xff]
  %v3050 = vld [vmem:[%s2677 + $0xf2] sm:$0xff]
  %v3051 = vld [vmem:[%s2677 + $0xfa] sm:$0xff]
  %v3052 = vld [vmem:[%s2677 + $0x10a] sm:$0xff]
  %v3053 = vld [vmem:[%s2677 + $0x112] sm:$0xff]
  %v3054 = vld [vmem:[%s2677 + $0x122] sm:$0xff]
  %v3055 = vld [vmem:[%s2677 + $0x12a] sm:$0xff]
  %v3056 = vld [vmem:[%s2677 + $0x13a] sm:$0xff]
  %v3057 = vld [vmem:[%s2677 + $0x142] sm:$0xff]
  %v3058 = vld [vmem:[%s2677 + $0x152] sm:$0xff]
  %v3059 = vld [vmem:[%s2677 + $0x15a] sm:$0xff]
  %v3060 = vld [vmem:[%s2677 + $0x16a] sm:$0xff]
  %v3061 = vld [vmem:[%s2677 + $0x172] sm:$0xff]
  %3062 = vst [vmem:[#allocation2 + $0x28] sm:$0xff] %v3030
  %3063 = vst [vmem:[#allocation2 + $0x70] sm:$0xff] %v3031
  %3064 = vst [vmem:[#allocation2 + $0xb8] sm:$0xff] %v3032
  %3065 = vst [vmem:[#allocation2 + $0x100] sm:$0xff] %v3033
  %3066 = vst [vmem:[#allocation2 + $0x148] sm:$0xff] %v3034
  %3067 = vst [vmem:[#allocation2 + $0x190] sm:$0xff] %v3035
  %3068 = vst [vmem:[#allocation2 + $0x1d8] sm:$0xff] %v3036
  %3069 = vst [vmem:[#allocation2 + $0x220] sm:$0xff] %v3037
  %3070 = vst [vmem:[#allocation2 + $0x268] sm:$0xff] %v3038
  %3071 = vst [vmem:[#allocation2 + $0x2b0] sm:$0xff] %v3039
  %3072 = vst [vmem:[#allocation2 + $0x2f8] sm:$0xff] %v3040
  %3073 = vst [vmem:[#allocation2 + $0x340] sm:$0xff] %v3041
  %3074 = vst [vmem:[#allocation2 + $0x388] sm:$0xff] %v3042
  %3075 = vst [vmem:[#allocation2 + $0x3d0] sm:$0xff] %v3043
  %3076 = vst [vmem:[#allocation2 + $0x418] sm:$0xff] %v3044
  %3077 = vst [vmem:[#allocation2 + $0x460] sm:$0xff] %v3045
  %3078 = vst [vmem:[#allocation2 + $0x4a8] sm:$0xff] %v3046
  %3079 = vst [vmem:[#allocation2 + $0x4f0] sm:$0xff] %v3047
  %3080 = vst [vmem:[#allocation2 + $0x538] sm:$0xff] %v3048
  %3081 = vst [vmem:[#allocation2 + $0x580] sm:$0xff] %v3049
  %3082 = vst [vmem:[#allocation2 + $0x5c8] sm:$0xff] %v3050
  %3083 = vst [vmem:[#allocation2 + $0x610] sm:$0xff] %v3051
  %3084 = vst [vmem:[#allocation2 + $0x658] sm:$0xff] %v3052
  %3085 = vst [vmem:[#allocation2 + $0x6a0] sm:$0xff] %v3053
  %3086 = vst [vmem:[#allocation2 + $0x6e8] sm:$0xff] %v3054
  %3087 = vst [vmem:[#allocation2 + $0x730] sm:$0xff] %v3055
  %3088 = vst [vmem:[#allocation2 + $0x778] sm:$0xff] %v3056
  %3089 = vst [vmem:[#allocation2 + $0x7c0] sm:$0xff] %v3057
  %3090 = vst [vmem:[#allocation2 + $0x808] sm:$0xff] %v3058
  %3091 = vst [vmem:[#allocation2 + $0x850] sm:$0xff] %v3059
  %3092 = vst [vmem:[#allocation2 + $0x898] sm:$0xff] %v3060
  %3093 = vst [vmem:[#allocation2 + $0x8e0] sm:$0xff] %v3061
  %s3094 = scalar_lea.vmem [#allocation3], 48
  %v3095 = vld [vmem:[%s3094] sm:$0xff]
  %v3096 = vld [vmem:[%s3094 + $0x8] sm:$0xff]
  %v3097 = vld [vmem:[%s3094 + $0x18] sm:$0xff]
  %v3098 = vld [vmem:[%s3094 + $0x20] sm:$0xff]
  %v3099 = vld [vmem:[%s3094 + $0x30] sm:$0xff]
  %v3100 = vld [vmem:[%s3094 + $0x38] sm:$0xff]
  %v3101 = vld [vmem:[%s3094 + $0x48] sm:$0xff]
  %v3102 = vld [vmem:[%s3094 + $0x50] sm:$0xff]
  %v3103 = vld [vmem:[%s3094 + $0x60] sm:$0xff]
  %v3104 = vld [vmem:[%s3094 + $0x68] sm:$0xff]
  %v3105 = vld [vmem:[%s3094 + $0x78] sm:$0xff]
  %v3106 = vld [vmem:[%s3094 + $0x80] sm:$0xff]
  %v3107 = vld [vmem:[%s3094 + $0x90] sm:$0xff]
  %v3108 = vld [vmem:[%s3094 + $0x98] sm:$0xff]
  %v3109 = vld [vmem:[%s3094 + $0xa8] sm:$0xff]
  %v3110 = vld [vmem:[%s3094 + $0xb0] sm:$0xff]
  %v3111 = vld [vmem:[%s3094 + $0xc0] sm:$0xff]
  %v3112 = vld [vmem:[%s3094 + $0xc8] sm:$0xff]
  %v3113 = vld [vmem:[%s3094 + $0xd8] sm:$0xff]
  %v3114 = vld [vmem:[%s3094 + $0xe0] sm:$0xff]
  %v3115 = vld [vmem:[%s3094 + $0xf0] sm:$0xff]
  %v3116 = vld [vmem:[%s3094 + $0xf8] sm:$0xff]
  %v3117 = vld [vmem:[%s3094 + $0x108] sm:$0xff]
  %v3118 = vld [vmem:[%s3094 + $0x110] sm:$0xff]
  %v3119 = vld [vmem:[%s3094 + $0x120] sm:$0xff]
  %v3120 = vld [vmem:[%s3094 + $0x128] sm:$0xff]
  %v3121 = vld [vmem:[%s3094 + $0x138] sm:$0xff]
  %v3122 = vld [vmem:[%s3094 + $0x140] sm:$0xff]
  %v3123 = vld [vmem:[%s3094 + $0x150] sm:$0xff]
  %v3124 = vld [vmem:[%s3094 + $0x158] sm:$0xff]
  %v3125 = vld [vmem:[%s3094 + $0x168] sm:$0xff]
  %v3126 = vld [vmem:[%s3094 + $0x170] sm:$0xff]
  %3127 = vst [vmem:[#allocation2 + $0x30] sm:$0xff] %v3095
  %3128 = vst [vmem:[#allocation2 + $0x78] sm:$0xff] %v3096
  %3129 = vst [vmem:[#allocation2 + $0xc0] sm:$0xff] %v3097
  %3130 = vst [vmem:[#allocation2 + $0x108] sm:$0xff] %v3098
  %3131 = vst [vmem:[#allocation2 + $0x150] sm:$0xff] %v3099
  %3132 = vst [vmem:[#allocation2 + $0x198] sm:$0xff] %v3100
  %3133 = vst [vmem:[#allocation2 + $0x1e0] sm:$0xff] %v3101
  %3134 = vst [vmem:[#allocation2 + $0x228] sm:$0xff] %v3102
  %3135 = vst [vmem:[#allocation2 + $0x270] sm:$0xff] %v3103
  %3136 = vst [vmem:[#allocation2 + $0x2b8] sm:$0xff] %v3104
  %3137 = vst [vmem:[#allocation2 + $0x300] sm:$0xff] %v3105
  %3138 = vst [vmem:[#allocation2 + $0x348] sm:$0xff] %v3106
  %3139 = vst [vmem:[#allocation2 + $0x390] sm:$0xff] %v3107
  %3140 = vst [vmem:[#allocation2 + $0x3d8] sm:$0xff] %v3108
  %3141 = vst [vmem:[#allocation2 + $0x420] sm:$0xff] %v3109
  %3142 = vst [vmem:[#allocation2 + $0x468] sm:$0xff] %v3110
  %3143 = vst [vmem:[#allocation2 + $0x4b0] sm:$0xff] %v3111
  %3144 = vst [vmem:[#allocation2 + $0x4f8] sm:$0xff] %v3112
  %3145 = vst [vmem:[#allocation2 + $0x540] sm:$0xff] %v3113
  %3146 = vst [vmem:[#allocation2 + $0x588] sm:$0xff] %v3114
  %3147 = vst [vmem:[#allocation2 + $0x5d0] sm:$0xff] %v3115
  %3148 = vst [vmem:[#allocation2 + $0x618] sm:$0xff] %v3116
  %3149 = vst [vmem:[#allocation2 + $0x660] sm:$0xff] %v3117
  %3150 = vst [vmem:[#allocation2 + $0x6a8] sm:$0xff] %v3118
  %3151 = vst [vmem:[#allocation2 + $0x6f0] sm:$0xff] %v3119
  %3152 = vst [vmem:[#allocation2 + $0x738] sm:$0xff] %v3120
  %3153 = vst [vmem:[#allocation2 + $0x780] sm:$0xff] %v3121
  %3154 = vst [vmem:[#allocation2 + $0x7c8] sm:$0xff] %v3122
  %3155 = vst [vmem:[#allocation2 + $0x810] sm:$0xff] %v3123
  %3156 = vst [vmem:[#allocation2 + $0x858] sm:$0xff] %v3124
  %3157 = vst [vmem:[#allocation2 + $0x8a0] sm:$0xff] %v3125
  %3158 = vst [vmem:[#allocation2 + $0x8e8] sm:$0xff] %v3126
  %v3159 = vld [vmem:[%s3094 + $0x1] sm:$0xff]
  %v3160 = vld [vmem:[%s3094 + $0x9] sm:$0xff]
  %v3161 = vld [vmem:[%s3094 + $0x19] sm:$0xff]
  %v3162 = vld [vmem:[%s3094 + $0x21] sm:$0xff]
  %v3163 = vld [vmem:[%s3094 + $0x31] sm:$0xff]
  %v3164 = vld [vmem:[%s3094 + $0x39] sm:$0xff]
  %v3165 = vld [vmem:[%s3094 + $0x49] sm:$0xff]
  %v3166 = vld [vmem:[%s3094 + $0x51] sm:$0xff]
  %v3167 = vld [vmem:[%s3094 + $0x61] sm:$0xff]
  %v3168 = vld [vmem:[%s3094 + $0x69] sm:$0xff]
  %v3169 = vld [vmem:[%s3094 + $0x79] sm:$0xff]
  %v3170 = vld [vmem:[%s3094 + $0x81] sm:$0xff]
  %v3171 = vld [vmem:[%s3094 + $0x91] sm:$0xff]
  %v3172 = vld [vmem:[%s3094 + $0x99] sm:$0xff]
  %v3173 = vld [vmem:[%s3094 + $0xa9] sm:$0xff]
  %v3174 = vld [vmem:[%s3094 + $0xb1] sm:$0xff]
  %v3175 = vld [vmem:[%s3094 + $0xc1] sm:$0xff]
  %v3176 = vld [vmem:[%s3094 + $0xc9] sm:$0xff]
  %v3177 = vld [vmem:[%s3094 + $0xd9] sm:$0xff]
  %v3178 = vld [vmem:[%s3094 + $0xe1] sm:$0xff]
  %v3179 = vld [vmem:[%s3094 + $0xf1] sm:$0xff]
  %v3180 = vld [vmem:[%s3094 + $0xf9] sm:$0xff]
  %v3181 = vld [vmem:[%s3094 + $0x109] sm:$0xff]
  %v3182 = vld [vmem:[%s3094 + $0x111] sm:$0xff]
  %v3183 = vld [vmem:[%s3094 + $0x121] sm:$0xff]
  %v3184 = vld [vmem:[%s3094 + $0x129] sm:$0xff]
  %v3185 = vld [vmem:[%s3094 + $0x139] sm:$0xff]
  %v3186 = vld [vmem:[%s3094 + $0x141] sm:$0xff]
  %v3187 = vld [vmem:[%s3094 + $0x151] sm:$0xff]
  %v3188 = vld [vmem:[%s3094 + $0x159] sm:$0xff]
  %v3189 = vld [vmem:[%s3094 + $0x169] sm:$0xff]
  %v3190 = vld [vmem:[%s3094 + $0x171] sm:$0xff]
  %3191 = vst [vmem:[#allocation2 + $0x38] sm:$0xff] %v3159
  %3192 = vst [vmem:[#allocation2 + $0x80] sm:$0xff] %v3160
  %3193 = vst [vmem:[#allocation2 + $0xc8] sm:$0xff] %v3161
  %3194 = vst [vmem:[#allocation2 + $0x110] sm:$0xff] %v3162
  %3195 = vst [vmem:[#allocation2 + $0x158] sm:$0xff] %v3163
  %3196 = vst [vmem:[#allocation2 + $0x1a0] sm:$0xff] %v3164
  %3197 = vst [vmem:[#allocation2 + $0x1e8] sm:$0xff] %v3165
  %3198 = vst [vmem:[#allocation2 + $0x230] sm:$0xff] %v3166
  %3199 = vst [vmem:[#allocation2 + $0x278] sm:$0xff] %v3167
  %3200 = vst [vmem:[#allocation2 + $0x2c0] sm:$0xff] %v3168
  %3201 = vst [vmem:[#allocation2 + $0x308] sm:$0xff] %v3169
  %3202 = vst [vmem:[#allocation2 + $0x350] sm:$0xff] %v3170
  %3203 = vst [vmem:[#allocation2 + $0x398] sm:$0xff] %v3171
  %3204 = vst [vmem:[#allocation2 + $0x3e0] sm:$0xff] %v3172
  %3205 = vst [vmem:[#allocation2 + $0x428] sm:$0xff] %v3173
  %3206 = vst [vmem:[#allocation2 + $0x470] sm:$0xff] %v3174
  %3207 = vst [vmem:[#allocation2 + $0x4b8] sm:$0xff] %v3175
  %3208 = vst [vmem:[#allocation2 + $0x500] sm:$0xff] %v3176
  %3209 = vst [vmem:[#allocation2 + $0x548] sm:$0xff] %v3177
  %3210 = vst [vmem:[#allocation2 + $0x590] sm:$0xff] %v3178
  %3211 = vst [vmem:[#allocation2 + $0x5d8] sm:$0xff] %v3179
  %3212 = vst [vmem:[#allocation2 + $0x620] sm:$0xff] %v3180
  %3213 = vst [vmem:[#allocation2 + $0x668] sm:$0xff] %v3181
  %3214 = vst [vmem:[#allocation2 + $0x6b0] sm:$0xff] %v3182
  %3215 = vst [vmem:[#allocation2 + $0x6f8] sm:$0xff] %v3183
  %3216 = vst [vmem:[#allocation2 + $0x740] sm:$0xff] %v3184
  %3217 = vst [vmem:[#allocation2 + $0x788] sm:$0xff] %v3185
  %3218 = vst [vmem:[#allocation2 + $0x7d0] sm:$0xff] %v3186
  %3219 = vst [vmem:[#allocation2 + $0x818] sm:$0xff] %v3187
  %3220 = vst [vmem:[#allocation2 + $0x860] sm:$0xff] %v3188
  %3221 = vst [vmem:[#allocation2 + $0x8a8] sm:$0xff] %v3189
  %3222 = vst [vmem:[#allocation2 + $0x8f0] sm:$0xff] %v3190
  %v3223 = vld [vmem:[%s3094 + $0x2] sm:$0xff]
  %v3224 = vld [vmem:[%s3094 + $0xa] sm:$0xff]
  %v3225 = vld [vmem:[%s3094 + $0x1a] sm:$0xff]
  %v3226 = vld [vmem:[%s3094 + $0x22] sm:$0xff]
  %v3227 = vld [vmem:[%s3094 + $0x32] sm:$0xff]
  %v3228 = vld [vmem:[%s3094 + $0x3a] sm:$0xff]
  %v3229 = vld [vmem:[%s3094 + $0x4a] sm:$0xff]
  %v3230 = vld [vmem:[%s3094 + $0x52] sm:$0xff]
  %v3231 = vld [vmem:[%s3094 + $0x62] sm:$0xff]
  %v3232 = vld [vmem:[%s3094 + $0x6a] sm:$0xff]
  %v3233 = vld [vmem:[%s3094 + $0x7a] sm:$0xff]
  %v3234 = vld [vmem:[%s3094 + $0x82] sm:$0xff]
  %v3235 = vld [vmem:[%s3094 + $0x92] sm:$0xff]
  %v3236 = vld [vmem:[%s3094 + $0x9a] sm:$0xff]
  %v3237 = vld [vmem:[%s3094 + $0xaa] sm:$0xff]
  %v3238 = vld [vmem:[%s3094 + $0xb2] sm:$0xff]
  %v3239 = vld [vmem:[%s3094 + $0xc2] sm:$0xff]
  %v3240 = vld [vmem:[%s3094 + $0xca] sm:$0xff]
  %v3241 = vld [vmem:[%s3094 + $0xda] sm:$0xff]
  %v3242 = vld [vmem:[%s3094 + $0xe2] sm:$0xff]
  %v3243 = vld [vmem:[%s3094 + $0xf2] sm:$0xff]
  %v3244 = vld [vmem:[%s3094 + $0xfa] sm:$0xff]
  %v3245 = vld [vmem:[%s3094 + $0x10a] sm:$0xff]
  %v3246 = vld [vmem:[%s3094 + $0x112] sm:$0xff]
  %v3247 = vld [vmem:[%s3094 + $0x122] sm:$0xff]
  %v3248 = vld [vmem:[%s3094 + $0x12a] sm:$0xff]
  %v3249 = vld [vmem:[%s3094 + $0x13a] sm:$0xff]
  %v3250 = vld [vmem:[%s3094 + $0x142] sm:$0xff]
  %v3251 = vld [vmem:[%s3094 + $0x152] sm:$0xff]
  %v3252 = vld [vmem:[%s3094 + $0x15a] sm:$0xff]
  %v3253 = vld [vmem:[%s3094 + $0x16a] sm:$0xff]
  %v3254 = vld [vmem:[%s3094 + $0x172] sm:$0xff]
  %3255 = vst [vmem:[#allocation2 + $0x40] sm:$0xff] %v3223
  %3256 = vst [vmem:[#allocation2 + $0x88] sm:$0xff] %v3224
  %3257 = vst [vmem:[#allocation2 + $0xd0] sm:$0xff] %v3225
  %3258 = vst [vmem:[#allocation2 + $0x118] sm:$0xff] %v3226
  %3259 = vst [vmem:[#allocation2 + $0x160] sm:$0xff] %v3227
  %3260 = vst [vmem:[#allocation2 + $0x1a8] sm:$0xff] %v3228
  %3261 = vst [vmem:[#allocation2 + $0x1f0] sm:$0xff] %v3229
  %3262 = vst [vmem:[#allocation2 + $0x238] sm:$0xff] %v3230
  %3263 = vst [vmem:[#allocation2 + $0x280] sm:$0xff] %v3231
  %3264 = vst [vmem:[#allocation2 + $0x2c8] sm:$0xff] %v3232
  %3265 = vst [vmem:[#allocation2 + $0x310] sm:$0xff] %v3233
  %3266 = vst [vmem:[#allocation2 + $0x358] sm:$0xff] %v3234
  %3267 = vst [vmem:[#allocation2 + $0x3a0] sm:$0xff] %v3235
  %3268 = vst [vmem:[#allocation2 + $0x3e8] sm:$0xff] %v3236
  %3269 = vst [vmem:[#allocation2 + $0x430] sm:$0xff] %v3237
  %3270 = vst [vmem:[#allocation2 + $0x478] sm:$0xff] %v3238
  %3271 = vst [vmem:[#allocation2 + $0x4c0] sm:$0xff] %v3239
  %3272 = vst [vmem:[#allocation2 + $0x508] sm:$0xff] %v3240
  %3273 = vst [vmem:[#allocation2 + $0x550] sm:$0xff] %v3241
  %3274 = vst [vmem:[#allocation2 + $0x598] sm:$0xff] %v3242
  %3275 = vst [vmem:[#allocation2 + $0x5e0] sm:$0xff] %v3243
  %3276 = vst [vmem:[#allocation2 + $0x628] sm:$0xff] %v3244
  %3277 = vst [vmem:[#allocation2 + $0x670] sm:$0xff] %v3245
  %3278 = vst [vmem:[#allocation2 + $0x6b8] sm:$0xff] %v3246
  %3279 = vst [vmem:[#allocation2 + $0x700] sm:$0xff] %v3247
  %3280 = vst [vmem:[#allocation2 + $0x748] sm:$0xff] %v3248
  %3281 = vst [vmem:[#allocation2 + $0x790] sm:$0xff] %v3249
  %3282 = vst [vmem:[#allocation2 + $0x7d8] sm:$0xff] %v3250
  %3283 = vst [vmem:[#allocation2 + $0x820] sm:$0xff] %v3251
  %3284 = vst [vmem:[#allocation2 + $0x868] sm:$0xff] %v3252
  %3285 = vst [vmem:[#allocation2 + $0x8b0] sm:$0xff] %v3253
  %3286 = vst [vmem:[#allocation2 + $0x8f8] sm:$0xff] %v3254
  %v3287 = vld [vmem:[#allocation2] sm:$0xff]
  %v3288 = vld [vmem:[#allocation2 + $0x8] sm:$0xff]
  %v3289 = vld [vmem:[#allocation2 + $0x10] sm:$0xff]
  %v3290 = vld [vmem:[#allocation2 + $0x18] sm:$0xff]
  %v3291 = vld [vmem:[#allocation2 + $0x20] sm:$0xff]
  %v3292 = vld [vmem:[#allocation2 + $0x28] sm:$0xff]
  %v3293 = vld [vmem:[#allocation2 + $0x30] sm:$0xff]
  %v3294 = vld [vmem:[#allocation2 + $0x38] sm:$0xff]
  %v3295 = vld [vmem:[#allocation2 + $0x40] sm:$0xff]
  %v3296 = vld [vmem:[#allocation2 + $0x48] sm:$0xff]
  %v3297 = vld [vmem:[#allocation2 + $0x50] sm:$0xff]
  %v3298 = vld [vmem:[#allocation2 + $0x58] sm:$0xff]
  %v3299 = vld [vmem:[#allocation2 + $0x60] sm:$0xff]
  %v3300 = vld [vmem:[#allocation2 + $0x68] sm:$0xff]
  %v3301 = vld [vmem:[#allocation2 + $0x70] sm:$0xff]
  %v3302 = vld [vmem:[#allocation2 + $0x78] sm:$0xff]
  %v3303 = vld [vmem:[#allocation2 + $0x80] sm:$0xff]
  %v3304 = vld [vmem:[#allocation2 + $0x88] sm:$0xff]
  %v3305 = vld [vmem:[#allocation2 + $0x90] sm:$0xff]
  %v3306 = vld [vmem:[#allocation2 + $0x98] sm:$0xff]
  %v3307 = vld [vmem:[#allocation2 + $0xa0] sm:$0xff]
  %v3308 = vld [vmem:[#allocation2 + $0xa8] sm:$0xff]
  %v3309 = vld [vmem:[#allocation2 + $0xb0] sm:$0xff]
  %v3310 = vld [vmem:[#allocation2 + $0xb8] sm:$0xff]
  %v3311 = vld [vmem:[#allocation2 + $0xc0] sm:$0xff]
  %v3312 = vld [vmem:[#allocation2 + $0xc8] sm:$0xff]
  %v3313 = vld [vmem:[#allocation2 + $0xd0] sm:$0xff]
  %v3314 = vld [vmem:[#allocation2 + $0xd8] sm:$0xff]
  %v3315 = vld [vmem:[#allocation2 + $0xe0] sm:$0xff]
  %v3316 = vld [vmem:[#allocation2 + $0xe8] sm:$0xff]
  %v3317 = vld [vmem:[#allocation2 + $0xf0] sm:$0xff]
  %v3318 = vld [vmem:[#allocation2 + $0xf8] sm:$0xff]
  %v3319 = vld [vmem:[#allocation2 + $0x100] sm:$0xff]
  %v3320 = vld [vmem:[#allocation2 + $0x108] sm:$0xff]
  %v3321 = vld [vmem:[#allocation2 + $0x110] sm:$0xff]
  %v3322 = vld [vmem:[#allocation2 + $0x118] sm:$0xff]
  %v3323 = vld [vmem:[#allocation2 + $0x120] sm:$0xff]
  %v3324 = vld [vmem:[#allocation2 + $0x128] sm:$0xff]
  %v3325 = vld [vmem:[#allocation2 + $0x130] sm:$0xff]
  %v3326 = vld [vmem:[#allocation2 + $0x138] sm:$0xff]
  %v3327 = vld [vmem:[#allocation2 + $0x140] sm:$0xff]
  %v3328 = vld [vmem:[#allocation2 + $0x148] sm:$0xff]
  %v3329 = vld [vmem:[#allocation2 + $0x150] sm:$0xff]
  %v3330 = vld [vmem:[#allocation2 + $0x158] sm:$0xff]
  %v3331 = vld [vmem:[#allocation2 + $0x160] sm:$0xff]
  %v3332 = vld [vmem:[#allocation2 + $0x168] sm:$0xff]
  %v3333 = vld [vmem:[#allocation2 + $0x170] sm:$0xff]
  %v3334 = vld [vmem:[#allocation2 + $0x178] sm:$0xff]
  %v3335 = vld [vmem:[#allocation2 + $0x180] sm:$0xff]
  %v3336 = vld [vmem:[#allocation2 + $0x188] sm:$0xff]
  %v3337 = vld [vmem:[#allocation2 + $0x190] sm:$0xff]
  %v3338 = vld [vmem:[#allocation2 + $0x198] sm:$0xff]
  %v3339 = vld [vmem:[#allocation2 + $0x1a0] sm:$0xff]
  %v3340 = vld [vmem:[#allocation2 + $0x1a8] sm:$0xff]
  %v3341 = vld [vmem:[#allocation2 + $0x1b0] sm:$0xff]
  %v3342 = vld [vmem:[#allocation2 + $0x1b8] sm:$0xff]
  %v3343 = vld [vmem:[#allocation2 + $0x1c0] sm:$0xff]
  %v3344 = vld [vmem:[#allocation2 + $0x1c8] sm:$0xff]
  %v3345 = vld [vmem:[#allocation2 + $0x1d0] sm:$0xff]
  %v3346 = vld [vmem:[#allocation2 + $0x1d8] sm:$0xff]
  %v3347 = vld [vmem:[#allocation2 + $0x1e0] sm:$0xff]
  %v3348 = vld [vmem:[#allocation2 + $0x1e8] sm:$0xff]
  %v3349 = vld [vmem:[#allocation2 + $0x1f0] sm:$0xff]
  %v3350 = vld [vmem:[#allocation2 + $0x1f8] sm:$0xff]
  %v3351 = vld [vmem:[#allocation2 + $0x200] sm:$0xff]
  %v3352 = vld [vmem:[#allocation2 + $0x208] sm:$0xff]
  %v3353 = vld [vmem:[#allocation2 + $0x210] sm:$0xff]
  %v3354 = vld [vmem:[#allocation2 + $0x218] sm:$0xff]
  %v3355 = vld [vmem:[#allocation2 + $0x220] sm:$0xff]
  %v3356 = vld [vmem:[#allocation2 + $0x228] sm:$0xff]
  %v3357 = vld [vmem:[#allocation2 + $0x230] sm:$0xff]
  %v3358 = vld [vmem:[#allocation2 + $0x238] sm:$0xff]
  %v3359 = vld [vmem:[#allocation2 + $0x240] sm:$0xff]
  %v3360 = vld [vmem:[#allocation2 + $0x248] sm:$0xff]
  %v3361 = vld [vmem:[#allocation2 + $0x250] sm:$0xff]
  %v3362 = vld [vmem:[#allocation2 + $0x258] sm:$0xff]
  %v3363 = vld [vmem:[#allocation2 + $0x260] sm:$0xff]
  %v3364 = vld [vmem:[#allocation2 + $0x268] sm:$0xff]
  %v3365 = vld [vmem:[#allocation2 + $0x270] sm:$0xff]
  %v3366 = vld [vmem:[#allocation2 + $0x278] sm:$0xff]
  %v3367 = vld [vmem:[#allocation2 + $0x280] sm:$0xff]
  %v3368 = vld [vmem:[#allocation2 + $0x288] sm:$0xff]
  %v3369 = vld [vmem:[#allocation2 + $0x290] sm:$0xff]
  %v3370 = vld [vmem:[#allocation2 + $0x298] sm:$0xff]
  %v3371 = vld [vmem:[#allocation2 + $0x2a0] sm:$0xff]
  %v3372 = vld [vmem:[#allocation2 + $0x2a8] sm:$0xff]
  %v3373 = vld [vmem:[#allocation2 + $0x2b0] sm:$0xff]
  %v3374 = vld [vmem:[#allocation2 + $0x2b8] sm:$0xff]
  %v3375 = vld [vmem:[#allocation2 + $0x2c0] sm:$0xff]
  %v3376 = vld [vmem:[#allocation2 + $0x2c8] sm:$0xff]
  %v3377 = vld [vmem:[#allocation2 + $0x2d0] sm:$0xff]
  %v3378 = vld [vmem:[#allocation2 + $0x2d8] sm:$0xff]
  %v3379 = vld [vmem:[#allocation2 + $0x2e0] sm:$0xff]
  %v3380 = vld [vmem:[#allocation2 + $0x2e8] sm:$0xff]
  %v3381 = vld [vmem:[#allocation2 + $0x2f0] sm:$0xff]
  %v3382 = vld [vmem:[#allocation2 + $0x2f8] sm:$0xff]
  %v3383 = vld [vmem:[#allocation2 + $0x300] sm:$0xff]
  %v3384 = vld [vmem:[#allocation2 + $0x308] sm:$0xff]
  %v3385 = vld [vmem:[#allocation2 + $0x310] sm:$0xff]
  %v3386 = vld [vmem:[#allocation2 + $0x318] sm:$0xff]
  %v3387 = vld [vmem:[#allocation2 + $0x320] sm:$0xff]
  %v3388 = vld [vmem:[#allocation2 + $0x328] sm:$0xff]
  %v3389 = vld [vmem:[#allocation2 + $0x330] sm:$0xff]
  %v3390 = vld [vmem:[#allocation2 + $0x338] sm:$0xff]
  %v3391 = vld [vmem:[#allocation2 + $0x340] sm:$0xff]
  %v3392 = vld [vmem:[#allocation2 + $0x348] sm:$0xff]
  %v3393 = vld [vmem:[#allocation2 + $0x350] sm:$0xff]
  %v3394 = vld [vmem:[#allocation2 + $0x358] sm:$0xff]
  %v3395 = vld [vmem:[#allocation2 + $0x360] sm:$0xff]
  %v3396 = vld [vmem:[#allocation2 + $0x368] sm:$0xff]
  %v3397 = vld [vmem:[#allocation2 + $0x370] sm:$0xff]
  %v3398 = vld [vmem:[#allocation2 + $0x378] sm:$0xff]
  %v3399 = vld [vmem:[#allocation2 + $0x380] sm:$0xff]
  %v3400 = vld [vmem:[#allocation2 + $0x388] sm:$0xff]
  %v3401 = vld [vmem:[#allocation2 + $0x390] sm:$0xff]
  %v3402 = vld [vmem:[#allocation2 + $0x398] sm:$0xff]
  %v3403 = vld [vmem:[#allocation2 + $0x3a0] sm:$0xff]
  %v3404 = vld [vmem:[#allocation2 + $0x3a8] sm:$0xff]
  %v3405 = vld [vmem:[#allocation2 + $0x3b0] sm:$0xff]
  %v3406 = vld [vmem:[#allocation2 + $0x3b8] sm:$0xff]
  %v3407 = vld [vmem:[#allocation2 + $0x3c0] sm:$0xff]
  %v3408 = vld [vmem:[#allocation2 + $0x3c8] sm:$0xff]
  %v3409 = vld [vmem:[#allocation2 + $0x3d0] sm:$0xff]
  %v3410 = vld [vmem:[#allocation2 + $0x3d8] sm:$0xff]
  %v3411 = vld [vmem:[#allocation2 + $0x3e0] sm:$0xff]
  %v3412 = vld [vmem:[#allocation2 + $0x3e8] sm:$0xff]
  %v3413 = vld [vmem:[#allocation2 + $0x3f0] sm:$0xff]
  %v3414 = vld [vmem:[#allocation2 + $0x3f8] sm:$0xff]
  %v3415 = vld [vmem:[#allocation2 + $0x400] sm:$0xff]
  %v3416 = vld [vmem:[#allocation2 + $0x408] sm:$0xff]
  %v3417 = vld [vmem:[#allocation2 + $0x410] sm:$0xff]
  %v3418 = vld [vmem:[#allocation2 + $0x418] sm:$0xff]
  %v3419 = vld [vmem:[#allocation2 + $0x420] sm:$0xff]
  %v3420 = vld [vmem:[#allocation2 + $0x428] sm:$0xff]
  %v3421 = vld [vmem:[#allocation2 + $0x430] sm:$0xff]
  %v3422 = vld [vmem:[#allocation2 + $0x438] sm:$0xff]
  %v3423 = vld [vmem:[#allocation2 + $0x440] sm:$0xff]
  %v3424 = vld [vmem:[#allocation2 + $0x448] sm:$0xff]
  %v3425 = vld [vmem:[#allocation2 + $0x450] sm:$0xff]
  %v3426 = vld [vmem:[#allocation2 + $0x458] sm:$0xff]
  %v3427 = vld [vmem:[#allocation2 + $0x460] sm:$0xff]
  %v3428 = vld [vmem:[#allocation2 + $0x468] sm:$0xff]
  %v3429 = vld [vmem:[#allocation2 + $0x470] sm:$0xff]
  %v3430 = vld [vmem:[#allocation2 + $0x478] sm:$0xff]
  %v3431 = vld [vmem:[#allocation2 + $0x480] sm:$0xff]
  %v3432 = vld [vmem:[#allocation2 + $0x488] sm:$0xff]
  %v3433 = vld [vmem:[#allocation2 + $0x490] sm:$0xff]
  %v3434 = vld [vmem:[#allocation2 + $0x498] sm:$0xff]
  %v3435 = vld [vmem:[#allocation2 + $0x4a0] sm:$0xff]
  %v3436 = vld [vmem:[#allocation2 + $0x4a8] sm:$0xff]
  %v3437 = vld [vmem:[#allocation2 + $0x4b0] sm:$0xff]
  %v3438 = vld [vmem:[#allocation2 + $0x4b8] sm:$0xff]
  %v3439 = vld [vmem:[#allocation2 + $0x4c0] sm:$0xff]
  %v3440 = vld [vmem:[#allocation2 + $0x4c8] sm:$0xff]
  %v3441 = vld [vmem:[#allocation2 + $0x4d0] sm:$0xff]
  %v3442 = vld [vmem:[#allocation2 + $0x4d8] sm:$0xff]
  %v3443 = vld [vmem:[#allocation2 + $0x4e0] sm:$0xff]
  %v3444 = vld [vmem:[#allocation2 + $0x4e8] sm:$0xff]
  %v3445 = vld [vmem:[#allocation2 + $0x4f0] sm:$0xff]
  %v3446 = vld [vmem:[#allocation2 + $0x4f8] sm:$0xff]
  %v3447 = vld [vmem:[#allocation2 + $0x500] sm:$0xff]
  %v3448 = vld [vmem:[#allocation2 + $0x508] sm:$0xff]
  %v3449 = vld [vmem:[#allocation2 + $0x510] sm:$0xff]
  %v3450 = vld [vmem:[#allocation2 + $0x518] sm:$0xff]
  %v3451 = vld [vmem:[#allocation2 + $0x520] sm:$0xff]
  %v3452 = vld [vmem:[#allocation2 + $0x528] sm:$0xff]
  %v3453 = vld [vmem:[#allocation2 + $0x530] sm:$0xff]
  %v3454 = vld [vmem:[#allocation2 + $0x538] sm:$0xff]
  %v3455 = vld [vmem:[#allocation2 + $0x540] sm:$0xff]
  %v3456 = vld [vmem:[#allocation2 + $0x548] sm:$0xff]
  %v3457 = vld [vmem:[#allocation2 + $0x550] sm:$0xff]
  %v3458 = vld [vmem:[#allocation2 + $0x558] sm:$0xff]
  %v3459 = vld [vmem:[#allocation2 + $0x560] sm:$0xff]
  %v3460 = vld [vmem:[#allocation2 + $0x568] sm:$0xff]
  %v3461 = vld [vmem:[#allocation2 + $0x570] sm:$0xff]
  %v3462 = vld [vmem:[#allocation2 + $0x578] sm:$0xff]
  %v3463 = vld [vmem:[#allocation2 + $0x580] sm:$0xff]
  %v3464 = vld [vmem:[#allocation2 + $0x588] sm:$0xff]
  %v3465 = vld [vmem:[#allocation2 + $0x590] sm:$0xff]
  %v3466 = vld [vmem:[#allocation2 + $0x598] sm:$0xff]
  %v3467 = vld [vmem:[#allocation2 + $0x5a0] sm:$0xff]
  %v3468 = vld [vmem:[#allocation2 + $0x5a8] sm:$0xff]
  %v3469 = vld [vmem:[#allocation2 + $0x5b0] sm:$0xff]
  %v3470 = vld [vmem:[#allocation2 + $0x5b8] sm:$0xff]
  %v3471 = vld [vmem:[#allocation2 + $0x5c0] sm:$0xff]
  %v3472 = vld [vmem:[#allocation2 + $0x5c8] sm:$0xff]
  %v3473 = vld [vmem:[#allocation2 + $0x5d0] sm:$0xff]
  %v3474 = vld [vmem:[#allocation2 + $0x5d8] sm:$0xff]
  %v3475 = vld [vmem:[#allocation2 + $0x5e0] sm:$0xff]
  %v3476 = vld [vmem:[#allocation2 + $0x5e8] sm:$0xff]
  %v3477 = vld [vmem:[#allocation2 + $0x5f0] sm:$0xff]
  %v3478 = vld [vmem:[#allocation2 + $0x5f8] sm:$0xff]
  %v3479 = vld [vmem:[#allocation2 + $0x600] sm:$0xff]
  %v3480 = vld [vmem:[#allocation2 + $0x608] sm:$0xff]
  %v3481 = vld [vmem:[#allocation2 + $0x610] sm:$0xff]
  %v3482 = vld [vmem:[#allocation2 + $0x618] sm:$0xff]
  %v3483 = vld [vmem:[#allocation2 + $0x620] sm:$0xff]
  %v3484 = vld [vmem:[#allocation2 + $0x628] sm:$0xff]
  %v3485 = vld [vmem:[#allocation2 + $0x630] sm:$0xff]
  %v3486 = vld [vmem:[#allocation2 + $0x638] sm:$0xff]
  %v3487 = vld [vmem:[#allocation2 + $0x640] sm:$0xff]
  %v3488 = vld [vmem:[#allocation2 + $0x648] sm:$0xff]
  %v3489 = vld [vmem:[#allocation2 + $0x650] sm:$0xff]
  %v3490 = vld [vmem:[#allocation2 + $0x658] sm:$0xff]
  %v3491 = vld [vmem:[#allocation2 + $0x660] sm:$0xff]
  %v3492 = vld [vmem:[#allocation2 + $0x668] sm:$0xff]
  %v3493 = vld [vmem:[#allocation2 + $0x670] sm:$0xff]
  %v3494 = vld [vmem:[#allocation2 + $0x678] sm:$0xff]
  %v3495 = vld [vmem:[#allocation2 + $0x680] sm:$0xff]
  %v3496 = vld [vmem:[#allocation2 + $0x688] sm:$0xff]
  %v3497 = vld [vmem:[#allocation2 + $0x690] sm:$0xff]
  %v3498 = vld [vmem:[#allocation2 + $0x698] sm:$0xff]
  %v3499 = vld [vmem:[#allocation2 + $0x6a0] sm:$0xff]
  %v3500 = vld [vmem:[#allocation2 + $0x6a8] sm:$0xff]
  %v3501 = vld [vmem:[#allocation2 + $0x6b0] sm:$0xff]
  %v3502 = vld [vmem:[#allocation2 + $0x6b8] sm:$0xff]
  %v3503 = vld [vmem:[#allocation2 + $0x6c0] sm:$0xff]
  %v3504 = vld [vmem:[#allocation2 + $0x6c8] sm:$0xff]
  %v3505 = vld [vmem:[#allocation2 + $0x6d0] sm:$0xff]
  %v3506 = vld [vmem:[#allocation2 + $0x6d8] sm:$0xff]
  %v3507 = vld [vmem:[#allocation2 + $0x6e0] sm:$0xff]
  %v3508 = vld [vmem:[#allocation2 + $0x6e8] sm:$0xff]
  %v3509 = vld [vmem:[#allocation2 + $0x6f0] sm:$0xff]
  %v3510 = vld [vmem:[#allocation2 + $0x6f8] sm:$0xff]
  %v3511 = vld [vmem:[#allocation2 + $0x700] sm:$0xff]
  %v3512 = vld [vmem:[#allocation2 + $0x708] sm:$0xff]
  %v3513 = vld [vmem:[#allocation2 + $0x710] sm:$0xff]
  %v3514 = vld [vmem:[#allocation2 + $0x718] sm:$0xff]
  %v3515 = vld [vmem:[#allocation2 + $0x720] sm:$0xff]
  %v3516 = vld [vmem:[#allocation2 + $0x728] sm:$0xff]
  %v3517 = vld [vmem:[#allocation2 + $0x730] sm:$0xff]
  %v3518 = vld [vmem:[#allocation2 + $0x738] sm:$0xff]
  %v3519 = vld [vmem:[#allocation2 + $0x740] sm:$0xff]
  %v3520 = vld [vmem:[#allocation2 + $0x748] sm:$0xff]
  %v3521 = vld [vmem:[#allocation2 + $0x750] sm:$0xff]
  %v3522 = vld [vmem:[#allocation2 + $0x758] sm:$0xff]
  %v3523 = vld [vmem:[#allocation2 + $0x760] sm:$0xff]
  %v3524 = vld [vmem:[#allocation2 + $0x768] sm:$0xff]
  %v3525 = vld [vmem:[#allocation2 + $0x770] sm:$0xff]
  %v3526 = vld [vmem:[#allocation2 + $0x778] sm:$0xff]
  %v3527 = vld [vmem:[#allocation2 + $0x780] sm:$0xff]
  %v3528 = vld [vmem:[#allocation2 + $0x788] sm:$0xff]
  %v3529 = vld [vmem:[#allocation2 + $0x790] sm:$0xff]
  %v3530 = vld [vmem:[#allocation2 + $0x798] sm:$0xff]
  %v3531 = vld [vmem:[#allocation2 + $0x7a0] sm:$0xff]
  %v3532 = vld [vmem:[#allocation2 + $0x7a8] sm:$0xff]
  %v3533 = vld [vmem:[#allocation2 + $0x7b0] sm:$0xff]
  %v3534 = vld [vmem:[#allocation2 + $0x7b8] sm:$0xff]
  %v3535 = vld [vmem:[#allocation2 + $0x7c0] sm:$0xff]
  %v3536 = vld [vmem:[#allocation2 + $0x7c8] sm:$0xff]
  %v3537 = vld [vmem:[#allocation2 + $0x7d0] sm:$0xff]
  %v3538 = vld [vmem:[#allocation2 + $0x7d8] sm:$0xff]
  %v3539 = vld [vmem:[#allocation2 + $0x7e0] sm:$0xff]
  %v3540 = vld [vmem:[#allocation2 + $0x7e8] sm:$0xff]
  %v3541 = vld [vmem:[#allocation2 + $0x7f0] sm:$0xff]
  %v3542 = vld [vmem:[#allocation2 + $0x7f8] sm:$0xff]
  %v3543 = vld [vmem:[#allocation2 + $0x800] sm:$0xff]
  %v3544 = vld [vmem:[#allocation2 + $0x808] sm:$0xff]
  %v3545 = vld [vmem:[#allocation2 + $0x810] sm:$0xff]
  %v3546 = vld [vmem:[#allocation2 + $0x818] sm:$0xff]
  %v3547 = vld [vmem:[#allocation2 + $0x820] sm:$0xff]
  %v3548 = vld [vmem:[#allocation2 + $0x828] sm:$0xff]
  %v3549 = vld [vmem:[#allocation2 + $0x830] sm:$0xff]
  %v3550 = vld [vmem:[#allocation2 + $0x838] sm:$0xff]
  %v3551 = vld [vmem:[#allocation2 + $0x840] sm:$0xff]
  %v3552 = vld [vmem:[#allocation2 + $0x848] sm:$0xff]
  %v3553 = vld [vmem:[#allocation2 + $0x850] sm:$0xff]
  %v3554 = vld [vmem:[#allocation2 + $0x858] sm:$0xff]
  %v3555 = vld [vmem:[#allocation2 + $0x860] sm:$0xff]
  %v3556 = vld [vmem:[#allocation2 + $0x868] sm:$0xff]
  %v3557 = vld [vmem:[#allocation2 + $0x870] sm:$0xff]
  %v3558 = vld [vmem:[#allocation2 + $0x878] sm:$0xff]
  %v3559 = vld [vmem:[#allocation2 + $0x880] sm:$0xff]
  %v3560 = vld [vmem:[#allocation2 + $0x888] sm:$0xff]
  %v3561 = vld [vmem:[#allocation2 + $0x890] sm:$0xff]
  %v3562 = vld [vmem:[#allocation2 + $0x898] sm:$0xff]
  %v3563 = vld [vmem:[#allocation2 + $0x8a0] sm:$0xff]
  %v3564 = vld [vmem:[#allocation2 + $0x8a8] sm:$0xff]
  %v3565 = vld [vmem:[#allocation2 + $0x8b0] sm:$0xff]
  %v3566 = vld [vmem:[#allocation2 + $0x8b8] sm:$0xff]
  %v3567 = vld [vmem:[#allocation2 + $0x8c0] sm:$0xff]
  %v3568 = vld [vmem:[#allocation2 + $0x8c8] sm:$0xff]
  %v3569 = vld [vmem:[#allocation2 + $0x8d0] sm:$0xff]
  %v3570 = vld [vmem:[#allocation2 + $0x8d8] sm:$0xff]
  %v3571 = vld [vmem:[#allocation2 + $0x8e0] sm:$0xff]
  %v3572 = vld [vmem:[#allocation2 + $0x8e8] sm:$0xff]
  %v3573 = vld [vmem:[#allocation2 + $0x8f0] sm:$0xff]
  %v3574 = vld [vmem:[#allocation2 + $0x8f8] sm:$0xff]
  %v3575 = vld [vmem:[%s2] sm:$0xff]
  %v3576 = vld [vmem:[%s2 + $0x8] sm:$0xff]
  %v3577 = vld [vmem:[%s2 + $0x10] sm:$0xff]
  %v3578 = vld [vmem:[%s2 + $0x18] sm:$0xff]
  %v3579 = vld [vmem:[%s2 + $0x20] sm:$0xff]
  %v3580 = vld [vmem:[%s2 + $0x28] sm:$0xff]
  %v3581 = vld [vmem:[%s2 + $0x30] sm:$0xff]
  %v3582 = vld [vmem:[%s2 + $0x38] sm:$0xff]
  %v3583 = vld [vmem:[%s2 + $0x40] sm:$0xff]
  %v3584 = vld [vmem:[%s2 + $0x48] sm:$0xff]
  %v3585 = vld [vmem:[%s2 + $0x50] sm:$0xff]
  %v3586 = vld [vmem:[%s2 + $0x58] sm:$0xff]
  %v3587 = vld [vmem:[%s2 + $0x60] sm:$0xff]
  %v3588 = vld [vmem:[%s2 + $0x68] sm:$0xff]
  %v3589 = vld [vmem:[%s2 + $0x70] sm:$0xff]
  %v3590 = vld [vmem:[%s2 + $0x78] sm:$0xff]
  %v3591 = vld [vmem:[%s2 + $0x80] sm:$0xff]
  %v3592 = vld [vmem:[%s2 + $0x88] sm:$0xff]
  %v3593 = vld [vmem:[%s2 + $0x90] sm:$0xff]
  %v3594 = vld [vmem:[%s2 + $0x98] sm:$0xff]
  %v3595 = vld [vmem:[%s2 + $0xa0] sm:$0xff]
  %v3596 = vld [vmem:[%s2 + $0xa8] sm:$0xff]
  %v3597 = vld [vmem:[%s2 + $0xb0] sm:$0xff]
  %v3598 = vld [vmem:[%s2 + $0xb8] sm:$0xff]
  %v3599 = vld [vmem:[%s2 + $0xc0] sm:$0xff]
  %v3600 = vld [vmem:[%s2 + $0xc8] sm:$0xff]
  %v3601 = vld [vmem:[%s2 + $0xd0] sm:$0xff]
  %v3602 = vld [vmem:[%s2 + $0xd8] sm:$0xff]
  %v3603 = vld [vmem:[%s2 + $0xe0] sm:$0xff]
  %v3604 = vld [vmem:[%s2 + $0xe8] sm:$0xff]
  %v3605 = vld [vmem:[%s2 + $0xf0] sm:$0xff]
  %v3606 = vld [vmem:[%s2 + $0xf8] sm:$0xff]
  %v3607 = vld [vmem:[%s2 + $0x100] sm:$0xff]
  %v3608 = vld [vmem:[%s2 + $0x108] sm:$0xff]
  %v3609 = vld [vmem:[%s2 + $0x110] sm:$0xff]
  %v3610 = vld [vmem:[%s2 + $0x118] sm:$0xff]
  %v3611 = vld [vmem:[%s2 + $0x120] sm:$0xff]
  %v3612 = vld [vmem:[%s2 + $0x128] sm:$0xff]
  %v3613 = vld [vmem:[%s2 + $0x130] sm:$0xff]
  %v3614 = vld [vmem:[%s2 + $0x138] sm:$0xff]
  %v3615 = vld [vmem:[%s2 + $0x140] sm:$0xff]
  %v3616 = vld [vmem:[%s2 + $0x148] sm:$0xff]
  %v3617 = vld [vmem:[%s2 + $0x150] sm:$0xff]
  %v3618 = vld [vmem:[%s2 + $0x158] sm:$0xff]
  %v3619 = vld [vmem:[%s2 + $0x160] sm:$0xff]
  %v3620 = vld [vmem:[%s2 + $0x168] sm:$0xff]
  %v3621 = vld [vmem:[%s2 + $0x170] sm:$0xff]
  %v3622 = vld [vmem:[%s2 + $0x178] sm:$0xff]
  %v3623 = vld [vmem:[%s2 + $0x180] sm:$0xff]
  %v3624 = vld [vmem:[%s2 + $0x188] sm:$0xff]
  %v3625 = vld [vmem:[%s2 + $0x190] sm:$0xff]
  %v3626 = vld [vmem:[%s2 + $0x198] sm:$0xff]
  %v3627 = vld [vmem:[%s2 + $0x1a0] sm:$0xff]
  %v3628 = vld [vmem:[%s2 + $0x1a8] sm:$0xff]
  %v3629 = vld [vmem:[%s2 + $0x1b0] sm:$0xff]
  %v3630 = vld [vmem:[%s2 + $0x1b8] sm:$0xff]
  %v3631 = vld [vmem:[%s2 + $0x1c0] sm:$0xff]
  %v3632 = vld [vmem:[%s2 + $0x1c8] sm:$0xff]
  %v3633 = vld [vmem:[%s2 + $0x1d0] sm:$0xff]
  %v3634 = vld [vmem:[%s2 + $0x1d8] sm:$0xff]
  %v3635 = vld [vmem:[%s2 + $0x1e0] sm:$0xff]
  %v3636 = vld [vmem:[%s2 + $0x1e8] sm:$0xff]
  %v3637 = vld [vmem:[%s2 + $0x1f0] sm:$0xff]
  %v3638 = vld [vmem:[%s2 + $0x1f8] sm:$0xff]
  %v3639 = vld [vmem:[%s2 + $0x200] sm:$0xff]
  %v3640 = vld [vmem:[%s2 + $0x208] sm:$0xff]
  %v3641 = vld [vmem:[%s2 + $0x210] sm:$0xff]
  %v3642 = vld [vmem:[%s2 + $0x218] sm:$0xff]
  %v3643 = vld [vmem:[%s2 + $0x220] sm:$0xff]
  %v3644 = vld [vmem:[%s2 + $0x228] sm:$0xff]
  %v3645 = vld [vmem:[%s2 + $0x230] sm:$0xff]
  %v3646 = vld [vmem:[%s2 + $0x238] sm:$0xff]
  %v3647 = vld [vmem:[%s2 + $0x240] sm:$0xff]
  %v3648 = vld [vmem:[%s2 + $0x248] sm:$0xff]
  %v3649 = vld [vmem:[%s2 + $0x250] sm:$0xff]
  %v3650 = vld [vmem:[%s2 + $0x258] sm:$0xff]
  %v3651 = vld [vmem:[%s2 + $0x260] sm:$0xff]
  %v3652 = vld [vmem:[%s2 + $0x268] sm:$0xff]
  %v3653 = vld [vmem:[%s2 + $0x270] sm:$0xff]
  %v3654 = vld [vmem:[%s2 + $0x278] sm:$0xff]
  %v3655 = vld [vmem:[%s2 + $0x280] sm:$0xff]
  %v3656 = vld [vmem:[%s2 + $0x288] sm:$0xff]
  %v3657 = vld [vmem:[%s2 + $0x290] sm:$0xff]
  %v3658 = vld [vmem:[%s2 + $0x298] sm:$0xff]
  %v3659 = vld [vmem:[%s2 + $0x2a0] sm:$0xff]
  %v3660 = vld [vmem:[%s2 + $0x2a8] sm:$0xff]
  %v3661 = vld [vmem:[%s2 + $0x2b0] sm:$0xff]
  %v3662 = vld [vmem:[%s2 + $0x2b8] sm:$0xff]
  %v3663 = vld [vmem:[%s2 + $0x2c0] sm:$0xff]
  %v3664 = vld [vmem:[%s2 + $0x2c8] sm:$0xff]
  %v3665 = vld [vmem:[%s2 + $0x2d0] sm:$0xff]
  %v3666 = vld [vmem:[%s2 + $0x2d8] sm:$0xff]
  %v3667 = vld [vmem:[%s2 + $0x2e0] sm:$0xff]
  %v3668 = vld [vmem:[%s2 + $0x2e8] sm:$0xff]
  %v3669 = vld [vmem:[%s2 + $0x2f0] sm:$0xff]
  %v3670 = vld [vmem:[%s2 + $0x2f8] sm:$0xff]
  %v3671 = vld [vmem:[%s2 + $0x300] sm:$0xff]
  %v3672 = vld [vmem:[%s2 + $0x308] sm:$0xff]
  %v3673 = vld [vmem:[%s2 + $0x310] sm:$0xff]
  %v3674 = vld [vmem:[%s2 + $0x318] sm:$0xff]
  %v3675 = vld [vmem:[%s2 + $0x320] sm:$0xff]
  %v3676 = vld [vmem:[%s2 + $0x328] sm:$0xff]
  %v3677 = vld [vmem:[%s2 + $0x330] sm:$0xff]
  %v3678 = vld [vmem:[%s2 + $0x338] sm:$0xff]
  %v3679 = vld [vmem:[%s2 + $0x340] sm:$0xff]
  %v3680 = vld [vmem:[%s2 + $0x348] sm:$0xff]
  %v3681 = vld [vmem:[%s2 + $0x350] sm:$0xff]
  %v3682 = vld [vmem:[%s2 + $0x358] sm:$0xff]
  %v3683 = vld [vmem:[%s2 + $0x360] sm:$0xff]
  %v3684 = vld [vmem:[%s2 + $0x368] sm:$0xff]
  %v3685 = vld [vmem:[%s2 + $0x370] sm:$0xff]
  %v3686 = vld [vmem:[%s2 + $0x378] sm:$0xff]
  %v3687 = vld [vmem:[%s2 + $0x380] sm:$0xff]
  %v3688 = vld [vmem:[%s2 + $0x388] sm:$0xff]
  %v3689 = vld [vmem:[%s2 + $0x390] sm:$0xff]
  %v3690 = vld [vmem:[%s2 + $0x398] sm:$0xff]
  %v3691 = vld [vmem:[%s2 + $0x3a0] sm:$0xff]
  %v3692 = vld [vmem:[%s2 + $0x3a8] sm:$0xff]
  %v3693 = vld [vmem:[%s2 + $0x3b0] sm:$0xff]
  %v3694 = vld [vmem:[%s2 + $0x3b8] sm:$0xff]
  %v3695 = vld [vmem:[%s2 + $0x3c0] sm:$0xff]
  %v3696 = vld [vmem:[%s2 + $0x3c8] sm:$0xff]
  %v3697 = vld [vmem:[%s2 + $0x3d0] sm:$0xff]
  %v3698 = vld [vmem:[%s2 + $0x3d8] sm:$0xff]
  %v3699 = vld [vmem:[%s2 + $0x3e0] sm:$0xff]
  %v3700 = vld [vmem:[%s2 + $0x3e8] sm:$0xff]
  %v3701 = vld [vmem:[%s2 + $0x3f0] sm:$0xff]
  %v3702 = vld [vmem:[%s2 + $0x3f8] sm:$0xff]
  %v3703 = vld [vmem:[%s2 + $0x400] sm:$0xff]
  %v3704 = vld [vmem:[%s2 + $0x408] sm:$0xff]
  %v3705 = vld [vmem:[%s2 + $0x410] sm:$0xff]
  %v3706 = vld [vmem:[%s2 + $0x418] sm:$0xff]
  %v3707 = vld [vmem:[%s2 + $0x420] sm:$0xff]
  %v3708 = vld [vmem:[%s2 + $0x428] sm:$0xff]
  %v3709 = vld [vmem:[%s2 + $0x430] sm:$0xff]
  %v3710 = vld [vmem:[%s2 + $0x438] sm:$0xff]
  %v3711 = vld [vmem:[%s2 + $0x440] sm:$0xff]
  %v3712 = vld [vmem:[%s2 + $0x448] sm:$0xff]
  %v3713 = vld [vmem:[%s2 + $0x450] sm:$0xff]
  %v3714 = vld [vmem:[%s2 + $0x458] sm:$0xff]
  %v3715 = vld [vmem:[%s2 + $0x460] sm:$0xff]
  %v3716 = vld [vmem:[%s2 + $0x468] sm:$0xff]
  %v3717 = vld [vmem:[%s2 + $0x470] sm:$0xff]
  %v3718 = vld [vmem:[%s2 + $0x478] sm:$0xff]
  %3719 = vmatprep.subr.mxu0 0.0
  %3720 = vmatpush1.msra.mxu0 %v3575
  %3721 = vmatprep.subr.mxu0 0.0
  %3722 = vmatpush1.msra.mxu0 %v3576
  %3723 = vmatprep.subr.mxu0 0.0
  %3724 = vmatpush1.msra.mxu0 %v3577
  %3725 = vmatprep.subr.mxu0 0.0
  %3726 = vmatpush1.msra.mxu0 %v3578
  %3727 = vmatprep.subr.mxu0 0.0
  %3728 = vmatpush1.msra.mxu0 %v3579
  %3729 = vmatprep.subr.mxu0 0.0
  %3730 = vmatpush1.msra.mxu0 %v3580
  %3731 = vmatprep.subr.mxu0 0.0
  %3732 = vmatpush1.msra.mxu0 %v3581
  %3733 = vmatprep.subr.mxu0 0.0
  %3734 = vmatpush1.msra.mxu0 %v3582
  %3735 = vmatprep.subr.mxu0 0.0
  %3736 = vmatpush1.msra.mxu0 %v3583
  %3737 = vmatprep.subr.mxu0 0.0
  %3738 = vmatpush1.msra.mxu0 %v3584
  %3739 = vmatprep.subr.mxu0 0.0
  %3740 = vmatpush1.msra.mxu0 %v3585
  %3741 = vmatprep.subr.mxu0 0.0
  %3742 = vmatpush1.msra.mxu0 %v3586
  %3743 = vmatprep.subr.mxu0 0.0
  %3744 = vmatpush1.msra.mxu0 %v3587
  %3745 = vmatprep.subr.mxu0 0.0
  %3746 = vmatpush1.msra.mxu0 %v3588
  %3747 = vmatprep.subr.mxu0 0.0
  %3748 = vmatpush1.msra.mxu0 %v3589
  %3749 = vmatprep.subr.mxu0 0.0
  %3750 = vmatpush1.msra.mxu0 %v3590
  %3751 = vmatprep.subr.mxu0 0.0
  %3752 = vmatpush1.msra.mxu0 %v3591
  %3753 = vmatprep.subr.mxu0 0.0
  %3754 = vmatpush1.msra.mxu0 %v3592
  %3755 = vmatprep.subr.mxu0 0.0
  %3756 = vmatpush1.msra.mxu0 %v3593
  %3757 = vmatprep.subr.mxu0 0.0
  %3758 = vmatpush1.msra.mxu0 %v3594
  %3759 = vmatprep.subr.mxu0 0.0
  %3760 = vmatpush1.msra.mxu0 %v3595
  %3761 = vmatprep.subr.mxu0 0.0
  %3762 = vmatpush1.msra.mxu0 %v3596
  %3763 = vmatprep.subr.mxu0 0.0
  %3764 = vmatpush1.msra.mxu0 %v3597
  %3765 = vmatprep.subr.mxu0 0.0
  %3766 = vmatpush1.msra.mxu0 %v3598
  %3767 = vmatprep.subr.mxu0 0.0
  %3768 = vmatpush1.msra.mxu0 %v3599
  %3769 = vmatprep.subr.mxu0 0.0
  %3770 = vmatpush1.msra.mxu0 %v3600
  %3771 = vmatprep.subr.mxu0 0.0
  %3772 = vmatpush1.msra.mxu0 %v3601
  %3773 = vmatprep.subr.mxu0 0.0
  %3774 = vmatpush1.msra.mxu0 %v3602
  %3775 = vmatprep.subr.mxu0 0.0
  %3776 = vmatpush1.msra.mxu0 %v3603
  %3777 = vmatprep.subr.mxu0 0.0
  %3778 = vmatpush1.msra.mxu0 %v3604
  %3779 = vmatprep.subr.mxu0 0.0
  %3780 = vmatpush1.msra.mxu0 %v3605
  %3781 = vmatprep.subr.mxu0 0.0
  %3782 = vmatpush1.msra.mxu0 %v3606
  %3783 = vmatprep.mubr.f32.mxu0 %v3288
  %3784 = vmatmul.mubr.f32.gmra.mrb[0].mxu0 %v3287
  %v3785 = vpop.f32.mrb[0].mxu0
  %v3786 = vadd.f32 0.0, %v3785
  %v3787 = vpop.f32.mrb[0].mxu0
  %3788 = vmatprep.mubr.f32.mxu0 %v3297
  %3789 = vmatmul.mubr.f32.gmra.mrb[0].mxu0 %v3296
  %v3790 = vpop.f32.mrb[0].mxu0
  %v3791 = vadd.f32 0.0, %v3790
  %v3792 = vpop.f32.mrb[0].mxu0
  %3793 = vmatprep.mubr.f32.mxu0 %v3306
  %3794 = vmatmul.mubr.f32.gmra.mrb[0].mxu0 %v3305
  %v3795 = vpop.f32.mrb[0].mxu0
  %v3796 = vadd.f32 0.0, %v3795
  %v3797 = vpop.f32.mrb[0].mxu0
  %3798 = vmatprep.mubr.f32.mxu0 %v3315
  %3799 = vmatmul.mubr.f32.gmra.mrb[0].mxu0 %v3314
  %v3800 = vpop.f32.mrb[0].mxu0
  %v3801 = vadd.f32 0.0, %v3800
  %v3802 = vpop.f32.mrb[0].mxu0
  %3803 = vmatprep.mubr.f32.mxu0 %v3324
  %3804 = vmatmul.mubr.f32.gmra.mrb[0].mxu0 %v3323
  %v3805 = vpop.f32.mrb[0].mxu0
  %v3806 = vadd.f32 0.0, %v3805
  %v3807 = vpop.f32.mrb[0].mxu0
  %3808 = vmatprep.mubr.f32.mxu0 %v3333
  %3809 = vmatmul.mubr.f32.gmra.mrb[0].mxu0 %v3332
  %v3810 = vpop.f32.mrb[0].mxu0
  %v3811 = vadd.f32 0.0, %v3810
  %v3812 = vpop.f32.mrb[0].mxu0
  %3813 = vmatprep.mubr.f32.mxu0 %v3342
  %3814 = vmatmul.mubr.f32.gmra.mrb[0].mxu0 %v3341
  %v3815 = vpop.f32.mrb[0].mxu0
  %v3816 = vadd.f32 0.0, %v3815
  %v3817 = vpop.f32.mrb[0].mxu0
  %3818 = vmatprep.mubr.f32.mxu0 %v3351
  %3819 = vmatmul.mubr.f32.gmra.mrb[0].mxu0 %v3350
  %v3820 = vpop.f32.mrb[0].mxu0
  %v3821 = vadd.f32 0.0, %v3820
  %v3822 = vpop.f32.mrb[0].mxu0
  %3823 = vmatprep.mubr.f32.mxu0 %v3360
  %3824 = vmatmul.mubr.f32.gmra.mrb[0].mxu0 %v3359
  %v3825 = vpop.f32.mrb[0].mxu0
  %v3826 = vadd.f32 0.0, %v3825
  %v3827 = vpop.f32.mrb[0].mxu0
  %3828 = vmatprep.mubr.f32.mxu0 %v3369
  %3829 = vmatmul.mubr.f32.gmra.mrb[0].mxu0 %v3368
  %v3830 = vpop.f32.mrb[0].mxu0
  %v3831 = vadd.f32 0.0, %v3830
  %v3832 = vpop.f32.mrb[0].mxu0
  %3833 = vmatprep.mubr.f32.mxu0 %v3378
  %3834 = vmatmul.mubr.f32.gmra.mrb[0].mxu0 %v3377
  %v3835 = vpop.f32.mrb[0].mxu0
  %v3836 = vadd.f32 0.0, %v3835
  %v3837 = vpop.f32.mrb[0].mxu0
  %3838 = vmatprep.mubr.f32.mxu0 %v3387
  %3839 = vmatmul.mubr.f32.gmra.mrb[0].mxu0 %v3386
  %v3840 = vpop.f32.mrb[0].mxu0
  %v3841 = vadd.f32 0.0, %v3840
  %v3842 = vpop.f32.mrb[0].mxu0
  %3843 = vmatprep.mubr.f32.mxu0 %v3396
  %3844 = vmatmul.mubr.f32.gmra.mrb[0].mxu0 %v3395
  %v3845 = vpop.f32.mrb[0].mxu0
  %v3846 = vadd.f32 0.0, %v3845
  %v3847 = vpop.f32.mrb[0].mxu0
  %3848 = vmatprep.mubr.f32.mxu0 %v3405
  %3849 = vmatmul.mubr.f32.gmra.mrb[0].mxu0 %v3404
  %v3850 = vpop.f32.mrb[0].mxu0
  %v3851 = vadd.f32 0.0, %v3850
  %v3852 = vpop.f32.mrb[0].mxu0
  %3853 = vmatprep.mubr.f32.mxu0 %v3414
  %3854 = vmatmul.mubr.f32.gmra.mrb[0].mxu0 %v3413
  %v3855 = vpop.f32.mrb[0].mxu0
  %v3856 = vadd.f32 0.0, %v3855
  %v3857 = vpop.f32.mrb[0].mxu0
  %3858 = vmatprep.mubr.f32.mxu0 %v3423
  %3859 = vmatmul.mubr.f32.gmra.mrb[0].mxu0 %v3422
  %v3860 = vpop.f32.mrb[0].mxu0
  %v3861 = vadd.f32 0.0, %v3860
  %v3862 = vpop.f32.mrb[0].mxu0
  %3863 = vmatprep.mubr.f32.mxu0 %v3432
  %3864 = vmatmul.mubr.f32.gmra.mrb[0].mxu0 %v3431
  %v3865 = vpop.f32.mrb[0].mxu0
  %v3866 = vadd.f32 0.0, %v3865
  %v3867 = vpop.f32.mrb[0].mxu0
  %3868 = vmatprep.mubr.f32.mxu0 %v3441
  %3869 = vmatmul.mubr.f32.gmra.mrb[0].mxu0 %v3440
  %v3870 = vpop.f32.mrb[0].mxu0
  %v3871 = vadd.f32 0.0, %v3870
  %v3872 = vpop.f32.mrb[0].mxu0
  %3873 = vmatprep.mubr.f32.mxu0 %v3450
  %3874 = vmatmul.mubr.f32.gmra.mrb[0].mxu0 %v3449
  %v3875 = vpop.f32.mrb[0].mxu0
  %v3876 = vadd.f32 0.0, %v3875
  %v3877 = vpop.f32.mrb[0].mxu0
  %3878 = vmatprep.mubr.f32.mxu0 %v3459
  %3879 = vmatmul.mubr.f32.gmra.mrb[0].mxu0 %v3458
  %v3880 = vpop.f32.mrb[0].mxu0
  %v3881 = vadd.f32 0.0, %v3880
  %v3882 = vpop.f32.mrb[0].mxu0
  %3883 = vmatprep.mubr.f32.mxu0 %v3468
  %3884 = vmatmul.mubr.f32.gmra.mrb[0].mxu0 %v3467
  %v3885 = vpop.f32.mrb[0].mxu0
  %v3886 = vadd.f32 0.0, %v3885
  %v3887 = vpop.f32.mrb[0].mxu0
  %3888 = vmatprep.mubr.f32.mxu0 %v3477
  %3889 = vmatmul.mubr.f32.gmra.mrb[0].mxu0 %v3476
  %v3890 = vpop.f32.mrb[0].mxu0
  %v3891 = vadd.f32 0.0, %v3890
  %v3892 = vpop.f32.mrb[0].mxu0
  %3893 = vmatprep.mubr.f32.mxu0 %v3486
  %3894 = vmatmul.mubr.f32.gmra.mrb[0].mxu0 %v3485
  %v3895 = vpop.f32.mrb[0].mxu0
  %v3896 = vadd.f32 0.0, %v3895
  %v3897 = vpop.f32.mrb[0].mxu0
  %3898 = vmatprep.mubr.f32.mxu0 %v3495
  %3899 = vmatmul.mubr.f32.gmra.mrb[0].mxu0 %v3494
  %v3900 = vpop.f32.mrb[0].mxu0
  %v3901 = vadd.f32 0.0, %v3900
  %v3902 = vpop.f32.mrb[0].mxu0
  %3903 = vmatprep.mubr.f32.mxu0 %v3504
  %3904 = vmatmul.mubr.f32.gmra.mrb[0].mxu0 %v3503
  %v3905 = vpop.f32.mrb[0].mxu0
  %v3906 = vadd.f32 0.0, %v3905
  %v3907 = vpop.f32.mrb[0].mxu0
  %3908 = vmatprep.mubr.f32.mxu0 %v3513
  %3909 = vmatmul.mubr.f32.gmra.mrb[0].mxu0 %v3512
  %v3910 = vpop.f32.mrb[0].mxu0
  %v3911 = vadd.f32 0.0, %v3910
  %v3912 = vpop.f32.mrb[0].mxu0
  %3913 = vmatprep.mubr.f32.mxu0 %v3522
  %3914 = vmatmul.mubr.f32.gmra.mrb[0].mxu0 %v3521
  %v3915 = vpop.f32.mrb[0].mxu0
  %v3916 = vadd.f32 0.0, %v3915
  %v3917 = vpop.f32.mrb[0].mxu0
  %3918 = vmatprep.mubr.f32.mxu0 %v3531
  %3919 = vmatmul.mubr.f32.gmra.mrb[0].mxu0 %v3530
  %v3920 = vpop.f32.mrb[0].mxu0
  %v3921 = vadd.f32 0.0, %v3920
  %v3922 = vpop.f32.mrb[0].mxu0
  %3923 = vmatprep.mubr.f32.mxu0 %v3540
  %3924 = vmatmul.mubr.f32.gmra.mrb[0].mxu0 %v3539
  %v3925 = vpop.f32.mrb[0].mxu0
  %v3926 = vadd.f32 0.0, %v3925
  %v3927 = vpop.f32.mrb[0].mxu0
  %3928 = vmatprep.mubr.f32.mxu0 %v3549
  %3929 = vmatmul.mubr.f32.gmra.mrb[0].mxu0 %v3548
  %v3930 = vpop.f32.mrb[0].mxu0
  %v3931 = vadd.f32 0.0, %v3930
  %v3932 = vpop.f32.mrb[0].mxu0
  %3933 = vmatprep.mubr.f32.mxu0 %v3558
  %3934 = vmatmul.mubr.f32.gmra.mrb[0].mxu0 %v3557
  %v3935 = vpop.f32.mrb[0].mxu0
  %v3936 = vadd.f32 0.0, %v3935
  %v3937 = vpop.f32.mrb[0].mxu0
  %3938 = vmatprep.mubr.f32.mxu0 %v3567
  %3939 = vmatmul.mubr.f32.gmra.mrb[0].mxu0 %v3566
  %v3940 = vpop.f32.mrb[0].mxu0
  %v3941 = vadd.f32 0.0, %v3940
  %v3942 = vpop.f32.mrb[0].mxu0
  %3943 = vdwg.mxu0
  %3944 = vmatprep.subr.mxu0 0.0
  %3945 = vmatpush1.msra.mxu0 %v3607
  %3946 = vmatprep.subr.mxu0 0.0
  %3947 = vmatpush1.msra.mxu0 %v3608
  %3948 = vmatprep.subr.mxu0 0.0
  %3949 = vmatpush1.msra.mxu0 %v3609
  %3950 = vmatprep.subr.mxu0 0.0
  %3951 = vmatpush1.msra.mxu0 %v3610
  %3952 = vmatprep.subr.mxu0 0.0
  %3953 = vmatpush1.msra.mxu0 %v3611
  %3954 = vmatprep.subr.mxu0 0.0
  %3955 = vmatpush1.msra.mxu0 %v3612
  %3956 = vmatprep.subr.mxu0 0.0
  %3957 = vmatpush1.msra.mxu0 %v3613
  %3958 = vmatprep.subr.mxu0 0.0
  %3959 = vmatpush1.msra.mxu0 %v3614
  %3960 = vmatprep.subr.mxu0 0.0
  %3961 = vmatpush1.msra.mxu0 %v3615
  %3962 = vmatprep.subr.mxu0 0.0
  %3963 = vmatpush1.msra.mxu0 %v3616
  %3964 = vmatprep.subr.mxu0 0.0
  %3965 = vmatpush1.msra.mxu0 %v3617
  %3966 = vmatprep.subr.mxu0 0.0
  %3967 = vmatpush1.msra.mxu0 %v3618
  %3968 = vmatprep.subr.mxu0 0.0
  %3969 = vmatpush1.msra.mxu0 %v3619
  %3970 = vmatprep.subr.mxu0 0.0
  %3971 = vmatpush1.msra.mxu0 %v3620
  %3972 = vmatprep.subr.mxu0 0.0
  %3973 = vmatpush1.msra.mxu0 %v3621
  %3974 = vmatprep.subr.mxu0 0.0
  %3975 = vmatpush1.msra.mxu0 %v3622
  %3976 = vmatprep.subr.mxu0 0.0
  %3977 = vmatpush1.msra.mxu0 %v3623
  %3978 = vmatprep.subr.mxu0 0.0
  %3979 = vmatpush1.msra.mxu0 %v3624
  %3980 = vmatprep.subr.mxu0 0.0
  %3981 = vmatpush1.msra.mxu0 %v3625
  %3982 = vmatprep.subr.mxu0 0.0
  %3983 = vmatpush1.msra.mxu0 %v3626
  %3984 = vmatprep.subr.mxu0 0.0
  %3985 = vmatpush1.msra.mxu0 %v3627
  %3986 = vmatprep.subr.mxu0 0.0
  %3987 = vmatpush1.msra.mxu0 %v3628
  %3988 = vmatprep.subr.mxu0 0.0
  %3989 = vmatpush1.msra.mxu0 %v3629
  %3990 = vmatprep.subr.mxu0 0.0
  %3991 = vmatpush1.msra.mxu0 %v3630
  %3992 = vmatprep.subr.mxu0 0.0
  %3993 = vmatpush1.msra.mxu0 %v3631
  %3994 = vmatprep.subr.mxu0 0.0
  %3995 = vmatpush1.msra.mxu0 %v3632
  %3996 = vmatprep.subr.mxu0 0.0
  %3997 = vmatpush1.msra.mxu0 %v3633
  %3998 = vmatprep.subr.mxu0 0.0
  %3999 = vmatpush1.msra.mxu0 %v3634
  %4000 = vmatprep.subr.mxu0 0.0
  %4001 = vmatpush1.msra.mxu0 %v3635
  %4002 = vmatprep.subr.mxu0 0.0
  %4003 = vmatpush1.msra.mxu0 %v3636
  %4004 = vmatprep.subr.mxu0 0.0
  %4005 = vmatpush1.msra.mxu0 %v3637
  %4006 = vmatprep.subr.mxu0 0.0
  %4007 = vmatpush1.msra.mxu0 %v3638
  %4008 = vmatprep.mubr.f32.mxu0 %v3290
  %4009 = vmatmul.mubr.f32.gmra.mrb[0].mxu0 %v3289
  %v4010 = vpop.f32.mrb[0].mxu0
  %v4011 = vadd.f32 %v3786, %v4010
  %v4012 = vpop.f32.mrb[0].mxu0
  %4013 = vmatprep.mubr.f32.mxu0 %v3299
  %4014 = vmatmul.mubr.f32.gmra.mrb[0].mxu0 %v3298
  %v4015 = vpop.f32.mrb[0].mxu0
  %v4016 = vadd.f32 %v3791, %v4015
  %v4017 = vpop.f32.mrb[0].mxu0
  %4018 = vmatprep.mubr.f32.mxu0 %v3308
  %4019 = vmatmul.mubr.f32.gmra.mrb[0].mxu0 %v3307
  %v4020 = vpop.f32.mrb[0].mxu0
  %v4021 = vadd.f32 %v3796, %v4020
  %v4022 = vpop.f32.mrb[0].mxu0
  %4023 = vmatprep.mubr.f32.mxu0 %v3317
  %4024 = vmatmul.mubr.f32.gmra.mrb[0].mxu0 %v3316
  %v4025 = vpop.f32.mrb[0].mxu0
  %v4026 = vadd.f32 %v3801, %v4025
  %v4027 = vpop.f32.mrb[0].mxu0
  %4028 = vmatprep.mubr.f32.mxu0 %v3326
  %4029 = vmatmul.mubr.f32.gmra.mrb[0].mxu0 %v3325
  %v4030 = vpop.f32.mrb[0].mxu0
  %v4031 = vadd.f32 %v3806, %v4030
  %v4032 = vpop.f32.mrb[0].mxu0
  %4033 = vmatprep.mubr.f32.mxu0 %v3335
  %4034 = vmatmul.mubr.f32.gmra.mrb[0].mxu0 %v3334
  %v4035 = vpop.f32.mrb[0].mxu0
  %v4036 = vadd.f32 %v3811, %v4035
  %v4037 = vpop.f32.mrb[0].mxu0
  %4038 = vmatprep.mubr.f32.mxu0 %v3344
  %4039 = vmatmul.mubr.f32.gmra.mrb[0].mxu0 %v3343
  %v4040 = vpop.f32.mrb[0].mxu0
  %v4041 = vadd.f32 %v3816, %v4040
  %v4042 = vpop.f32.mrb[0].mxu0
  %4043 = vmatprep.mubr.f32.mxu0 %v3353
  %4044 = vmatmul.mubr.f32.gmra.mrb[0].mxu0 %v3352
  %v4045 = vpop.f32.mrb[0].mxu0
  %v4046 = vadd.f32 %v3821, %v4045
  %v4047 = vpop.f32.mrb[0].mxu0
  %4048 = vmatprep.mubr.f32.mxu0 %v3362
  %4049 = vmatmul.mubr.f32.gmra.mrb[0].mxu0 %v3361
  %v4050 = vpop.f32.mrb[0].mxu0
  %v4051 = vadd.f32 %v3826, %v4050
  %v4052 = vpop.f32.mrb[0].mxu0
  %4053 = vmatprep.mubr.f32.mxu0 %v3371
  %4054 = vmatmul.mubr.f32.gmra.mrb[0].mxu0 %v3370
  %v4055 = vpop.f32.mrb[0].mxu0
  %v4056 = vadd.f32 %v3831, %v4055
  %v4057 = vpop.f32.mrb[0].mxu0
  %4058 = vmatprep.mubr.f32.mxu0 %v3380
  %4059 = vmatmul.mubr.f32.gmra.mrb[0].mxu0 %v3379
  %v4060 = vpop.f32.mrb[0].mxu0
  %v4061 = vadd.f32 %v3836, %v4060
  %v4062 = vpop.f32.mrb[0].mxu0
  %4063 = vmatprep.mubr.f32.mxu0 %v3389
  %4064 = vmatmul.mubr.f32.gmra.mrb[0].mxu0 %v3388
  %v4065 = vpop.f32.mrb[0].mxu0
  %v4066 = vadd.f32 %v3841, %v4065
  %v4067 = vpop.f32.mrb[0].mxu0
  %4068 = vmatprep.mubr.f32.mxu0 %v3398
  %4069 = vmatmul.mubr.f32.gmra.mrb[0].mxu0 %v3397
  %v4070 = vpop.f32.mrb[0].mxu0
  %v4071 = vadd.f32 %v3846, %v4070
  %v4072 = vpop.f32.mrb[0].mxu0
  %4073 = vmatprep.mubr.f32.mxu0 %v3407
  %4074 = vmatmul.mubr.f32.gmra.mrb[0].mxu0 %v3406
  %v4075 = vpop.f32.mrb[0].mxu0
  %v4076 = vadd.f32 %v3851, %v4075
  %v4077 = vpop.f32.mrb[0].mxu0
  %4078 = vmatprep.mubr.f32.mxu0 %v3416
  %4079 = vmatmul.mubr.f32.gmra.mrb[0].mxu0 %v3415
  %v4080 = vpop.f32.mrb[0].mxu0
  %v4081 = vadd.f32 %v3856, %v4080
  %v4082 = vpop.f32.mrb[0].mxu0
  %4083 = vmatprep.mubr.f32.mxu0 %v3425
  %4084 = vmatmul.mubr.f32.gmra.mrb[0].mxu0 %v3424
  %v4085 = vpop.f32.mrb[0].mxu0
  %v4086 = vadd.f32 %v3861, %v4085
  %v4087 = vpop.f32.mrb[0].mxu0
  %4088 = vmatprep.mubr.f32.mxu0 %v3434
  %4089 = vmatmul.mubr.f32.gmra.mrb[0].mxu0 %v3433
  %v4090 = vpop.f32.mrb[0].mxu0
  %v4091 = vadd.f32 %v3866, %v4090
  %v4092 = vpop.f32.mrb[0].mxu0
  %4093 = vmatprep.mubr.f32.mxu0 %v3443
  %4094 = vmatmul.mubr.f32.gmra.mrb[0].mxu0 %v3442
  %v4095 = vpop.f32.mrb[0].mxu0
  %v4096 = vadd.f32 %v3871, %v4095
  %v4097 = vpop.f32.mrb[0].mxu0
  %4098 = vmatprep.mubr.f32.mxu0 %v3452
  %4099 = vmatmul.mubr.f32.gmra.mrb[0].mxu0 %v3451
  %v4100 = vpop.f32.mrb[0].mxu0
  %v4101 = vadd.f32 %v3876, %v4100
  %v4102 = vpop.f32.mrb[0].mxu0
  %4103 = vmatprep.mubr.f32.mxu0 %v3461
  %4104 = vmatmul.mubr.f32.gmra.mrb[0].mxu0 %v3460
  %v4105 = vpop.f32.mrb[0].mxu0
  %v4106 = vadd.f32 %v3881, %v4105
  %v4107 = vpop.f32.mrb[0].mxu0
  %4108 = vmatprep.mubr.f32.mxu0 %v3470
  %4109 = vmatmul.mubr.f32.gmra.mrb[0].mxu0 %v3469
  %v4110 = vpop.f32.mrb[0].mxu0
  %v4111 = vadd.f32 %v3886, %v4110
  %v4112 = vpop.f32.mrb[0].mxu0
  %4113 = vmatprep.mubr.f32.mxu0 %v3479
  %4114 = vmatmul.mubr.f32.gmra.mrb[0].mxu0 %v3478
  %v4115 = vpop.f32.mrb[0].mxu0
  %v4116 = vadd.f32 %v3891, %v4115
  %v4117 = vpop.f32.mrb[0].mxu0
  %4118 = vmatprep.mubr.f32.mxu0 %v3488
  %4119 = vmatmul.mubr.f32.gmra.mrb[0].mxu0 %v3487
  %v4120 = vpop.f32.mrb[0].mxu0
  %v4121 = vadd.f32 %v3896, %v4120
  %v4122 = vpop.f32.mrb[0].mxu0
  %4123 = vmatprep.mubr.f32.mxu0 %v3497
  %4124 = vmatmul.mubr.f32.gmra.mrb[0].mxu0 %v3496
  %v4125 = vpop.f32.mrb[0].mxu0
  %v4126 = vadd.f32 %v3901, %v4125
  %v4127 = vpop.f32.mrb[0].mxu0
  %4128 = vmatprep.mubr.f32.mxu0 %v3506
  %4129 = vmatmul.mubr.f32.gmra.mrb[0].mxu0 %v3505
  %v4130 = vpop.f32.mrb[0].mxu0
  %v4131 = vadd.f32 %v3906, %v4130
  %v4132 = vpop.f32.mrb[0].mxu0
  %4133 = vmatprep.mubr.f32.mxu0 %v3515
  %4134 = vmatmul.mubr.f32.gmra.mrb[0].mxu0 %v3514
  %v4135 = vpop.f32.mrb[0].mxu0
  %v4136 = vadd.f32 %v3911, %v4135
  %v4137 = vpop.f32.mrb[0].mxu0
  %4138 = vmatprep.mubr.f32.mxu0 %v3524
  %4139 = vmatmul.mubr.f32.gmra.mrb[0].mxu0 %v3523
  %v4140 = vpop.f32.mrb[0].mxu0
  %v4141 = vadd.f32 %v3916, %v4140
  %v4142 = vpop.f32.mrb[0].mxu0
  %4143 = vmatprep.mubr.f32.mxu0 %v3533
  %4144 = vmatmul.mubr.f32.gmra.mrb[0].mxu0 %v3532
  %v4145 = vpop.f32.mrb[0].mxu0
  %v4146 = vadd.f32 %v3921, %v4145
  %v4147 = vpop.f32.mrb[0].mxu0
  %4148 = vmatprep.mubr.f32.mxu0 %v3542
  %4149 = vmatmul.mubr.f32.gmra.mrb[0].mxu0 %v3541
  %v4150 = vpop.f32.mrb[0].mxu0
  %v4151 = vadd.f32 %v3926, %v4150
  %v4152 = vpop.f32.mrb[0].mxu0
  %4153 = vmatprep.mubr.f32.mxu0 %v3551
  %4154 = vmatmul.mubr.f32.gmra.mrb[0].mxu0 %v3550
  %v4155 = vpop.f32.mrb[0].mxu0
  %v4156 = vadd.f32 %v3931, %v4155
  %v4157 = vpop.f32.mrb[0].mxu0
  %4158 = vmatprep.mubr.f32.mxu0 %v3560
  %4159 = vmatmul.mubr.f32.gmra.mrb[0].mxu0 %v3559
  %v4160 = vpop.f32.mrb[0].mxu0
  %v4161 = vadd.f32 %v3936, %v4160
  %v4162 = vpop.f32.mrb[0].mxu0
  %4163 = vmatprep.mubr.f32.mxu0 %v3569
  %4164 = vmatmul.mubr.f32.gmra.mrb[0].mxu0 %v3568
  %v4165 = vpop.f32.mrb[0].mxu0
  %v4166 = vadd.f32 %v3941, %v4165
  %v4167 = vpop.f32.mrb[0].mxu0
  %4168 = vdwg.mxu0
  %4169 = vmatprep.subr.mxu0 0.0
  %4170 = vmatpush1.msra.mxu0 %v3639
  %4171 = vmatprep.subr.mxu0 0.0
  %4172 = vmatpush1.msra.mxu0 %v3640
  %4173 = vmatprep.subr.mxu0 0.0
  %4174 = vmatpush1.msra.mxu0 %v3641
  %4175 = vmatprep.subr.mxu0 0.0
  %4176 = vmatpush1.msra.mxu0 %v3642
  %4177 = vmatprep.subr.mxu0 0.0
  %4178 = vmatpush1.msra.mxu0 %v3643
  %4179 = vmatprep.subr.mxu0 0.0
  %4180 = vmatpush1.msra.mxu0 %v3644
  %4181 = vmatprep.subr.mxu0 0.0
  %4182 = vmatpush1.msra.mxu0 %v3645
  %4183 = vmatprep.subr.mxu0 0.0
  %4184 = vmatpush1.msra.mxu0 %v3646
  %4185 = vmatprep.subr.mxu0 0.0
  %4186 = vmatpush1.msra.mxu0 %v3647
  %4187 = vmatprep.subr.mxu0 0.0
  %4188 = vmatpush1.msra.mxu0 %v3648
  %4189 = vmatprep.subr.mxu0 0.0
  %4190 = vmatpush1.msra.mxu0 %v3649
  %4191 = vmatprep.subr.mxu0 0.0
  %4192 = vmatpush1.msra.mxu0 %v3650
  %4193 = vmatprep.subr.mxu0 0.0
  %4194 = vmatpush1.msra.mxu0 %v3651
  %4195 = vmatprep.subr.mxu0 0.0
  %4196 = vmatpush1.msra.mxu0 %v3652
  %4197 = vmatprep.subr.mxu0 0.0
  %4198 = vmatpush1.msra.mxu0 %v3653
  %4199 = vmatprep.subr.mxu0 0.0
  %4200 = vmatpush1.msra.mxu0 %v3654
  %4201 = vmatprep.subr.mxu0 0.0
  %4202 = vmatpush1.msra.mxu0 %v3655
  %4203 = vmatprep.subr.mxu0 0.0
  %4204 = vmatpush1.msra.mxu0 %v3656
  %4205 = vmatprep.subr.mxu0 0.0
  %4206 = vmatpush1.msra.mxu0 %v3657
  %4207 = vmatprep.subr.mxu0 0.0
  %4208 = vmatpush1.msra.mxu0 %v3658
  %4209 = vmatprep.subr.mxu0 0.0
  %4210 = vmatpush1.msra.mxu0 %v3659
  %4211 = vmatprep.subr.mxu0 0.0
  %4212 = vmatpush1.msra.mxu0 %v3660
  %4213 = vmatprep.subr.mxu0 0.0
  %4214 = vmatpush1.msra.mxu0 %v3661
  %4215 = vmatprep.subr.mxu0 0.0
  %4216 = vmatpush1.msra.mxu0 %v3662
  %4217 = vmatprep.subr.mxu0 0.0
  %4218 = vmatpush1.msra.mxu0 %v3663
  %4219 = vmatprep.subr.mxu0 0.0
  %4220 = vmatpush1.msra.mxu0 %v3664
  %4221 = vmatprep.subr.mxu0 0.0
  %4222 = vmatpush1.msra.mxu0 %v3665
  %4223 = vmatprep.subr.mxu0 0.0
  %4224 = vmatpush1.msra.mxu0 %v3666
  %4225 = vmatprep.subr.mxu0 0.0
  %4226 = vmatpush1.msra.mxu0 %v3667
  %4227 = vmatprep.subr.mxu0 0.0
  %4228 = vmatpush1.msra.mxu0 %v3668
  %4229 = vmatprep.subr.mxu0 0.0
  %4230 = vmatpush1.msra.mxu0 %v3669
  %4231 = vmatprep.subr.mxu0 0.0
  %4232 = vmatpush1.msra.mxu0 %v3670
  %4233 = vmatprep.mubr.f32.mxu0 %v3292
  %4234 = vmatmul.mubr.f32.gmra.mrb[0].mxu0 %v3291
  %v4235 = vpop.f32.mrb[0].mxu0
  %v4236 = vadd.f32 %v4011, %v4235
  %v4237 = vpop.f32.mrb[0].mxu0
  %4238 = vmatprep.mubr.f32.mxu0 %v3301
  %4239 = vmatmul.mubr.f32.gmra.mrb[0].mxu0 %v3300
  %v4240 = vpop.f32.mrb[0].mxu0
  %v4241 = vadd.f32 %v4016, %v4240
  %v4242 = vpop.f32.mrb[0].mxu0
  %4243 = vmatprep.mubr.f32.mxu0 %v3310
  %4244 = vmatmul.mubr.f32.gmra.mrb[0].mxu0 %v3309
  %v4245 = vpop.f32.mrb[0].mxu0
  %v4246 = vadd.f32 %v4021, %v4245
  %v4247 = vpop.f32.mrb[0].mxu0
  %4248 = vmatprep.mubr.f32.mxu0 %v3319
  %4249 = vmatmul.mubr.f32.gmra.mrb[0].mxu0 %v3318
  %v4250 = vpop.f32.mrb[0].mxu0
  %v4251 = vadd.f32 %v4026, %v4250
  %v4252 = vpop.f32.mrb[0].mxu0
  %4253 = vmatprep.mubr.f32.mxu0 %v3328
  %4254 = vmatmul.mubr.f32.gmra.mrb[0].mxu0 %v3327
  %v4255 = vpop.f32.mrb[0].mxu0
  %v4256 = vadd.f32 %v4031, %v4255
  %v4257 = vpop.f32.mrb[0].mxu0
  %4258 = vmatprep.mubr.f32.mxu0 %v3337
  %4259 = vmatmul.mubr.f32.gmra.mrb[0].mxu0 %v3336
  %v4260 = vpop.f32.mrb[0].mxu0
  %v4261 = vadd.f32 %v4036, %v4260
  %v4262 = vpop.f32.mrb[0].mxu0
  %4263 = vmatprep.mubr.f32.mxu0 %v3346
  %4264 = vmatmul.mubr.f32.gmra.mrb[0].mxu0 %v3345
  %v4265 = vpop.f32.mrb[0].mxu0
  %v4266 = vadd.f32 %v4041, %v4265
  %v4267 = vpop.f32.mrb[0].mxu0
  %4268 = vmatprep.mubr.f32.mxu0 %v3355
  %4269 = vmatmul.mubr.f32.gmra.mrb[0].mxu0 %v3354
  %v4270 = vpop.f32.mrb[0].mxu0
  %v4271 = vadd.f32 %v4046, %v4270
  %v4272 = vpop.f32.mrb[0].mxu0
  %4273 = vmatprep.mubr.f32.mxu0 %v3364
  %4274 = vmatmul.mubr.f32.gmra.mrb[0].mxu0 %v3363
  %v4275 = vpop.f32.mrb[0].mxu0
  %v4276 = vadd.f32 %v4051, %v4275
  %v4277 = vpop.f32.mrb[0].mxu0
  %4278 = vmatprep.mubr.f32.mxu0 %v3373
  %4279 = vmatmul.mubr.f32.gmra.mrb[0].mxu0 %v3372
  %v4280 = vpop.f32.mrb[0].mxu0
  %v4281 = vadd.f32 %v4056, %v4280
  %v4282 = vpop.f32.mrb[0].mxu0
  %4283 = vmatprep.mubr.f32.mxu0 %v3382
  %4284 = vmatmul.mubr.f32.gmra.mrb[0].mxu0 %v3381
  %v4285 = vpop.f32.mrb[0].mxu0
  %v4286 = vadd.f32 %v4061, %v4285
  %v4287 = vpop.f32.mrb[0].mxu0
  %4288 = vmatprep.mubr.f32.mxu0 %v3391
  %4289 = vmatmul.mubr.f32.gmra.mrb[0].mxu0 %v3390
  %v4290 = vpop.f32.mrb[0].mxu0
  %v4291 = vadd.f32 %v4066, %v4290
  %v4292 = vpop.f32.mrb[0].mxu0
  %4293 = vmatprep.mubr.f32.mxu0 %v3400
  %4294 = vmatmul.mubr.f32.gmra.mrb[0].mxu0 %v3399
  %v4295 = vpop.f32.mrb[0].mxu0
  %v4296 = vadd.f32 %v4071, %v4295
  %v4297 = vpop.f32.mrb[0].mxu0
  %4298 = vmatprep.mubr.f32.mxu0 %v3409
  %4299 = vmatmul.mubr.f32.gmra.mrb[0].mxu0 %v3408
  %v4300 = vpop.f32.mrb[0].mxu0
  %v4301 = vadd.f32 %v4076, %v4300
  %v4302 = vpop.f32.mrb[0].mxu0
  %4303 = vmatprep.mubr.f32.mxu0 %v3418
  %4304 = vmatmul.mubr.f32.gmra.mrb[0].mxu0 %v3417
  %v4305 = vpop.f32.mrb[0].mxu0
  %v4306 = vadd.f32 %v4081, %v4305
  %v4307 = vpop.f32.mrb[0].mxu0
  %4308 = vmatprep.mubr.f32.mxu0 %v3427
  %4309 = vmatmul.mubr.f32.gmra.mrb[0].mxu0 %v3426
  %v4310 = vpop.f32.mrb[0].mxu0
  %v4311 = vadd.f32 %v4086, %v4310
  %v4312 = vpop.f32.mrb[0].mxu0
  %4313 = vmatprep.mubr.f32.mxu0 %v3436
  %4314 = vmatmul.mubr.f32.gmra.mrb[0].mxu0 %v3435
  %v4315 = vpop.f32.mrb[0].mxu0
  %v4316 = vadd.f32 %v4091, %v4315
  %v4317 = vpop.f32.mrb[0].mxu0
  %4318 = vmatprep.mubr.f32.mxu0 %v3445
  %4319 = vmatmul.mubr.f32.gmra.mrb[0].mxu0 %v3444
  %v4320 = vpop.f32.mrb[0].mxu0
  %v4321 = vadd.f32 %v4096, %v4320
  %v4322 = vpop.f32.mrb[0].mxu0
  %4323 = vmatprep.mubr.f32.mxu0 %v3454
  %4324 = vmatmul.mubr.f32.gmra.mrb[0].mxu0 %v3453
  %v4325 = vpop.f32.mrb[0].mxu0
  %v4326 = vadd.f32 %v4101, %v4325
  %v4327 = vpop.f32.mrb[0].mxu0
  %4328 = vmatprep.mubr.f32.mxu0 %v3463
  %4329 = vmatmul.mubr.f32.gmra.mrb[0].mxu0 %v3462
  %v4330 = vpop.f32.mrb[0].mxu0
  %v4331 = vadd.f32 %v4106, %v4330
  %v4332 = vpop.f32.mrb[0].mxu0
  %4333 = vmatprep.mubr.f32.mxu0 %v3472
  %4334 = vmatmul.mubr.f32.gmra.mrb[0].mxu0 %v3471
  %v4335 = vpop.f32.mrb[0].mxu0
  %v4336 = vadd.f32 %v4111, %v4335
  %v4337 = vpop.f32.mrb[0].mxu0
  %4338 = vmatprep.mubr.f32.mxu0 %v3481
  %4339 = vmatmul.mubr.f32.gmra.mrb[0].mxu0 %v3480
  %v4340 = vpop.f32.mrb[0].mxu0
  %v4341 = vadd.f32 %v4116, %v4340
  %v4342 = vpop.f32.mrb[0].mxu0
  %4343 = vmatprep.mubr.f32.mxu0 %v3490
  %4344 = vmatmul.mubr.f32.gmra.mrb[0].mxu0 %v3489
  %v4345 = vpop.f32.mrb[0].mxu0
  %v4346 = vadd.f32 %v4121, %v4345
  %v4347 = vpop.f32.mrb[0].mxu0
  %4348 = vmatprep.mubr.f32.mxu0 %v3499
  %4349 = vmatmul.mubr.f32.gmra.mrb[0].mxu0 %v3498
  %v4350 = vpop.f32.mrb[0].mxu0
  %v4351 = vadd.f32 %v4126, %v4350
  %v4352 = vpop.f32.mrb[0].mxu0
  %4353 = vmatprep.mubr.f32.mxu0 %v3508
  %4354 = vmatmul.mubr.f32.gmra.mrb[0].mxu0 %v3507
  %v4355 = vpop.f32.mrb[0].mxu0
  %v4356 = vadd.f32 %v4131, %v4355
  %v4357 = vpop.f32.mrb[0].mxu0
  %4358 = vmatprep.mubr.f32.mxu0 %v3517
  %4359 = vmatmul.mubr.f32.gmra.mrb[0].mxu0 %v3516
  %v4360 = vpop.f32.mrb[0].mxu0
  %v4361 = vadd.f32 %v4136, %v4360
  %v4362 = vpop.f32.mrb[0].mxu0
  %4363 = vmatprep.mubr.f32.mxu0 %v3526
  %4364 = vmatmul.mubr.f32.gmra.mrb[0].mxu0 %v3525
  %v4365 = vpop.f32.mrb[0].mxu0
  %v4366 = vadd.f32 %v4141, %v4365
  %v4367 = vpop.f32.mrb[0].mxu0
  %4368 = vmatprep.mubr.f32.mxu0 %v3535
  %4369 = vmatmul.mubr.f32.gmra.mrb[0].mxu0 %v3534
  %v4370 = vpop.f32.mrb[0].mxu0
  %v4371 = vadd.f32 %v4146, %v4370
  %v4372 = vpop.f32.mrb[0].mxu0
  %4373 = vmatprep.mubr.f32.mxu0 %v3544
  %4374 = vmatmul.mubr.f32.gmra.mrb[0].mxu0 %v3543
  %v4375 = vpop.f32.mrb[0].mxu0
  %v4376 = vadd.f32 %v4151, %v4375
  %v4377 = vpop.f32.mrb[0].mxu0
  %4378 = vmatprep.mubr.f32.mxu0 %v3553
  %4379 = vmatmul.mubr.f32.gmra.mrb[0].mxu0 %v3552
  %v4380 = vpop.f32.mrb[0].mxu0
  %v4381 = vadd.f32 %v4156, %v4380
  %v4382 = vpop.f32.mrb[0].mxu0
  %4383 = vmatprep.mubr.f32.mxu0 %v3562
  %4384 = vmatmul.mubr.f32.gmra.mrb[0].mxu0 %v3561
  %v4385 = vpop.f32.mrb[0].mxu0
  %v4386 = vadd.f32 %v4161, %v4385
  %v4387 = vpop.f32.mrb[0].mxu0
  %4388 = vmatprep.mubr.f32.mxu0 %v3571
  %4389 = vmatmul.mubr.f32.gmra.mrb[0].mxu0 %v3570
  %v4390 = vpop.f32.mrb[0].mxu0
  %v4391 = vadd.f32 %v4166, %v4390
  %v4392 = vpop.f32.mrb[0].mxu0
  %4393 = vdwg.mxu0
  %4394 = vmatprep.subr.mxu0 0.0
  %4395 = vmatpush1.msra.mxu0 %v3671
  %4396 = vmatprep.subr.mxu0 0.0
  %4397 = vmatpush1.msra.mxu0 %v3672
  %4398 = vmatprep.subr.mxu0 0.0
  %4399 = vmatpush1.msra.mxu0 %v3673
  %4400 = vmatprep.subr.mxu0 0.0
  %4401 = vmatpush1.msra.mxu0 %v3674
  %4402 = vmatprep.subr.mxu0 0.0
  %4403 = vmatpush1.msra.mxu0 %v3675
  %4404 = vmatprep.subr.mxu0 0.0
  %4405 = vmatpush1.msra.mxu0 %v3676
  %4406 = vmatprep.subr.mxu0 0.0
  %4407 = vmatpush1.msra.mxu0 %v3677
  %4408 = vmatprep.subr.mxu0 0.0
  %4409 = vmatpush1.msra.mxu0 %v3678
  %4410 = vmatprep.subr.mxu0 0.0
  %4411 = vmatpush1.msra.mxu0 %v3679
  %4412 = vmatprep.subr.mxu0 0.0
  %4413 = vmatpush1.msra.mxu0 %v3680
  %4414 = vmatprep.subr.mxu0 0.0
  %4415 = vmatpush1.msra.mxu0 %v3681
  %4416 = vmatprep.subr.mxu0 0.0
  %4417 = vmatpush1.msra.mxu0 %v3682
  %4418 = vmatprep.subr.mxu0 0.0
  %4419 = vmatpush1.msra.mxu0 %v3683
  %4420 = vmatprep.subr.mxu0 0.0
  %4421 = vmatpush1.msra.mxu0 %v3684
  %4422 = vmatprep.subr.mxu0 0.0
  %4423 = vmatpush1.msra.mxu0 %v3685
  %4424 = vmatprep.subr.mxu0 0.0
  %4425 = vmatpush1.msra.mxu0 %v3686
  %4426 = vmatprep.subr.mxu0 0.0
  %4427 = vmatpush1.msra.mxu0 %v3687
  %4428 = vmatprep.subr.mxu0 0.0
  %4429 = vmatpush1.msra.mxu0 %v3688
  %4430 = vmatprep.subr.mxu0 0.0
  %4431 = vmatpush1.msra.mxu0 %v3689
  %4432 = vmatprep.subr.mxu0 0.0
  %4433 = vmatpush1.msra.mxu0 %v3690
  %4434 = vmatprep.subr.mxu0 0.0
  %4435 = vmatpush1.msra.mxu0 %v3691
  %4436 = vmatprep.subr.mxu0 0.0
  %4437 = vmatpush1.msra.mxu0 %v3692
  %4438 = vmatprep.subr.mxu0 0.0
  %4439 = vmatpush1.msra.mxu0 %v3693
  %4440 = vmatprep.subr.mxu0 0.0
  %4441 = vmatpush1.msra.mxu0 %v3694
  %4442 = vmatprep.subr.mxu0 0.0
  %4443 = vmatpush1.msra.mxu0 %v3695
  %4444 = vmatprep.subr.mxu0 0.0
  %4445 = vmatpush1.msra.mxu0 %v3696
  %4446 = vmatprep.subr.mxu0 0.0
  %4447 = vmatpush1.msra.mxu0 %v3697
  %4448 = vmatprep.subr.mxu0 0.0
  %4449 = vmatpush1.msra.mxu0 %v3698
  %4450 = vmatprep.subr.mxu0 0.0
  %4451 = vmatpush1.msra.mxu0 %v3699
  %4452 = vmatprep.subr.mxu0 0.0
  %4453 = vmatpush1.msra.mxu0 %v3700
  %4454 = vmatprep.subr.mxu0 0.0
  %4455 = vmatpush1.msra.mxu0 %v3701
  %4456 = vmatprep.subr.mxu0 0.0
  %4457 = vmatpush1.msra.mxu0 %v3702
  %4458 = vmatprep.mubr.f32.mxu0 %v3294
  %4459 = vmatmul.mubr.f32.gmra.mrb[0].mxu0 %v3293
  %v4460 = vpop.f32.mrb[0].mxu0
  %v4461 = vadd.f32 %v4236, %v4460
  %v4462 = vpop.f32.mrb[0].mxu0
  %4463 = vmatprep.mubr.f32.mxu0 %v3303
  %4464 = vmatmul.mubr.f32.gmra.mrb[0].mxu0 %v3302
  %v4465 = vpop.f32.mrb[0].mxu0
  %v4466 = vadd.f32 %v4241, %v4465
  %v4467 = vpop.f32.mrb[0].mxu0
  %4468 = vmatprep.mubr.f32.mxu0 %v3312
  %4469 = vmatmul.mubr.f32.gmra.mrb[0].mxu0 %v3311
  %v4470 = vpop.f32.mrb[0].mxu0
  %v4471 = vadd.f32 %v4246, %v4470
  %v4472 = vpop.f32.mrb[0].mxu0
  %4473 = vmatprep.mubr.f32.mxu0 %v3321
  %4474 = vmatmul.mubr.f32.gmra.mrb[0].mxu0 %v3320
  %v4475 = vpop.f32.mrb[0].mxu0
  %v4476 = vadd.f32 %v4251, %v4475
  %v4477 = vpop.f32.mrb[0].mxu0
  %4478 = vmatprep.mubr.f32.mxu0 %v3330
  %4479 = vmatmul.mubr.f32.gmra.mrb[0].mxu0 %v3329
  %v4480 = vpop.f32.mrb[0].mxu0
  %v4481 = vadd.f32 %v4256, %v4480
  %v4482 = vpop.f32.mrb[0].mxu0
  %4483 = vmatprep.mubr.f32.mxu0 %v3339
  %4484 = vmatmul.mubr.f32.gmra.mrb[0].mxu0 %v3338
  %v4485 = vpop.f32.mrb[0].mxu0
  %v4486 = vadd.f32 %v4261, %v4485
  %v4487 = vpop.f32.mrb[0].mxu0
  %4488 = vmatprep.mubr.f32.mxu0 %v3348
  %4489 = vmatmul.mubr.f32.gmra.mrb[0].mxu0 %v3347
  %v4490 = vpop.f32.mrb[0].mxu0
  %v4491 = vadd.f32 %v4266, %v4490
  %v4492 = vpop.f32.mrb[0].mxu0
  %4493 = vmatprep.mubr.f32.mxu0 %v3357
  %4494 = vmatmul.mubr.f32.gmra.mrb[0].mxu0 %v3356
  %v4495 = vpop.f32.mrb[0].mxu0
  %v4496 = vadd.f32 %v4271, %v4495
  %v4497 = vpop.f32.mrb[0].mxu0
  %4498 = vmatprep.mubr.f32.mxu0 %v3366
  %4499 = vmatmul.mubr.f32.gmra.mrb[0].mxu0 %v3365
  %v4500 = vpop.f32.mrb[0].mxu0
  %v4501 = vadd.f32 %v4276, %v4500
  %v4502 = vpop.f32.mrb[0].mxu0
  %4503 = vmatprep.mubr.f32.mxu0 %v3375
  %4504 = vmatmul.mubr.f32.gmra.mrb[0].mxu0 %v3374
  %v4505 = vpop.f32.mrb[0].mxu0
  %v4506 = vadd.f32 %v4281, %v4505
  %v4507 = vpop.f32.mrb[0].mxu0
  %4508 = vmatprep.mubr.f32.mxu0 %v3384
  %4509 = vmatmul.mubr.f32.gmra.mrb[0].mxu0 %v3383
  %v4510 = vpop.f32.mrb[0].mxu0
  %v4511 = vadd.f32 %v4286, %v4510
  %v4512 = vpop.f32.mrb[0].mxu0
  %4513 = vmatprep.mubr.f32.mxu0 %v3393
  %4514 = vmatmul.mubr.f32.gmra.mrb[0].mxu0 %v3392
  %v4515 = vpop.f32.mrb[0].mxu0
  %v4516 = vadd.f32 %v4291, %v4515
  %v4517 = vpop.f32.mrb[0].mxu0
  %4518 = vmatprep.mubr.f32.mxu0 %v3402
  %4519 = vmatmul.mubr.f32.gmra.mrb[0].mxu0 %v3401
  %v4520 = vpop.f32.mrb[0].mxu0
  %v4521 = vadd.f32 %v4296, %v4520
  %v4522 = vpop.f32.mrb[0].mxu0
  %4523 = vmatprep.mubr.f32.mxu0 %v3411
  %4524 = vmatmul.mubr.f32.gmra.mrb[0].mxu0 %v3410
  %v4525 = vpop.f32.mrb[0].mxu0
  %v4526 = vadd.f32 %v4301, %v4525
  %v4527 = vpop.f32.mrb[0].mxu0
  %4528 = vmatprep.mubr.f32.mxu0 %v3420
  %4529 = vmatmul.mubr.f32.gmra.mrb[0].mxu0 %v3419
  %v4530 = vpop.f32.mrb[0].mxu0
  %v4531 = vadd.f32 %v4306, %v4530
  %v4532 = vpop.f32.mrb[0].mxu0
  %4533 = vmatprep.mubr.f32.mxu0 %v3429
  %4534 = vmatmul.mubr.f32.gmra.mrb[0].mxu0 %v3428
  %v4535 = vpop.f32.mrb[0].mxu0
  %v4536 = vadd.f32 %v4311, %v4535
  %v4537 = vpop.f32.mrb[0].mxu0
  %4538 = vmatprep.mubr.f32.mxu0 %v3438
  %4539 = vmatmul.mubr.f32.gmra.mrb[0].mxu0 %v3437
  %v4540 = vpop.f32.mrb[0].mxu0
  %v4541 = vadd.f32 %v4316, %v4540
  %v4542 = vpop.f32.mrb[0].mxu0
  %4543 = vmatprep.mubr.f32.mxu0 %v3447
  %4544 = vmatmul.mubr.f32.gmra.mrb[0].mxu0 %v3446
  %v4545 = vpop.f32.mrb[0].mxu0
  %v4546 = vadd.f32 %v4321, %v4545
  %v4547 = vpop.f32.mrb[0].mxu0
  %4548 = vmatprep.mubr.f32.mxu0 %v3456
  %4549 = vmatmul.mubr.f32.gmra.mrb[0].mxu0 %v3455
  %v4550 = vpop.f32.mrb[0].mxu0
  %v4551 = vadd.f32 %v4326, %v4550
  %v4552 = vpop.f32.mrb[0].mxu0
  %4553 = vmatprep.mubr.f32.mxu0 %v3465
  %4554 = vmatmul.mubr.f32.gmra.mrb[0].mxu0 %v3464
  %v4555 = vpop.f32.mrb[0].mxu0
  %v4556 = vadd.f32 %v4331, %v4555
  %v4557 = vpop.f32.mrb[0].mxu0
  %4558 = vmatprep.mubr.f32.mxu0 %v3474
  %4559 = vmatmul.mubr.f32.gmra.mrb[0].mxu0 %v3473
  %v4560 = vpop.f32.mrb[0].mxu0
  %v4561 = vadd.f32 %v4336, %v4560
  %v4562 = vpop.f32.mrb[0].mxu0
  %4563 = vmatprep.mubr.f32.mxu0 %v3483
  %4564 = vmatmul.mubr.f32.gmra.mrb[0].mxu0 %v3482
  %v4565 = vpop.f32.mrb[0].mxu0
  %v4566 = vadd.f32 %v4341, %v4565
  %v4567 = vpop.f32.mrb[0].mxu0
  %4568 = vmatprep.mubr.f32.mxu0 %v3492
  %4569 = vmatmul.mubr.f32.gmra.mrb[0].mxu0 %v3491
  %v4570 = vpop.f32.mrb[0].mxu0
  %v4571 = vadd.f32 %v4346, %v4570
  %v4572 = vpop.f32.mrb[0].mxu0
  %4573 = vmatprep.mubr.f32.mxu0 %v3501
  %4574 = vmatmul.mubr.f32.gmra.mrb[0].mxu0 %v3500
  %v4575 = vpop.f32.mrb[0].mxu0
  %v4576 = vadd.f32 %v4351, %v4575
  %v4577 = vpop.f32.mrb[0].mxu0
  %4578 = vmatprep.mubr.f32.mxu0 %v3510
  %4579 = vmatmul.mubr.f32.gmra.mrb[0].mxu0 %v3509
  %v4580 = vpop.f32.mrb[0].mxu0
  %v4581 = vadd.f32 %v4356, %v4580
  %v4582 = vpop.f32.mrb[0].mxu0
  %4583 = vmatprep.mubr.f32.mxu0 %v3519
  %4584 = vmatmul.mubr.f32.gmra.mrb[0].mxu0 %v3518
  %v4585 = vpop.f32.mrb[0].mxu0
  %v4586 = vadd.f32 %v4361, %v4585
  %v4587 = vpop.f32.mrb[0].mxu0
  %4588 = vmatprep.mubr.f32.mxu0 %v3528
  %4589 = vmatmul.mubr.f32.gmra.mrb[0].mxu0 %v3527
  %v4590 = vpop.f32.mrb[0].mxu0
  %v4591 = vadd.f32 %v4366, %v4590
  %v4592 = vpop.f32.mrb[0].mxu0
  %4593 = vmatprep.mubr.f32.mxu0 %v3537
  %4594 = vmatmul.mubr.f32.gmra.mrb[0].mxu0 %v3536
  %v4595 = vpop.f32.mrb[0].mxu0
  %v4596 = vadd.f32 %v4371, %v4595
  %v4597 = vpop.f32.mrb[0].mxu0
  %4598 = vmatprep.mubr.f32.mxu0 %v3546
  %4599 = vmatmul.mubr.f32.gmra.mrb[0].mxu0 %v3545
  %v4600 = vpop.f32.mrb[0].mxu0
  %v4601 = vadd.f32 %v4376, %v4600
  %v4602 = vpop.f32.mrb[0].mxu0
  %4603 = vmatprep.mubr.f32.mxu0 %v3555
  %4604 = vmatmul.mubr.f32.gmra.mrb[0].mxu0 %v3554
  %v4605 = vpop.f32.mrb[0].mxu0
  %v4606 = vadd.f32 %v4381, %v4605
  %v4607 = vpop.f32.mrb[0].mxu0
  %4608 = vmatprep.mubr.f32.mxu0 %v3564
  %4609 = vmatmul.mubr.f32.gmra.mrb[0].mxu0 %v3563
  %v4610 = vpop.f32.mrb[0].mxu0
  %v4611 = vadd.f32 %v4386, %v4610
  %v4612 = vpop.f32.mrb[0].mxu0
  %4613 = vmatprep.mubr.f32.mxu0 %v3573
  %4614 = vmatmul.mubr.f32.gmra.mrb[0].mxu0 %v3572
  %v4615 = vpop.f32.mrb[0].mxu0
  %v4616 = vadd.f32 %v4391, %v4615
  %v4617 = vpop.f32.mrb[0].mxu0
  %4618 = vdwg.mxu0
  %4619 = vmatprep.subr.mxu0 0.0
  %4620 = vmatpush1.msra.mxu0 %v3703
  %4621 = vmatprep.subr.mxu0 0.0
  %4622 = vmatpush1.msra.mxu0 %v3704
  %4623 = vmatprep.subr.mxu0 0.0
  %4624 = vmatpush1.msra.mxu0 %v3705
  %4625 = vmatprep.subr.mxu0 0.0
  %4626 = vmatpush1.msra.mxu0 %v3706
  %4627 = vmatprep.subr.mxu0 0.0
  %4628 = vmatpush1.msra.mxu0 %v3707
  %4629 = vmatprep.subr.mxu0 0.0
  %4630 = vmatpush1.msra.mxu0 %v3708
  %4631 = vmatprep.subr.mxu0 0.0
  %4632 = vmatpush1.msra.mxu0 %v3709
  %4633 = vmatprep.subr.mxu0 0.0
  %4634 = vmatpush1.msra.mxu0 %v3710
  %4635 = vmatprep.subr.mxu0 0.0
  %4636 = vmatpush1.msra.mxu0 %v3711
  %4637 = vmatprep.subr.mxu0 0.0
  %4638 = vmatpush1.msra.mxu0 %v3712
  %4639 = vmatprep.subr.mxu0 0.0
  %4640 = vmatpush1.msra.mxu0 %v3713
  %4641 = vmatprep.subr.mxu0 0.0
  %4642 = vmatpush1.msra.mxu0 %v3714
  %4643 = vmatprep.subr.mxu0 0.0
  %4644 = vmatpush1.msra.mxu0 %v3715
  %4645 = vmatprep.subr.mxu0 0.0
  %4646 = vmatpush1.msra.mxu0 %v3716
  %4647 = vmatprep.subr.mxu0 0.0
  %4648 = vmatpush1.msra.mxu0 %v3717
  %4649 = vmatprep.subr.mxu0 0.0
  %4650 = vmatpush1.msra.mxu0 %v3718
  %4651 = vmatprep.subr.mxu0 0.0
  %4652 = vmatpush1.msra.mxu0 0.0
  %4653 = vmatprep.subr.mxu0 0.0
  %4654 = vmatpush1.msra.mxu0 0.0
  %4655 = vmatprep.subr.mxu0 0.0
  %4656 = vmatpush1.msra.mxu0 0.0
  %4657 = vmatprep.subr.mxu0 0.0
  %4658 = vmatpush1.msra.mxu0 0.0
  %4659 = vmatprep.subr.mxu0 0.0
  %4660 = vmatpush1.msra.mxu0 0.0
  %4661 = vmatprep.subr.mxu0 0.0
  %4662 = vmatpush1.msra.mxu0 0.0
  %4663 = vmatprep.subr.mxu0 0.0
  %4664 = vmatpush1.msra.mxu0 0.0
  %4665 = vmatprep.subr.mxu0 0.0
  %4666 = vmatpush1.msra.mxu0 0.0
  %4667 = vmatprep.subr.mxu0 0.0
  %4668 = vmatpush1.msra.mxu0 0.0
  %4669 = vmatprep.subr.mxu0 0.0
  %4670 = vmatpush1.msra.mxu0 0.0
  %4671 = vmatprep.subr.mxu0 0.0
  %4672 = vmatpush1.msra.mxu0 0.0
  %4673 = vmatprep.subr.mxu0 0.0
  %4674 = vmatpush1.msra.mxu0 0.0
  %4675 = vmatprep.subr.mxu0 0.0
  %4676 = vmatpush1.msra.mxu0 0.0
  %4677 = vmatprep.subr.mxu0 0.0
  %4678 = vmatpush1.msra.mxu0 0.0
  %4679 = vmatprep.subr.mxu0 0.0
  %4680 = vmatpush1.msra.mxu0 0.0
  %4681 = vmatprep.subr.mxu0 0.0
  %4682 = vmatpush1.msra.mxu0 0.0
  %4683 = vmatprep.mubr.f32.mxu0 0.0
  %4684 = vmatmul.mubr.f32.gmra.mrb[0].mxu0 %v3295
  %v4685 = vpop.f32.mrb[0].mxu0
  %v4686 = vadd.f32 %v4461, %v4685
  %v4687 = vpop.f32.mrb[0].mxu0
  %4688 = vmatprep.mubr.f32.mxu0 0.0
  %4689 = vmatmul.mubr.f32.gmra.mrb[0].mxu0 %v3304
  %v4690 = vpop.f32.mrb[0].mxu0
  %v4691 = vadd.f32 %v4466, %v4690
  %v4692 = vpop.f32.mrb[0].mxu0
  %4693 = vmatprep.mubr.f32.mxu0 0.0
  %4694 = vmatmul.mubr.f32.gmra.mrb[0].mxu0 %v3313
  %v4695 = vpop.f32.mrb[0].mxu0
  %v4696 = vadd.f32 %v4471, %v4695
  %v4697 = vpop.f32.mrb[0].mxu0
  %4698 = vmatprep.mubr.f32.mxu0 0.0
  %4699 = vmatmul.mubr.f32.gmra.mrb[0].mxu0 %v3322
  %v4700 = vpop.f32.mrb[0].mxu0
  %v4701 = vadd.f32 %v4476, %v4700
  %v4702 = vpop.f32.mrb[0].mxu0
  %4703 = vmatprep.mubr.f32.mxu0 0.0
  %4704 = vmatmul.mubr.f32.gmra.mrb[0].mxu0 %v3331
  %v4705 = vpop.f32.mrb[0].mxu0
  %v4706 = vadd.f32 %v4481, %v4705
  %v4707 = vpop.f32.mrb[0].mxu0
  %4708 = vmatprep.mubr.f32.mxu0 0.0
  %4709 = vmatmul.mubr.f32.gmra.mrb[0].mxu0 %v3340
  %v4710 = vpop.f32.mrb[0].mxu0
  %v4711 = vadd.f32 %v4486, %v4710
  %v4712 = vpop.f32.mrb[0].mxu0
  %4713 = vmatprep.mubr.f32.mxu0 0.0
  %4714 = vmatmul.mubr.f32.gmra.mrb[0].mxu0 %v3349
  %v4715 = vpop.f32.mrb[0].mxu0
  %v4716 = vadd.f32 %v4491, %v4715
  %v4717 = vpop.f32.mrb[0].mxu0
  %4718 = vmatprep.mubr.f32.mxu0 0.0
  %4719 = vmatmul.mubr.f32.gmra.mrb[0].mxu0 %v3358
  %v4720 = vpop.f32.mrb[0].mxu0
  %v4721 = vadd.f32 %v4496, %v4720
  %v4722 = vpop.f32.mrb[0].mxu0
  %4723 = vmatprep.mubr.f32.mxu0 0.0
  %4724 = vmatmul.mubr.f32.gmra.mrb[0].mxu0 %v3367
  %v4725 = vpop.f32.mrb[0].mxu0
  %v4726 = vadd.f32 %v4501, %v4725
  %v4727 = vpop.f32.mrb[0].mxu0
  %4728 = vmatprep.mubr.f32.mxu0 0.0
  %4729 = vmatmul.mubr.f32.gmra.mrb[0].mxu0 %v3376
  %v4730 = vpop.f32.mrb[0].mxu0
  %v4731 = vadd.f32 %v4506, %v4730
  %v4732 = vpop.f32.mrb[0].mxu0
  %4733 = vmatprep.mubr.f32.mxu0 0.0
  %4734 = vmatmul.mubr.f32.gmra.mrb[0].mxu0 %v3385
  %v4735 = vpop.f32.mrb[0].mxu0
  %v4736 = vadd.f32 %v4511, %v4735
  %v4737 = vpop.f32.mrb[0].mxu0
  %4738 = vmatprep.mubr.f32.mxu0 0.0
  %4739 = vmatmul.mubr.f32.gmra.mrb[0].mxu0 %v3394
  %v4740 = vpop.f32.mrb[0].mxu0
  %v4741 = vadd.f32 %v4516, %v4740
  %v4742 = vpop.f32.mrb[0].mxu0
  %4743 = vmatprep.mubr.f32.mxu0 0.0
  %4744 = vmatmul.mubr.f32.gmra.mrb[0].mxu0 %v3403
  %v4745 = vpop.f32.mrb[0].mxu0
  %v4746 = vadd.f32 %v4521, %v4745
  %v4747 = vpop.f32.mrb[0].mxu0
  %4748 = vmatprep.mubr.f32.mxu0 0.0
  %4749 = vmatmul.mubr.f32.gmra.mrb[0].mxu0 %v3412
  %v4750 = vpop.f32.mrb[0].mxu0
  %v4751 = vadd.f32 %v4526, %v4750
  %v4752 = vpop.f32.mrb[0].mxu0
  %4753 = vmatprep.mubr.f32.mxu0 0.0
  %4754 = vmatmul.mubr.f32.gmra.mrb[0].mxu0 %v3421
  %v4755 = vpop.f32.mrb[0].mxu0
  %v4756 = vadd.f32 %v4531, %v4755
  %v4757 = vpop.f32.mrb[0].mxu0
  %4758 = vmatprep.mubr.f32.mxu0 0.0
  %4759 = vmatmul.mubr.f32.gmra.mrb[0].mxu0 %v3430
  %v4760 = vpop.f32.mrb[0].mxu0
  %v4761 = vadd.f32 %v4536, %v4760
  %v4762 = vpop.f32.mrb[0].mxu0
  %4763 = vmatprep.mubr.f32.mxu0 0.0
  %4764 = vmatmul.mubr.f32.gmra.mrb[0].mxu0 %v3439
  %v4765 = vpop.f32.mrb[0].mxu0
  %v4766 = vadd.f32 %v4541, %v4765
  %v4767 = vpop.f32.mrb[0].mxu0
  %4768 = vmatprep.mubr.f32.mxu0 0.0
  %4769 = vmatmul.mubr.f32.gmra.mrb[0].mxu0 %v3448
  %v4770 = vpop.f32.mrb[0].mxu0
  %v4771 = vadd.f32 %v4546, %v4770
  %v4772 = vpop.f32.mrb[0].mxu0
  %4773 = vmatprep.mubr.f32.mxu0 0.0
  %4774 = vmatmul.mubr.f32.gmra.mrb[0].mxu0 %v3457
  %v4775 = vpop.f32.mrb[0].mxu0
  %v4776 = vadd.f32 %v4551, %v4775
  %v4777 = vpop.f32.mrb[0].mxu0
  %4778 = vmatprep.mubr.f32.mxu0 0.0
  %4779 = vmatmul.mubr.f32.gmra.mrb[0].mxu0 %v3466
  %v4780 = vpop.f32.mrb[0].mxu0
  %v4781 = vadd.f32 %v4556, %v4780
  %v4782 = vpop.f32.mrb[0].mxu0
  %4783 = vmatprep.mubr.f32.mxu0 0.0
  %4784 = vmatmul.mubr.f32.gmra.mrb[0].mxu0 %v3475
  %v4785 = vpop.f32.mrb[0].mxu0
  %v4786 = vadd.f32 %v4561, %v4785
  %v4787 = vpop.f32.mrb[0].mxu0
  %4788 = vmatprep.mubr.f32.mxu0 0.0
  %4789 = vmatmul.mubr.f32.gmra.mrb[0].mxu0 %v3484
  %v4790 = vpop.f32.mrb[0].mxu0
  %v4791 = vadd.f32 %v4566, %v4790
  %v4792 = vpop.f32.mrb[0].mxu0
  %4793 = vmatprep.mubr.f32.mxu0 0.0
  %4794 = vmatmul.mubr.f32.gmra.mrb[0].mxu0 %v3493
  %v4795 = vpop.f32.mrb[0].mxu0
  %v4796 = vadd.f32 %v4571, %v4795
  %v4797 = vpop.f32.mrb[0].mxu0
  %4798 = vmatprep.mubr.f32.mxu0 0.0
  %4799 = vmatmul.mubr.f32.gmra.mrb[0].mxu0 %v3502
  %v4800 = vpop.f32.mrb[0].mxu0
  %v4801 = vadd.f32 %v4576, %v4800
  %v4802 = vpop.f32.mrb[0].mxu0
  %4803 = vmatprep.mubr.f32.mxu0 0.0
  %4804 = vmatmul.mubr.f32.gmra.mrb[0].mxu0 %v3511
  %v4805 = vpop.f32.mrb[0].mxu0
  %v4806 = vadd.f32 %v4581, %v4805
  %v4807 = vpop.f32.mrb[0].mxu0
  %4808 = vmatprep.mubr.f32.mxu0 0.0
  %4809 = vmatmul.mubr.f32.gmra.mrb[0].mxu0 %v3520
  %v4810 = vpop.f32.mrb[0].mxu0
  %v4811 = vadd.f32 %v4586, %v4810
  %v4812 = vpop.f32.mrb[0].mxu0
  %4813 = vmatprep.mubr.f32.mxu0 0.0
  %4814 = vmatmul.mubr.f32.gmra.mrb[0].mxu0 %v3529
  %v4815 = vpop.f32.mrb[0].mxu0
  %v4816 = vadd.f32 %v4591, %v4815
  %v4817 = vpop.f32.mrb[0].mxu0
  %4818 = vmatprep.mubr.f32.mxu0 0.0
  %4819 = vmatmul.mubr.f32.gmra.mrb[0].mxu0 %v3538
  %v4820 = vpop.f32.mrb[0].mxu0
  %v4821 = vadd.f32 %v4596, %v4820
  %v4822 = vpop.f32.mrb[0].mxu0
  %4823 = vmatprep.mubr.f32.mxu0 0.0
  %4824 = vmatmul.mubr.f32.gmra.mrb[0].mxu0 %v3547
  %v4825 = vpop.f32.mrb[0].mxu0
  %v4826 = vadd.f32 %v4601, %v4825
  %v4827 = vpop.f32.mrb[0].mxu0
  %4828 = vmatprep.mubr.f32.mxu0 0.0
  %4829 = vmatmul.mubr.f32.gmra.mrb[0].mxu0 %v3556
  %v4830 = vpop.f32.mrb[0].mxu0
  %v4831 = vadd.f32 %v4606, %v4830
  %v4832 = vpop.f32.mrb[0].mxu0
  %4833 = vmatprep.mubr.f32.mxu0 0.0
  %4834 = vmatmul.mubr.f32.gmra.mrb[0].mxu0 %v3565
  %v4835 = vpop.f32.mrb[0].mxu0
  %v4836 = vadd.f32 %v4611, %v4835
  %v4837 = vpop.f32.mrb[0].mxu0
  %4838 = vmatprep.mubr.f32.mxu0 0.0
  %4839 = vmatmul.mubr.f32.gmra.mrb[0].mxu0 %v3574
  %v4840 = vpop.f32.mrb[0].mxu0
  %v4841 = vadd.f32 %v4616, %v4840
  %v4842 = vpop.f32.mrb[0].mxu0
  %4843 = vdwg.mxu0
  %v4844 = vadd.f32 %v4686, %v4691
  %v4845 = vadd.f32 %v4844, %v4696
  %v4846 = vadd.f32 %v4845, %v4701
  %v4847 = vadd.f32 %v4846, %v4706
  %v4848 = vadd.f32 %v4847, %v4711
  %v4849 = vadd.f32 %v4848, %v4716
  %v4850 = vadd.f32 %v4849, %v4721
  %v4851 = vadd.f32 %v4850, %v4726
  %v4852 = vadd.f32 %v4851, %v4731
  %v4853 = vadd.f32 %v4852, %v4736
  %v4854 = vadd.f32 %v4853, %v4741
  %v4855 = vadd.f32 %v4854, %v4746
  %v4856 = vadd.f32 %v4855, %v4751
  %v4857 = vadd.f32 %v4856, %v4756
  %v4858 = vadd.f32 %v4857, %v4761
  %v4859 = vadd.f32 %v4858, %v4766
  %v4860 = vadd.f32 %v4859, %v4771
  %v4861 = vadd.f32 %v4860, %v4776
  %v4862 = vadd.f32 %v4861, %v4781
  %v4863 = vadd.f32 %v4862, %v4786
  %v4864 = vadd.f32 %v4863, %v4791
  %v4865 = vadd.f32 %v4864, %v4796
  %v4866 = vadd.f32 %v4865, %v4801
  %v4867 = vadd.f32 %v4866, %v4806
  %v4868 = vadd.f32 %v4867, %v4811
  %v4869 = vadd.f32 %v4868, %v4816
  %v4870 = vadd.f32 %v4869, %v4821
  %v4871 = vadd.f32 %v4870, %v4826
  %v4872 = vadd.f32 %v4871, %v4831
  %v4873 = vadd.f32 %v4872, %v4836
  %v4874 = vadd.f32 %v4873, %v4841
  %v4875 = vrot.slane %v4874, 4
  %v4876 = vadd.f32 %v4874, %v4875
  %v4877 = vrot.slane %v4876, 2
  %v4878 = vadd.f32 %v4876, %v4877
  %v4879 = vrot.slane %v4878, 1
  %v4880 = vadd.f32 %v4878, %v4879
  %v4881 = vmul.f32 %v4686, %v4686
  %v4882 = vmul.f32 %v4691, %v4691
  %v4883 = vmul.f32 %v4696, %v4696
  %v4884 = vmul.f32 %v4701, %v4701
  %v4885 = vmul.f32 %v4706, %v4706
  %v4886 = vmul.f32 %v4711, %v4711
  %v4887 = vmul.f32 %v4716, %v4716
  %v4888 = vmul.f32 %v4721, %v4721
  %v4889 = vmul.f32 %v4726, %v4726
  %v4890 = vmul.f32 %v4731, %v4731
  %v4891 = vmul.f32 %v4736, %v4736
  %v4892 = vmul.f32 %v4741, %v4741
  %v4893 = vmul.f32 %v4746, %v4746
  %v4894 = vmul.f32 %v4751, %v4751
  %v4895 = vmul.f32 %v4756, %v4756
  %v4896 = vmul.f32 %v4761, %v4761
  %v4897 = vmul.f32 %v4766, %v4766
  %v4898 = vmul.f32 %v4771, %v4771
  %v4899 = vmul.f32 %v4776, %v4776
  %v4900 = vmul.f32 %v4781, %v4781
  %v4901 = vmul.f32 %v4786, %v4786
  %v4902 = vmul.f32 %v4791, %v4791
  %v4903 = vmul.f32 %v4796, %v4796
  %v4904 = vmul.f32 %v4801, %v4801
  %v4905 = vmul.f32 %v4806, %v4806
  %v4906 = vmul.f32 %v4811, %v4811
  %v4907 = vmul.f32 %v4816, %v4816
  %v4908 = vmul.f32 %v4821, %v4821
  %v4909 = vmul.f32 %v4826, %v4826
  %v4910 = vmul.f32 %v4831, %v4831
  %v4911 = vmul.f32 %v4836, %v4836
  %v4912 = vmul.f32 %v4841, %v4841
  %v4913 = vadd.f32 %v4881, %v4882
  %v4914 = vadd.f32 %v4913, %v4883
  %v4915 = vadd.f32 %v4914, %v4884
  %v4916 = vadd.f32 %v4915, %v4885
  %v4917 = vadd.f32 %v4916, %v4886
  %v4918 = vadd.f32 %v4917, %v4887
  %v4919 = vadd.f32 %v4918, %v4888
  %v4920 = vadd.f32 %v4919, %v4889
  %v4921 = vadd.f32 %v4920, %v4890
  %v4922 = vadd.f32 %v4921, %v4891
  %v4923 = vadd.f32 %v4922, %v4892
  %v4924 = vadd.f32 %v4923, %v4893
  %v4925 = vadd.f32 %v4924, %v4894
  %v4926 = vadd.f32 %v4925, %v4895
  %v4927 = vadd.f32 %v4926, %v4896
  %v4928 = vadd.f32 %v4927, %v4897
  %v4929 = vadd.f32 %v4928, %v4898
  %v4930 = vadd.f32 %v4929, %v4899
  %v4931 = vadd.f32 %v4930, %v4900
  %v4932 = vadd.f32 %v4931, %v4901
  %v4933 = vadd.f32 %v4932, %v4902
  %v4934 = vadd.f32 %v4933, %v4903
  %v4935 = vadd.f32 %v4934, %v4904
  %v4936 = vadd.f32 %v4935, %v4905
  %v4937 = vadd.f32 %v4936, %v4906
  %v4938 = vadd.f32 %v4937, %v4907
  %v4939 = vadd.f32 %v4938, %v4908
  %v4940 = vadd.f32 %v4939, %v4909
  %v4941 = vadd.f32 %v4940, %v4910
  %v4942 = vadd.f32 %v4941, %v4911
  %v4943 = vadd.f32 %v4942, %v4912
  %v4944 = vrot.slane %v4943, 4
  %v4945 = vadd.f32 %v4943, %v4944
  %v4946 = vrot.slane %v4945, 2
  %v4947 = vadd.f32 %v4945, %v4946
  %v4948 = vrot.slane %v4947, 1
  %v4949 = vadd.f32 %v4947, %v4948
  %v4950 = vmul.f32 %v26, 256.0
  %v4951 = vadd.f32 %v4880, %v4950
  %v4952 = vmul.f32 %v26, 2.0
  %v4953 = vmul.f32 %v4952, %v4880
  %v4954 = vadd.f32 %v4949, %v4953
  %v4955 = vmul.f32 %v26, %v26
  %v4956 = vmul.f32 %v4955, 256.0
  %v4957 = vadd.f32 %v4954, %v4956
  %v4959 = vrot.slane %v4957, 7
  %v4961 = vsel %vm2324, %v4951, %v4959
  %v4962 = vld [vmem:[%s4] sm:$0xff]
  %v4963 = vld [vmem:[%s4 + $0x8] sm:$0xff]
  %v4964 = vld [vmem:[%s4 + $0x10] sm:$0xff]
  %v4965 = vld [vmem:[%s4 + $0x18] sm:$0xff]
  %v4966 = vld [vmem:[%s4 + $0x20] sm:$0xff]
  %v4967 = vld [vmem:[%s4 + $0x28] sm:$0xff]
  %v4968 = vld [vmem:[%s4 + $0x30] sm:$0xff]
  %v4969 = vld [vmem:[%s4 + $0x38] sm:$0xff]
  %v4970 = vld [vmem:[%s4 + $0x40] sm:$0xff]
  %v4971 = vld [vmem:[%s4 + $0x48] sm:$0xff]
  %v4972 = vld [vmem:[%s4 + $0x50] sm:$0xff]
  %v4973 = vld [vmem:[%s4 + $0x58] sm:$0xff]
  %v4974 = vld [vmem:[%s4 + $0x60] sm:$0xff]
  %v4975 = vld [vmem:[%s4 + $0x68] sm:$0xff]
  %v4976 = vld [vmem:[%s4 + $0x70] sm:$0xff]
  %v4977 = vld [vmem:[%s4 + $0x78] sm:$0xff]
  %4978 = vmatprep.subr.mxu0 0.0
  %4979 = vmatpush1.msra.mxu0 %v4962
  %4980 = vmatprep.subr.mxu0 0.0
  %4981 = vmatpush1.msra.mxu0 %v4963
  %4982 = vmatprep.subr.mxu0 0.0
  %4983 = vmatpush1.msra.mxu0 %v4964
  %4984 = vmatprep.subr.mxu0 0.0
  %4985 = vmatpush1.msra.mxu0 %v4965
  %4986 = vmatprep.subr.mxu0 0.0
  %4987 = vmatpush1.msra.mxu0 %v4966
  %4988 = vmatprep.subr.mxu0 0.0
  %4989 = vmatpush1.msra.mxu0 %v4967
  %4990 = vmatprep.subr.mxu0 0.0
  %4991 = vmatpush1.msra.mxu0 %v4968
  %4992 = vmatprep.subr.mxu0 0.0
  %4993 = vmatpush1.msra.mxu0 %v4969
  %4994 = vmatprep.subr.mxu0 0.0
  %4995 = vmatpush1.msra.mxu0 %v4970
  %4996 = vmatprep.subr.mxu0 0.0
  %4997 = vmatpush1.msra.mxu0 %v4971
  %4998 = vmatprep.subr.mxu0 0.0
  %4999 = vmatpush1.msra.mxu0 %v4972
  %5000 = vmatprep.subr.mxu0 0.0
  %5001 = vmatpush1.msra.mxu0 %v4973
  %5002 = vmatprep.subr.mxu0 0.0
  %5003 = vmatpush1.msra.mxu0 %v4974
  %5004 = vmatprep.subr.mxu0 0.0
  %5005 = vmatpush1.msra.mxu0 %v4975
  %5006 = vmatprep.subr.mxu0 0.0
  %5007 = vmatpush1.msra.mxu0 %v4976
  %5008 = vmatprep.subr.mxu0 0.0
  %5009 = vmatpush1.msra.mxu0 %v4977
  %5010 = vmatprep.subr.mxu0 0.0
  %5011 = vmatpush1.msra.mxu0 0.0
  %5012 = vmatprep.subr.mxu0 0.0
  %5013 = vmatpush1.msra.mxu0 0.0
  %5014 = vmatprep.subr.mxu0 0.0
  %5015 = vmatpush1.msra.mxu0 0.0
  %5016 = vmatprep.subr.mxu0 0.0
  %5017 = vmatpush1.msra.mxu0 0.0
  %5018 = vmatprep.subr.mxu0 0.0
  %5019 = vmatpush1.msra.mxu0 0.0
  %5020 = vmatprep.subr.mxu0 0.0
  %5021 = vmatpush1.msra.mxu0 0.0
  %5022 = vmatprep.subr.mxu0 0.0
  %5023 = vmatpush1.msra.mxu0 0.0
  %5024 = vmatprep.subr.mxu0 0.0
  %5025 = vmatpush1.msra.mxu0 0.0
  %5026 = vmatprep.subr.mxu0 0.0
  %5027 = vmatpush1.msra.mxu0 0.0
  %5028 = vmatprep.subr.mxu0 0.0
  %5029 = vmatpush1.msra.mxu0 0.0
  %5030 = vmatprep.subr.mxu0 0.0
  %5031 = vmatpush1.msra.mxu0 0.0
  %5032 = vmatprep.subr.mxu0 0.0
  %5033 = vmatpush1.msra.mxu0 0.0
  %5034 = vmatprep.subr.mxu0 0.0
  %5035 = vmatpush1.msra.mxu0 0.0
  %5036 = vmatprep.subr.mxu0 0.0
  %5037 = vmatpush1.msra.mxu0 0.0
  %5038 = vmatprep.subr.mxu0 0.0
  %5039 = vmatpush1.msra.mxu0 0.0
  %5040 = vmatprep.subr.mxu0 0.0
  %5041 = vmatpush1.msra.mxu0 0.0
  %5042 = vmatprep.mubr.f32.mxu0 0.0
  %5043 = vmatmul.mubr.f32.gmra.mrb[0].mxu0 %v4961
  %v5044 = vpop.f32.mrb[0].mxu0
  %v5045 = vadd.f32 0.0, %v5044
  %v5046 = vpop.f32.mrb[0].mxu0
  %5047 = vdwg.mxu0
  %v5048 = vmul.f32 %v5045, 0.0009765625
  %v5049 = vmul.f32 %v5048, %v5048
  %v5051 = vrot.slane %v5049, 7
  %v5053 = vsub.f32 %v5048, %v5051
  %v5054 = vadd.f32 %v5053, 1e-05
  %v5055 = vrsqrt.pop %v5054
  %v5056 = vsel %vm2324, %v5048, %v5055
  %v5057 = vld [vmem:[%s5] sm:$0xff]
  %v5058 = vld [vmem:[%s5 + $0x8] sm:$0xff]
  %v5059 = vld [vmem:[%s5 + $0x10] sm:$0xff]
  %v5060 = vld [vmem:[%s5 + $0x18] sm:$0xff]
  %v5062 = vsel %vm2425, %v5056, 0
  %5064 = vmatprep.subr.mxu0 0.0
  %5065 = vmatpush1.msra.mxu0 %v5057
  %5066 = vmatprep.subr.mxu0 0.0
  %5067 = vmatpush1.msra.mxu0 %v5058
  %5068 = vmatprep.subr.mxu0 0.0
  %5069 = vmatpush1.msra.mxu0 %v5059
  %5070 = vmatprep.subr.mxu0 0.0
  %5071 = vmatpush1.msra.mxu0 %v5060
  %5072 = vmatprep.subr.mxu0 0.0
  %5073 = vmatpush1.msra.mxu0 0.0
  %5074 = vmatprep.subr.mxu0 0.0
  %5075 = vmatpush1.msra.mxu0 0.0
  %5076 = vmatprep.subr.mxu0 0.0
  %5077 = vmatpush1.msra.mxu0 0.0
  %5078 = vmatprep.subr.mxu0 0.0
  %5079 = vmatpush1.msra.mxu0 0.0
  %5080 = vmatprep.subr.mxu0 0.0
  %5081 = vmatpush1.msra.mxu0 0.0
  %5082 = vmatprep.subr.mxu0 0.0
  %5083 = vmatpush1.msra.mxu0 0.0
  %5084 = vmatprep.subr.mxu0 0.0
  %5085 = vmatpush1.msra.mxu0 0.0
  %5086 = vmatprep.subr.mxu0 0.0
  %5087 = vmatpush1.msra.mxu0 0.0
  %5088 = vmatprep.subr.mxu0 0.0
  %5089 = vmatpush1.msra.mxu0 0.0
  %5090 = vmatprep.subr.mxu0 0.0
  %5091 = vmatpush1.msra.mxu0 0.0
  %5092 = vmatprep.subr.mxu0 0.0
  %5093 = vmatpush1.msra.mxu0 0.0
  %5094 = vmatprep.subr.mxu0 0.0
  %5095 = vmatpush1.msra.mxu0 0.0
  %5096 = vmatprep.subr.mxu0 0.0
  %5097 = vmatpush1.msra.mxu0 0.0
  %5098 = vmatprep.subr.mxu0 0.0
  %5099 = vmatpush1.msra.mxu0 0.0
  %5100 = vmatprep.subr.mxu0 0.0
  %5101 = vmatpush1.msra.mxu0 0.0
  %5102 = vmatprep.subr.mxu0 0.0
  %5103 = vmatpush1.msra.mxu0 0.0
  %5104 = vmatprep.subr.mxu0 0.0
  %5105 = vmatpush1.msra.mxu0 0.0
  %5106 = vmatprep.subr.mxu0 0.0
  %5107 = vmatpush1.msra.mxu0 0.0
  %5108 = vmatprep.subr.mxu0 0.0
  %5109 = vmatpush1.msra.mxu0 0.0
  %5110 = vmatprep.subr.mxu0 0.0
  %5111 = vmatpush1.msra.mxu0 0.0
  %5112 = vmatprep.subr.mxu0 0.0
  %5113 = vmatpush1.msra.mxu0 0.0
  %5114 = vmatprep.subr.mxu0 0.0
  %5115 = vmatpush1.msra.mxu0 0.0
  %5116 = vmatprep.subr.mxu0 0.0
  %5117 = vmatpush1.msra.mxu0 0.0
  %5118 = vmatprep.subr.mxu0 0.0
  %5119 = vmatpush1.msra.mxu0 0.0
  %5120 = vmatprep.subr.mxu0 0.0
  %5121 = vmatpush1.msra.mxu0 0.0
  %5122 = vmatprep.subr.mxu0 0.0
  %5123 = vmatpush1.msra.mxu0 0.0
  %5124 = vmatprep.subr.mxu0 0.0
  %5125 = vmatpush1.msra.mxu0 0.0
  %5126 = vmatprep.subr.mxu0 0.0
  %5127 = vmatpush1.msra.mxu0 0.0
  %5128 = vmatprep.mubr.f32.mxu0 0.0
  %5129 = vmatmul.mubr.f32.gmra.mrb[0].mxu0 %v5062
  %v5130 = vpop.f32.mrb[0].mxu0
  %v5131 = vadd.f32 0.0, %v5130
  %v5132 = vpop.f32.mrb[0].mxu0
  %5133 = vdwg.mxu0
  %v5135 = vrot.slane %v27, 7
  %v5137 = vmul.f32 %v5131, %v5135
  %v5138 = vsub.f32 %v26, %v5131
  %v5140 = vrot.slane %v5137, 1
  %v5142 = vmul.f32 %v5138, %v5140
  %v5143 = vadd.f32 %v28, %v5142
  %v5144 = vlaneseq
  %v5145 = vshrl.u32 %v5144, 7
  %v5146 = vsub.s32 1, %v5145
  %v5147 = vrot.slane %v5137, %v5146
  %v5148 = vmul.f32 %v4686, %v5147
  %v5149 = vmul.f32 %v4691, %v5147
  %v5150 = vmul.f32 %v4696, %v5147
  %v5151 = vmul.f32 %v4701, %v5147
  %v5152 = vmul.f32 %v4706, %v5147
  %v5153 = vmul.f32 %v4711, %v5147
  %v5154 = vmul.f32 %v4716, %v5147
  %v5155 = vmul.f32 %v4721, %v5147
  %v5156 = vmul.f32 %v4726, %v5147
  %v5157 = vmul.f32 %v4731, %v5147
  %v5158 = vmul.f32 %v4736, %v5147
  %v5159 = vmul.f32 %v4741, %v5147
  %v5160 = vmul.f32 %v4746, %v5147
  %v5161 = vmul.f32 %v4751, %v5147
  %v5162 = vmul.f32 %v4756, %v5147
  %v5163 = vmul.f32 %v4761, %v5147
  %v5164 = vmul.f32 %v4766, %v5147
  %v5165 = vmul.f32 %v4771, %v5147
  %v5166 = vmul.f32 %v4776, %v5147
  %v5167 = vmul.f32 %v4781, %v5147
  %v5168 = vmul.f32 %v4786, %v5147
  %v5169 = vmul.f32 %v4791, %v5147
  %v5170 = vmul.f32 %v4796, %v5147
  %v5171 = vmul.f32 %v4801, %v5147
  %v5172 = vmul.f32 %v4806, %v5147
  %v5173 = vmul.f32 %v4811, %v5147
  %v5174 = vmul.f32 %v4816, %v5147
  %v5175 = vmul.f32 %v4821, %v5147
  %v5176 = vmul.f32 %v4826, %v5147
  %v5177 = vmul.f32 %v4831, %v5147
  %v5178 = vmul.f32 %v4836, %v5147
  %v5179 = vmul.f32 %v4841, %v5147
  %v5180 = vlaneseq
  %v5181 = vshrl.u32 %v5180, 7
  %v5182 = vsub.s32 0, %v5181
  %v5183 = vrot.slane %v5143, %v5182
  %v5184 = vadd.f32 %v5148, %v5183
  %v5185 = vadd.f32 %v5149, %v5183
  %v5186 = vadd.f32 %v5150, %v5183
  %v5187 = vadd.f32 %v5151, %v5183
  %v5188 = vadd.f32 %v5152, %v5183
  %v5189 = vadd.f32 %v5153, %v5183
  %v5190 = vadd.f32 %v5154, %v5183
  %v5191 = vadd.f32 %v5155, %v5183
  %v5192 = vadd.f32 %v5156, %v5183
  %v5193 = vadd.f32 %v5157, %v5183
  %v5194 = vadd.f32 %v5158, %v5183
  %v5195 = vadd.f32 %v5159, %v5183
  %v5196 = vadd.f32 %v5160, %v5183
  %v5197 = vadd.f32 %v5161, %v5183
  %v5198 = vadd.f32 %v5162, %v5183
  %v5199 = vadd.f32 %v5163, %v5183
  %v5200 = vadd.f32 %v5164, %v5183
  %v5201 = vadd.f32 %v5165, %v5183
  %v5202 = vadd.f32 %v5166, %v5183
  %v5203 = vadd.f32 %v5167, %v5183
  %v5204 = vadd.f32 %v5168, %v5183
  %v5205 = vadd.f32 %v5169, %v5183
  %v5206 = vadd.f32 %v5170, %v5183
  %v5207 = vadd.f32 %v5171, %v5183
  %v5208 = vadd.f32 %v5172, %v5183
  %v5209 = vadd.f32 %v5173, %v5183
  %v5210 = vadd.f32 %v5174, %v5183
  %v5211 = vadd.f32 %v5175, %v5183
  %v5212 = vadd.f32 %v5176, %v5183
  %v5213 = vadd.f32 %v5177, %v5183
  %v5214 = vadd.f32 %v5178, %v5183
  %v5215 = vadd.f32 %v5179, %v5183
  %vm5216 = vcmp.ge.f32.partialorder %v5184, 0.0
  %vm5217 = vcmp.ge.f32.partialorder %v5185, 0.0
  %vm5218 = vcmp.ge.f32.partialorder %v5186, 0.0
  %vm5219 = vcmp.ge.f32.partialorder %v5187, 0.0
  %vm5220 = vcmp.ge.f32.partialorder %v5188, 0.0
  %vm5221 = vcmp.ge.f32.partialorder %v5189, 0.0
  %vm5222 = vcmp.ge.f32.partialorder %v5190, 0.0
  %vm5223 = vcmp.ge.f32.partialorder %v5191, 0.0
  %vm5224 = vcmp.ge.f32.partialorder %v5192, 0.0
  %vm5225 = vcmp.ge.f32.partialorder %v5193, 0.0
  %vm5226 = vcmp.ge.f32.partialorder %v5194, 0.0
  %vm5227 = vcmp.ge.f32.partialorder %v5195, 0.0
  %vm5228 = vcmp.ge.f32.partialorder %v5196, 0.0
  %vm5229 = vcmp.ge.f32.partialorder %v5197, 0.0
  %vm5230 = vcmp.ge.f32.partialorder %v5198, 0.0
  %vm5231 = vcmp.ge.f32.partialorder %v5199, 0.0
  %vm5232 = vcmp.ge.f32.partialorder %v5200, 0.0
  %vm5233 = vcmp.ge.f32.partialorder %v5201, 0.0
  %vm5234 = vcmp.ge.f32.partialorder %v5202, 0.0
  %vm5235 = vcmp.ge.f32.partialorder %v5203, 0.0
  %vm5236 = vcmp.ge.f32.partialorder %v5204, 0.0
  %vm5237 = vcmp.ge.f32.partialorder %v5205, 0.0
  %vm5238 = vcmp.ge.f32.partialorder %v5206, 0.0
  %vm5239 = vcmp.ge.f32.partialorder %v5207, 0.0
  %vm5240 = vcmp.ge.f32.partialorder %v5208, 0.0
  %vm5241 = vcmp.ge.f32.partialorder %v5209, 0.0
  %vm5242 = vcmp.ge.f32.partialorder %v5210, 0.0
  %vm5243 = vcmp.ge.f32.partialorder %v5211, 0.0
  %vm5244 = vcmp.ge.f32.partialorder %v5212, 0.0
  %vm5245 = vcmp.ge.f32.partialorder %v5213, 0.0
  %vm5246 = vcmp.ge.f32.partialorder %v5214, 0.0
  %vm5247 = vcmp.ge.f32.partialorder %v5215, 0.0
  %v5248 = vmul.f32 %v5184, 0.2
  %v5249 = vmul.f32 %v5185, 0.2
  %v5250 = vmul.f32 %v5186, 0.2
  %v5251 = vmul.f32 %v5187, 0.2
  %v5252 = vmul.f32 %v5188, 0.2
  %v5253 = vmul.f32 %v5189, 0.2
  %v5254 = vmul.f32 %v5190, 0.2
  %v5255 = vmul.f32 %v5191, 0.2
  %v5256 = vmul.f32 %v5192, 0.2
  %v5257 = vmul.f32 %v5193, 0.2
  %v5258 = vmul.f32 %v5194, 0.2
  %v5259 = vmul.f32 %v5195, 0.2
  %v5260 = vmul.f32 %v5196, 0.2
  %v5261 = vmul.f32 %v5197, 0.2
  %v5262 = vmul.f32 %v5198, 0.2
  %v5263 = vmul.f32 %v5199, 0.2
  %v5264 = vmul.f32 %v5200, 0.2
  %v5265 = vmul.f32 %v5201, 0.2
  %v5266 = vmul.f32 %v5202, 0.2
  %v5267 = vmul.f32 %v5203, 0.2
  %v5268 = vmul.f32 %v5204, 0.2
  %v5269 = vmul.f32 %v5205, 0.2
  %v5270 = vmul.f32 %v5206, 0.2
  %v5271 = vmul.f32 %v5207, 0.2
  %v5272 = vmul.f32 %v5208, 0.2
  %v5273 = vmul.f32 %v5209, 0.2
  %v5274 = vmul.f32 %v5210, 0.2
  %v5275 = vmul.f32 %v5211, 0.2
  %v5276 = vmul.f32 %v5212, 0.2
  %v5277 = vmul.f32 %v5213, 0.2
  %v5278 = vmul.f32 %v5214, 0.2
  %v5279 = vmul.f32 %v5215, 0.2
  %v5280 = vsel %vm5216, %v5184, %v5248
  %v5281 = vsel %vm5217, %v5185, %v5249
  %v5282 = vsel %vm5218, %v5186, %v5250
  %v5283 = vsel %vm5219, %v5187, %v5251
  %v5284 = vsel %vm5220, %v5188, %v5252
  %v5285 = vsel %vm5221, %v5189, %v5253
  %v5286 = vsel %vm5222, %v5190, %v5254
  %v5287 = vsel %vm5223, %v5191, %v5255
  %v5288 = vsel %vm5224, %v5192, %v5256
  %v5289 = vsel %vm5225, %v5193, %v5257
  %v5290 = vsel %vm5226, %v5194, %v5258
  %v5291 = vsel %vm5227, %v5195, %v5259
  %v5292 = vsel %vm5228, %v5196, %v5260
  %v5293 = vsel %vm5229, %v5197, %v5261
  %v5294 = vsel %vm5230, %v5198, %v5262
  %v5295 = vsel %vm5231, %v5199, %v5263
  %v5296 = vsel %vm5232, %v5200, %v5264
  %v5297 = vsel %vm5233, %v5201, %v5265
  %v5298 = vsel %vm5234, %v5202, %v5266
  %v5299 = vsel %vm5235, %v5203, %v5267
  %v5300 = vsel %vm5236, %v5204, %v5268
  %v5301 = vsel %vm5237, %v5205, %v5269
  %v5302 = vsel %vm5238, %v5206, %v5270
  %v5303 = vsel %vm5239, %v5207, %v5271
  %v5304 = vsel %vm5240, %v5208, %v5272
  %v5305 = vsel %vm5241, %v5209, %v5273
  %v5306 = vsel %vm5242, %v5210, %v5274
  %v5307 = vsel %vm5243, %v5211, %v5275
  %v5308 = vsel %vm5244, %v5212, %v5276
  %v5309 = vsel %vm5245, %v5213, %v5277
  %v5310 = vsel %vm5246, %v5214, %v5278
  %v5311 = vsel %vm5247, %v5215, %v5279
  %5312 = vst [vmem:[%s6] sm:$0xff] %v5280
  %5313 = vst [vmem:[%s6 + $0x8] sm:$0xff] %v5281
  %5314 = vst [vmem:[%s6 + $0x10] sm:$0xff] %v5282
  %5315 = vst [vmem:[%s6 + $0x18] sm:$0xff] %v5283
  %5316 = vst [vmem:[%s6 + $0x20] sm:$0xff] %v5284
  %5317 = vst [vmem:[%s6 + $0x28] sm:$0xff] %v5285
  %5318 = vst [vmem:[%s6 + $0x30] sm:$0xff] %v5286
  %5319 = vst [vmem:[%s6 + $0x38] sm:$0xff] %v5287
  %5320 = vst [vmem:[%s6 + $0x40] sm:$0xff] %v5288
  %5321 = vst [vmem:[%s6 + $0x48] sm:$0xff] %v5289
  %5322 = vst [vmem:[%s6 + $0x50] sm:$0xff] %v5290
  %5323 = vst [vmem:[%s6 + $0x58] sm:$0xff] %v5291
  %5324 = vst [vmem:[%s6 + $0x60] sm:$0xff] %v5292
  %5325 = vst [vmem:[%s6 + $0x68] sm:$0xff] %v5293
  %5326 = vst [vmem:[%s6 + $0x70] sm:$0xff] %v5294
  %5327 = vst [vmem:[%s6 + $0x78] sm:$0xff] %v5295
  %5328 = vst [vmem:[%s6 + $0x80] sm:$0xff] %v5296
  %5329 = vst [vmem:[%s6 + $0x88] sm:$0xff] %v5297
  %5330 = vst [vmem:[%s6 + $0x90] sm:$0xff] %v5298
  %5331 = vst [vmem:[%s6 + $0x98] sm:$0xff] %v5299
  %5332 = vst [vmem:[%s6 + $0xa0] sm:$0xff] %v5300
  %5333 = vst [vmem:[%s6 + $0xa8] sm:$0xff] %v5301
  %5334 = vst [vmem:[%s6 + $0xb0] sm:$0xff] %v5302
  %5335 = vst [vmem:[%s6 + $0xb8] sm:$0xff] %v5303
  %5336 = vst [vmem:[%s6 + $0xc0] sm:$0xff] %v5304
  %5337 = vst [vmem:[%s6 + $0xc8] sm:$0xff] %v5305
  %5338 = vst [vmem:[%s6 + $0xd0] sm:$0xff] %v5306
  %5339 = vst [vmem:[%s6 + $0xd8] sm:$0xff] %v5307
  %5340 = vst [vmem:[%s6 + $0xe0] sm:$0xff] %v5308
  %5341 = vst [vmem:[%s6 + $0xe8] sm:$0xff] %v5309
  %5342 = vst [vmem:[%s6 + $0xf0] sm:$0xff] %v5310
  %5343 = vst [vmem:[%s6 + $0xf8] sm:$0xff] %v5311
  // Predicated region
  $region26: #{encoder_split_forward.1} parent=0 // pred_check
    _
  $region27: #{encoder_split_forward.1} parent=0 // pred_check_branch
    %5345 = sbr.rel (0) target = $region29
  $region28: #{encoder_split_forward.1} parent=0 // pred_region
    _
  $region29: #{encoder_split_forward.1} parent=0 // pred_fallthru
    _
  // Predicated region
  $region30: #{encoder_split_forward.1} parent=0 // pred_check
    _
  $region31: #{encoder_split_forward.1} parent=0 // pred_check_branch
    %5347 = sbr.rel (0) target = $region33
  $region32: #{encoder_split_forward.1} parent=0 // pred_region
    _
  $region33: #{encoder_split_forward.1} parent=0 // pred_fallthru
    _

</llo_original>
